<compile_context>
chip_gen: v7x
topology: tpu7x:2x2x1
jax: 0.10.0
libtpu: 0.0.40
codegen_flags: <defaults>
</compile_context>

<pallas_src>
import math
import string
from functools import partial

import jax
import jax.numpy as jnp
from jax import lax
from jax.experimental import pallas as pl
from jax.experimental.pallas import tpu as pltpu

ALL_LETTERS = string.printable
NUM_CLASSES = len(ALL_LETTERS)        # 100
HIDDEN_SIZE = 200
NUM_LAYERS = 2                        # kernel below is specialized for 2 layers (as in the module)


def _round_up(x, m):
    return (x + m - 1) // m * m


D_PAD = _round_up(NUM_CLASSES, 128)   # 128  (input feature dim, lane-padded)
H_PAD = _round_up(HIDDEN_SIZE, 128)   # 256  (hidden dim, lane-padded -> aligned gate slabs)
C_PAD = _round_up(NUM_CLASSES, 128)   # 128  (FC output dim, lane-padded)
B_SUB = 8                             # sublane granularity for the batch dim

# dtype of MXU operands (weights + matmul inputs).  float32 keeps exact parity with the
# PyTorch module; switch to jnp.bfloat16 on v6e/v7x for ~2x weight DMA / MXU throughput
# (accumulation and all elementwise/state math stays f32 either way).
MATMUL_DTYPE = jnp.float32


# ----------------------------------------------------------------------------
# Fused Pallas kernel: LSTM layer 0 -> LSTM layer 1 -> Linear head
# ----------------------------------------------------------------------------
def _fused_lstm_kernel(x_ref, h00_ref, c00_ref, h01_ref, c01_ref,
                       wih0_ref, whh0_ref, b0_ref,
                       wih1_ref, whh1_ref, b1_ref,
                       wfc_ref, bfc_ref,
                       out_ref, hn0_ref, cn0_ref, hn1_ref, cn1_ref,
                       gx_sc, y_sc, h_sc, c_sc,
                       *, seq_len, bp, hp):
    def mm(a, w_ref):
        w = w_ref[...]
        return jnp.dot(a.astype(w.dtype), w, preferred_element_type=jnp.float32)

    def run_layer(whh_ref, hn_ref, cn_ref):
        whh = whh_ref[...]            # load recurrent weight once per layer

        def step(t, carry):
            row = t * bp
            if not isinstance(row, int):
                row = pl.multiple_of(row, 8)          # sublane-aligned row offset hint
            h = h_sc[...]
            gates = gx_sc[pl.ds(row, bp), :] + jnp.dot(
                h.astype(whh.dtype), whh, preferred_element_type=jnp.float32)
            # hp is a multiple of 128 -> each gate slab is a zero-cost lane-aligned view
            i_g = jax.nn.sigmoid(gates[:, 0 * hp:1 * hp])
            f_g = jax.nn.sigmoid(gates[:, 1 * hp:2 * hp])
            g_g = jnp.tanh(gates[:, 2 * hp:3 * hp])
            o_g = jax.nn.sigmoid(gates[:, 3 * hp:4 * hp])
            c_new = f_g * c_sc[...] + i_g * g_g
            h_new = o_g * jnp.tanh(c_new)
            h_sc[...] = h_new
            c_sc[...] = c_new
            y_sc[pl.ds(row, bp), :] = h_new
            return carry

        # Fully unroll short recurrences (LLO scheduler visibility); partially unroll
        # long ones to keep compile time bounded.
        unroll = True if seq_len <= 32 else 8
        lax.fori_loop(0, seq_len, step, 0, unroll=unroll)
        # finalize from the carry scratch (robust to any future grid restructuring)
        hn_ref[...] = h_sc[...]
        cn_ref[...] = c_sc[...]

    # ---- layer 0: hoisted input projection over all timesteps, then recurrence ----
    gx_sc[...] = mm(x_ref[...], wih0_ref) + b0_ref[...]
    h_sc[...] = h00_ref[...]
    c_sc[...] = c00_ref[...]
    run_layer(whh0_ref, hn0_ref, cn0_ref)

    # ---- layer 1 ----
    # TODO(synk): nn.LSTM inter-layer dropout (p=0.1) is train-mode only; eval-mode
    #             (identity) semantics are implemented here.
    gx_sc[...] = mm(y_sc[...], wih1_ref) + b1_ref[...]
    h_sc[...] = h01_ref[...]
    c_sc[...] = c01_ref[...]
    run_layer(whh1_ref, hn1_ref, cn1_ref)

    # ---- Linear head over the whole (S*Bp, Hp) slab (single MXU matmul) ----
    out_ref[...] = mm(y_sc[...], wfc_ref) + bfc_ref[...]


# ----------------------------------------------------------------------------
# One-time weight packing (transpose + per-gate lane padding + bias folding)
# ----------------------------------------------------------------------------
def _pack_gate_weight(w, in_dim_pad, hp, dtype):
    """PyTorch (4H, in_dim) -> transposed, per-gate lane-padded (in_dim_pad, 4*hp)."""
    four_h, in_dim = w.shape
    h = four_h // 4
    wt = jnp.asarray(w, jnp.float32).T.reshape(in_dim, 4, h)          # (in, 4, H)
    wt = jnp.pad(wt, ((0, in_dim_pad - in_dim), (0, 0), (0, hp - h)))  # pad in & H
    return wt.reshape(in_dim_pad, 4 * hp).astype(dtype)


def _pack_gate_bias(b_ih, b_hh, hp):
    b = jnp.asarray(b_ih, jnp.float32) + jnp.asarray(b_hh, jnp.float32)
    h = b.shape[0] // 4
    b = jnp.pad(b.reshape(4, h), ((0, 0), (0, hp - h)))
    return b.reshape(1, 4 * hp)


def pack_params(params, matmul_dtype=MATMUL_DTYPE):
    """Prepare weights once (do NOT redo this per forward call)."""
    l0, l1 = params["lstm"]
    fc = params["fc"]
    H, C = HIDDEN_SIZE, NUM_CLASSES
    wfc = jnp.zeros((H_PAD, C_PAD), jnp.float32).at[:H, :C].set(
        jnp.asarray(fc["w"], jnp.float32).T)
    bfc = jnp.zeros((1, C_PAD), jnp.float32).at[0, :C].set(fc["b"])
    return {
        "wih0": _pack_gate_weight(l0["w_ih"], D_PAD, H_PAD, matmul_dtype),
        "whh0": _pack_gate_weight(l0["w_hh"], H_PAD, H_PAD, matmul_dtype),
        "b0": _pack_gate_bias(l0["b_ih"], l0["b_hh"], H_PAD),
        "wih1": _pack_gate_weight(l1["w_ih"], H_PAD, H_PAD, matmul_dtype),
        "whh1": _pack_gate_weight(l1["w_hh"], H_PAD, H_PAD, matmul_dtype),
        "b1": _pack_gate_bias(l1["b_ih"], l1["b_hh"], H_PAD),
        "wfc": wfc.astype(matmul_dtype),
        "bfc": bfc,
    }


# ----------------------------------------------------------------------------
# Forward wrapper
# ----------------------------------------------------------------------------
def lstm_forward(packed, inp, hidden):
    """Equivalent of LSTM.forward(inp, hidden) in eval mode.

    inp:    (S, B, NUM_CLASSES)
    hidden: (h0, c0), each (NUM_LAYERS, B, HIDDEN_SIZE)
    returns (output, (h_n, c_n)); output: (S, B, NUM_CLASSES)
    """
    h0, c0 = hidden
    S, B, D = inp.shape
    H, C = HIDDEN_SIZE, NUM_CLASSES
    BP = _round_up(max(B, 1), B_SUB)
    M = S * BP

    # zero-pad batch -> 8 sublanes, features -> 128-lane multiples
    x2d = jnp.zeros((S, BP, D_PAD), jnp.float32).at[:, :B, :D].set(inp).reshape(M, D_PAD)

    def pad_state(s):
        return jnp.zeros((BP, H_PAD), jnp.float32).at[:B, :H].set(s)

    h00, h01 = pad_state(h0[0]), pad_state(h0[1])
    c00, c01 = pad_state(c0[0]), pad_state(c0[1])

    kernel = partial(_fused_lstm_kernel, seq_len=S, bp=BP, hp=H_PAD)

    out_shapes = (
        jax.ShapeDtypeStruct((M, C_PAD), jnp.float32),   # fc output (lane-dense slab)
        jax.ShapeDtypeStruct((BP, H_PAD), jnp.float32),  # h_n layer 0
        jax.ShapeDtypeStruct((BP, H_PAD), jnp.float32),  # c_n layer 0
        jax.ShapeDtypeStruct((BP, H_PAD), jnp.float32),  # h_n layer 1
        jax.ShapeDtypeStruct((BP, H_PAD), jnp.float32),  # c_n layer 1
    )

    out2d, hn0, cn0, hn1, cn1 = pl.pallas_call(
        kernel,
        out_shape=out_shapes,
        scratch_shapes=[
            pltpu.VMEM((M, 4 * H_PAD), jnp.float32),     # hoisted input-projection gates
            pltpu.VMEM((M, H_PAD), jnp.float32),         # per-layer output sequence
            pltpu.VMEM((BP, H_PAD), jnp.float32),        # h carry
            pltpu.VMEM((BP, H_PAD), jnp.float32),        # c carry
        ],
        compiler_params=pltpu.CompilerParams(
            vmem_limit_bytes=96 * 1024 * 1024),          # headroom for longer sequences
        # no grid: single invocation, everything VMEM-resident (few MiB total here)
    )(x2d, h00, c00, h01, c01,
      packed["wih0"], packed["whh0"], packed["b0"],
      packed["wih1"], packed["whh1"], packed["b1"],
      packed["wfc"], packed["bfc"])

    output = out2d.reshape(S, BP, C_PAD)[:, :B, :C]
    h_n = jnp.stack([hn0[:B, :H], hn1[:B, :H]])
    c_n = jnp.stack([cn0[:B, :H], cn1[:B, :H]])
    return output, (h_n, c_n)


# ----------------------------------------------------------------------------
# Parameter init (PyTorch default U(-1/sqrt(H), 1/sqrt(H)), PyTorch layout)
# ----------------------------------------------------------------------------
def init_params(key, input_size=NUM_CLASSES, hidden_size=HIDDEN_SIZE,
                num_layers=NUM_LAYERS):
    k = 1.0 / math.sqrt(hidden_size)
    lstm_params = []
    for layer in range(num_layers):
        d_in = input_size if layer == 0 else hidden_size
        key, k1, k2, k3, k4 = jax.random.split(key, 5)
        lstm_params.append({
            "w_ih": jax.random.uniform(k1, (4 * hidden_size, d_in), jnp.float32, -k, k),
            "w_hh": jax.random.uniform(k2, (4 * hidden_size, hidden_size), jnp.float32, -k, k),
            "b_ih": jax.random.uniform(k3, (4 * hidden_size,), jnp.float32, -k, k),
            "b_hh": jax.random.uniform(k4, (4 * hidden_size,), jnp.float32, -k, k),
        })
    key, k5, k6 = jax.random.split(key, 3)
    fc_params = {
        "w": jax.random.uniform(k5, (input_size, hidden_size), jnp.float32, -k, k),
        "b": jax.random.uniform(k6, (input_size,), jnp.float32, -k, k),
    }
    return {"lstm": lstm_params, "fc": fc_params}


# ----------------------------------------------------------------------------
# Pure-JAX reference (eval-mode nn.LSTM + Linear) for correctness checking
# ----------------------------------------------------------------------------
def _reference_forward(params, inp, hidden):
    h0, c0 = hidden
    x = inp
    H = HIDDEN_SIZE
    h_n, c_n = [], []
    for layer in range(NUM_LAYERS):
        p = params["lstm"][layer]
        h, c = h0[layer], c0[layer]
        ys = []
        for t in range(x.shape[0]):
            g = x[t] @ p["w_ih"].T + p["b_ih"] + h @ p["w_hh"].T + p["b_hh"]
            i = jax.nn.sigmoid(g[:, :H])
            f = jax.nn.sigmoid(g[:, H:2 * H])
            gg = jnp.tanh(g[:, 2 * H:3 * H])
            o = jax.nn.sigmoid(g[:, 3 * H:4 * H])
            c = f * c + i * gg
            h = o * jnp.tanh(c)
            ys.append(h)
        x = jnp.stack(ys)
        h_n.append(h)
        c_n.append(c)
    out = x @ params["fc"]["w"].T + params["fc"]["b"]
    return out, (jnp.stack(h_n), jnp.stack(c_n))


# ----------------------------------------------------------------------------
if __name__ == "__main__":
    key = jax.random.PRNGKey(0)
    key, pkey, xkey = jax.random.split(key, 3)

    S, B = 8, 2
    params = init_params(pkey)
    packed = pack_params(params)                 # one-time weight prep

    inp = jax.random.normal(xkey, (S, B, NUM_CLASSES), jnp.float32)
    h0 = jnp.zeros((NUM_LAYERS, B, HIDDEN_SIZE), jnp.float32)
    c0 = jnp.zeros((NUM_LAYERS, B, HIDDEN_SIZE), jnp.float32)

    fwd = jax.jit(lstm_forward)
    output, (h_n, c_n) = fwd(packed, inp, (h0, c0))
    jax.block_until_ready((output, h_n, c_n))

    assert output.shape == (S, B, NUM_CLASSES)
    assert h_n.shape == (NUM_LAYERS, B, HIDDEN_SIZE)
    assert c_n.shape == (NUM_LAYERS, B, HIDDEN_SIZE)

    ref_out, (ref_h, ref_c) = _reference_forward(params, inp, (h0, c0))
    tol = 5e-2
    assert float(jnp.max(jnp.abs(output - ref_out))) < tol, "output mismatch"
    assert float(jnp.max(jnp.abs(h_n - ref_h))) < tol, "h_n mismatch"
    assert float(jnp.max(jnp.abs(c_n - ref_c))) < tol, "c_n mismatch"

    print("KERNEL_OK")
</pallas_src>

<mosaic_0001>
module attributes {stable_mosaic.version = 11 : i64} {
  func.func @_fused_lstm_kernel(%arg0: memref<64x128xf32, #tpu.memory_space<vmem>>, %arg1: memref<8x256xf32, #tpu.memory_space<vmem>>, %arg2: memref<8x256xf32, #tpu.memory_space<vmem>>, %arg3: memref<8x256xf32, #tpu.memory_space<vmem>>, %arg4: memref<8x256xf32, #tpu.memory_space<vmem>>, %arg5: memref<128x1024xf32, #tpu.memory_space<vmem>>, %arg6: memref<256x1024xf32, #tpu.memory_space<vmem>>, %arg7: memref<1x1024xf32, #tpu.memory_space<vmem>>, %arg8: memref<256x1024xf32, #tpu.memory_space<vmem>>, %arg9: memref<256x1024xf32, #tpu.memory_space<vmem>>, %arg10: memref<1x1024xf32, #tpu.memory_space<vmem>>, %arg11: memref<256x128xf32, #tpu.memory_space<vmem>>, %arg12: memref<1x128xf32, #tpu.memory_space<vmem>>, %arg13: memref<64x128xf32, #tpu.memory_space<vmem>>, %arg14: memref<8x256xf32, #tpu.memory_space<vmem>>, %arg15: memref<8x256xf32, #tpu.memory_space<vmem>>, %arg16: memref<8x256xf32, #tpu.memory_space<vmem>>, %arg17: memref<8x256xf32, #tpu.memory_space<vmem>>, %arg18: memref<64x1024xf32, #tpu.memory_space<vmem>>, %arg19: memref<64x256xf32, #tpu.memory_space<vmem>>, %arg20: memref<8x256xf32, #tpu.memory_space<vmem>>, %arg21: memref<8x256xf32, #tpu.memory_space<vmem>>) attributes {dimension_semantics = [], scalar_prefetch = 0 : i64, scratch_operands = 4 : i64, tpu.core_type = #tpu.core_type<tc>} {
    %c0 = arith.constant 0 : index
    %c0_0 = arith.constant 0 : index
    %0 = vector.load %arg0[%c0, %c0_0] : memref<64x128xf32, #tpu.memory_space<vmem>>, vector<64x128xf32>
    %c0_1 = arith.constant 0 : index
    %c0_2 = arith.constant 0 : index
    %1 = vector.load %arg5[%c0_1, %c0_2] : memref<128x1024xf32, #tpu.memory_space<vmem>>, vector<128x1024xf32>
    %cst = arith.constant dense<0.000000e+00> : vector<64x1024xf32>
    %2 = tpu.matmul %0, %1, %cst {dimension_numbers = #tpu.dot_dimension_numbers<[1], [0], [0], [1], [0, 0, 1, 1], [], []>} : vector<64x128xf32>, vector<128x1024xf32>, vector<64x1024xf32> -> vector<64x1024xf32>
    %c0_3 = arith.constant 0 : index
    %c0_4 = arith.constant 0 : index
    %3 = vector.load %arg7[%c0_3, %c0_4] : memref<1x1024xf32, #tpu.memory_space<vmem>>, vector<1x1024xf32>
    %4 = vector.broadcast %3 : vector<1x1024xf32> to vector<64x1024xf32>
    %5 = arith.addf %2, %4 : vector<64x1024xf32>
    %c0_5 = arith.constant 0 : index
    %c0_6 = arith.constant 0 : index
    %6 = vector.load %arg18[%c0_5, %c0_6] : memref<64x1024xf32, #tpu.memory_space<vmem>>, vector<64x1024xf32>
    tpu.vector_store %arg18[%c0_5, %c0_6], %5 {strides = array<i32>} : memref<64x1024xf32, #tpu.memory_space<vmem>>, vector<64x1024xf32>,
    %c0_7 = arith.constant 0 : index
    %c0_8 = arith.constant 0 : index
    %7 = vector.load %arg1[%c0_7, %c0_8] : memref<8x256xf32, #tpu.memory_space<vmem>>, vector<8x256xf32>
    %c0_9 = arith.constant 0 : index
    %c0_10 = arith.constant 0 : index
    %8 = vector.load %arg20[%c0_9, %c0_10] : memref<8x256xf32, #tpu.memory_space<vmem>>, vector<8x256xf32>
    tpu.vector_store %arg20[%c0_9, %c0_10], %7 {strides = array<i32>} : memref<8x256xf32, #tpu.memory_space<vmem>>, vector<8x256xf32>,
    %c0_11 = arith.constant 0 : index
    %c0_12 = arith.constant 0 : index
    %9 = vector.load %arg2[%c0_11, %c0_12] : memref<8x256xf32, #tpu.memory_space<vmem>>, vector<8x256xf32>
    %c0_13 = arith.constant 0 : index
    %c0_14 = arith.constant 0 : index
    %10 = vector.load %arg21[%c0_13, %c0_14] : memref<8x256xf32, #tpu.memory_space<vmem>>, vector<8x256xf32>
    tpu.vector_store %arg21[%c0_13, %c0_14], %9 {strides = array<i32>} : memref<8x256xf32, #tpu.memory_space<vmem>>, vector<8x256xf32>,
    %c0_15 = arith.constant 0 : index
    %c0_16 = arith.constant 0 : index
    %11 = vector.load %arg6[%c0_15, %c0_16] : memref<256x1024xf32, #tpu.memory_space<vmem>>, vector<256x1024xf32>
    %c0_i32 = arith.constant 0 : i32
    %c8_i32 = arith.constant 8 : i32
    %12 = arith.muli %c0_i32, %c8_i32 : i32
    %13 = tpu.assume_multiple %12, 8 : i32
    %c0_17 = arith.constant 0 : index
    %c0_18 = arith.constant 0 : index
    %14 = vector.load %arg20[%c0_17, %c0_18] : memref<8x256xf32, #tpu.memory_space<vmem>>, vector<8x256xf32>
    %15 = arith.index_cast %13 : i32 to index
    %c0_19 = arith.constant 0 : index
    %16 = vector.load %arg18[%15, %c0_19] : memref<64x1024xf32, #tpu.memory_space<vmem>>, vector<8x1024xf32>
    %cst_20 = arith.constant dense<0.000000e+00> : vector<8x1024xf32>
    %17 = tpu.matmul %14, %11, %cst_20 {dimension_numbers = #tpu.dot_dimension_numbers<[1], [0], [0], [1], [0, 0, 1, 1], [], []>} : vector<8x256xf32>, vector<256x1024xf32>, vector<8x1024xf32> -> vector<8x1024xf32>
    %18 = arith.addf %16, %17 : vector<8x1024xf32>
    %19 = vector.extract_strided_slice %18 {offsets = [0, 0], sizes = [8, 256], strides = [1, 1]} : vector<8x1024xf32> to vector<8x256xf32>
    %20 = arith.negf %19 : vector<8x256xf32>
    %21 = math.exp %20 : vector<8x256xf32>
    %cst_21 = arith.constant 1.000000e+00 : f32
    %22 = vector.broadcast %cst_21 : f32 to vector<8x256xf32>
    %23 = arith.addf %22, %21 : vector<8x256xf32>
    %24 = arith.divf %22, %23 : vector<8x256xf32>
    %25 = vector.extract_strided_slice %18 {offsets = [0, 256], sizes = [8, 256], strides = [1, 1]} : vector<8x1024xf32> to vector<8x256xf32>
    %26 = arith.negf %25 : vector<8x256xf32>
    %27 = math.exp %26 : vector<8x256xf32>
    %cst_22 = arith.constant 1.000000e+00 : f32
    %28 = vector.broadcast %cst_22 : f32 to vector<8x256xf32>
    %29 = arith.addf %28, %27 : vector<8x256xf32>
    %30 = arith.divf %28, %29 : vector<8x256xf32>
    %31 = vector.extract_strided_slice %18 {offsets = [0, 512], sizes = [8, 256], strides = [1, 1]} : vector<8x1024xf32> to vector<8x256xf32>
    %32 = math.tanh %31 : vector<8x256xf32>
    %33 = vector.extract_strided_slice %18 {offsets = [0, 768], sizes = [8, 256], strides = [1, 1]} : vector<8x1024xf32> to vector<8x256xf32>
    %34 = arith.negf %33 : vector<8x256xf32>
    %35 = math.exp %34 : vector<8x256xf32>
    %cst_23 = arith.constant 1.000000e+00 : f32
    %36 = vector.broadcast %cst_23 : f32 to vector<8x256xf32>
    %37 = arith.addf %36, %35 : vector<8x256xf32>
    %38 = arith.divf %36, %37 : vector<8x256xf32>
    %c0_24 = arith.constant 0 : index
    %c0_25 = arith.constant 0 : index
    %39 = vector.load %arg21[%c0_24, %c0_25] : memref<8x256xf32, #tpu.memory_space<vmem>>, vector<8x256xf32>
    %40 = arith.mulf %30, %39 : vector<8x256xf32>
    %41 = arith.mulf %24, %32 : vector<8x256xf32>
    %42 = arith.addf %40, %41 : vector<8x256xf32>
    %43 = math.tanh %42 : vector<8x256xf32>
    %44 = arith.mulf %38, %43 : vector<8x256xf32>
    %c0_26 = arith.constant 0 : index
    %c0_27 = arith.constant 0 : index
    %45 = vector.load %arg20[%c0_26, %c0_27] : memref<8x256xf32, #tpu.memory_space<vmem>>, vector<8x256xf32>
    tpu.vector_store %arg20[%c0_26, %c0_27], %44 {strides = array<i32>} : memref<8x256xf32, #tpu.memory_space<vmem>>, vector<8x256xf32>,
    %c0_28 = arith.constant 0 : index
    %c0_29 = arith.constant 0 : index
    %46 = vector.load %arg21[%c0_28, %c0_29] : memref<8x256xf32, #tpu.memory_space<vmem>>, vector<8x256xf32>
    tpu.vector_store %arg21[%c0_28, %c0_29], %42 {strides = array<i32>} : memref<8x256xf32, #tpu.memory_space<vmem>>, vector<8x256xf32>,
    %47 = arith.index_cast %13 : i32 to index
    %c0_30 = arith.constant 0 : index
    %48 = vector.load %arg19[%47, %c0_30] : memref<64x256xf32, #tpu.memory_space<vmem>>, vector<8x256xf32>
    tpu.vector_store %arg19[%47, %c0_30], %44 {strides = array<i32>} : memref<64x256xf32, #tpu.memory_space<vmem>>, vector<8x256xf32>,
    %c1_i32 = arith.constant 1 : i32
    %c8_i32_31 = arith.constant 8 : i32
    %49 = arith.muli %c1_i32, %c8_i32_31 : i32
    %50 = tpu.assume_multiple %49, 8 : i32
    %c0_32 = arith.constant 0 : index
    %c0_33 = arith.constant 0 : index
    %51 = vector.load %arg20[%c0_32, %c0_33] : memref<8x256xf32, #tpu.memory_space<vmem>>, vector<8x256xf32>
    %52 = arith.index_cast %50 : i32 to index
    %c0_34 = arith.constant 0 : index
    %53 = vector.load %arg18[%52, %c0_34] : memref<64x1024xf32, #tpu.memory_space<vmem>>, vector<8x1024xf32>
    %cst_35 = arith.constant dense<0.000000e+00> : vector<8x1024xf32>
    %54 = tpu.matmul %51, %11, %cst_35 {dimension_numbers = #tpu.dot_dimension_numbers<[1], [0], [0], [1], [0, 0, 1, 1], [], []>} : vector<8x256xf32>, vector<256x1024xf32>, vector<8x1024xf32> -> vector<8x1024xf32>
    %55 = arith.addf %53, %54 : vector<8x1024xf32>
    %56 = vector.extract_strided_slice %55 {offsets = [0, 0], sizes = [8, 256], strides = [1, 1]} : vector<8x1024xf32> to vector<8x256xf32>
    %57 = arith.negf %56 : vector<8x256xf32>
    %58 = math.exp %57 : vector<8x256xf32>
    %cst_36 = arith.constant 1.000000e+00 : f32
    %59 = vector.broadcast %cst_36 : f32 to vector<8x256xf32>
    %60 = arith.addf %59, %58 : vector<8x256xf32>
    %61 = arith.divf %59, %60 : vector<8x256xf32>
    %62 = vector.extract_strided_slice %55 {offsets = [0, 256], sizes = [8, 256], strides = [1, 1]} : vector<8x1024xf32> to vector<8x256xf32>
    %63 = arith.negf %62 : vector<8x256xf32>
    %64 = math.exp %63 : vector<8x256xf32>
    %cst_37 = arith.constant 1.000000e+00 : f32
    %65 = vector.broadcast %cst_37 : f32 to vector<8x256xf32>
    %66 = arith.addf %65, %64 : vector<8x256xf32>
    %67 = arith.divf %65, %66 : vector<8x256xf32>
    %68 = vector.extract_strided_slice %55 {offsets = [0, 512], sizes = [8, 256], strides = [1, 1]} : vector<8x1024xf32> to vector<8x256xf32>
    %69 = math.tanh %68 : vector<8x256xf32>
    %70 = vector.extract_strided_slice %55 {offsets = [0, 768], sizes = [8, 256], strides = [1, 1]} : vector<8x1024xf32> to vector<8x256xf32>
    %71 = arith.negf %70 : vector<8x256xf32>
    %72 = math.exp %71 : vector<8x256xf32>
    %cst_38 = arith.constant 1.000000e+00 : f32
    %73 = vector.broadcast %cst_38 : f32 to vector<8x256xf32>
    %74 = arith.addf %73, %72 : vector<8x256xf32>
    %75 = arith.divf %73, %74 : vector<8x256xf32>
    %c0_39 = arith.constant 0 : index
    %c0_40 = arith.constant 0 : index
    %76 = vector.load %arg21[%c0_39, %c0_40] : memref<8x256xf32, #tpu.memory_space<vmem>>, vector<8x256xf32>
    %77 = arith.mulf %67, %76 : vector<8x256xf32>
    %78 = arith.mulf %61, %69 : vector<8x256xf32>
    %79 = arith.addf %77, %78 : vector<8x256xf32>
    %80 = math.tanh %79 : vector<8x256xf32>
    %81 = arith.mulf %75, %80 : vector<8x256xf32>
    %c0_41 = arith.constant 0 : index
    %c0_42 = arith.constant 0 : index
    %82 = vector.load %arg20[%c0_41, %c0_42] : memref<8x256xf32, #tpu.memory_space<vmem>>, vector<8x256xf32>
    tpu.vector_store %arg20[%c0_41, %c0_42], %81 {strides = array<i32>} : memref<8x256xf32, #tpu.memory_space<vmem>>, vector<8x256xf32>,
    %c0_43 = arith.constant 0 : index
    %c0_44 = arith.constant 0 : index
    %83 = vector.load %arg21[%c0_43, %c0_44] : memref<8x256xf32, #tpu.memory_space<vmem>>, vector<8x256xf32>
    tpu.vector_store %arg21[%c0_43, %c0_44], %79 {strides = array<i32>} : memref<8x256xf32, #tpu.memory_space<vmem>>, vector<8x256xf32>,
    %84 = arith.index_cast %50 : i32 to index
    %c0_45 = arith.constant 0 : index
    %85 = vector.load %arg19[%84, %c0_45] : memref<64x256xf32, #tpu.memory_space<vmem>>, vector<8x256xf32>
    tpu.vector_store %arg19[%84, %c0_45], %81 {strides = array<i32>} : memref<64x256xf32, #tpu.memory_space<vmem>>, vector<8x256xf32>,
    %c2_i32 = arith.constant 2 : i32
    %c8_i32_46 = arith.constant 8 : i32
    %86 = arith.muli %c2_i32, %c8_i32_46 : i32
    %87 = tpu.assume_multiple %86, 8 : i32
    %c0_47 = arith.constant 0 : index
    %c0_48 = arith.constant 0 : index
    %88 = vector.load %arg20[%c0_47, %c0_48] : memref<8x256xf32, #tpu.memory_space<vmem>>, vector<8x256xf32>
    %89 = arith.index_cast %87 : i32 to index
    %c0_49 = arith.constant 0 : index
    %90 = vector.load %arg18[%89, %c0_49] : memref<64x1024xf32, #tpu.memory_space<vmem>>, vector<8x1024xf32>
    %cst_50 = arith.constant dense<0.000000e+00> : vector<8x1024xf32>
    %91 = tpu.matmul %88, %11, %cst_50 {dimension_numbers = #tpu.dot_dimension_numbers<[1], [0], [0], [1], [0, 0, 1, 1], [], []>} : vector<8x256xf32>, vector<256x1024xf32>, vector<8x1024xf32> -> vector<8x1024xf32>
    %92 = arith.addf %90, %91 : vector<8x1024xf32>
    %93 = vector.extract_strided_slice %92 {offsets = [0, 0], sizes = [8, 256], strides = [1, 1]} : vector<8x1024xf32> to vector<8x256xf32>
    %94 = arith.negf %93 : vector<8x256xf32>
    %95 = math.exp %94 : vector<8x256xf32>
    %cst_51 = arith.constant 1.000000e+00 : f32
    %96 = vector.broadcast %cst_51 : f32 to vector<8x256xf32>
    %97 = arith.addf %96, %95 : vector<8x256xf32>
    %98 = arith.divf %96, %97 : vector<8x256xf32>
    %99 = vector.extract_strided_slice %92 {offsets = [0, 256], sizes = [8, 256], strides = [1, 1]} : vector<8x1024xf32> to vector<8x256xf32>
    %100 = arith.negf %99 : vector<8x256xf32>
    %101 = math.exp %100 : vector<8x256xf32>
    %cst_52 = arith.constant 1.000000e+00 : f32
    %102 = vector.broadcast %cst_52 : f32 to vector<8x256xf32>
    %103 = arith.addf %102, %101 : vector<8x256xf32>
    %104 = arith.divf %102, %103 : vector<8x256xf32>
    %105 = vector.extract_strided_slice %92 {offsets = [0, 512], sizes = [8, 256], strides = [1, 1]} : vector<8x1024xf32> to vector<8x256xf32>
    %106 = math.tanh %105 : vector<8x256xf32>
    %107 = vector.extract_strided_slice %92 {offsets = [0, 768], sizes = [8, 256], strides = [1, 1]} : vector<8x1024xf32> to vector<8x256xf32>
    %108 = arith.negf %107 : vector<8x256xf32>
    %109 = math.exp %108 : vector<8x256xf32>
    %cst_53 = arith.constant 1.000000e+00 : f32
    %110 = vector.broadcast %cst_53 : f32 to vector<8x256xf32>
    %111 = arith.addf %110, %109 : vector<8x256xf32>
    %112 = arith.divf %110, %111 : vector<8x256xf32>
    %c0_54 = arith.constant 0 : index
    %c0_55 = arith.constant 0 : index
    %113 = vector.load %arg21[%c0_54, %c0_55] : memref<8x256xf32, #tpu.memory_space<vmem>>, vector<8x256xf32>
    %114 = arith.mulf %104, %113 : vector<8x256xf32>
    %115 = arith.mulf %98, %106 : vector<8x256xf32>
    %116 = arith.addf %114, %115 : vector<8x256xf32>
    %117 = math.tanh %116 : vector<8x256xf32>
    %118 = arith.mulf %112, %117 : vector<8x256xf32>
    %c0_56 = arith.constant 0 : index
    %c0_57 = arith.constant 0 : index
    %119 = vector.load %arg20[%c0_56, %c0_57] : memref<8x256xf32, #tpu.memory_space<vmem>>, vector<8x256xf32>
    tpu.vector_store %arg20[%c0_56, %c0_57], %118 {strides = array<i32>} : memref<8x256xf32, #tpu.memory_space<vmem>>, vector<8x256xf32>,
    %c0_58 = arith.constant 0 : index
    %c0_59 = arith.constant 0 : index
    %120 = vector.load %arg21[%c0_58, %c0_59] : memref<8x256xf32, #tpu.memory_space<vmem>>, vector<8x256xf32>
    tpu.vector_store %arg21[%c0_58, %c0_59], %116 {strides = array<i32>} : memref<8x256xf32, #tpu.memory_space<vmem>>, vector<8x256xf32>,
    %121 = arith.index_cast %87 : i32 to index
    %c0_60 = arith.constant 0 : index
    %122 = vector.load %arg19[%121, %c0_60] : memref<64x256xf32, #tpu.memory_space<vmem>>, vector<8x256xf32>
    tpu.vector_store %arg19[%121, %c0_60], %118 {strides = array<i32>} : memref<64x256xf32, #tpu.memory_space<vmem>>, vector<8x256xf32>,
    %c3_i32 = arith.constant 3 : i32
    %c8_i32_61 = arith.constant 8 : i32
    %123 = arith.muli %c3_i32, %c8_i32_61 : i32
    %124 = tpu.assume_multiple %123, 8 : i32
    %c0_62 = arith.constant 0 : index
    %c0_63 = arith.constant 0 : index
    %125 = vector.load %arg20[%c0_62, %c0_63] : memref<8x256xf32, #tpu.memory_space<vmem>>, vector<8x256xf32>
    %126 = arith.index_cast %124 : i32 to index
    %c0_64 = arith.constant 0 : index
    %127 = vector.load %arg18[%126, %c0_64] : memref<64x1024xf32, #tpu.memory_space<vmem>>, vector<8x1024xf32>
    %cst_65 = arith.constant dense<0.000000e+00> : vector<8x1024xf32>
    %128 = tpu.matmul %125, %11, %cst_65 {dimension_numbers = #tpu.dot_dimension_numbers<[1], [0], [0], [1], [0, 0, 1, 1], [], []>} : vector<8x256xf32>, vector<256x1024xf32>, vector<8x1024xf32> -> vector<8x1024xf32>
    %129 = arith.addf %127, %128 : vector<8x1024xf32>
    %130 = vector.extract_strided_slice %129 {offsets = [0, 0], sizes = [8, 256], strides = [1, 1]} : vector<8x1024xf32> to vector<8x256xf32>
    %131 = arith.negf %130 : vector<8x256xf32>
    %132 = math.exp %131 : vector<8x256xf32>
    %cst_66 = arith.constant 1.000000e+00 : f32
    %133 = vector.broadcast %cst_66 : f32 to vector<8x256xf32>
    %134 = arith.addf %133, %132 : vector<8x256xf32>
    %135 = arith.divf %133, %134 : vector<8x256xf32>
    %136 = vector.extract_strided_slice %129 {offsets = [0, 256], sizes = [8, 256], strides = [1, 1]} : vector<8x1024xf32> to vector<8x256xf32>
    %137 = arith.negf %136 : vector<8x256xf32>
    %138 = math.exp %137 : vector<8x256xf32>
    %cst_67 = arith.constant 1.000000e+00 : f32
    %139 = vector.broadcast %cst_67 : f32 to vector<8x256xf32>
    %140 = arith.addf %139, %138 : vector<8x256xf32>
    %141 = arith.divf %139, %140 : vector<8x256xf32>
    %142 = vector.extract_strided_slice %129 {offsets = [0, 512], sizes = [8, 256], strides = [1, 1]} : vector<8x1024xf32> to vector<8x256xf32>
    %143 = math.tanh %142 : vector<8x256xf32>
    %144 = vector.extract_strided_slice %129 {offsets = [0, 768], sizes = [8, 256], strides = [1, 1]} : vector<8x1024xf32> to vector<8x256xf32>
    %145 = arith.negf %144 : vector<8x256xf32>
    %146 = math.exp %145 : vector<8x256xf32>
    %cst_68 = arith.constant 1.000000e+00 : f32
    %147 = vector.broadcast %cst_68 : f32 to vector<8x256xf32>
    %148 = arith.addf %147, %146 : vector<8x256xf32>
    %149 = arith.divf %147, %148 : vector<8x256xf32>
    %c0_69 = arith.constant 0 : index
    %c0_70 = arith.constant 0 : index
    %150 = vector.load %arg21[%c0_69, %c0_70] : memref<8x256xf32, #tpu.memory_space<vmem>>, vector<8x256xf32>
    %151 = arith.mulf %141, %150 : vector<8x256xf32>
    %152 = arith.mulf %135, %143 : vector<8x256xf32>
    %153 = arith.addf %151, %152 : vector<8x256xf32>
    %154 = math.tanh %153 : vector<8x256xf32>
    %155 = arith.mulf %149, %154 : vector<8x256xf32>
    %c0_71 = arith.constant 0 : index
    %c0_72 = arith.constant 0 : index
    %156 = vector.load %arg20[%c0_71, %c0_72] : memref<8x256xf32, #tpu.memory_space<vmem>>, vector<8x256xf32>
    tpu.vector_store %arg20[%c0_71, %c0_72], %155 {strides = array<i32>} : memref<8x256xf32, #tpu.memory_space<vmem>>, vector<8x256xf32>,
    %c0_73 = arith.constant 0 : index
    %c0_74 = arith.constant 0 : index
    %157 = vector.load %arg21[%c0_73, %c0_74] : memref<8x256xf32, #tpu.memory_space<vmem>>, vector<8x256xf32>
    tpu.vector_store %arg21[%c0_73, %c0_74], %153 {strides = array<i32>} : memref<8x256xf32, #tpu.memory_space<vmem>>, vector<8x256xf32>,
    %158 = arith.index_cast %124 : i32 to index
    %c0_75 = arith.constant 0 : index
    %159 = vector.load %arg19[%158, %c0_75] : memref<64x256xf32, #tpu.memory_space<vmem>>, vector<8x256xf32>
    tpu.vector_store %arg19[%158, %c0_75], %155 {strides = array<i32>} : memref<64x256xf32, #tpu.memory_space<vmem>>, vector<8x256xf32>,
    %c4_i32 = arith.constant 4 : i32
    %c8_i32_76 = arith.constant 8 : i32
    %160 = arith.muli %c4_i32, %c8_i32_76 : i32
    %161 = tpu.assume_multiple %160, 8 : i32
    %c0_77 = arith.constant 0 : index
    %c0_78 = arith.constant 0 : index
    %162 = vector.load %arg20[%c0_77, %c0_78] : memref<8x256xf32, #tpu.memory_space<vmem>>, vector<8x256xf32>
    %163 = arith.index_cast %161 : i32 to index
    %c0_79 = arith.constant 0 : index
    %164 = vector.load %arg18[%163, %c0_79] : memref<64x1024xf32, #tpu.memory_space<vmem>>, vector<8x1024xf32>
    %cst_80 = arith.constant dense<0.000000e+00> : vector<8x1024xf32>
    %165 = tpu.matmul %162, %11, %cst_80 {dimension_numbers = #tpu.dot_dimension_numbers<[1], [0], [0], [1], [0, 0, 1, 1], [], []>} : vector<8x256xf32>, vector<256x1024xf32>, vector<8x1024xf32> -> vector<8x1024xf32>
    %166 = arith.addf %164, %165 : vector<8x1024xf32>
    %167 = vector.extract_strided_slice %166 {offsets = [0, 0], sizes = [8, 256], strides = [1, 1]} : vector<8x1024xf32> to vector<8x256xf32>
    %168 = arith.negf %167 : vector<8x256xf32>
    %169 = math.exp %168 : vector<8x256xf32>
    %cst_81 = arith.constant 1.000000e+00 : f32
    %170 = vector.broadcast %cst_81 : f32 to vector<8x256xf32>
    %171 = arith.addf %170, %169 : vector<8x256xf32>
    %172 = arith.divf %170, %171 : vector<8x256xf32>
    %173 = vector.extract_strided_slice %166 {offsets = [0, 256], sizes = [8, 256], strides = [1, 1]} : vector<8x1024xf32> to vector<8x256xf32>
    %174 = arith.negf %173 : vector<8x256xf32>
    %175 = math.exp %174 : vector<8x256xf32>
    %cst_82 = arith.constant 1.000000e+00 : f32
    %176 = vector.broadcast %cst_82 : f32 to vector<8x256xf32>
    %177 = arith.addf %176, %175 : vector<8x256xf32>
    %178 = arith.divf %176, %177 : vector<8x256xf32>
    %179 = vector.extract_strided_slice %166 {offsets = [0, 512], sizes = [8, 256], strides = [1, 1]} : vector<8x1024xf32> to vector<8x256xf32>
    %180 = math.tanh %179 : vector<8x256xf32>
    %181 = vector.extract_strided_slice %166 {offsets = [0, 768], sizes = [8, 256], strides = [1, 1]} : vector<8x1024xf32> to vector<8x256xf32>
    %182 = arith.negf %181 : vector<8x256xf32>
    %183 = math.exp %182 : vector<8x256xf32>
    %cst_83 = arith.constant 1.000000e+00 : f32
    %184 = vector.broadcast %cst_83 : f32 to vector<8x256xf32>
    %185 = arith.addf %184, %183 : vector<8x256xf32>
    %186 = arith.divf %184, %185 : vector<8x256xf32>
    %c0_84 = arith.constant 0 : index
    %c0_85 = arith.constant 0 : index
    %187 = vector.load %arg21[%c0_84, %c0_85] : memref<8x256xf32, #tpu.memory_space<vmem>>, vector<8x256xf32>
    %188 = arith.mulf %178, %187 : vector<8x256xf32>
    %189 = arith.mulf %172, %180 : vector<8x256xf32>
    %190 = arith.addf %188, %189 : vector<8x256xf32>
    %191 = math.tanh %190 : vector<8x256xf32>
    %192 = arith.mulf %186, %191 : vector<8x256xf32>
    %c0_86 = arith.constant 0 : index
    %c0_87 = arith.constant 0 : index
    %193 = vector.load %arg20[%c0_86, %c0_87] : memref<8x256xf32, #tpu.memory_space<vmem>>, vector<8x256xf32>
    tpu.vector_store %arg20[%c0_86, %c0_87], %192 {strides = array<i32>} : memref<8x256xf32, #tpu.memory_space<vmem>>, vector<8x256xf32>,
    %c0_88 = arith.constant 0 : index
    %c0_89 = arith.constant 0 : index
    %194 = vector.load %arg21[%c0_88, %c0_89] : memref<8x256xf32, #tpu.memory_space<vmem>>, vector<8x256xf32>
    tpu.vector_store %arg21[%c0_88, %c0_89], %190 {strides = array<i32>} : memref<8x256xf32, #tpu.memory_space<vmem>>, vector<8x256xf32>,
    %195 = arith.index_cast %161 : i32 to index
    %c0_90 = arith.constant 0 : index
    %196 = vector.load %arg19[%195, %c0_90] : memref<64x256xf32, #tpu.memory_space<vmem>>, vector<8x256xf32>
    tpu.vector_store %arg19[%195, %c0_90], %192 {strides = array<i32>} : memref<64x256xf32, #tpu.memory_space<vmem>>, vector<8x256xf32>,
    %c5_i32 = arith.constant 5 : i32
    %c8_i32_91 = arith.constant 8 : i32
    %197 = arith.muli %c5_i32, %c8_i32_91 : i32
    %198 = tpu.assume_multiple %197, 8 : i32
    %c0_92 = arith.constant 0 : index
    %c0_93 = arith.constant 0 : index
    %199 = vector.load %arg20[%c0_92, %c0_93] : memref<8x256xf32, #tpu.memory_space<vmem>>, vector<8x256xf32>
    %200 = arith.index_cast %198 : i32 to index
    %c0_94 = arith.constant 0 : index
    %201 = vector.load %arg18[%200, %c0_94] : memref<64x1024xf32, #tpu.memory_space<vmem>>, vector<8x1024xf32>
    %cst_95 = arith.constant dense<0.000000e+00> : vector<8x1024xf32>
    %202 = tpu.matmul %199, %11, %cst_95 {dimension_numbers = #tpu.dot_dimension_numbers<[1], [0], [0], [1], [0, 0, 1, 1], [], []>} : vector<8x256xf32>, vector<256x1024xf32>, vector<8x1024xf32> -> vector<8x1024xf32>
    %203 = arith.addf %201, %202 : vector<8x1024xf32>
    %204 = vector.extract_strided_slice %203 {offsets = [0, 0], sizes = [8, 256], strides = [1, 1]} : vector<8x1024xf32> to vector<8x256xf32>
    %205 = arith.negf %204 : vector<8x256xf32>
    %206 = math.exp %205 : vector<8x256xf32>
    %cst_96 = arith.constant 1.000000e+00 : f32
    %207 = vector.broadcast %cst_96 : f32 to vector<8x256xf32>
    %208 = arith.addf %207, %206 : vector<8x256xf32>
    %209 = arith.divf %207, %208 : vector<8x256xf32>
    %210 = vector.extract_strided_slice %203 {offsets = [0, 256], sizes = [8, 256], strides = [1, 1]} : vector<8x1024xf32> to vector<8x256xf32>
    %211 = arith.negf %210 : vector<8x256xf32>
    %212 = math.exp %211 : vector<8x256xf32>
    %cst_97 = arith.constant 1.000000e+00 : f32
    %213 = vector.broadcast %cst_97 : f32 to vector<8x256xf32>
    %214 = arith.addf %213, %212 : vector<8x256xf32>
    %215 = arith.divf %213, %214 : vector<8x256xf32>
    %216 = vector.extract_strided_slice %203 {offsets = [0, 512], sizes = [8, 256], strides = [1, 1]} : vector<8x1024xf32> to vector<8x256xf32>
    %217 = math.tanh %216 : vector<8x256xf32>
    %218 = vector.extract_strided_slice %203 {offsets = [0, 768], sizes = [8, 256], strides = [1, 1]} : vector<8x1024xf32> to vector<8x256xf32>
    %219 = arith.negf %218 : vector<8x256xf32>
    %220 = math.exp %219 : vector<8x256xf32>
    %cst_98 = arith.constant 1.000000e+00 : f32
    %221 = vector.broadcast %cst_98 : f32 to vector<8x256xf32>
    %222 = arith.addf %221, %220 : vector<8x256xf32>
    %223 = arith.divf %221, %222 : vector<8x256xf32>
    %c0_99 = arith.constant 0 : index
    %c0_100 = arith.constant 0 : index
    %224 = vector.load %arg21[%c0_99, %c0_100] : memref<8x256xf32, #tpu.memory_space<vmem>>, vector<8x256xf32>
    %225 = arith.mulf %215, %224 : vector<8x256xf32>
    %226 = arith.mulf %209, %217 : vector<8x256xf32>
    %227 = arith.addf %225, %226 : vector<8x256xf32>
    %228 = math.tanh %227 : vector<8x256xf32>
    %229 = arith.mulf %223, %228 : vector<8x256xf32>
    %c0_101 = arith.constant 0 : index
    %c0_102 = arith.constant 0 : index
    %230 = vector.load %arg20[%c0_101, %c0_102] : memref<8x256xf32, #tpu.memory_space<vmem>>, vector<8x256xf32>
    tpu.vector_store %arg20[%c0_101, %c0_102], %229 {strides = array<i32>} : memref<8x256xf32, #tpu.memory_space<vmem>>, vector<8x256xf32>,
    %c0_103 = arith.constant 0 : index
    %c0_104 = arith.constant 0 : index
    %231 = vector.load %arg21[%c0_103, %c0_104] : memref<8x256xf32, #tpu.memory_space<vmem>>, vector<8x256xf32>
    tpu.vector_store %arg21[%c0_103, %c0_104], %227 {strides = array<i32>} : memref<8x256xf32, #tpu.memory_space<vmem>>, vector<8x256xf32>,
    %232 = arith.index_cast %198 : i32 to index
    %c0_105 = arith.constant 0 : index
    %233 = vector.load %arg19[%232, %c0_105] : memref<64x256xf32, #tpu.memory_space<vmem>>, vector<8x256xf32>
    tpu.vector_store %arg19[%232, %c0_105], %229 {strides = array<i32>} : memref<64x256xf32, #tpu.memory_space<vmem>>, vector<8x256xf32>,
    %c6_i32 = arith.constant 6 : i32
    %c8_i32_106 = arith.constant 8 : i32
    %234 = arith.muli %c6_i32, %c8_i32_106 : i32
    %235 = tpu.assume_multiple %234, 8 : i32
    %c0_107 = arith.constant 0 : index
    %c0_108 = arith.constant 0 : index
    %236 = vector.load %arg20[%c0_107, %c0_108] : memref<8x256xf32, #tpu.memory_space<vmem>>, vector<8x256xf32>
    %237 = arith.index_cast %235 : i32 to index
    %c0_109 = arith.constant 0 : index
    %238 = vector.load %arg18[%237, %c0_109] : memref<64x1024xf32, #tpu.memory_space<vmem>>, vector<8x1024xf32>
    %cst_110 = arith.constant dense<0.000000e+00> : vector<8x1024xf32>
    %239 = tpu.matmul %236, %11, %cst_110 {dimension_numbers = #tpu.dot_dimension_numbers<[1], [0], [0], [1], [0, 0, 1, 1], [], []>} : vector<8x256xf32>, vector<256x1024xf32>, vector<8x1024xf32> -> vector<8x1024xf32>
    %240 = arith.addf %238, %239 : vector<8x1024xf32>
    %241 = vector.extract_strided_slice %240 {offsets = [0, 0], sizes = [8, 256], strides = [1, 1]} : vector<8x1024xf32> to vector<8x256xf32>
    %242 = arith.negf %241 : vector<8x256xf32>
    %243 = math.exp %242 : vector<8x256xf32>
    %cst_111 = arith.constant 1.000000e+00 : f32
    %244 = vector.broadcast %cst_111 : f32 to vector<8x256xf32>
    %245 = arith.addf %244, %243 : vector<8x256xf32>
    %246 = arith.divf %244, %245 : vector<8x256xf32>
    %247 = vector.extract_strided_slice %240 {offsets = [0, 256], sizes = [8, 256], strides = [1, 1]} : vector<8x1024xf32> to vector<8x256xf32>
    %248 = arith.negf %247 : vector<8x256xf32>
    %249 = math.exp %248 : vector<8x256xf32>
    %cst_112 = arith.constant 1.000000e+00 : f32
    %250 = vector.broadcast %cst_112 : f32 to vector<8x256xf32>
    %251 = arith.addf %250, %249 : vector<8x256xf32>
    %252 = arith.divf %250, %251 : vector<8x256xf32>
    %253 = vector.extract_strided_slice %240 {offsets = [0, 512], sizes = [8, 256], strides = [1, 1]} : vector<8x1024xf32> to vector<8x256xf32>
    %254 = math.tanh %253 : vector<8x256xf32>
    %255 = vector.extract_strided_slice %240 {offsets = [0, 768], sizes = [8, 256], strides = [1, 1]} : vector<8x1024xf32> to vector<8x256xf32>
    %256 = arith.negf %255 : vector<8x256xf32>
    %257 = math.exp %256 : vector<8x256xf32>
    %cst_113 = arith.constant 1.000000e+00 : f32
    %258 = vector.broadcast %cst_113 : f32 to vector<8x256xf32>
    %259 = arith.addf %258, %257 : vector<8x256xf32>
    %260 = arith.divf %258, %259 : vector<8x256xf32>
    %c0_114 = arith.constant 0 : index
    %c0_115 = arith.constant 0 : index
    %261 = vector.load %arg21[%c0_114, %c0_115] : memref<8x256xf32, #tpu.memory_space<vmem>>, vector<8x256xf32>
    %262 = arith.mulf %252, %261 : vector<8x256xf32>
    %263 = arith.mulf %246, %254 : vector<8x256xf32>
    %264 = arith.addf %262, %263 : vector<8x256xf32>
    %265 = math.tanh %264 : vector<8x256xf32>
    %266 = arith.mulf %260, %265 : vector<8x256xf32>
    %c0_116 = arith.constant 0 : index
    %c0_117 = arith.constant 0 : index
    %267 = vector.load %arg20[%c0_116, %c0_117] : memref<8x256xf32, #tpu.memory_space<vmem>>, vector<8x256xf32>
    tpu.vector_store %arg20[%c0_116, %c0_117], %266 {strides = array<i32>} : memref<8x256xf32, #tpu.memory_space<vmem>>, vector<8x256xf32>,
    %c0_118 = arith.constant 0 : index
    %c0_119 = arith.constant 0 : index
    %268 = vector.load %arg21[%c0_118, %c0_119] : memref<8x256xf32, #tpu.memory_space<vmem>>, vector<8x256xf32>
    tpu.vector_store %arg21[%c0_118, %c0_119], %264 {strides = array<i32>} : memref<8x256xf32, #tpu.memory_space<vmem>>, vector<8x256xf32>,
    %269 = arith.index_cast %235 : i32 to index
    %c0_120 = arith.constant 0 : index
    %270 = vector.load %arg19[%269, %c0_120] : memref<64x256xf32, #tpu.memory_space<vmem>>, vector<8x256xf32>
    tpu.vector_store %arg19[%269, %c0_120], %266 {strides = array<i32>} : memref<64x256xf32, #tpu.memory_space<vmem>>, vector<8x256xf32>,
    %c7_i32 = arith.constant 7 : i32
    %c8_i32_121 = arith.constant 8 : i32
    %271 = arith.muli %c7_i32, %c8_i32_121 : i32
    %272 = tpu.assume_multiple %271, 8 : i32
    %c0_122 = arith.constant 0 : index
    %c0_123 = arith.constant 0 : index
    %273 = vector.load %arg20[%c0_122, %c0_123] : memref<8x256xf32, #tpu.memory_space<vmem>>, vector<8x256xf32>
    %274 = arith.index_cast %272 : i32 to index
    %c0_124 = arith.constant 0 : index
    %275 = vector.load %arg18[%274, %c0_124] : memref<64x1024xf32, #tpu.memory_space<vmem>>, vector<8x1024xf32>
    %cst_125 = arith.constant dense<0.000000e+00> : vector<8x1024xf32>
    %276 = tpu.matmul %273, %11, %cst_125 {dimension_numbers = #tpu.dot_dimension_numbers<[1], [0], [0], [1], [0, 0, 1, 1], [], []>} : vector<8x256xf32>, vector<256x1024xf32>, vector<8x1024xf32> -> vector<8x1024xf32>
    %277 = arith.addf %275, %276 : vector<8x1024xf32>
    %278 = vector.extract_strided_slice %277 {offsets = [0, 0], sizes = [8, 256], strides = [1, 1]} : vector<8x1024xf32> to vector<8x256xf32>
    %279 = arith.negf %278 : vector<8x256xf32>
    %280 = math.exp %279 : vector<8x256xf32>
    %cst_126 = arith.constant 1.000000e+00 : f32
    %281 = vector.broadcast %cst_126 : f32 to vector<8x256xf32>
    %282 = arith.addf %281, %280 : vector<8x256xf32>
    %283 = arith.divf %281, %282 : vector<8x256xf32>
    %284 = vector.extract_strided_slice %277 {offsets = [0, 256], sizes = [8, 256], strides = [1, 1]} : vector<8x1024xf32> to vector<8x256xf32>
    %285 = arith.negf %284 : vector<8x256xf32>
    %286 = math.exp %285 : vector<8x256xf32>
    %cst_127 = arith.constant 1.000000e+00 : f32
    %287 = vector.broadcast %cst_127 : f32 to vector<8x256xf32>
    %288 = arith.addf %287, %286 : vector<8x256xf32>
    %289 = arith.divf %287, %288 : vector<8x256xf32>
    %290 = vector.extract_strided_slice %277 {offsets = [0, 512], sizes = [8, 256], strides = [1, 1]} : vector<8x1024xf32> to vector<8x256xf32>
    %291 = math.tanh %290 : vector<8x256xf32>
    %292 = vector.extract_strided_slice %277 {offsets = [0, 768], sizes = [8, 256], strides = [1, 1]} : vector<8x1024xf32> to vector<8x256xf32>
    %293 = arith.negf %292 : vector<8x256xf32>
    %294 = math.exp %293 : vector<8x256xf32>
    %cst_128 = arith.constant 1.000000e+00 : f32
    %295 = vector.broadcast %cst_128 : f32 to vector<8x256xf32>
    %296 = arith.addf %295, %294 : vector<8x256xf32>
    %297 = arith.divf %295, %296 : vector<8x256xf32>
    %c0_129 = arith.constant 0 : index
    %c0_130 = arith.constant 0 : index
    %298 = vector.load %arg21[%c0_129, %c0_130] : memref<8x256xf32, #tpu.memory_space<vmem>>, vector<8x256xf32>
    %299 = arith.mulf %289, %298 : vector<8x256xf32>
    %300 = arith.mulf %283, %291 : vector<8x256xf32>
    %301 = arith.addf %299, %300 : vector<8x256xf32>
    %302 = math.tanh %301 : vector<8x256xf32>
    %303 = arith.mulf %297, %302 : vector<8x256xf32>
    %c0_131 = arith.constant 0 : index
    %c0_132 = arith.constant 0 : index
    %304 = vector.load %arg20[%c0_131, %c0_132] : memref<8x256xf32, #tpu.memory_space<vmem>>, vector<8x256xf32>
    tpu.vector_store %arg20[%c0_131, %c0_132], %303 {strides = array<i32>} : memref<8x256xf32, #tpu.memory_space<vmem>>, vector<8x256xf32>,
    %c0_133 = arith.constant 0 : index
    %c0_134 = arith.constant 0 : index
    %305 = vector.load %arg21[%c0_133, %c0_134] : memref<8x256xf32, #tpu.memory_space<vmem>>, vector<8x256xf32>
    tpu.vector_store %arg21[%c0_133, %c0_134], %301 {strides = array<i32>} : memref<8x256xf32, #tpu.memory_space<vmem>>, vector<8x256xf32>,
    %306 = arith.index_cast %272 : i32 to index
    %c0_135 = arith.constant 0 : index
    %307 = vector.load %arg19[%306, %c0_135] : memref<64x256xf32, #tpu.memory_space<vmem>>, vector<8x256xf32>
    tpu.vector_store %arg19[%306, %c0_135], %303 {strides = array<i32>} : memref<64x256xf32, #tpu.memory_space<vmem>>, vector<8x256xf32>,
    %c8_i32_136 = arith.constant 8 : i32
    %c0_137 = arith.constant 0 : index
    %c0_138 = arith.constant 0 : index
    %308 = vector.load %arg20[%c0_137, %c0_138] : memref<8x256xf32, #tpu.memory_space<vmem>>, vector<8x256xf32>
    %c0_139 = arith.constant 0 : index
    %c0_140 = arith.constant 0 : index
    %309 = vector.load %arg14[%c0_139, %c0_140] : memref<8x256xf32, #tpu.memory_space<vmem>>, vector<8x256xf32>
    tpu.vector_store %arg14[%c0_139, %c0_140], %308 {strides = array<i32>} : memref<8x256xf32, #tpu.memory_space<vmem>>, vector<8x256xf32>,
    %c0_141 = arith.constant 0 : index
    %c0_142 = arith.constant 0 : index
    %310 = vector.load %arg21[%c0_141, %c0_142] : memref<8x256xf32, #tpu.memory_space<vmem>>, vector<8x256xf32>
    %c0_143 = arith.constant 0 : index
    %c0_144 = arith.constant 0 : index
    %311 = vector.load %arg15[%c0_143, %c0_144] : memref<8x256xf32, #tpu.memory_space<vmem>>, vector<8x256xf32>
    tpu.vector_store %arg15[%c0_143, %c0_144], %310 {strides = array<i32>} : memref<8x256xf32, #tpu.memory_space<vmem>>, vector<8x256xf32>,
    %c0_145 = arith.constant 0 : index
    %c0_146 = arith.constant 0 : index
    %312 = vector.load %arg19[%c0_145, %c0_146] : memref<64x256xf32, #tpu.memory_space<vmem>>, vector<64x256xf32>
    %c0_147 = arith.constant 0 : index
    %c0_148 = arith.constant 0 : index
    %313 = vector.load %arg8[%c0_147, %c0_148] : memref<256x1024xf32, #tpu.memory_space<vmem>>, vector<256x1024xf32>
    %cst_149 = arith.constant dense<0.000000e+00> : vector<64x1024xf32>
    %314 = tpu.matmul %312, %313, %cst_149 {dimension_numbers = #tpu.dot_dimension_numbers<[1], [0], [0], [1], [0, 0, 1, 1], [], []>} : vector<64x256xf32>, vector<256x1024xf32>, vector<64x1024xf32> -> vector<64x1024xf32>
    %c0_150 = arith.constant 0 : index
    %c0_151 = arith.constant 0 : index
    %315 = vector.load %arg10[%c0_150, %c0_151] : memref<1x1024xf32, #tpu.memory_space<vmem>>, vector<1x1024xf32>
    %316 = vector.broadcast %315 : vector<1x1024xf32> to vector<64x1024xf32>
    %317 = arith.addf %314, %316 : vector<64x1024xf32>
    %c0_152 = arith.constant 0 : index
    %c0_153 = arith.constant 0 : index
    %318 = vector.load %arg18[%c0_152, %c0_153] : memref<64x1024xf32, #tpu.memory_space<vmem>>, vector<64x1024xf32>
    tpu.vector_store %arg18[%c0_152, %c0_153], %317 {strides = array<i32>} : memref<64x1024xf32, #tpu.memory_space<vmem>>, vector<64x1024xf32>,
    %c0_154 = arith.constant 0 : index
    %c0_155 = arith.constant 0 : index
    %319 = vector.load %arg3[%c0_154, %c0_155] : memref<8x256xf32, #tpu.memory_space<vmem>>, vector<8x256xf32>
    %c0_156 = arith.constant 0 : index
    %c0_157 = arith.constant 0 : index
    %320 = vector.load %arg20[%c0_156, %c0_157] : memref<8x256xf32, #tpu.memory_space<vmem>>, vector<8x256xf32>
    tpu.vector_store %arg20[%c0_156, %c0_157], %319 {strides = array<i32>} : memref<8x256xf32, #tpu.memory_space<vmem>>, vector<8x256xf32>,
    %c0_158 = arith.constant 0 : index
    %c0_159 = arith.constant 0 : index
    %321 = vector.load %arg4[%c0_158, %c0_159] : memref<8x256xf32, #tpu.memory_space<vmem>>, vector<8x256xf32>
    %c0_160 = arith.constant 0 : index
    %c0_161 = arith.constant 0 : index
    %322 = vector.load %arg21[%c0_160, %c0_161] : memref<8x256xf32, #tpu.memory_space<vmem>>, vector<8x256xf32>
    tpu.vector_store %arg21[%c0_160, %c0_161], %321 {strides = array<i32>} : memref<8x256xf32, #tpu.memory_space<vmem>>, vector<8x256xf32>,
    %c0_162 = arith.constant 0 : index
    %c0_163 = arith.constant 0 : index
    %323 = vector.load %arg9[%c0_162, %c0_163] : memref<256x1024xf32, #tpu.memory_space<vmem>>, vector<256x1024xf32>
    %c0_i32_164 = arith.constant 0 : i32
    %c8_i32_165 = arith.constant 8 : i32
    %324 = arith.muli %c0_i32_164, %c8_i32_165 : i32
    %325 = tpu.assume_multiple %324, 8 : i32
    %c0_166 = arith.constant 0 : index
    %c0_167 = arith.constant 0 : index
    %326 = vector.load %arg20[%c0_166, %c0_167] : memref<8x256xf32, #tpu.memory_space<vmem>>, vector<8x256xf32>
    %327 = arith.index_cast %325 : i32 to index
    %c0_168 = arith.constant 0 : index
    %328 = vector.load %arg18[%327, %c0_168] : memref<64x1024xf32, #tpu.memory_space<vmem>>, vector<8x1024xf32>
    %cst_169 = arith.constant dense<0.000000e+00> : vector<8x1024xf32>
    %329 = tpu.matmul %326, %323, %cst_169 {dimension_numbers = #tpu.dot_dimension_numbers<[1], [0], [0], [1], [0, 0, 1, 1], [], []>} : vector<8x256xf32>, vector<256x1024xf32>, vector<8x1024xf32> -> vector<8x1024xf32>
    %330 = arith.addf %328, %329 : vector<8x1024xf32>
    %331 = vector.extract_strided_slice %330 {offsets = [0, 0], sizes = [8, 256], strides = [1, 1]} : vector<8x1024xf32> to vector<8x256xf32>
    %332 = arith.negf %331 : vector<8x256xf32>
    %333 = math.exp %332 : vector<8x256xf32>
    %cst_170 = arith.constant 1.000000e+00 : f32
    %334 = vector.broadcast %cst_170 : f32 to vector<8x256xf32>
    %335 = arith.addf %334, %333 : vector<8x256xf32>
    %336 = arith.divf %334, %335 : vector<8x256xf32>
    %337 = vector.extract_strided_slice %330 {offsets = [0, 256], sizes = [8, 256], strides = [1, 1]} : vector<8x1024xf32> to vector<8x256xf32>
    %338 = arith.negf %337 : vector<8x256xf32>
    %339 = math.exp %338 : vector<8x256xf32>
    %cst_171 = arith.constant 1.000000e+00 : f32
    %340 = vector.broadcast %cst_171 : f32 to vector<8x256xf32>
    %341 = arith.addf %340, %339 : vector<8x256xf32>
    %342 = arith.divf %340, %341 : vector<8x256xf32>
    %343 = vector.extract_strided_slice %330 {offsets = [0, 512], sizes = [8, 256], strides = [1, 1]} : vector<8x1024xf32> to vector<8x256xf32>
    %344 = math.tanh %343 : vector<8x256xf32>
    %345 = vector.extract_strided_slice %330 {offsets = [0, 768], sizes = [8, 256], strides = [1, 1]} : vector<8x1024xf32> to vector<8x256xf32>
    %346 = arith.negf %345 : vector<8x256xf32>
    %347 = math.exp %346 : vector<8x256xf32>
    %cst_172 = arith.constant 1.000000e+00 : f32
    %348 = vector.broadcast %cst_172 : f32 to vector<8x256xf32>
    %349 = arith.addf %348, %347 : vector<8x256xf32>
    %350 = arith.divf %348, %349 : vector<8x256xf32>
    %c0_173 = arith.constant 0 : index
    %c0_174 = arith.constant 0 : index
    %351 = vector.load %arg21[%c0_173, %c0_174] : memref<8x256xf32, #tpu.memory_space<vmem>>, vector<8x256xf32>
    %352 = arith.mulf %342, %351 : vector<8x256xf32>
    %353 = arith.mulf %336, %344 : vector<8x256xf32>
    %354 = arith.addf %352, %353 : vector<8x256xf32>
    %355 = math.tanh %354 : vector<8x256xf32>
    %356 = arith.mulf %350, %355 : vector<8x256xf32>
    %c0_175 = arith.constant 0 : index
    %c0_176 = arith.constant 0 : index
    %357 = vector.load %arg20[%c0_175, %c0_176] : memref<8x256xf32, #tpu.memory_space<vmem>>, vector<8x256xf32>
    tpu.vector_store %arg20[%c0_175, %c0_176], %356 {strides = array<i32>} : memref<8x256xf32, #tpu.memory_space<vmem>>, vector<8x256xf32>,
    %c0_177 = arith.constant 0 : index
    %c0_178 = arith.constant 0 : index
    %358 = vector.load %arg21[%c0_177, %c0_178] : memref<8x256xf32, #tpu.memory_space<vmem>>, vector<8x256xf32>
    tpu.vector_store %arg21[%c0_177, %c0_178], %354 {strides = array<i32>} : memref<8x256xf32, #tpu.memory_space<vmem>>, vector<8x256xf32>,
    %359 = arith.index_cast %325 : i32 to index
    %c0_179 = arith.constant 0 : index
    %360 = vector.load %arg19[%359, %c0_179] : memref<64x256xf32, #tpu.memory_space<vmem>>, vector<8x256xf32>
    tpu.vector_store %arg19[%359, %c0_179], %356 {strides = array<i32>} : memref<64x256xf32, #tpu.memory_space<vmem>>, vector<8x256xf32>,
    %c1_i32_180 = arith.constant 1 : i32
    %c8_i32_181 = arith.constant 8 : i32
    %361 = arith.muli %c1_i32_180, %c8_i32_181 : i32
    %362 = tpu.assume_multiple %361, 8 : i32
    %c0_182 = arith.constant 0 : index
    %c0_183 = arith.constant 0 : index
    %363 = vector.load %arg20[%c0_182, %c0_183] : memref<8x256xf32, #tpu.memory_space<vmem>>, vector<8x256xf32>
    %364 = arith.index_cast %362 : i32 to index
    %c0_184 = arith.constant 0 : index
    %365 = vector.load %arg18[%364, %c0_184] : memref<64x1024xf32, #tpu.memory_space<vmem>>, vector<8x1024xf32>
    %cst_185 = arith.constant dense<0.000000e+00> : vector<8x1024xf32>
    %366 = tpu.matmul %363, %323, %cst_185 {dimension_numbers = #tpu.dot_dimension_numbers<[1], [0], [0], [1], [0, 0, 1, 1], [], []>} : vector<8x256xf32>, vector<256x1024xf32>, vector<8x1024xf32> -> vector<8x1024xf32>
    %367 = arith.addf %365, %366 : vector<8x1024xf32>
    %368 = vector.extract_strided_slice %367 {offsets = [0, 0], sizes = [8, 256], strides = [1, 1]} : vector<8x1024xf32> to vector<8x256xf32>
    %369 = arith.negf %368 : vector<8x256xf32>
    %370 = math.exp %369 : vector<8x256xf32>
    %cst_186 = arith.constant 1.000000e+00 : f32
    %371 = vector.broadcast %cst_186 : f32 to vector<8x256xf32>
    %372 = arith.addf %371, %370 : vector<8x256xf32>
    %373 = arith.divf %371, %372 : vector<8x256xf32>
    %374 = vector.extract_strided_slice %367 {offsets = [0, 256], sizes = [8, 256], strides = [1, 1]} : vector<8x1024xf32> to vector<8x256xf32>
    %375 = arith.negf %374 : vector<8x256xf32>
    %376 = math.exp %375 : vector<8x256xf32>
    %cst_187 = arith.constant 1.000000e+00 : f32
    %377 = vector.broadcast %cst_187 : f32 to vector<8x256xf32>
    %378 = arith.addf %377, %376 : vector<8x256xf32>
    %379 = arith.divf %377, %378 : vector<8x256xf32>
    %380 = vector.extract_strided_slice %367 {offsets = [0, 512], sizes = [8, 256], strides = [1, 1]} : vector<8x1024xf32> to vector<8x256xf32>
    %381 = math.tanh %380 : vector<8x256xf32>
    %382 = vector.extract_strided_slice %367 {offsets = [0, 768], sizes = [8, 256], strides = [1, 1]} : vector<8x1024xf32> to vector<8x256xf32>
    %383 = arith.negf %382 : vector<8x256xf32>
    %384 = math.exp %383 : vector<8x256xf32>
    %cst_188 = arith.constant 1.000000e+00 : f32
    %385 = vector.broadcast %cst_188 : f32 to vector<8x256xf32>
    %386 = arith.addf %385, %384 : vector<8x256xf32>
    %387 = arith.divf %385, %386 : vector<8x256xf32>
    %c0_189 = arith.constant 0 : index
    %c0_190 = arith.constant 0 : index
    %388 = vector.load %arg21[%c0_189, %c0_190] : memref<8x256xf32, #tpu.memory_space<vmem>>, vector<8x256xf32>
    %389 = arith.mulf %379, %388 : vector<8x256xf32>
    %390 = arith.mulf %373, %381 : vector<8x256xf32>
    %391 = arith.addf %389, %390 : vector<8x256xf32>
    %392 = math.tanh %391 : vector<8x256xf32>
    %393 = arith.mulf %387, %392 : vector<8x256xf32>
    %c0_191 = arith.constant 0 : index
    %c0_192 = arith.constant 0 : index
    %394 = vector.load %arg20[%c0_191, %c0_192] : memref<8x256xf32, #tpu.memory_space<vmem>>, vector<8x256xf32>
    tpu.vector_store %arg20[%c0_191, %c0_192], %393 {strides = array<i32>} : memref<8x256xf32, #tpu.memory_space<vmem>>, vector<8x256xf32>,
    %c0_193 = arith.constant 0 : index
    %c0_194 = arith.constant 0 : index
    %395 = vector.load %arg21[%c0_193, %c0_194] : memref<8x256xf32, #tpu.memory_space<vmem>>, vector<8x256xf32>
    tpu.vector_store %arg21[%c0_193, %c0_194], %391 {strides = array<i32>} : memref<8x256xf32, #tpu.memory_space<vmem>>, vector<8x256xf32>,
    %396 = arith.index_cast %362 : i32 to index
    %c0_195 = arith.constant 0 : index
    %397 = vector.load %arg19[%396, %c0_195] : memref<64x256xf32, #tpu.memory_space<vmem>>, vector<8x256xf32>
    tpu.vector_store %arg19[%396, %c0_195], %393 {strides = array<i32>} : memref<64x256xf32, #tpu.memory_space<vmem>>, vector<8x256xf32>,
    %c2_i32_196 = arith.constant 2 : i32
    %c8_i32_197 = arith.constant 8 : i32
    %398 = arith.muli %c2_i32_196, %c8_i32_197 : i32
    %399 = tpu.assume_multiple %398, 8 : i32
    %c0_198 = arith.constant 0 : index
    %c0_199 = arith.constant 0 : index
    %400 = vector.load %arg20[%c0_198, %c0_199] : memref<8x256xf32, #tpu.memory_space<vmem>>, vector<8x256xf32>
    %401 = arith.index_cast %399 : i32 to index
    %c0_200 = arith.constant 0 : index
    %402 = vector.load %arg18[%401, %c0_200] : memref<64x1024xf32, #tpu.memory_space<vmem>>, vector<8x1024xf32>
    %cst_201 = arith.constant dense<0.000000e+00> : vector<8x1024xf32>
    %403 = tpu.matmul %400, %323, %cst_201 {dimension_numbers = #tpu.dot_dimension_numbers<[1], [0], [0], [1], [0, 0, 1, 1], [], []>} : vector<8x256xf32>, vector<256x1024xf32>, vector<8x1024xf32> -> vector<8x1024xf32>
    %404 = arith.addf %402, %403 : vector<8x1024xf32>
    %405 = vector.extract_strided_slice %404 {offsets = [0, 0], sizes = [8, 256], strides = [1, 1]} : vector<8x1024xf32> to vector<8x256xf32>
    %406 = arith.negf %405 : vector<8x256xf32>
    %407 = math.exp %406 : vector<8x256xf32>
    %cst_202 = arith.constant 1.000000e+00 : f32
    %408 = vector.broadcast %cst_202 : f32 to vector<8x256xf32>
    %409 = arith.addf %408, %407 : vector<8x256xf32>
    %410 = arith.divf %408, %409 : vector<8x256xf32>
    %411 = vector.extract_strided_slice %404 {offsets = [0, 256], sizes = [8, 256], strides = [1, 1]} : vector<8x1024xf32> to vector<8x256xf32>
    %412 = arith.negf %411 : vector<8x256xf32>
    %413 = math.exp %412 : vector<8x256xf32>
    %cst_203 = arith.constant 1.000000e+00 : f32
    %414 = vector.broadcast %cst_203 : f32 to vector<8x256xf32>
    %415 = arith.addf %414, %413 : vector<8x256xf32>
    %416 = arith.divf %414, %415 : vector<8x256xf32>
    %417 = vector.extract_strided_slice %404 {offsets = [0, 512], sizes = [8, 256], strides = [1, 1]} : vector<8x1024xf32> to vector<8x256xf32>
    %418 = math.tanh %417 : vector<8x256xf32>
    %419 = vector.extract_strided_slice %404 {offsets = [0, 768], sizes = [8, 256], strides = [1, 1]} : vector<8x1024xf32> to vector<8x256xf32>
    %420 = arith.negf %419 : vector<8x256xf32>
    %421 = math.exp %420 : vector<8x256xf32>
    %cst_204 = arith.constant 1.000000e+00 : f32
    %422 = vector.broadcast %cst_204 : f32 to vector<8x256xf32>
    %423 = arith.addf %422, %421 : vector<8x256xf32>
    %424 = arith.divf %422, %423 : vector<8x256xf32>
    %c0_205 = arith.constant 0 : index
    %c0_206 = arith.constant 0 : index
    %425 = vector.load %arg21[%c0_205, %c0_206] : memref<8x256xf32, #tpu.memory_space<vmem>>, vector<8x256xf32>
    %426 = arith.mulf %416, %425 : vector<8x256xf32>
    %427 = arith.mulf %410, %418 : vector<8x256xf32>
    %428 = arith.addf %426, %427 : vector<8x256xf32>
    %429 = math.tanh %428 : vector<8x256xf32>
    %430 = arith.mulf %424, %429 : vector<8x256xf32>
    %c0_207 = arith.constant 0 : index
    %c0_208 = arith.constant 0 : index
    %431 = vector.load %arg20[%c0_207, %c0_208] : memref<8x256xf32, #tpu.memory_space<vmem>>, vector<8x256xf32>
    tpu.vector_store %arg20[%c0_207, %c0_208], %430 {strides = array<i32>} : memref<8x256xf32, #tpu.memory_space<vmem>>, vector<8x256xf32>,
    %c0_209 = arith.constant 0 : index
    %c0_210 = arith.constant 0 : index
    %432 = vector.load %arg21[%c0_209, %c0_210] : memref<8x256xf32, #tpu.memory_space<vmem>>, vector<8x256xf32>
    tpu.vector_store %arg21[%c0_209, %c0_210], %428 {strides = array<i32>} : memref<8x256xf32, #tpu.memory_space<vmem>>, vector<8x256xf32>,
    %433 = arith.index_cast %399 : i32 to index
    %c0_211 = arith.constant 0 : index
    %434 = vector.load %arg19[%433, %c0_211] : memref<64x256xf32, #tpu.memory_space<vmem>>, vector<8x256xf32>
    tpu.vector_store %arg19[%433, %c0_211], %430 {strides = array<i32>} : memref<64x256xf32, #tpu.memory_space<vmem>>, vector<8x256xf32>,
    %c3_i32_212 = arith.constant 3 : i32
    %c8_i32_213 = arith.constant 8 : i32
    %435 = arith.muli %c3_i32_212, %c8_i32_213 : i32
    %436 = tpu.assume_multiple %435, 8 : i32
    %c0_214 = arith.constant 0 : index
    %c0_215 = arith.constant 0 : index
    %437 = vector.load %arg20[%c0_214, %c0_215] : memref<8x256xf32, #tpu.memory_space<vmem>>, vector<8x256xf32>
    %438 = arith.index_cast %436 : i32 to index
    %c0_216 = arith.constant 0 : index
    %439 = vector.load %arg18[%438, %c0_216] : memref<64x1024xf32, #tpu.memory_space<vmem>>, vector<8x1024xf32>
    %cst_217 = arith.constant dense<0.000000e+00> : vector<8x1024xf32>
    %440 = tpu.matmul %437, %323, %cst_217 {dimension_numbers = #tpu.dot_dimension_numbers<[1], [0], [0], [1], [0, 0, 1, 1], [], []>} : vector<8x256xf32>, vector<256x1024xf32>, vector<8x1024xf32> -> vector<8x1024xf32>
    %441 = arith.addf %439, %440 : vector<8x1024xf32>
    %442 = vector.extract_strided_slice %441 {offsets = [0, 0], sizes = [8, 256], strides = [1, 1]} : vector<8x1024xf32> to vector<8x256xf32>
    %443 = arith.negf %442 : vector<8x256xf32>
    %444 = math.exp %443 : vector<8x256xf32>
    %cst_218 = arith.constant 1.000000e+00 : f32
    %445 = vector.broadcast %cst_218 : f32 to vector<8x256xf32>
    %446 = arith.addf %445, %444 : vector<8x256xf32>
    %447 = arith.divf %445, %446 : vector<8x256xf32>
    %448 = vector.extract_strided_slice %441 {offsets = [0, 256], sizes = [8, 256], strides = [1, 1]} : vector<8x1024xf32> to vector<8x256xf32>
    %449 = arith.negf %448 : vector<8x256xf32>
    %450 = math.exp %449 : vector<8x256xf32>
    %cst_219 = arith.constant 1.000000e+00 : f32
    %451 = vector.broadcast %cst_219 : f32 to vector<8x256xf32>
    %452 = arith.addf %451, %450 : vector<8x256xf32>
    %453 = arith.divf %451, %452 : vector<8x256xf32>
    %454 = vector.extract_strided_slice %441 {offsets = [0, 512], sizes = [8, 256], strides = [1, 1]} : vector<8x1024xf32> to vector<8x256xf32>
    %455 = math.tanh %454 : vector<8x256xf32>
    %456 = vector.extract_strided_slice %441 {offsets = [0, 768], sizes = [8, 256], strides = [1, 1]} : vector<8x1024xf32> to vector<8x256xf32>
    %457 = arith.negf %456 : vector<8x256xf32>
    %458 = math.exp %457 : vector<8x256xf32>
    %cst_220 = arith.constant 1.000000e+00 : f32
    %459 = vector.broadcast %cst_220 : f32 to vector<8x256xf32>
    %460 = arith.addf %459, %458 : vector<8x256xf32>
    %461 = arith.divf %459, %460 : vector<8x256xf32>
    %c0_221 = arith.constant 0 : index
    %c0_222 = arith.constant 0 : index
    %462 = vector.load %arg21[%c0_221, %c0_222] : memref<8x256xf32, #tpu.memory_space<vmem>>, vector<8x256xf32>
    %463 = arith.mulf %453, %462 : vector<8x256xf32>
    %464 = arith.mulf %447, %455 : vector<8x256xf32>
    %465 = arith.addf %463, %464 : vector<8x256xf32>
    %466 = math.tanh %465 : vector<8x256xf32>
    %467 = arith.mulf %461, %466 : vector<8x256xf32>
    %c0_223 = arith.constant 0 : index
    %c0_224 = arith.constant 0 : index
    %468 = vector.load %arg20[%c0_223, %c0_224] : memref<8x256xf32, #tpu.memory_space<vmem>>, vector<8x256xf32>
    tpu.vector_store %arg20[%c0_223, %c0_224], %467 {strides = array<i32>} : memref<8x256xf32, #tpu.memory_space<vmem>>, vector<8x256xf32>,
    %c0_225 = arith.constant 0 : index
    %c0_226 = arith.constant 0 : index
    %469 = vector.load %arg21[%c0_225, %c0_226] : memref<8x256xf32, #tpu.memory_space<vmem>>, vector<8x256xf32>
    tpu.vector_store %arg21[%c0_225, %c0_226], %465 {strides = array<i32>} : memref<8x256xf32, #tpu.memory_space<vmem>>, vector<8x256xf32>,
    %470 = arith.index_cast %436 : i32 to index
    %c0_227 = arith.constant 0 : index
    %471 = vector.load %arg19[%470, %c0_227] : memref<64x256xf32, #tpu.memory_space<vmem>>, vector<8x256xf32>
    tpu.vector_store %arg19[%470, %c0_227], %467 {strides = array<i32>} : memref<64x256xf32, #tpu.memory_space<vmem>>, vector<8x256xf32>,
    %c4_i32_228 = arith.constant 4 : i32
    %c8_i32_229 = arith.constant 8 : i32
    %472 = arith.muli %c4_i32_228, %c8_i32_229 : i32
    %473 = tpu.assume_multiple %472, 8 : i32
    %c0_230 = arith.constant 0 : index
    %c0_231 = arith.constant 0 : index
    %474 = vector.load %arg20[%c0_230, %c0_231] : memref<8x256xf32, #tpu.memory_space<vmem>>, vector<8x256xf32>
    %475 = arith.index_cast %473 : i32 to index
    %c0_232 = arith.constant 0 : index
    %476 = vector.load %arg18[%475, %c0_232] : memref<64x1024xf32, #tpu.memory_space<vmem>>, vector<8x1024xf32>
    %cst_233 = arith.constant dense<0.000000e+00> : vector<8x1024xf32>
    %477 = tpu.matmul %474, %323, %cst_233 {dimension_numbers = #tpu.dot_dimension_numbers<[1], [0], [0], [1], [0, 0, 1, 1], [], []>} : vector<8x256xf32>, vector<256x1024xf32>, vector<8x1024xf32> -> vector<8x1024xf32>
    %478 = arith.addf %476, %477 : vector<8x1024xf32>
    %479 = vector.extract_strided_slice %478 {offsets = [0, 0], sizes = [8, 256], strides = [1, 1]} : vector<8x1024xf32> to vector<8x256xf32>
    %480 = arith.negf %479 : vector<8x256xf32>
    %481 = math.exp %480 : vector<8x256xf32>
    %cst_234 = arith.constant 1.000000e+00 : f32
    %482 = vector.broadcast %cst_234 : f32 to vector<8x256xf32>
    %483 = arith.addf %482, %481 : vector<8x256xf32>
    %484 = arith.divf %482, %483 : vector<8x256xf32>
    %485 = vector.extract_strided_slice %478 {offsets = [0, 256], sizes = [8, 256], strides = [1, 1]} : vector<8x1024xf32> to vector<8x256xf32>
    %486 = arith.negf %485 : vector<8x256xf32>
    %487 = math.exp %486 : vector<8x256xf32>
    %cst_235 = arith.constant 1.000000e+00 : f32
    %488 = vector.broadcast %cst_235 : f32 to vector<8x256xf32>
    %489 = arith.addf %488, %487 : vector<8x256xf32>
    %490 = arith.divf %488, %489 : vector<8x256xf32>
    %491 = vector.extract_strided_slice %478 {offsets = [0, 512], sizes = [8, 256], strides = [1, 1]} : vector<8x1024xf32> to vector<8x256xf32>
    %492 = math.tanh %491 : vector<8x256xf32>
    %493 = vector.extract_strided_slice %478 {offsets = [0, 768], sizes = [8, 256], strides = [1, 1]} : vector<8x1024xf32> to vector<8x256xf32>
    %494 = arith.negf %493 : vector<8x256xf32>
    %495 = math.exp %494 : vector<8x256xf32>
    %cst_236 = arith.constant 1.000000e+00 : f32
    %496 = vector.broadcast %cst_236 : f32 to vector<8x256xf32>
    %497 = arith.addf %496, %495 : vector<8x256xf32>
    %498 = arith.divf %496, %497 : vector<8x256xf32>
    %c0_237 = arith.constant 0 : index
    %c0_238 = arith.constant 0 : index
    %499 = vector.load %arg21[%c0_237, %c0_238] : memref<8x256xf32, #tpu.memory_space<vmem>>, vector<8x256xf32>
    %500 = arith.mulf %490, %499 : vector<8x256xf32>
    %501 = arith.mulf %484, %492 : vector<8x256xf32>
    %502 = arith.addf %500, %501 : vector<8x256xf32>
    %503 = math.tanh %502 : vector<8x256xf32>
    %504 = arith.mulf %498, %503 : vector<8x256xf32>
    %c0_239 = arith.constant 0 : index
    %c0_240 = arith.constant 0 : index
    %505 = vector.load %arg20[%c0_239, %c0_240] : memref<8x256xf32, #tpu.memory_space<vmem>>, vector<8x256xf32>
    tpu.vector_store %arg20[%c0_239, %c0_240], %504 {strides = array<i32>} : memref<8x256xf32, #tpu.memory_space<vmem>>, vector<8x256xf32>,
    %c0_241 = arith.constant 0 : index
    %c0_242 = arith.constant 0 : index
    %506 = vector.load %arg21[%c0_241, %c0_242] : memref<8x256xf32, #tpu.memory_space<vmem>>, vector<8x256xf32>
    tpu.vector_store %arg21[%c0_241, %c0_242], %502 {strides = array<i32>} : memref<8x256xf32, #tpu.memory_space<vmem>>, vector<8x256xf32>,
    %507 = arith.index_cast %473 : i32 to index
    %c0_243 = arith.constant 0 : index
    %508 = vector.load %arg19[%507, %c0_243] : memref<64x256xf32, #tpu.memory_space<vmem>>, vector<8x256xf32>
    tpu.vector_store %arg19[%507, %c0_243], %504 {strides = array<i32>} : memref<64x256xf32, #tpu.memory_space<vmem>>, vector<8x256xf32>,
    %c5_i32_244 = arith.constant 5 : i32
    %c8_i32_245 = arith.constant 8 : i32
    %509 = arith.muli %c5_i32_244, %c8_i32_245 : i32
    %510 = tpu.assume_multiple %509, 8 : i32
    %c0_246 = arith.constant 0 : index
    %c0_247 = arith.constant 0 : index
    %511 = vector.load %arg20[%c0_246, %c0_247] : memref<8x256xf32, #tpu.memory_space<vmem>>, vector<8x256xf32>
    %512 = arith.index_cast %510 : i32 to index
    %c0_248 = arith.constant 0 : index
    %513 = vector.load %arg18[%512, %c0_248] : memref<64x1024xf32, #tpu.memory_space<vmem>>, vector<8x1024xf32>
    %cst_249 = arith.constant dense<0.000000e+00> : vector<8x1024xf32>
    %514 = tpu.matmul %511, %323, %cst_249 {dimension_numbers = #tpu.dot_dimension_numbers<[1], [0], [0], [1], [0, 0, 1, 1], [], []>} : vector<8x256xf32>, vector<256x1024xf32>, vector<8x1024xf32> -> vector<8x1024xf32>
    %515 = arith.addf %513, %514 : vector<8x1024xf32>
    %516 = vector.extract_strided_slice %515 {offsets = [0, 0], sizes = [8, 256], strides = [1, 1]} : vector<8x1024xf32> to vector<8x256xf32>
    %517 = arith.negf %516 : vector<8x256xf32>
    %518 = math.exp %517 : vector<8x256xf32>
    %cst_250 = arith.constant 1.000000e+00 : f32
    %519 = vector.broadcast %cst_250 : f32 to vector<8x256xf32>
    %520 = arith.addf %519, %518 : vector<8x256xf32>
    %521 = arith.divf %519, %520 : vector<8x256xf32>
    %522 = vector.extract_strided_slice %515 {offsets = [0, 256], sizes = [8, 256], strides = [1, 1]} : vector<8x1024xf32> to vector<8x256xf32>
    %523 = arith.negf %522 : vector<8x256xf32>
    %524 = math.exp %523 : vector<8x256xf32>
    %cst_251 = arith.constant 1.000000e+00 : f32
    %525 = vector.broadcast %cst_251 : f32 to vector<8x256xf32>
    %526 = arith.addf %525, %524 : vector<8x256xf32>
    %527 = arith.divf %525, %526 : vector<8x256xf32>
    %528 = vector.extract_strided_slice %515 {offsets = [0, 512], sizes = [8, 256], strides = [1, 1]} : vector<8x1024xf32> to vector<8x256xf32>
    %529 = math.tanh %528 : vector<8x256xf32>
    %530 = vector.extract_strided_slice %515 {offsets = [0, 768], sizes = [8, 256], strides = [1, 1]} : vector<8x1024xf32> to vector<8x256xf32>
    %531 = arith.negf %530 : vector<8x256xf32>
    %532 = math.exp %531 : vector<8x256xf32>
    %cst_252 = arith.constant 1.000000e+00 : f32
    %533 = vector.broadcast %cst_252 : f32 to vector<8x256xf32>
    %534 = arith.addf %533, %532 : vector<8x256xf32>
    %535 = arith.divf %533, %534 : vector<8x256xf32>
    %c0_253 = arith.constant 0 : index
    %c0_254 = arith.constant 0 : index
    %536 = vector.load %arg21[%c0_253, %c0_254] : memref<8x256xf32, #tpu.memory_space<vmem>>, vector<8x256xf32>
    %537 = arith.mulf %527, %536 : vector<8x256xf32>
    %538 = arith.mulf %521, %529 : vector<8x256xf32>
    %539 = arith.addf %537, %538 : vector<8x256xf32>
    %540 = math.tanh %539 : vector<8x256xf32>
    %541 = arith.mulf %535, %540 : vector<8x256xf32>
    %c0_255 = arith.constant 0 : index
    %c0_256 = arith.constant 0 : index
    %542 = vector.load %arg20[%c0_255, %c0_256] : memref<8x256xf32, #tpu.memory_space<vmem>>, vector<8x256xf32>
    tpu.vector_store %arg20[%c0_255, %c0_256], %541 {strides = array<i32>} : memref<8x256xf32, #tpu.memory_space<vmem>>, vector<8x256xf32>,
    %c0_257 = arith.constant 0 : index
    %c0_258 = arith.constant 0 : index
    %543 = vector.load %arg21[%c0_257, %c0_258] : memref<8x256xf32, #tpu.memory_space<vmem>>, vector<8x256xf32>
    tpu.vector_store %arg21[%c0_257, %c0_258], %539 {strides = array<i32>} : memref<8x256xf32, #tpu.memory_space<vmem>>, vector<8x256xf32>,
    %544 = arith.index_cast %510 : i32 to index
    %c0_259 = arith.constant 0 : index
    %545 = vector.load %arg19[%544, %c0_259] : memref<64x256xf32, #tpu.memory_space<vmem>>, vector<8x256xf32>
    tpu.vector_store %arg19[%544, %c0_259], %541 {strides = array<i32>} : memref<64x256xf32, #tpu.memory_space<vmem>>, vector<8x256xf32>,
    %c6_i32_260 = arith.constant 6 : i32
    %c8_i32_261 = arith.constant 8 : i32
    %546 = arith.muli %c6_i32_260, %c8_i32_261 : i32
    %547 = tpu.assume_multiple %546, 8 : i32
    %c0_262 = arith.constant 0 : index
    %c0_263 = arith.constant 0 : index
    %548 = vector.load %arg20[%c0_262, %c0_263] : memref<8x256xf32, #tpu.memory_space<vmem>>, vector<8x256xf32>
    %549 = arith.index_cast %547 : i32 to index
    %c0_264 = arith.constant 0 : index
    %550 = vector.load %arg18[%549, %c0_264] : memref<64x1024xf32, #tpu.memory_space<vmem>>, vector<8x1024xf32>
    %cst_265 = arith.constant dense<0.000000e+00> : vector<8x1024xf32>
    %551 = tpu.matmul %548, %323, %cst_265 {dimension_numbers = #tpu.dot_dimension_numbers<[1], [0], [0], [1], [0, 0, 1, 1], [], []>} : vector<8x256xf32>, vector<256x1024xf32>, vector<8x1024xf32> -> vector<8x1024xf32>
    %552 = arith.addf %550, %551 : vector<8x1024xf32>
    %553 = vector.extract_strided_slice %552 {offsets = [0, 0], sizes = [8, 256], strides = [1, 1]} : vector<8x1024xf32> to vector<8x256xf32>
    %554 = arith.negf %553 : vector<8x256xf32>
    %555 = math.exp %554 : vector<8x256xf32>
    %cst_266 = arith.constant 1.000000e+00 : f32
    %556 = vector.broadcast %cst_266 : f32 to vector<8x256xf32>
    %557 = arith.addf %556, %555 : vector<8x256xf32>
    %558 = arith.divf %556, %557 : vector<8x256xf32>
    %559 = vector.extract_strided_slice %552 {offsets = [0, 256], sizes = [8, 256], strides = [1, 1]} : vector<8x1024xf32> to vector<8x256xf32>
    %560 = arith.negf %559 : vector<8x256xf32>
    %561 = math.exp %560 : vector<8x256xf32>
    %cst_267 = arith.constant 1.000000e+00 : f32
    %562 = vector.broadcast %cst_267 : f32 to vector<8x256xf32>
    %563 = arith.addf %562, %561 : vector<8x256xf32>
    %564 = arith.divf %562, %563 : vector<8x256xf32>
    %565 = vector.extract_strided_slice %552 {offsets = [0, 512], sizes = [8, 256], strides = [1, 1]} : vector<8x1024xf32> to vector<8x256xf32>
    %566 = math.tanh %565 : vector<8x256xf32>
    %567 = vector.extract_strided_slice %552 {offsets = [0, 768], sizes = [8, 256], strides = [1, 1]} : vector<8x1024xf32> to vector<8x256xf32>
    %568 = arith.negf %567 : vector<8x256xf32>
    %569 = math.exp %568 : vector<8x256xf32>
    %cst_268 = arith.constant 1.000000e+00 : f32
    %570 = vector.broadcast %cst_268 : f32 to vector<8x256xf32>
    %571 = arith.addf %570, %569 : vector<8x256xf32>
    %572 = arith.divf %570, %571 : vector<8x256xf32>
    %c0_269 = arith.constant 0 : index
    %c0_270 = arith.constant 0 : index
    %573 = vector.load %arg21[%c0_269, %c0_270] : memref<8x256xf32, #tpu.memory_space<vmem>>, vector<8x256xf32>
    %574 = arith.mulf %564, %573 : vector<8x256xf32>
    %575 = arith.mulf %558, %566 : vector<8x256xf32>
    %576 = arith.addf %574, %575 : vector<8x256xf32>
    %577 = math.tanh %576 : vector<8x256xf32>
    %578 = arith.mulf %572, %577 : vector<8x256xf32>
    %c0_271 = arith.constant 0 : index
    %c0_272 = arith.constant 0 : index
    %579 = vector.load %arg20[%c0_271, %c0_272] : memref<8x256xf32, #tpu.memory_space<vmem>>, vector<8x256xf32>
    tpu.vector_store %arg20[%c0_271, %c0_272], %578 {strides = array<i32>} : memref<8x256xf32, #tpu.memory_space<vmem>>, vector<8x256xf32>,
    %c0_273 = arith.constant 0 : index
    %c0_274 = arith.constant 0 : index
    %580 = vector.load %arg21[%c0_273, %c0_274] : memref<8x256xf32, #tpu.memory_space<vmem>>, vector<8x256xf32>
    tpu.vector_store %arg21[%c0_273, %c0_274], %576 {strides = array<i32>} : memref<8x256xf32, #tpu.memory_space<vmem>>, vector<8x256xf32>,
    %581 = arith.index_cast %547 : i32 to index
    %c0_275 = arith.constant 0 : index
    %582 = vector.load %arg19[%581, %c0_275] : memref<64x256xf32, #tpu.memory_space<vmem>>, vector<8x256xf32>
    tpu.vector_store %arg19[%581, %c0_275], %578 {strides = array<i32>} : memref<64x256xf32, #tpu.memory_space<vmem>>, vector<8x256xf32>,
    %c7_i32_276 = arith.constant 7 : i32
    %c8_i32_277 = arith.constant 8 : i32
    %583 = arith.muli %c7_i32_276, %c8_i32_277 : i32
    %584 = tpu.assume_multiple %583, 8 : i32
    %c0_278 = arith.constant 0 : index
    %c0_279 = arith.constant 0 : index
    %585 = vector.load %arg20[%c0_278, %c0_279] : memref<8x256xf32, #tpu.memory_space<vmem>>, vector<8x256xf32>
    %586 = arith.index_cast %584 : i32 to index
    %c0_280 = arith.constant 0 : index
    %587 = vector.load %arg18[%586, %c0_280] : memref<64x1024xf32, #tpu.memory_space<vmem>>, vector<8x1024xf32>
    %cst_281 = arith.constant dense<0.000000e+00> : vector<8x1024xf32>
    %588 = tpu.matmul %585, %323, %cst_281 {dimension_numbers = #tpu.dot_dimension_numbers<[1], [0], [0], [1], [0, 0, 1, 1], [], []>} : vector<8x256xf32>, vector<256x1024xf32>, vector<8x1024xf32> -> vector<8x1024xf32>
    %589 = arith.addf %587, %588 : vector<8x1024xf32>
    %590 = vector.extract_strided_slice %589 {offsets = [0, 0], sizes = [8, 256], strides = [1, 1]} : vector<8x1024xf32> to vector<8x256xf32>
    %591 = arith.negf %590 : vector<8x256xf32>
    %592 = math.exp %591 : vector<8x256xf32>
    %cst_282 = arith.constant 1.000000e+00 : f32
    %593 = vector.broadcast %cst_282 : f32 to vector<8x256xf32>
    %594 = arith.addf %593, %592 : vector<8x256xf32>
    %595 = arith.divf %593, %594 : vector<8x256xf32>
    %596 = vector.extract_strided_slice %589 {offsets = [0, 256], sizes = [8, 256], strides = [1, 1]} : vector<8x1024xf32> to vector<8x256xf32>
    %597 = arith.negf %596 : vector<8x256xf32>
    %598 = math.exp %597 : vector<8x256xf32>
    %cst_283 = arith.constant 1.000000e+00 : f32
    %599 = vector.broadcast %cst_283 : f32 to vector<8x256xf32>
    %600 = arith.addf %599, %598 : vector<8x256xf32>
    %601 = arith.divf %599, %600 : vector<8x256xf32>
    %602 = vector.extract_strided_slice %589 {offsets = [0, 512], sizes = [8, 256], strides = [1, 1]} : vector<8x1024xf32> to vector<8x256xf32>
    %603 = math.tanh %602 : vector<8x256xf32>
    %604 = vector.extract_strided_slice %589 {offsets = [0, 768], sizes = [8, 256], strides = [1, 1]} : vector<8x1024xf32> to vector<8x256xf32>
    %605 = arith.negf %604 : vector<8x256xf32>
    %606 = math.exp %605 : vector<8x256xf32>
    %cst_284 = arith.constant 1.000000e+00 : f32
    %607 = vector.broadcast %cst_284 : f32 to vector<8x256xf32>
    %608 = arith.addf %607, %606 : vector<8x256xf32>
    %609 = arith.divf %607, %608 : vector<8x256xf32>
    %c0_285 = arith.constant 0 : index
    %c0_286 = arith.constant 0 : index
    %610 = vector.load %arg21[%c0_285, %c0_286] : memref<8x256xf32, #tpu.memory_space<vmem>>, vector<8x256xf32>
    %611 = arith.mulf %601, %610 : vector<8x256xf32>
    %612 = arith.mulf %595, %603 : vector<8x256xf32>
    %613 = arith.addf %611, %612 : vector<8x256xf32>
    %614 = math.tanh %613 : vector<8x256xf32>
    %615 = arith.mulf %609, %614 : vector<8x256xf32>
    %c0_287 = arith.constant 0 : index
    %c0_288 = arith.constant 0 : index
    %616 = vector.load %arg20[%c0_287, %c0_288] : memref<8x256xf32, #tpu.memory_space<vmem>>, vector<8x256xf32>
    tpu.vector_store %arg20[%c0_287, %c0_288], %615 {strides = array<i32>} : memref<8x256xf32, #tpu.memory_space<vmem>>, vector<8x256xf32>,
    %c0_289 = arith.constant 0 : index
    %c0_290 = arith.constant 0 : index
    %617 = vector.load %arg21[%c0_289, %c0_290] : memref<8x256xf32, #tpu.memory_space<vmem>>, vector<8x256xf32>
    tpu.vector_store %arg21[%c0_289, %c0_290], %613 {strides = array<i32>} : memref<8x256xf32, #tpu.memory_space<vmem>>, vector<8x256xf32>,
    %618 = arith.index_cast %584 : i32 to index
    %c0_291 = arith.constant 0 : index
    %619 = vector.load %arg19[%618, %c0_291] : memref<64x256xf32, #tpu.memory_space<vmem>>, vector<8x256xf32>
    tpu.vector_store %arg19[%618, %c0_291], %615 {strides = array<i32>} : memref<64x256xf32, #tpu.memory_space<vmem>>, vector<8x256xf32>,
    %c8_i32_292 = arith.constant 8 : i32
    %c0_293 = arith.constant 0 : index
    %c0_294 = arith.constant 0 : index
    %620 = vector.load %arg20[%c0_293, %c0_294] : memref<8x256xf32, #tpu.memory_space<vmem>>, vector<8x256xf32>
    %c0_295 = arith.constant 0 : index
    %c0_296 = arith.constant 0 : index
    %621 = vector.load %arg16[%c0_295, %c0_296] : memref<8x256xf32, #tpu.memory_space<vmem>>, vector<8x256xf32>
    tpu.vector_store %arg16[%c0_295, %c0_296], %620 {strides = array<i32>} : memref<8x256xf32, #tpu.memory_space<vmem>>, vector<8x256xf32>,
    %c0_297 = arith.constant 0 : index
    %c0_298 = arith.constant 0 : index
    %622 = vector.load %arg21[%c0_297, %c0_298] : memref<8x256xf32, #tpu.memory_space<vmem>>, vector<8x256xf32>
    %c0_299 = arith.constant 0 : index
    %c0_300 = arith.constant 0 : index
    %623 = vector.load %arg17[%c0_299, %c0_300] : memref<8x256xf32, #tpu.memory_space<vmem>>, vector<8x256xf32>
    tpu.vector_store %arg17[%c0_299, %c0_300], %622 {strides = array<i32>} : memref<8x256xf32, #tpu.memory_space<vmem>>, vector<8x256xf32>,
    %c0_301 = arith.constant 0 : index
    %c0_302 = arith.constant 0 : index
    %624 = vector.load %arg19[%c0_301, %c0_302] : memref<64x256xf32, #tpu.memory_space<vmem>>, vector<64x256xf32>
    %c0_303 = arith.constant 0 : index
    %c0_304 = arith.constant 0 : index
    %625 = vector.load %arg11[%c0_303, %c0_304] : memref<256x128xf32, #tpu.memory_space<vmem>>, vector<256x128xf32>
    %cst_305 = arith.constant dense<0.000000e+00> : vector<64x128xf32>
    %626 = tpu.matmul %624, %625, %cst_305 {dimension_numbers = #tpu.dot_dimension_numbers<[1], [0], [0], [1], [0, 0, 1, 1], [], []>} : vector<64x256xf32>, vector<256x128xf32>, vector<64x128xf32> -> vector<64x128xf32>
    %c0_306 = arith.constant 0 : index
    %c0_307 = arith.constant 0 : index
    %627 = vector.load %arg12[%c0_306, %c0_307] : memref<1x128xf32, #tpu.memory_space<vmem>>, vector<1x128xf32>
    %628 = vector.broadcast %627 : vector<1x128xf32> to vector<64x128xf32>
    %629 = arith.addf %626, %628 : vector<64x128xf32>
    %c0_308 = arith.constant 0 : index
    %c0_309 = arith.constant 0 : index
    %630 = vector.load %arg13[%c0_308, %c0_309] : memref<64x128xf32, #tpu.memory_space<vmem>>, vector<64x128xf32>
    tpu.vector_store %arg13[%c0_308, %c0_309], %629 {strides = array<i32>} : memref<64x128xf32, #tpu.memory_space<vmem>>, vector<64x128xf32>,
    return
  }
}

</mosaic_0001>

<llo_original>
// kernel: lstm_forward.1
$region0: #{lstm_forward.1}
  #allocation0 [shape = 'u32[]', space=smem, size = 0x4, offset = 0x4, fixed_abs, tag = 'smem constant byte address 0x4 - core index']
  #allocation1 [shape = 'u32[144,128]{1,0:T(1,128)}', space=vmem, size = 0x12000, scoped, tag = 'internal scratch']
  #allocation2 [shape = 'f32[64,1024]{1,0:T(8,128)}', space=vmem, size = 0x40000, scoped, tag = 'scratch operand']
  #allocation3 [shape = 'f32[64,256]{1,0:T(8,128)}', space=vmem, size = 0x10000, scoped, tag = 'scratch operand']
  #allocation4 [shape = 'f32[8,256]{1,0:T(8,128)}', space=vmem, size = 0x2000, scoped, tag = 'scratch operand']
  #allocation5 [shape = 'f32[8,256]{1,0:T(8,128)}', space=vmem, size = 0x2000, scoped, tag = 'scratch operand']
  %s0 = inlined_call_operand.hbm [shape: f32[64,128], index: 0, kind: input, shape index: {}]
  %s1 = inlined_call_operand.hbm [shape: f32[8,256], index: 1, kind: input, shape index: {}]
  %s2 = inlined_call_operand.hbm [shape: f32[8,256], index: 2, kind: input, shape index: {}]
  %s3 = inlined_call_operand.hbm [shape: f32[8,256], index: 3, kind: input, shape index: {}]
  %s4 = inlined_call_operand.hbm [shape: f32[8,256], index: 4, kind: input, shape index: {}]
  %s5 = inlined_call_operand.hbm [shape: f32[128,1024], index: 5, kind: input, shape index: {}]
  %s6 = inlined_call_operand.hbm [shape: f32[256,1024], index: 6, kind: input, shape index: {}]
  %s7 = inlined_call_operand.hbm [shape: f32[1,1024], index: 7, kind: input, shape index: {}]
  %s8 = inlined_call_operand.hbm [shape: f32[256,1024], index: 8, kind: input, shape index: {}]
  %s9 = inlined_call_operand.hbm [shape: f32[256,1024], index: 9, kind: input, shape index: {}]
  %s10 = inlined_call_operand.hbm [shape: f32[1,1024], index: 10, kind: input, shape index: {}]
  %s11 = inlined_call_operand.hbm [shape: f32[256,128], index: 11, kind: input, shape index: {}]
  %s12 = inlined_call_operand.hbm [shape: f32[1,128], index: 12, kind: input, shape index: {}]
  %s13 = inlined_call_operand.hbm [shape: f32[64,128], index: 13, kind: output, shape index: {0}]
  %s14 = inlined_call_operand.hbm [shape: f32[8,256], index: 14, kind: output, shape index: {1}]
  %s15 = inlined_call_operand.hbm [shape: f32[8,256], index: 15, kind: output, shape index: {2}]
  %s16 = inlined_call_operand.hbm [shape: f32[8,256], index: 16, kind: output, shape index: {3}]
  %s17 = inlined_call_operand.hbm [shape: f32[8,256], index: 17, kind: output, shape index: {4}]
  %18 = xla_tuple %s13, %s14, %s15, %s16, %s17
  %s19 = sld [smem:[#allocation0]]
  $region146: #{lstm_forward.1} parent=0
    _
  %s21 = ssub.s32 1, %s19
  %s22 = scalar_select 0, %s21, %s19
  $region1: #{lstm_forward.1} parent=0
    #allocation6 [shape = 'u8[32768]{0}', space=vmem, size = 0x8000, scoped, tag = 'input window, operand 0, single buffered']
    #allocation7 [shape = 's32[1]{0}', space=sflag, size = 0x4, scoped, tag = 'scoped memory for lstm_forward.1']
    #allocation8 [shape = 's32[1]{0}', space=sflag, size = 0x4, scoped, tag = 'scoped memory for lstm_forward.1']
    #allocation9 [shape = 'u8[8192]{0}', space=vmem, size = 0x2000, scoped, tag = 'input window, operand 1, single buffered']
    #allocation10 [shape = 's32[1]{0}', space=sflag, size = 0x4, scoped, tag = 'scoped memory for lstm_forward.1']
    #allocation11 [shape = 'u8[8192]{0}', space=vmem, size = 0x2000, scoped, tag = 'input window, operand 2, single buffered']
    #allocation12 [shape = 'u8[8192]{0}', space=vmem, size = 0x2000, scoped, tag = 'input window, operand 3, single buffered']
    #allocation13 [shape = 's32[1]{0}', space=sflag, size = 0x4, scoped, tag = 'scoped memory for lstm_forward.1']
    #allocation14 [shape = 'u8[8192]{0}', space=vmem, size = 0x2000, scoped, tag = 'input window, operand 4, single buffered']
    #allocation15 [shape = 'u8[524288]{0}', space=vmem, size = 0x80000, scoped, tag = 'input window, operand 5, single buffered']
    #allocation16 [shape = 's32[1]{0}', space=sflag, size = 0x4, scoped, tag = 'scoped memory for lstm_forward.1']
    #allocation17 [shape = 'u8[1048576]{0}', space=vmem, size = 0x100000, scoped, tag = 'input window, operand 6, single buffered']
    #allocation18 [shape = 'u8[4096]{0}', space=vmem, size = 0x1000, scoped, tag = 'input window, operand 7, single buffered']
    #allocation19 [shape = 's32[1]{0}', space=sflag, size = 0x4, scoped, tag = 'scoped memory for lstm_forward.1']
    #allocation20 [shape = 'u8[1048576]{0}', space=vmem, size = 0x100000, scoped, tag = 'input window, operand 8, single buffered']
    #allocation21 [shape = 'u8[1048576]{0}', space=vmem, size = 0x100000, scoped, tag = 'input window, operand 9, single buffered']
    #allocation22 [shape = 's32[1]{0}', space=sflag, size = 0x4, scoped, tag = 'scoped memory for lstm_forward.1']
    #allocation23 [shape = 'u8[4096]{0}', space=vmem, size = 0x1000, scoped, tag = 'input window, operand 10, single buffered']
    #allocation24 [shape = 'u8[131072]{0}', space=vmem, size = 0x20000, scoped, tag = 'input window, operand 11, single buffered']
    #allocation25 [shape = 's32[1]{0}', space=sflag, size = 0x4, scoped, tag = 'scoped memory for lstm_forward.1']
    #allocation26 [shape = 'u8[512]{0}', space=vmem, size = 0x400, scoped, tag = 'input window, operand 12, single buffered']
    #allocation27 [shape = 'u8[32768]{0}', space=vmem, size = 0x8000, scoped, tag = 'output window, operand 0, single buffered']
    #allocation28 [shape = 'u8[8192]{0}', space=vmem, size = 0x2000, scoped, tag = 'output window, operand 1, single buffered']
    #allocation29 [shape = 's32[1]{0}', space=sflag, size = 0x4, scoped, tag = 'scoped memory for lstm_forward.1']
    #allocation30 [shape = 'u8[8192]{0}', space=vmem, size = 0x2000, scoped, tag = 'output window, operand 2, single buffered']
    #allocation31 [shape = 'u8[8192]{0}', space=vmem, size = 0x2000, scoped, tag = 'output window, operand 3, single buffered']
    #allocation32 [shape = 's32[1]{0}', space=sflag, size = 0x4, scoped, tag = 'scoped memory for lstm_forward.1']
    #allocation33 [shape = 'u8[8192]{0}', space=vmem, size = 0x2000, scoped, tag = 'output window, operand 4, single buffered']
    %23 = vsyncpa [#allocation7], 0
    %24 = vsyncpa [#allocation10], 0
    %25 = vsyncpa [#allocation13], 0
    %26 = vsyncpa [#allocation16], 0
    %27 = vsyncpa [#allocation19], 0
    %28 = vsyncpa [#allocation22], 0
    %29 = vsyncpa [#allocation25], 0
    %30 = vsyncpa [#allocation8], 0
    %31 = vsyncpa [#allocation29], 0
    %32 = vsyncpa [#allocation32], 0
    // Predicated region
    $region2: #{lstm_forward.1} parent=1 // pred_check
      _
    $region3: #{lstm_forward.1} parent=1 // pred_check_branch
      %34 = sbr.rel (0) target = $region5
    $region4: #{lstm_forward.1} parent=1 // pred_region
      %s36 = ssub.s32 1024, 1024
      %37 = vsyncadd [#allocation7], %s36
      %s38 = sshll.u32 [#allocation6], 4
      %s39 = int_to_ptr.vmem [resolvable:$true] %s38
      %44 = dma.hbm_to_vmem [thread:$0]  %s0, 1024, %s39, [#allocation7], 128, 128, 8
    $region5: #{lstm_forward.1} parent=1 // pred_fallthru
      _
    // Predicated region
    $region6: #{lstm_forward.1} parent=1 // pred_check
      _
    $region7: #{lstm_forward.1} parent=1 // pred_check_branch
      %46 = sbr.rel (0) target = $region9
    $region8: #{lstm_forward.1} parent=1 // pred_region
      %s48 = ssub.s32 256, 256
      %49 = vsyncadd [#allocation10], %s48
      %s51 = sshll.u32 [#allocation9], 4
      %s52 = int_to_ptr.vmem [resolvable:$true] %s51
      %54 = dma.hbm_to_vmem [thread:$0]  %s1, 256, %s52, [#allocation10]
    $region9: #{lstm_forward.1} parent=1 // pred_fallthru
      _
    // Predicated region
    $region10: #{lstm_forward.1} parent=1 // pred_check
      _
    $region11: #{lstm_forward.1} parent=1 // pred_check_branch
      %56 = sbr.rel (0) target = $region13
    $region12: #{lstm_forward.1} parent=1 // pred_region
      %s58 = ssub.s32 256, 256
      %59 = vsyncadd [#allocation10], %s58
      %s61 = sshll.u32 [#allocation11], 4
      %s62 = int_to_ptr.vmem [resolvable:$true] %s61
      %64 = dma.hbm_to_vmem [thread:$0]  %s2, 256, %s62, [#allocation10]
    $region13: #{lstm_forward.1} parent=1 // pred_fallthru
      _
    // Predicated region
    $region14: #{lstm_forward.1} parent=1 // pred_check
      _
    $region15: #{lstm_forward.1} parent=1 // pred_check_branch
      %66 = sbr.rel (0) target = $region17
    $region16: #{lstm_forward.1} parent=1 // pred_region
      %s68 = ssub.s32 256, 256
      %69 = vsyncadd [#allocation13], %s68
      %s71 = sshll.u32 [#allocation12], 4
      %s72 = int_to_ptr.vmem [resolvable:$true] %s71
      %74 = dma.hbm_to_vmem [thread:$0]  %s3, 256, %s72, [#allocation13]
    $region17: #{lstm_forward.1} parent=1 // pred_fallthru
      _
    // Predicated region
    $region18: #{lstm_forward.1} parent=1 // pred_check
      _
    $region19: #{lstm_forward.1} parent=1 // pred_check_branch
      %76 = sbr.rel (0) target = $region21
    $region20: #{lstm_forward.1} parent=1 // pred_region
      %s78 = ssub.s32 256, 256
      %79 = vsyncadd [#allocation13], %s78
      %s81 = sshll.u32 [#allocation14], 4
      %s82 = int_to_ptr.vmem [resolvable:$true] %s81
      %84 = dma.hbm_to_vmem [thread:$0]  %s4, 256, %s82, [#allocation13]
    $region21: #{lstm_forward.1} parent=1 // pred_fallthru
      _
    // Predicated region
    $region22: #{lstm_forward.1} parent=1 // pred_check
      _
    $region23: #{lstm_forward.1} parent=1 // pred_check_branch
      %86 = sbr.rel (0) target = $region25
    $region24: #{lstm_forward.1} parent=1 // pred_region
      %s88 = ssub.s32 16384, 16384
      %89 = vsyncadd [#allocation16], %s88
      %s90 = sshll.u32 [#allocation15], 4
      %s91 = int_to_ptr.vmem [resolvable:$true] %s90
      %96 = dma.hbm_to_vmem [thread:$0]  %s5, 16384, %s91, [#allocation16], 1024, 1024, 64
    $region25: #{lstm_forward.1} parent=1 // pred_fallthru
      _
    // Predicated region
    $region26: #{lstm_forward.1} parent=1 // pred_check
      _
    $region27: #{lstm_forward.1} parent=1 // pred_check_branch
      %98 = sbr.rel (0) target = $region29
    $region28: #{lstm_forward.1} parent=1 // pred_region
      %s100 = ssub.s32 32768, 32768
      %101 = vsyncadd [#allocation16], %s100
      %s102 = sshll.u32 [#allocation17], 4
      %s103 = int_to_ptr.vmem [resolvable:$true] %s102
      %108 = dma.hbm_to_vmem [thread:$0]  %s6, 32768, %s103, [#allocation16], 1024, 1024, 64
    $region29: #{lstm_forward.1} parent=1 // pred_fallthru
      _
    // Predicated region
    $region30: #{lstm_forward.1} parent=1 // pred_check
      _
    $region31: #{lstm_forward.1} parent=1 // pred_check_branch
      %110 = sbr.rel (0) target = $region33
    $region32: #{lstm_forward.1} parent=1 // pred_region
      %s112 = ssub.s32 128, 128
      %113 = vsyncadd [#allocation19], %s112
      %s115 = sshll.u32 [#allocation18], 4
      %s116 = int_to_ptr.vmem [resolvable:$true] %s115
      %118 = dma.hbm_to_vmem [thread:$0]  %s7, 128, %s116, [#allocation19]
    $region33: #{lstm_forward.1} parent=1 // pred_fallthru
      _
    // Predicated region
    $region34: #{lstm_forward.1} parent=1 // pred_check
      _
    $region35: #{lstm_forward.1} parent=1 // pred_check_branch
      %120 = sbr.rel (0) target = $region37
    $region36: #{lstm_forward.1} parent=1 // pred_region
      %s122 = ssub.s32 32768, 32768
      %123 = vsyncadd [#allocation19], %s122
      %s124 = sshll.u32 [#allocation20], 4
      %s125 = int_to_ptr.vmem [resolvable:$true] %s124
      %130 = dma.hbm_to_vmem [thread:$0]  %s8, 32768, %s125, [#allocation19], 1024, 1024, 64
    $region37: #{lstm_forward.1} parent=1 // pred_fallthru
      _
    // Predicated region
    $region38: #{lstm_forward.1} parent=1 // pred_check
      _
    $region39: #{lstm_forward.1} parent=1 // pred_check_branch
      %132 = sbr.rel (0) target = $region41
    $region40: #{lstm_forward.1} parent=1 // pred_region
      %s134 = ssub.s32 32768, 32768
      %135 = vsyncadd [#allocation22], %s134
      %s136 = sshll.u32 [#allocation21], 4
      %s137 = int_to_ptr.vmem [resolvable:$true] %s136
      %142 = dma.hbm_to_vmem [thread:$0]  %s9, 32768, %s137, [#allocation22], 1024, 1024, 64
    $region41: #{lstm_forward.1} parent=1 // pred_fallthru
      _
    // Predicated region
    $region42: #{lstm_forward.1} parent=1 // pred_check
      _
    $region43: #{lstm_forward.1} parent=1 // pred_check_branch
      %144 = sbr.rel (0) target = $region45
    $region44: #{lstm_forward.1} parent=1 // pred_region
      %s146 = ssub.s32 128, 128
      %147 = vsyncadd [#allocation22], %s146
      %s149 = sshll.u32 [#allocation23], 4
      %s150 = int_to_ptr.vmem [resolvable:$true] %s149
      %152 = dma.hbm_to_vmem [thread:$0]  %s10, 128, %s150, [#allocation22]
    $region45: #{lstm_forward.1} parent=1 // pred_fallthru
      _
    // Predicated region
    $region46: #{lstm_forward.1} parent=1 // pred_check
      _
    $region47: #{lstm_forward.1} parent=1 // pred_check_branch
      %154 = sbr.rel (0) target = $region49
    $region48: #{lstm_forward.1} parent=1 // pred_region
      %s156 = ssub.s32 4096, 4096
      %157 = vsyncadd [#allocation25], %s156
      %s158 = sshll.u32 [#allocation24], 4
      %s159 = int_to_ptr.vmem [resolvable:$true] %s158
      %164 = dma.hbm_to_vmem [thread:$0]  %s11, 4096, %s159, [#allocation25], 128, 128, 8
    $region49: #{lstm_forward.1} parent=1 // pred_fallthru
      _
    // Predicated region
    $region50: #{lstm_forward.1} parent=1 // pred_check
      _
    $region51: #{lstm_forward.1} parent=1 // pred_check_branch
      %166 = sbr.rel (0) target = $region53
    $region52: #{lstm_forward.1} parent=1 // pred_region
      %s168 = ssub.s32 16, 16
      %169 = vsyncadd [#allocation25], %s168
      %s171 = sshll.u32 [#allocation26], 4
      %s172 = int_to_ptr.vmem [resolvable:$true] %s171
      %174 = dma.hbm_to_vmem [thread:$0]  %s12, 16, %s172, [#allocation25]
    $region53: #{lstm_forward.1} parent=1 // pred_fallthru
      _
    // Predicated region
    $region54: #{lstm_forward.1} parent=1 // pred_check
      _
    $region55: #{lstm_forward.1} parent=1 // pred_check_branch
      %176 = sbr.rel (0) target = $region57
    $region56: #{lstm_forward.1} parent=1 // pred_region
      %177 = dma.done [#allocation7], 1024
    $region57: #{lstm_forward.1} parent=1 // pred_fallthru
      _
    // Predicated region
    $region58: #{lstm_forward.1} parent=1 // pred_check
      _
    $region59: #{lstm_forward.1} parent=1 // pred_check_branch
      %179 = sbr.rel (0) target = $region61
    $region60: #{lstm_forward.1} parent=1 // pred_region
      %180 = dma.done [#allocation10], 256
    $region61: #{lstm_forward.1} parent=1 // pred_fallthru
      _
    // Predicated region
    $region62: #{lstm_forward.1} parent=1 // pred_check
      _
    $region63: #{lstm_forward.1} parent=1 // pred_check_branch
      %182 = sbr.rel (0) target = $region65
    $region64: #{lstm_forward.1} parent=1 // pred_region
      %183 = dma.done [#allocation10], 256
    $region65: #{lstm_forward.1} parent=1 // pred_fallthru
      _
    // Predicated region
    $region66: #{lstm_forward.1} parent=1 // pred_check
      _
    $region67: #{lstm_forward.1} parent=1 // pred_check_branch
      %185 = sbr.rel (0) target = $region69
    $region68: #{lstm_forward.1} parent=1 // pred_region
      %186 = dma.done [#allocation13], 256
    $region69: #{lstm_forward.1} parent=1 // pred_fallthru
      _
    // Predicated region
    $region70: #{lstm_forward.1} parent=1 // pred_check
      _
    $region71: #{lstm_forward.1} parent=1 // pred_check_branch
      %188 = sbr.rel (0) target = $region73
    $region72: #{lstm_forward.1} parent=1 // pred_region
      %189 = dma.done [#allocation13], 256
    $region73: #{lstm_forward.1} parent=1 // pred_fallthru
      _
    // Predicated region
    $region74: #{lstm_forward.1} parent=1 // pred_check
      _
    $region75: #{lstm_forward.1} parent=1 // pred_check_branch
      %191 = sbr.rel (0) target = $region77
    $region76: #{lstm_forward.1} parent=1 // pred_region
      %192 = dma.done [#allocation16], 16384
    $region77: #{lstm_forward.1} parent=1 // pred_fallthru
      _
    // Predicated region
    $region78: #{lstm_forward.1} parent=1 // pred_check
      _
    $region79: #{lstm_forward.1} parent=1 // pred_check_branch
      %194 = sbr.rel (0) target = $region81
    $region80: #{lstm_forward.1} parent=1 // pred_region
      %195 = dma.done [#allocation16], 32768
    $region81: #{lstm_forward.1} parent=1 // pred_fallthru
      _
    // Predicated region
    $region82: #{lstm_forward.1} parent=1 // pred_check
      _
    $region83: #{lstm_forward.1} parent=1 // pred_check_branch
      %197 = sbr.rel (0) target = $region85
    $region84: #{lstm_forward.1} parent=1 // pred_region
      %198 = dma.done [#allocation19], 128
    $region85: #{lstm_forward.1} parent=1 // pred_fallthru
      _
    // Predicated region
    $region86: #{lstm_forward.1} parent=1 // pred_check
      _
    $region87: #{lstm_forward.1} parent=1 // pred_check_branch
      %200 = sbr.rel (0) target = $region89
    $region88: #{lstm_forward.1} parent=1 // pred_region
      %201 = dma.done [#allocation19], 32768
    $region89: #{lstm_forward.1} parent=1 // pred_fallthru
      _
    // Predicated region
    $region90: #{lstm_forward.1} parent=1 // pred_check
      _
    $region91: #{lstm_forward.1} parent=1 // pred_check_branch
      %203 = sbr.rel (0) target = $region93
    $region92: #{lstm_forward.1} parent=1 // pred_region
      %204 = dma.done [#allocation22], 32768
    $region93: #{lstm_forward.1} parent=1 // pred_fallthru
      _
    // Predicated region
    $region94: #{lstm_forward.1} parent=1 // pred_check
      _
    $region95: #{lstm_forward.1} parent=1 // pred_check_branch
      %206 = sbr.rel (0) target = $region97
    $region96: #{lstm_forward.1} parent=1 // pred_region
      %207 = dma.done [#allocation22], 128
    $region97: #{lstm_forward.1} parent=1 // pred_fallthru
      _
    // Predicated region
    $region98: #{lstm_forward.1} parent=1 // pred_check
      _
    $region99: #{lstm_forward.1} parent=1 // pred_check_branch
      %209 = sbr.rel (0) target = $region101
    $region100: #{lstm_forward.1} parent=1 // pred_region
      %210 = dma.done [#allocation25], 4096
    $region101: #{lstm_forward.1} parent=1 // pred_fallthru
      _
    // Predicated region
    $region102: #{lstm_forward.1} parent=1 // pred_check
      _
    $region103: #{lstm_forward.1} parent=1 // pred_check_branch
      %212 = sbr.rel (0) target = $region105
    $region104: #{lstm_forward.1} parent=1 // pred_region
      %213 = dma.done [#allocation25], 16
    $region105: #{lstm_forward.1} parent=1 // pred_fallthru
      _
    %v214 = vld [vmem:[#allocation6] sm:$0xff]
    %v215 = vld [vmem:[#allocation6 + $0x8] sm:$0xff]
    %v216 = vld [vmem:[#allocation6 + $0x10] sm:$0xff]
    %v217 = vld [vmem:[#allocation6 + $0x18] sm:$0xff]
    %v218 = vld [vmem:[#allocation6 + $0x20] sm:$0xff]
    %v219 = vld [vmem:[#allocation6 + $0x28] sm:$0xff]
    %v220 = vld [vmem:[#allocation6 + $0x30] sm:$0xff]
    %v221 = vld [vmem:[#allocation6 + $0x38] sm:$0xff]
    %v222 = vld [vmem:[#allocation15] sm:$0xff]
    %v223 = vld [vmem:[#allocation15 + $0x8] sm:$0xff]
    %v224 = vld [vmem:[#allocation15 + $0x10] sm:$0xff]
    %v225 = vld [vmem:[#allocation15 + $0x18] sm:$0xff]
    %v226 = vld [vmem:[#allocation15 + $0x20] sm:$0xff]
    %v227 = vld [vmem:[#allocation15 + $0x28] sm:$0xff]
    %v228 = vld [vmem:[#allocation15 + $0x30] sm:$0xff]
    %v229 = vld [vmem:[#allocation15 + $0x38] sm:$0xff]
    %v230 = vld [vmem:[#allocation15 + $0x40] sm:$0xff]
    %v231 = vld [vmem:[#allocation15 + $0x48] sm:$0xff]
    %v232 = vld [vmem:[#allocation15 + $0x50] sm:$0xff]
    %v233 = vld [vmem:[#allocation15 + $0x58] sm:$0xff]
    %v234 = vld [vmem:[#allocation15 + $0x60] sm:$0xff]
    %v235 = vld [vmem:[#allocation15 + $0x68] sm:$0xff]
    %v236 = vld [vmem:[#allocation15 + $0x70] sm:$0xff]
    %v237 = vld [vmem:[#allocation15 + $0x78] sm:$0xff]
    %v238 = vld [vmem:[#allocation15 + $0x80] sm:$0xff]
    %v239 = vld [vmem:[#allocation15 + $0x88] sm:$0xff]
    %v240 = vld [vmem:[#allocation15 + $0x90] sm:$0xff]
    %v241 = vld [vmem:[#allocation15 + $0x98] sm:$0xff]
    %v242 = vld [vmem:[#allocation15 + $0xa0] sm:$0xff]
    %v243 = vld [vmem:[#allocation15 + $0xa8] sm:$0xff]
    %v244 = vld [vmem:[#allocation15 + $0xb0] sm:$0xff]
    %v245 = vld [vmem:[#allocation15 + $0xb8] sm:$0xff]
    %v246 = vld [vmem:[#allocation15 + $0xc0] sm:$0xff]
    %v247 = vld [vmem:[#allocation15 + $0xc8] sm:$0xff]
    %v248 = vld [vmem:[#allocation15 + $0xd0] sm:$0xff]
    %v249 = vld [vmem:[#allocation15 + $0xd8] sm:$0xff]
    %v250 = vld [vmem:[#allocation15 + $0xe0] sm:$0xff]
    %v251 = vld [vmem:[#allocation15 + $0xe8] sm:$0xff]
    %v252 = vld [vmem:[#allocation15 + $0xf0] sm:$0xff]
    %v253 = vld [vmem:[#allocation15 + $0xf8] sm:$0xff]
    %v254 = vld [vmem:[#allocation15 + $0x100] sm:$0xff]
    %v255 = vld [vmem:[#allocation15 + $0x108] sm:$0xff]
    %v256 = vld [vmem:[#allocation15 + $0x110] sm:$0xff]
    %v257 = vld [vmem:[#allocation15 + $0x118] sm:$0xff]
    %v258 = vld [vmem:[#allocation15 + $0x120] sm:$0xff]
    %v259 = vld [vmem:[#allocation15 + $0x128] sm:$0xff]
    %v260 = vld [vmem:[#allocation15 + $0x130] sm:$0xff]
    %v261 = vld [vmem:[#allocation15 + $0x138] sm:$0xff]
    %v262 = vld [vmem:[#allocation15 + $0x140] sm:$0xff]
    %v263 = vld [vmem:[#allocation15 + $0x148] sm:$0xff]
    %v264 = vld [vmem:[#allocation15 + $0x150] sm:$0xff]
    %v265 = vld [vmem:[#allocation15 + $0x158] sm:$0xff]
    %v266 = vld [vmem:[#allocation15 + $0x160] sm:$0xff]
    %v267 = vld [vmem:[#allocation15 + $0x168] sm:$0xff]
    %v268 = vld [vmem:[#allocation15 + $0x170] sm:$0xff]
    %v269 = vld [vmem:[#allocation15 + $0x178] sm:$0xff]
    %v270 = vld [vmem:[#allocation15 + $0x180] sm:$0xff]
    %v271 = vld [vmem:[#allocation15 + $0x188] sm:$0xff]
    %v272 = vld [vmem:[#allocation15 + $0x190] sm:$0xff]
    %v273 = vld [vmem:[#allocation15 + $0x198] sm:$0xff]
    %v274 = vld [vmem:[#allocation15 + $0x1a0] sm:$0xff]
    %v275 = vld [vmem:[#allocation15 + $0x1a8] sm:$0xff]
    %v276 = vld [vmem:[#allocation15 + $0x1b0] sm:$0xff]
    %v277 = vld [vmem:[#allocation15 + $0x1b8] sm:$0xff]
    %v278 = vld [vmem:[#allocation15 + $0x1c0] sm:$0xff]
    %v279 = vld [vmem:[#allocation15 + $0x1c8] sm:$0xff]
    %v280 = vld [vmem:[#allocation15 + $0x1d0] sm:$0xff]
    %v281 = vld [vmem:[#allocation15 + $0x1d8] sm:$0xff]
    %v282 = vld [vmem:[#allocation15 + $0x1e0] sm:$0xff]
    %v283 = vld [vmem:[#allocation15 + $0x1e8] sm:$0xff]
    %v284 = vld [vmem:[#allocation15 + $0x1f0] sm:$0xff]
    %v285 = vld [vmem:[#allocation15 + $0x1f8] sm:$0xff]
    %v286 = vld [vmem:[#allocation15 + $0x200] sm:$0xff]
    %v287 = vld [vmem:[#allocation15 + $0x208] sm:$0xff]
    %v288 = vld [vmem:[#allocation15 + $0x210] sm:$0xff]
    %v289 = vld [vmem:[#allocation15 + $0x218] sm:$0xff]
    %v290 = vld [vmem:[#allocation15 + $0x220] sm:$0xff]
    %v291 = vld [vmem:[#allocation15 + $0x228] sm:$0xff]
    %v292 = vld [vmem:[#allocation15 + $0x230] sm:$0xff]
    %v293 = vld [vmem:[#allocation15 + $0x238] sm:$0xff]
    %v294 = vld [vmem:[#allocation15 + $0x240] sm:$0xff]
    %v295 = vld [vmem:[#allocation15 + $0x248] sm:$0xff]
    %v296 = vld [vmem:[#allocation15 + $0x250] sm:$0xff]
    %v297 = vld [vmem:[#allocation15 + $0x258] sm:$0xff]
    %v298 = vld [vmem:[#allocation15 + $0x260] sm:$0xff]
    %v299 = vld [vmem:[#allocation15 + $0x268] sm:$0xff]
    %v300 = vld [vmem:[#allocation15 + $0x270] sm:$0xff]
    %v301 = vld [vmem:[#allocation15 + $0x278] sm:$0xff]
    %v302 = vld [vmem:[#allocation15 + $0x280] sm:$0xff]
    %v303 = vld [vmem:[#allocation15 + $0x288] sm:$0xff]
    %v304 = vld [vmem:[#allocation15 + $0x290] sm:$0xff]
    %v305 = vld [vmem:[#allocation15 + $0x298] sm:$0xff]
    %v306 = vld [vmem:[#allocation15 + $0x2a0] sm:$0xff]
    %v307 = vld [vmem:[#allocation15 + $0x2a8] sm:$0xff]
    %v308 = vld [vmem:[#allocation15 + $0x2b0] sm:$0xff]
    %v309 = vld [vmem:[#allocation15 + $0x2b8] sm:$0xff]
    %v310 = vld [vmem:[#allocation15 + $0x2c0] sm:$0xff]
    %v311 = vld [vmem:[#allocation15 + $0x2c8] sm:$0xff]
    %v312 = vld [vmem:[#allocation15 + $0x2d0] sm:$0xff]
    %v313 = vld [vmem:[#allocation15 + $0x2d8] sm:$0xff]
    %v314 = vld [vmem:[#allocation15 + $0x2e0] sm:$0xff]
    %v315 = vld [vmem:[#allocation15 + $0x2e8] sm:$0xff]
    %v316 = vld [vmem:[#allocation15 + $0x2f0] sm:$0xff]
    %v317 = vld [vmem:[#allocation15 + $0x2f8] sm:$0xff]
    %v318 = vld [vmem:[#allocation15 + $0x300] sm:$0xff]
    %v319 = vld [vmem:[#allocation15 + $0x308] sm:$0xff]
    %v320 = vld [vmem:[#allocation15 + $0x310] sm:$0xff]
    %v321 = vld [vmem:[#allocation15 + $0x318] sm:$0xff]
    %v322 = vld [vmem:[#allocation15 + $0x320] sm:$0xff]
    %v323 = vld [vmem:[#allocation15 + $0x328] sm:$0xff]
    %v324 = vld [vmem:[#allocation15 + $0x330] sm:$0xff]
    %v325 = vld [vmem:[#allocation15 + $0x338] sm:$0xff]
    %v326 = vld [vmem:[#allocation15 + $0x340] sm:$0xff]
    %v327 = vld [vmem:[#allocation15 + $0x348] sm:$0xff]
    %v328 = vld [vmem:[#allocation15 + $0x350] sm:$0xff]
    %v329 = vld [vmem:[#allocation15 + $0x358] sm:$0xff]
    %v330 = vld [vmem:[#allocation15 + $0x360] sm:$0xff]
    %v331 = vld [vmem:[#allocation15 + $0x368] sm:$0xff]
    %v332 = vld [vmem:[#allocation15 + $0x370] sm:$0xff]
    %v333 = vld [vmem:[#allocation15 + $0x378] sm:$0xff]
    %v334 = vld [vmem:[#allocation15 + $0x380] sm:$0xff]
    %v335 = vld [vmem:[#allocation15 + $0x388] sm:$0xff]
    %v336 = vld [vmem:[#allocation15 + $0x390] sm:$0xff]
    %v337 = vld [vmem:[#allocation15 + $0x398] sm:$0xff]
    %v338 = vld [vmem:[#allocation15 + $0x3a0] sm:$0xff]
    %v339 = vld [vmem:[#allocation15 + $0x3a8] sm:$0xff]
    %v340 = vld [vmem:[#allocation15 + $0x3b0] sm:$0xff]
    %v341 = vld [vmem:[#allocation15 + $0x3b8] sm:$0xff]
    %v342 = vld [vmem:[#allocation15 + $0x3c0] sm:$0xff]
    %v343 = vld [vmem:[#allocation15 + $0x3c8] sm:$0xff]
    %v344 = vld [vmem:[#allocation15 + $0x3d0] sm:$0xff]
    %v345 = vld [vmem:[#allocation15 + $0x3d8] sm:$0xff]
    %v346 = vld [vmem:[#allocation15 + $0x3e0] sm:$0xff]
    %v347 = vld [vmem:[#allocation15 + $0x3e8] sm:$0xff]
    %v348 = vld [vmem:[#allocation15 + $0x3f0] sm:$0xff]
    %v349 = vld [vmem:[#allocation15 + $0x3f8] sm:$0xff]
    %v350 = vld [vmem:[#allocation18] sm:$0xff]
    %v352 = vlaneseq
    %v353 = vshrl.u32 %v352, 7
    %v354 = vsub.s32 0, %v353
    %v355 = vrot.slane %v350, %v354
    %v356 = vlaneseq
    %v357 = vshrl.u32 %v356, 7
    %v358 = vsub.s32 1, %v357
    %v359 = vrot.slane %v350, %v358
    %v360 = vlaneseq
    %v361 = vshrl.u32 %v360, 7
    %v362 = vsub.s32 2, %v361
    %v363 = vrot.slane %v350, %v362
    %v364 = vlaneseq
    %v365 = vshrl.u32 %v364, 7
    %v366 = vsub.s32 3, %v365
    %v367 = vrot.slane %v350, %v366
    %v368 = vlaneseq
    %v369 = vshrl.u32 %v368, 7
    %v370 = vsub.s32 4, %v369
    %v371 = vrot.slane %v350, %v370
    %v372 = vlaneseq
    %v373 = vshrl.u32 %v372, 7
    %v374 = vsub.s32 5, %v373
    %v375 = vrot.slane %v350, %v374
    %v376 = vlaneseq
    %v377 = vshrl.u32 %v376, 7
    %v378 = vsub.s32 6, %v377
    %v379 = vrot.slane %v350, %v378
    %v380 = vlaneseq
    %v381 = vshrl.u32 %v380, 7
    %v382 = vsub.s32 7, %v381
    %v383 = vrot.slane %v350, %v382
    %392 = vmatprep.subr.mxu0 %v223
    %393 = vmatpush1.msra.mxu0 %v222
    %394 = vmatprep.subr.mxu0 %v231
    %395 = vmatpush1.msra.mxu0 %v230
    %396 = vmatprep.subr.mxu0 %v239
    %397 = vmatpush1.msra.mxu0 %v238
    %398 = vmatprep.subr.mxu0 %v247
    %399 = vmatpush1.msra.mxu0 %v246
    %400 = vmatprep.subr.mxu0 %v255
    %401 = vmatpush1.msra.mxu0 %v254
    %402 = vmatprep.subr.mxu0 %v263
    %403 = vmatpush1.msra.mxu0 %v262
    %404 = vmatprep.subr.mxu0 %v271
    %405 = vmatpush1.msra.mxu0 %v270
    %406 = vmatprep.subr.mxu0 %v279
    %407 = vmatpush1.msra.mxu0 %v278
    %408 = vmatprep.subr.mxu0 %v287
    %409 = vmatpush1.msra.mxu0 %v286
    %410 = vmatprep.subr.mxu0 %v295
    %411 = vmatpush1.msra.mxu0 %v294
    %412 = vmatprep.subr.mxu0 %v303
    %413 = vmatpush1.msra.mxu0 %v302
    %414 = vmatprep.subr.mxu0 %v311
    %415 = vmatpush1.msra.mxu0 %v310
    %416 = vmatprep.subr.mxu0 %v319
    %417 = vmatpush1.msra.mxu0 %v318
    %418 = vmatprep.subr.mxu0 %v327
    %419 = vmatpush1.msra.mxu0 %v326
    %420 = vmatprep.subr.mxu0 %v335
    %421 = vmatpush1.msra.mxu0 %v334
    %422 = vmatprep.subr.mxu0 %v343
    %423 = vmatpush1.msra.mxu0 %v342
    %424 = vmatprep.subr.mxu0 0.0
    %425 = vmatpush1.msra.mxu0 0.0
    %426 = vmatprep.subr.mxu0 0.0
    %427 = vmatpush1.msra.mxu0 0.0
    %428 = vmatprep.subr.mxu0 0.0
    %429 = vmatpush1.msra.mxu0 0.0
    %430 = vmatprep.subr.mxu0 0.0
    %431 = vmatpush1.msra.mxu0 0.0
    %432 = vmatprep.subr.mxu0 0.0
    %433 = vmatpush1.msra.mxu0 0.0
    %434 = vmatprep.subr.mxu0 0.0
    %435 = vmatpush1.msra.mxu0 0.0
    %436 = vmatprep.subr.mxu0 0.0
    %437 = vmatpush1.msra.mxu0 0.0
    %438 = vmatprep.subr.mxu0 0.0
    %439 = vmatpush1.msra.mxu0 0.0
    %440 = vmatprep.subr.mxu0 0.0
    %441 = vmatpush1.msra.mxu0 0.0
    %442 = vmatprep.subr.mxu0 0.0
    %443 = vmatpush1.msra.mxu0 0.0
    %444 = vmatprep.subr.mxu0 0.0
    %445 = vmatpush1.msra.mxu0 0.0
    %446 = vmatprep.subr.mxu0 0.0
    %447 = vmatpush1.msra.mxu0 0.0
    %448 = vmatprep.subr.mxu0 0.0
    %449 = vmatpush1.msra.mxu0 0.0
    %450 = vmatprep.subr.mxu0 0.0
    %451 = vmatpush1.msra.mxu0 0.0
    %452 = vmatprep.subr.mxu0 0.0
    %453 = vmatpush1.msra.mxu0 0.0
    %454 = vmatprep.subr.mxu0 0.0
    %455 = vmatpush1.msra.mxu0 0.0
    %456 = vmatprep.mubr.f32.mxu0 0.0
    %457 = vmatmul.mubr.f32.gmra.mrb[0].mxu0 %v214
    %v458 = vpop.f32.mrb[0].mxu0
    %v459 = vadd.f32 %v355, %v458
    %v460 = vpop.f32.mrb[0].mxu0
    %v461 = vadd.f32 %v359, %v460
    %462 = vmatprep.mubr.f32.mxu0 0.0
    %463 = vmatmul.mubr.f32.gmra.mrb[0].mxu0 %v215
    %v464 = vpop.f32.mrb[0].mxu0
    %v465 = vadd.f32 %v355, %v464
    %v466 = vpop.f32.mrb[0].mxu0
    %v467 = vadd.f32 %v359, %v466
    %468 = vmatprep.mubr.f32.mxu0 0.0
    %469 = vmatmul.mubr.f32.gmra.mrb[0].mxu0 %v216
    %v470 = vpop.f32.mrb[0].mxu0
    %v471 = vadd.f32 %v355, %v470
    %v472 = vpop.f32.mrb[0].mxu0
    %v473 = vadd.f32 %v359, %v472
    %474 = vmatprep.mubr.f32.mxu0 0.0
    %475 = vmatmul.mubr.f32.gmra.mrb[0].mxu0 %v217
    %v476 = vpop.f32.mrb[0].mxu0
    %v477 = vadd.f32 %v355, %v476
    %v478 = vpop.f32.mrb[0].mxu0
    %v479 = vadd.f32 %v359, %v478
    %480 = vmatprep.mubr.f32.mxu0 0.0
    %481 = vmatmul.mubr.f32.gmra.mrb[0].mxu0 %v218
    %v482 = vpop.f32.mrb[0].mxu0
    %v483 = vadd.f32 %v355, %v482
    %v484 = vpop.f32.mrb[0].mxu0
    %v485 = vadd.f32 %v359, %v484
    %486 = vmatprep.mubr.f32.mxu0 0.0
    %487 = vmatmul.mubr.f32.gmra.mrb[0].mxu0 %v219
    %v488 = vpop.f32.mrb[0].mxu0
    %v489 = vadd.f32 %v355, %v488
    %v490 = vpop.f32.mrb[0].mxu0
    %v491 = vadd.f32 %v359, %v490
    %492 = vmatprep.mubr.f32.mxu0 0.0
    %493 = vmatmul.mubr.f32.gmra.mrb[0].mxu0 %v220
    %v494 = vpop.f32.mrb[0].mxu0
    %v495 = vadd.f32 %v355, %v494
    %v496 = vpop.f32.mrb[0].mxu0
    %v497 = vadd.f32 %v359, %v496
    %498 = vmatprep.mubr.f32.mxu0 0.0
    %499 = vmatmul.mubr.f32.gmra.mrb[0].mxu0 %v221
    %v500 = vpop.f32.mrb[0].mxu0
    %v501 = vadd.f32 %v355, %v500
    %v502 = vpop.f32.mrb[0].mxu0
    %v503 = vadd.f32 %v359, %v502
    %504 = vdwg.mxu0
    %505 = vmatprep.subr.mxu0 %v225
    %506 = vmatpush1.msra.mxu0 %v224
    %507 = vmatprep.subr.mxu0 %v233
    %508 = vmatpush1.msra.mxu0 %v232
    %509 = vmatprep.subr.mxu0 %v241
    %510 = vmatpush1.msra.mxu0 %v240
    %511 = vmatprep.subr.mxu0 %v249
    %512 = vmatpush1.msra.mxu0 %v248
    %513 = vmatprep.subr.mxu0 %v257
    %514 = vmatpush1.msra.mxu0 %v256
    %515 = vmatprep.subr.mxu0 %v265
    %516 = vmatpush1.msra.mxu0 %v264
    %517 = vmatprep.subr.mxu0 %v273
    %518 = vmatpush1.msra.mxu0 %v272
    %519 = vmatprep.subr.mxu0 %v281
    %520 = vmatpush1.msra.mxu0 %v280
    %521 = vmatprep.subr.mxu0 %v289
    %522 = vmatpush1.msra.mxu0 %v288
    %523 = vmatprep.subr.mxu0 %v297
    %524 = vmatpush1.msra.mxu0 %v296
    %525 = vmatprep.subr.mxu0 %v305
    %526 = vmatpush1.msra.mxu0 %v304
    %527 = vmatprep.subr.mxu0 %v313
    %528 = vmatpush1.msra.mxu0 %v312
    %529 = vmatprep.subr.mxu0 %v321
    %530 = vmatpush1.msra.mxu0 %v320
    %531 = vmatprep.subr.mxu0 %v329
    %532 = vmatpush1.msra.mxu0 %v328
    %533 = vmatprep.subr.mxu0 %v337
    %534 = vmatpush1.msra.mxu0 %v336
    %535 = vmatprep.subr.mxu0 %v345
    %536 = vmatpush1.msra.mxu0 %v344
    %537 = vmatprep.subr.mxu0 0.0
    %538 = vmatpush1.msra.mxu0 0.0
    %539 = vmatprep.subr.mxu0 0.0
    %540 = vmatpush1.msra.mxu0 0.0
    %541 = vmatprep.subr.mxu0 0.0
    %542 = vmatpush1.msra.mxu0 0.0
    %543 = vmatprep.subr.mxu0 0.0
    %544 = vmatpush1.msra.mxu0 0.0
    %545 = vmatprep.subr.mxu0 0.0
    %546 = vmatpush1.msra.mxu0 0.0
    %547 = vmatprep.subr.mxu0 0.0
    %548 = vmatpush1.msra.mxu0 0.0
    %549 = vmatprep.subr.mxu0 0.0
    %550 = vmatpush1.msra.mxu0 0.0
    %551 = vmatprep.subr.mxu0 0.0
    %552 = vmatpush1.msra.mxu0 0.0
    %553 = vmatprep.subr.mxu0 0.0
    %554 = vmatpush1.msra.mxu0 0.0
    %555 = vmatprep.subr.mxu0 0.0
    %556 = vmatpush1.msra.mxu0 0.0
    %557 = vmatprep.subr.mxu0 0.0
    %558 = vmatpush1.msra.mxu0 0.0
    %559 = vmatprep.subr.mxu0 0.0
    %560 = vmatpush1.msra.mxu0 0.0
    %561 = vmatprep.subr.mxu0 0.0
    %562 = vmatpush1.msra.mxu0 0.0
    %563 = vmatprep.subr.mxu0 0.0
    %564 = vmatpush1.msra.mxu0 0.0
    %565 = vmatprep.subr.mxu0 0.0
    %566 = vmatpush1.msra.mxu0 0.0
    %567 = vmatprep.subr.mxu0 0.0
    %568 = vmatpush1.msra.mxu0 0.0
    %569 = vmatprep.mubr.f32.mxu0 0.0
    %570 = vmatmul.mubr.f32.gmra.mrb[0].mxu0 %v214
    %v571 = vpop.f32.mrb[0].mxu0
    %v572 = vadd.f32 %v363, %v571
    %v573 = vpop.f32.mrb[0].mxu0
    %v574 = vadd.f32 %v367, %v573
    %575 = vmatprep.mubr.f32.mxu0 0.0
    %576 = vmatmul.mubr.f32.gmra.mrb[0].mxu0 %v215
    %v577 = vpop.f32.mrb[0].mxu0
    %v578 = vadd.f32 %v363, %v577
    %v579 = vpop.f32.mrb[0].mxu0
    %v580 = vadd.f32 %v367, %v579
    %581 = vmatprep.mubr.f32.mxu0 0.0
    %582 = vmatmul.mubr.f32.gmra.mrb[0].mxu0 %v216
    %v583 = vpop.f32.mrb[0].mxu0
    %v584 = vadd.f32 %v363, %v583
    %v585 = vpop.f32.mrb[0].mxu0
    %v586 = vadd.f32 %v367, %v585
    %587 = vmatprep.mubr.f32.mxu0 0.0
    %588 = vmatmul.mubr.f32.gmra.mrb[0].mxu0 %v217
    %v589 = vpop.f32.mrb[0].mxu0
    %v590 = vadd.f32 %v363, %v589
    %v591 = vpop.f32.mrb[0].mxu0
    %v592 = vadd.f32 %v367, %v591
    %593 = vmatprep.mubr.f32.mxu0 0.0
    %594 = vmatmul.mubr.f32.gmra.mrb[0].mxu0 %v218
    %v595 = vpop.f32.mrb[0].mxu0
    %v596 = vadd.f32 %v363, %v595
    %v597 = vpop.f32.mrb[0].mxu0
    %v598 = vadd.f32 %v367, %v597
    %599 = vmatprep.mubr.f32.mxu0 0.0
    %600 = vmatmul.mubr.f32.gmra.mrb[0].mxu0 %v219
    %v601 = vpop.f32.mrb[0].mxu0
    %v602 = vadd.f32 %v363, %v601
    %v603 = vpop.f32.mrb[0].mxu0
    %v604 = vadd.f32 %v367, %v603
    %605 = vmatprep.mubr.f32.mxu0 0.0
    %606 = vmatmul.mubr.f32.gmra.mrb[0].mxu0 %v220
    %v607 = vpop.f32.mrb[0].mxu0
    %v608 = vadd.f32 %v363, %v607
    %v609 = vpop.f32.mrb[0].mxu0
    %v610 = vadd.f32 %v367, %v609
    %611 = vmatprep.mubr.f32.mxu0 0.0
    %612 = vmatmul.mubr.f32.gmra.mrb[0].mxu0 %v221
    %v613 = vpop.f32.mrb[0].mxu0
    %v614 = vadd.f32 %v363, %v613
    %v615 = vpop.f32.mrb[0].mxu0
    %v616 = vadd.f32 %v367, %v615
    %617 = vdwg.mxu0
    %618 = vmatprep.subr.mxu0 %v227
    %619 = vmatpush1.msra.mxu0 %v226
    %620 = vmatprep.subr.mxu0 %v235
    %621 = vmatpush1.msra.mxu0 %v234
    %622 = vmatprep.subr.mxu0 %v243
    %623 = vmatpush1.msra.mxu0 %v242
    %624 = vmatprep.subr.mxu0 %v251
    %625 = vmatpush1.msra.mxu0 %v250
    %626 = vmatprep.subr.mxu0 %v259
    %627 = vmatpush1.msra.mxu0 %v258
    %628 = vmatprep.subr.mxu0 %v267
    %629 = vmatpush1.msra.mxu0 %v266
    %630 = vmatprep.subr.mxu0 %v275
    %631 = vmatpush1.msra.mxu0 %v274
    %632 = vmatprep.subr.mxu0 %v283
    %633 = vmatpush1.msra.mxu0 %v282
    %634 = vmatprep.subr.mxu0 %v291
    %635 = vmatpush1.msra.mxu0 %v290
    %636 = vmatprep.subr.mxu0 %v299
    %637 = vmatpush1.msra.mxu0 %v298
    %638 = vmatprep.subr.mxu0 %v307
    %639 = vmatpush1.msra.mxu0 %v306
    %640 = vmatprep.subr.mxu0 %v315
    %641 = vmatpush1.msra.mxu0 %v314
    %642 = vmatprep.subr.mxu0 %v323
    %643 = vmatpush1.msra.mxu0 %v322
    %644 = vmatprep.subr.mxu0 %v331
    %645 = vmatpush1.msra.mxu0 %v330
    %646 = vmatprep.subr.mxu0 %v339
    %647 = vmatpush1.msra.mxu0 %v338
    %648 = vmatprep.subr.mxu0 %v347
    %649 = vmatpush1.msra.mxu0 %v346
    %650 = vmatprep.subr.mxu0 0.0
    %651 = vmatpush1.msra.mxu0 0.0
    %652 = vmatprep.subr.mxu0 0.0
    %653 = vmatpush1.msra.mxu0 0.0
    %654 = vmatprep.subr.mxu0 0.0
    %655 = vmatpush1.msra.mxu0 0.0
    %656 = vmatprep.subr.mxu0 0.0
    %657 = vmatpush1.msra.mxu0 0.0
    %658 = vmatprep.subr.mxu0 0.0
    %659 = vmatpush1.msra.mxu0 0.0
    %660 = vmatprep.subr.mxu0 0.0
    %661 = vmatpush1.msra.mxu0 0.0
    %662 = vmatprep.subr.mxu0 0.0
    %663 = vmatpush1.msra.mxu0 0.0
    %664 = vmatprep.subr.mxu0 0.0
    %665 = vmatpush1.msra.mxu0 0.0
    %666 = vmatprep.subr.mxu0 0.0
    %667 = vmatpush1.msra.mxu0 0.0
    %668 = vmatprep.subr.mxu0 0.0
    %669 = vmatpush1.msra.mxu0 0.0
    %670 = vmatprep.subr.mxu0 0.0
    %671 = vmatpush1.msra.mxu0 0.0
    %672 = vmatprep.subr.mxu0 0.0
    %673 = vmatpush1.msra.mxu0 0.0
    %674 = vmatprep.subr.mxu0 0.0
    %675 = vmatpush1.msra.mxu0 0.0
    %676 = vmatprep.subr.mxu0 0.0
    %677 = vmatpush1.msra.mxu0 0.0
    %678 = vmatprep.subr.mxu0 0.0
    %679 = vmatpush1.msra.mxu0 0.0
    %680 = vmatprep.subr.mxu0 0.0
    %681 = vmatpush1.msra.mxu0 0.0
    %682 = vmatprep.mubr.f32.mxu0 0.0
    %683 = vmatmul.mubr.f32.gmra.mrb[0].mxu0 %v214
    %v684 = vpop.f32.mrb[0].mxu0
    %v685 = vadd.f32 %v371, %v684
    %v686 = vpop.f32.mrb[0].mxu0
    %v687 = vadd.f32 %v375, %v686
    %688 = vmatprep.mubr.f32.mxu0 0.0
    %689 = vmatmul.mubr.f32.gmra.mrb[0].mxu0 %v215
    %v690 = vpop.f32.mrb[0].mxu0
    %v691 = vadd.f32 %v371, %v690
    %v692 = vpop.f32.mrb[0].mxu0
    %v693 = vadd.f32 %v375, %v692
    %694 = vmatprep.mubr.f32.mxu0 0.0
    %695 = vmatmul.mubr.f32.gmra.mrb[0].mxu0 %v216
    %v696 = vpop.f32.mrb[0].mxu0
    %v697 = vadd.f32 %v371, %v696
    %v698 = vpop.f32.mrb[0].mxu0
    %v699 = vadd.f32 %v375, %v698
    %700 = vmatprep.mubr.f32.mxu0 0.0
    %701 = vmatmul.mubr.f32.gmra.mrb[0].mxu0 %v217
    %v702 = vpop.f32.mrb[0].mxu0
    %v703 = vadd.f32 %v371, %v702
    %v704 = vpop.f32.mrb[0].mxu0
    %v705 = vadd.f32 %v375, %v704
    %706 = vmatprep.mubr.f32.mxu0 0.0
    %707 = vmatmul.mubr.f32.gmra.mrb[0].mxu0 %v218
    %v708 = vpop.f32.mrb[0].mxu0
    %v709 = vadd.f32 %v371, %v708
    %v710 = vpop.f32.mrb[0].mxu0
    %v711 = vadd.f32 %v375, %v710
    %712 = vmatprep.mubr.f32.mxu0 0.0
    %713 = vmatmul.mubr.f32.gmra.mrb[0].mxu0 %v219
    %v714 = vpop.f32.mrb[0].mxu0
    %v715 = vadd.f32 %v371, %v714
    %v716 = vpop.f32.mrb[0].mxu0
    %v717 = vadd.f32 %v375, %v716
    %718 = vmatprep.mubr.f32.mxu0 0.0
    %719 = vmatmul.mubr.f32.gmra.mrb[0].mxu0 %v220
    %v720 = vpop.f32.mrb[0].mxu0
    %v721 = vadd.f32 %v371, %v720
    %v722 = vpop.f32.mrb[0].mxu0
    %v723 = vadd.f32 %v375, %v722
    %724 = vmatprep.mubr.f32.mxu0 0.0
    %725 = vmatmul.mubr.f32.gmra.mrb[0].mxu0 %v221
    %v726 = vpop.f32.mrb[0].mxu0
    %v727 = vadd.f32 %v371, %v726
    %v728 = vpop.f32.mrb[0].mxu0
    %v729 = vadd.f32 %v375, %v728
    %730 = vdwg.mxu0
    %731 = vmatprep.subr.mxu0 %v229
    %732 = vmatpush1.msra.mxu0 %v228
    %733 = vmatprep.subr.mxu0 %v237
    %734 = vmatpush1.msra.mxu0 %v236
    %735 = vmatprep.subr.mxu0 %v245
    %736 = vmatpush1.msra.mxu0 %v244
    %737 = vmatprep.subr.mxu0 %v253
    %738 = vmatpush1.msra.mxu0 %v252
    %739 = vmatprep.subr.mxu0 %v261
    %740 = vmatpush1.msra.mxu0 %v260
    %741 = vmatprep.subr.mxu0 %v269
    %742 = vmatpush1.msra.mxu0 %v268
    %743 = vmatprep.subr.mxu0 %v277
    %744 = vmatpush1.msra.mxu0 %v276
    %745 = vmatprep.subr.mxu0 %v285
    %746 = vmatpush1.msra.mxu0 %v284
    %747 = vmatprep.subr.mxu0 %v293
    %748 = vmatpush1.msra.mxu0 %v292
    %749 = vmatprep.subr.mxu0 %v301
    %750 = vmatpush1.msra.mxu0 %v300
    %751 = vmatprep.subr.mxu0 %v309
    %752 = vmatpush1.msra.mxu0 %v308
    %753 = vmatprep.subr.mxu0 %v317
    %754 = vmatpush1.msra.mxu0 %v316
    %755 = vmatprep.subr.mxu0 %v325
    %756 = vmatpush1.msra.mxu0 %v324
    %757 = vmatprep.subr.mxu0 %v333
    %758 = vmatpush1.msra.mxu0 %v332
    %759 = vmatprep.subr.mxu0 %v341
    %760 = vmatpush1.msra.mxu0 %v340
    %761 = vmatprep.subr.mxu0 %v349
    %762 = vmatpush1.msra.mxu0 %v348
    %763 = vmatprep.subr.mxu0 0.0
    %764 = vmatpush1.msra.mxu0 0.0
    %765 = vmatprep.subr.mxu0 0.0
    %766 = vmatpush1.msra.mxu0 0.0
    %767 = vmatprep.subr.mxu0 0.0
    %768 = vmatpush1.msra.mxu0 0.0
    %769 = vmatprep.subr.mxu0 0.0
    %770 = vmatpush1.msra.mxu0 0.0
    %771 = vmatprep.subr.mxu0 0.0
    %772 = vmatpush1.msra.mxu0 0.0
    %773 = vmatprep.subr.mxu0 0.0
    %774 = vmatpush1.msra.mxu0 0.0
    %775 = vmatprep.subr.mxu0 0.0
    %776 = vmatpush1.msra.mxu0 0.0
    %777 = vmatprep.subr.mxu0 0.0
    %778 = vmatpush1.msra.mxu0 0.0
    %779 = vmatprep.subr.mxu0 0.0
    %780 = vmatpush1.msra.mxu0 0.0
    %781 = vmatprep.subr.mxu0 0.0
    %782 = vmatpush1.msra.mxu0 0.0
    %783 = vmatprep.subr.mxu0 0.0
    %784 = vmatpush1.msra.mxu0 0.0
    %785 = vmatprep.subr.mxu0 0.0
    %786 = vmatpush1.msra.mxu0 0.0
    %787 = vmatprep.subr.mxu0 0.0
    %788 = vmatpush1.msra.mxu0 0.0
    %789 = vmatprep.subr.mxu0 0.0
    %790 = vmatpush1.msra.mxu0 0.0
    %791 = vmatprep.subr.mxu0 0.0
    %792 = vmatpush1.msra.mxu0 0.0
    %793 = vmatprep.subr.mxu0 0.0
    %794 = vmatpush1.msra.mxu0 0.0
    %795 = vmatprep.mubr.f32.mxu0 0.0
    %796 = vmatmul.mubr.f32.gmra.mrb[0].mxu0 %v214
    %v797 = vpop.f32.mrb[0].mxu0
    %v798 = vadd.f32 %v379, %v797
    %v799 = vpop.f32.mrb[0].mxu0
    %v800 = vadd.f32 %v383, %v799
    %801 = vmatprep.mubr.f32.mxu0 0.0
    %802 = vmatmul.mubr.f32.gmra.mrb[0].mxu0 %v215
    %v803 = vpop.f32.mrb[0].mxu0
    %v804 = vadd.f32 %v379, %v803
    %v805 = vpop.f32.mrb[0].mxu0
    %v806 = vadd.f32 %v383, %v805
    %807 = vmatprep.mubr.f32.mxu0 0.0
    %808 = vmatmul.mubr.f32.gmra.mrb[0].mxu0 %v216
    %v809 = vpop.f32.mrb[0].mxu0
    %v810 = vadd.f32 %v379, %v809
    %v811 = vpop.f32.mrb[0].mxu0
    %v812 = vadd.f32 %v383, %v811
    %813 = vmatprep.mubr.f32.mxu0 0.0
    %814 = vmatmul.mubr.f32.gmra.mrb[0].mxu0 %v217
    %v815 = vpop.f32.mrb[0].mxu0
    %v816 = vadd.f32 %v379, %v815
    %v817 = vpop.f32.mrb[0].mxu0
    %v818 = vadd.f32 %v383, %v817
    %819 = vmatprep.mubr.f32.mxu0 0.0
    %820 = vmatmul.mubr.f32.gmra.mrb[0].mxu0 %v218
    %v821 = vpop.f32.mrb[0].mxu0
    %v822 = vadd.f32 %v379, %v821
    %v823 = vpop.f32.mrb[0].mxu0
    %v824 = vadd.f32 %v383, %v823
    %825 = vmatprep.mubr.f32.mxu0 0.0
    %826 = vmatmul.mubr.f32.gmra.mrb[0].mxu0 %v219
    %v827 = vpop.f32.mrb[0].mxu0
    %v828 = vadd.f32 %v379, %v827
    %v829 = vpop.f32.mrb[0].mxu0
    %v830 = vadd.f32 %v383, %v829
    %831 = vmatprep.mubr.f32.mxu0 0.0
    %832 = vmatmul.mubr.f32.gmra.mrb[0].mxu0 %v220
    %v833 = vpop.f32.mrb[0].mxu0
    %v834 = vadd.f32 %v379, %v833
    %v835 = vpop.f32.mrb[0].mxu0
    %v836 = vadd.f32 %v383, %v835
    %837 = vmatprep.mubr.f32.mxu0 0.0
    %838 = vmatmul.mubr.f32.gmra.mrb[0].mxu0 %v221
    %v839 = vpop.f32.mrb[0].mxu0
    %v840 = vadd.f32 %v379, %v839
    %v841 = vpop.f32.mrb[0].mxu0
    %v842 = vadd.f32 %v383, %v841
    %843 = vdwg.mxu0
    %844 = vst [vmem:[#allocation2] sm:$0xff] %v459
    %845 = vst [vmem:[#allocation2 + $0x8] sm:$0xff] %v461
    %846 = vst [vmem:[#allocation2 + $0x10] sm:$0xff] %v572
    %847 = vst [vmem:[#allocation2 + $0x18] sm:$0xff] %v574
    %848 = vst [vmem:[#allocation2 + $0x20] sm:$0xff] %v685
    %849 = vst [vmem:[#allocation2 + $0x28] sm:$0xff] %v687
    %850 = vst [vmem:[#allocation2 + $0x30] sm:$0xff] %v798
    %851 = vst [vmem:[#allocation2 + $0x38] sm:$0xff] %v800
    %852 = vst [vmem:[#allocation2 + $0x40] sm:$0xff] %v465
    %853 = vst [vmem:[#allocation2 + $0x48] sm:$0xff] %v467
    %854 = vst [vmem:[#allocation2 + $0x50] sm:$0xff] %v578
    %855 = vst [vmem:[#allocation2 + $0x58] sm:$0xff] %v580
    %856 = vst [vmem:[#allocation2 + $0x60] sm:$0xff] %v691
    %857 = vst [vmem:[#allocation2 + $0x68] sm:$0xff] %v693
    %858 = vst [vmem:[#allocation2 + $0x70] sm:$0xff] %v804
    %859 = vst [vmem:[#allocation2 + $0x78] sm:$0xff] %v806
    %860 = vst [vmem:[#allocation2 + $0x80] sm:$0xff] %v471
    %861 = vst [vmem:[#allocation2 + $0x88] sm:$0xff] %v473
    %862 = vst [vmem:[#allocation2 + $0x90] sm:$0xff] %v584
    %863 = vst [vmem:[#allocation2 + $0x98] sm:$0xff] %v586
    %864 = vst [vmem:[#allocation2 + $0xa0] sm:$0xff] %v697
    %865 = vst [vmem:[#allocation2 + $0xa8] sm:$0xff] %v699
    %866 = vst [vmem:[#allocation2 + $0xb0] sm:$0xff] %v810
    %867 = vst [vmem:[#allocation2 + $0xb8] sm:$0xff] %v812
    %868 = vst [vmem:[#allocation2 + $0xc0] sm:$0xff] %v477
    %869 = vst [vmem:[#allocation2 + $0xc8] sm:$0xff] %v479
    %870 = vst [vmem:[#allocation2 + $0xd0] sm:$0xff] %v590
    %871 = vst [vmem:[#allocation2 + $0xd8] sm:$0xff] %v592
    %872 = vst [vmem:[#allocation2 + $0xe0] sm:$0xff] %v703
    %873 = vst [vmem:[#allocation2 + $0xe8] sm:$0xff] %v705
    %874 = vst [vmem:[#allocation2 + $0xf0] sm:$0xff] %v816
    %875 = vst [vmem:[#allocation2 + $0xf8] sm:$0xff] %v818
    %876 = vst [vmem:[#allocation2 + $0x100] sm:$0xff] %v483
    %877 = vst [vmem:[#allocation2 + $0x108] sm:$0xff] %v485
    %878 = vst [vmem:[#allocation2 + $0x110] sm:$0xff] %v596
    %879 = vst [vmem:[#allocation2 + $0x118] sm:$0xff] %v598
    %880 = vst [vmem:[#allocation2 + $0x120] sm:$0xff] %v709
    %881 = vst [vmem:[#allocation2 + $0x128] sm:$0xff] %v711
    %882 = vst [vmem:[#allocation2 + $0x130] sm:$0xff] %v822
    %883 = vst [vmem:[#allocation2 + $0x138] sm:$0xff] %v824
    %884 = vst [vmem:[#allocation2 + $0x140] sm:$0xff] %v489
    %885 = vst [vmem:[#allocation2 + $0x148] sm:$0xff] %v491
    %886 = vst [vmem:[#allocation2 + $0x150] sm:$0xff] %v602
    %887 = vst [vmem:[#allocation2 + $0x158] sm:$0xff] %v604
    %888 = vst [vmem:[#allocation2 + $0x160] sm:$0xff] %v715
    %889 = vst [vmem:[#allocation2 + $0x168] sm:$0xff] %v717
    %890 = vst [vmem:[#allocation2 + $0x170] sm:$0xff] %v828
    %891 = vst [vmem:[#allocation2 + $0x178] sm:$0xff] %v830
    %892 = vst [vmem:[#allocation2 + $0x180] sm:$0xff] %v495
    %893 = vst [vmem:[#allocation2 + $0x188] sm:$0xff] %v497
    %894 = vst [vmem:[#allocation2 + $0x190] sm:$0xff] %v608
    %895 = vst [vmem:[#allocation2 + $0x198] sm:$0xff] %v610
    %896 = vst [vmem:[#allocation2 + $0x1a0] sm:$0xff] %v721
    %897 = vst [vmem:[#allocation2 + $0x1a8] sm:$0xff] %v723
    %898 = vst [vmem:[#allocation2 + $0x1b0] sm:$0xff] %v834
    %899 = vst [vmem:[#allocation2 + $0x1b8] sm:$0xff] %v836
    %900 = vst [vmem:[#allocation2 + $0x1c0] sm:$0xff] %v501
    %901 = vst [vmem:[#allocation2 + $0x1c8] sm:$0xff] %v503
    %902 = vst [vmem:[#allocation2 + $0x1d0] sm:$0xff] %v614
    %903 = vst [vmem:[#allocation2 + $0x1d8] sm:$0xff] %v616
    %904 = vst [vmem:[#allocation2 + $0x1e0] sm:$0xff] %v727
    %905 = vst [vmem:[#allocation2 + $0x1e8] sm:$0xff] %v729
    %906 = vst [vmem:[#allocation2 + $0x1f0] sm:$0xff] %v840
    %907 = vst [vmem:[#allocation2 + $0x1f8] sm:$0xff] %v842
    %v908 = vld [vmem:[#allocation9] sm:$0xff]
    %v909 = vld [vmem:[#allocation9 + $0x8] sm:$0xff]
    %910 = vst [vmem:[#allocation4] sm:$0xff] %v908
    %911 = vst [vmem:[#allocation4 + $0x8] sm:$0xff] %v909
    %v912 = vld [vmem:[#allocation11] sm:$0xff]
    %v913 = vld [vmem:[#allocation11 + $0x8] sm:$0xff]
    %914 = vst [vmem:[#allocation5] sm:$0xff] %v912
    %915 = vst [vmem:[#allocation5 + $0x8] sm:$0xff] %v913
    %v916 = vld [vmem:[#allocation17] sm:$0xff]
    %v917 = vld [vmem:[#allocation17 + $0x8] sm:$0xff]
    %v918 = vld [vmem:[#allocation17 + $0x10] sm:$0xff]
    %v919 = vld [vmem:[#allocation17 + $0x18] sm:$0xff]
    %v920 = vld [vmem:[#allocation17 + $0x20] sm:$0xff]
    %v921 = vld [vmem:[#allocation17 + $0x28] sm:$0xff]
    %v922 = vld [vmem:[#allocation17 + $0x30] sm:$0xff]
    %v923 = vld [vmem:[#allocation17 + $0x38] sm:$0xff]
    %v924 = vld [vmem:[#allocation17 + $0x40] sm:$0xff]
    %v925 = vld [vmem:[#allocation17 + $0x48] sm:$0xff]
    %v926 = vld [vmem:[#allocation17 + $0x50] sm:$0xff]
    %v927 = vld [vmem:[#allocation17 + $0x58] sm:$0xff]
    %v928 = vld [vmem:[#allocation17 + $0x60] sm:$0xff]
    %v929 = vld [vmem:[#allocation17 + $0x68] sm:$0xff]
    %v930 = vld [vmem:[#allocation17 + $0x70] sm:$0xff]
    %v931 = vld [vmem:[#allocation17 + $0x78] sm:$0xff]
    %v932 = vld [vmem:[#allocation17 + $0x80] sm:$0xff]
    %v933 = vld [vmem:[#allocation17 + $0x88] sm:$0xff]
    %v934 = vld [vmem:[#allocation17 + $0x90] sm:$0xff]
    %v935 = vld [vmem:[#allocation17 + $0x98] sm:$0xff]
    %v936 = vld [vmem:[#allocation17 + $0xa0] sm:$0xff]
    %v937 = vld [vmem:[#allocation17 + $0xa8] sm:$0xff]
    %v938 = vld [vmem:[#allocation17 + $0xb0] sm:$0xff]
    %v939 = vld [vmem:[#allocation17 + $0xb8] sm:$0xff]
    %v940 = vld [vmem:[#allocation17 + $0xc0] sm:$0xff]
    %v941 = vld [vmem:[#allocation17 + $0xc8] sm:$0xff]
    %v942 = vld [vmem:[#allocation17 + $0xd0] sm:$0xff]
    %v943 = vld [vmem:[#allocation17 + $0xd8] sm:$0xff]
    %v944 = vld [vmem:[#allocation17 + $0xe0] sm:$0xff]
    %v945 = vld [vmem:[#allocation17 + $0xe8] sm:$0xff]
    %v946 = vld [vmem:[#allocation17 + $0xf0] sm:$0xff]
    %v947 = vld [vmem:[#allocation17 + $0xf8] sm:$0xff]
    %v948 = vld [vmem:[#allocation17 + $0x100] sm:$0xff]
    %v949 = vld [vmem:[#allocation17 + $0x108] sm:$0xff]
    %v950 = vld [vmem:[#allocation17 + $0x110] sm:$0xff]
    %v951 = vld [vmem:[#allocation17 + $0x118] sm:$0xff]
    %v952 = vld [vmem:[#allocation17 + $0x120] sm:$0xff]
    %v953 = vld [vmem:[#allocation17 + $0x128] sm:$0xff]
    %v954 = vld [vmem:[#allocation17 + $0x130] sm:$0xff]
    %v955 = vld [vmem:[#allocation17 + $0x138] sm:$0xff]
    %v956 = vld [vmem:[#allocation17 + $0x140] sm:$0xff]
    %v957 = vld [vmem:[#allocation17 + $0x148] sm:$0xff]
    %v958 = vld [vmem:[#allocation17 + $0x150] sm:$0xff]
    %v959 = vld [vmem:[#allocation17 + $0x158] sm:$0xff]
    %v960 = vld [vmem:[#allocation17 + $0x160] sm:$0xff]
    %v961 = vld [vmem:[#allocation17 + $0x168] sm:$0xff]
    %v962 = vld [vmem:[#allocation17 + $0x170] sm:$0xff]
    %v963 = vld [vmem:[#allocation17 + $0x178] sm:$0xff]
    %v964 = vld [vmem:[#allocation17 + $0x180] sm:$0xff]
    %v965 = vld [vmem:[#allocation17 + $0x188] sm:$0xff]
    %v966 = vld [vmem:[#allocation17 + $0x190] sm:$0xff]
    %v967 = vld [vmem:[#allocation17 + $0x198] sm:$0xff]
    %v968 = vld [vmem:[#allocation17 + $0x1a0] sm:$0xff]
    %v969 = vld [vmem:[#allocation17 + $0x1a8] sm:$0xff]
    %v970 = vld [vmem:[#allocation17 + $0x1b0] sm:$0xff]
    %v971 = vld [vmem:[#allocation17 + $0x1b8] sm:$0xff]
    %v972 = vld [vmem:[#allocation17 + $0x1c0] sm:$0xff]
    %v973 = vld [vmem:[#allocation17 + $0x1c8] sm:$0xff]
    %v974 = vld [vmem:[#allocation17 + $0x1d0] sm:$0xff]
    %v975 = vld [vmem:[#allocation17 + $0x1d8] sm:$0xff]
    %v976 = vld [vmem:[#allocation17 + $0x1e0] sm:$0xff]
    %v977 = vld [vmem:[#allocation17 + $0x1e8] sm:$0xff]
    %v978 = vld [vmem:[#allocation17 + $0x1f0] sm:$0xff]
    %v979 = vld [vmem:[#allocation17 + $0x1f8] sm:$0xff]
    %v980 = vld [vmem:[#allocation17 + $0x200] sm:$0xff]
    %v981 = vld [vmem:[#allocation17 + $0x208] sm:$0xff]
    %v982 = vld [vmem:[#allocation17 + $0x210] sm:$0xff]
    %v983 = vld [vmem:[#allocation17 + $0x218] sm:$0xff]
    %v984 = vld [vmem:[#allocation17 + $0x220] sm:$0xff]
    %v985 = vld [vmem:[#allocation17 + $0x228] sm:$0xff]
    %v986 = vld [vmem:[#allocation17 + $0x230] sm:$0xff]
    %v987 = vld [vmem:[#allocation17 + $0x238] sm:$0xff]
    %v988 = vld [vmem:[#allocation17 + $0x240] sm:$0xff]
    %v989 = vld [vmem:[#allocation17 + $0x248] sm:$0xff]
    %v990 = vld [vmem:[#allocation17 + $0x250] sm:$0xff]
    %v991 = vld [vmem:[#allocation17 + $0x258] sm:$0xff]
    %v992 = vld [vmem:[#allocation17 + $0x260] sm:$0xff]
    %v993 = vld [vmem:[#allocation17 + $0x268] sm:$0xff]
    %v994 = vld [vmem:[#allocation17 + $0x270] sm:$0xff]
    %v995 = vld [vmem:[#allocation17 + $0x278] sm:$0xff]
    %v996 = vld [vmem:[#allocation17 + $0x280] sm:$0xff]
    %v997 = vld [vmem:[#allocation17 + $0x288] sm:$0xff]
    %v998 = vld [vmem:[#allocation17 + $0x290] sm:$0xff]
    %v999 = vld [vmem:[#allocation17 + $0x298] sm:$0xff]
    %v1000 = vld [vmem:[#allocation17 + $0x2a0] sm:$0xff]
    %v1001 = vld [vmem:[#allocation17 + $0x2a8] sm:$0xff]
    %v1002 = vld [vmem:[#allocation17 + $0x2b0] sm:$0xff]
    %v1003 = vld [vmem:[#allocation17 + $0x2b8] sm:$0xff]
    %v1004 = vld [vmem:[#allocation17 + $0x2c0] sm:$0xff]
    %v1005 = vld [vmem:[#allocation17 + $0x2c8] sm:$0xff]
    %v1006 = vld [vmem:[#allocation17 + $0x2d0] sm:$0xff]
    %v1007 = vld [vmem:[#allocation17 + $0x2d8] sm:$0xff]
    %v1008 = vld [vmem:[#allocation17 + $0x2e0] sm:$0xff]
    %v1009 = vld [vmem:[#allocation17 + $0x2e8] sm:$0xff]
    %v1010 = vld [vmem:[#allocation17 + $0x2f0] sm:$0xff]
    %v1011 = vld [vmem:[#allocation17 + $0x2f8] sm:$0xff]
    %v1012 = vld [vmem:[#allocation17 + $0x300] sm:$0xff]
    %v1013 = vld [vmem:[#allocation17 + $0x308] sm:$0xff]
    %v1014 = vld [vmem:[#allocation17 + $0x310] sm:$0xff]
    %v1015 = vld [vmem:[#allocation17 + $0x318] sm:$0xff]
    %v1016 = vld [vmem:[#allocation17 + $0x320] sm:$0xff]
    %v1017 = vld [vmem:[#allocation17 + $0x328] sm:$0xff]
    %v1018 = vld [vmem:[#allocation17 + $0x330] sm:$0xff]
    %v1019 = vld [vmem:[#allocation17 + $0x338] sm:$0xff]
    %v1020 = vld [vmem:[#allocation17 + $0x340] sm:$0xff]
    %v1021 = vld [vmem:[#allocation17 + $0x348] sm:$0xff]
    %v1022 = vld [vmem:[#allocation17 + $0x350] sm:$0xff]
    %v1023 = vld [vmem:[#allocation17 + $0x358] sm:$0xff]
    %v1024 = vld [vmem:[#allocation17 + $0x360] sm:$0xff]
    %v1025 = vld [vmem:[#allocation17 + $0x368] sm:$0xff]
    %v1026 = vld [vmem:[#allocation17 + $0x370] sm:$0xff]
    %v1027 = vld [vmem:[#allocation17 + $0x378] sm:$0xff]
    %v1028 = vld [vmem:[#allocation17 + $0x380] sm:$0xff]
    %v1029 = vld [vmem:[#allocation17 + $0x388] sm:$0xff]
    %v1030 = vld [vmem:[#allocation17 + $0x390] sm:$0xff]
    %v1031 = vld [vmem:[#allocation17 + $0x398] sm:$0xff]
    %v1032 = vld [vmem:[#allocation17 + $0x3a0] sm:$0xff]
    %v1033 = vld [vmem:[#allocation17 + $0x3a8] sm:$0xff]
    %v1034 = vld [vmem:[#allocation17 + $0x3b0] sm:$0xff]
    %v1035 = vld [vmem:[#allocation17 + $0x3b8] sm:$0xff]
    %v1036 = vld [vmem:[#allocation17 + $0x3c0] sm:$0xff]
    %v1037 = vld [vmem:[#allocation17 + $0x3c8] sm:$0xff]
    %v1038 = vld [vmem:[#allocation17 + $0x3d0] sm:$0xff]
    %v1039 = vld [vmem:[#allocation17 + $0x3d8] sm:$0xff]
    %v1040 = vld [vmem:[#allocation17 + $0x3e0] sm:$0xff]
    %v1041 = vld [vmem:[#allocation17 + $0x3e8] sm:$0xff]
    %v1042 = vld [vmem:[#allocation17 + $0x3f0] sm:$0xff]
    %v1043 = vld [vmem:[#allocation17 + $0x3f8] sm:$0xff]
    %v1044 = vld [vmem:[#allocation17 + $0x400] sm:$0xff]
    %v1045 = vld [vmem:[#allocation17 + $0x408] sm:$0xff]
    %v1046 = vld [vmem:[#allocation17 + $0x410] sm:$0xff]
    %v1047 = vld [vmem:[#allocation17 + $0x418] sm:$0xff]
    %v1048 = vld [vmem:[#allocation17 + $0x420] sm:$0xff]
    %v1049 = vld [vmem:[#allocation17 + $0x428] sm:$0xff]
    %v1050 = vld [vmem:[#allocation17 + $0x430] sm:$0xff]
    %v1051 = vld [vmem:[#allocation17 + $0x438] sm:$0xff]
    %v1052 = vld [vmem:[#allocation17 + $0x440] sm:$0xff]
    %v1053 = vld [vmem:[#allocation17 + $0x448] sm:$0xff]
    %v1054 = vld [vmem:[#allocation17 + $0x450] sm:$0xff]
    %v1055 = vld [vmem:[#allocation17 + $0x458] sm:$0xff]
    %v1056 = vld [vmem:[#allocation17 + $0x460] sm:$0xff]
    %v1057 = vld [vmem:[#allocation17 + $0x468] sm:$0xff]
    %v1058 = vld [vmem:[#allocation17 + $0x470] sm:$0xff]
    %v1059 = vld [vmem:[#allocation17 + $0x478] sm:$0xff]
    %v1060 = vld [vmem:[#allocation17 + $0x480] sm:$0xff]
    %v1061 = vld [vmem:[#allocation17 + $0x488] sm:$0xff]
    %v1062 = vld [vmem:[#allocation17 + $0x490] sm:$0xff]
    %v1063 = vld [vmem:[#allocation17 + $0x498] sm:$0xff]
    %v1064 = vld [vmem:[#allocation17 + $0x4a0] sm:$0xff]
    %v1065 = vld [vmem:[#allocation17 + $0x4a8] sm:$0xff]
    %v1066 = vld [vmem:[#allocation17 + $0x4b0] sm:$0xff]
    %v1067 = vld [vmem:[#allocation17 + $0x4b8] sm:$0xff]
    %v1068 = vld [vmem:[#allocation17 + $0x4c0] sm:$0xff]
    %v1069 = vld [vmem:[#allocation17 + $0x4c8] sm:$0xff]
    %v1070 = vld [vmem:[#allocation17 + $0x4d0] sm:$0xff]
    %v1071 = vld [vmem:[#allocation17 + $0x4d8] sm:$0xff]
    %v1072 = vld [vmem:[#allocation17 + $0x4e0] sm:$0xff]
    %v1073 = vld [vmem:[#allocation17 + $0x4e8] sm:$0xff]
    %v1074 = vld [vmem:[#allocation17 + $0x4f0] sm:$0xff]
    %v1075 = vld [vmem:[#allocation17 + $0x4f8] sm:$0xff]
    %v1076 = vld [vmem:[#allocation17 + $0x500] sm:$0xff]
    %v1077 = vld [vmem:[#allocation17 + $0x508] sm:$0xff]
    %v1078 = vld [vmem:[#allocation17 + $0x510] sm:$0xff]
    %v1079 = vld [vmem:[#allocation17 + $0x518] sm:$0xff]
    %v1080 = vld [vmem:[#allocation17 + $0x520] sm:$0xff]
    %v1081 = vld [vmem:[#allocation17 + $0x528] sm:$0xff]
    %v1082 = vld [vmem:[#allocation17 + $0x530] sm:$0xff]
    %v1083 = vld [vmem:[#allocation17 + $0x538] sm:$0xff]
    %v1084 = vld [vmem:[#allocation17 + $0x540] sm:$0xff]
    %v1085 = vld [vmem:[#allocation17 + $0x548] sm:$0xff]
    %v1086 = vld [vmem:[#allocation17 + $0x550] sm:$0xff]
    %v1087 = vld [vmem:[#allocation17 + $0x558] sm:$0xff]
    %v1088 = vld [vmem:[#allocation17 + $0x560] sm:$0xff]
    %v1089 = vld [vmem:[#allocation17 + $0x568] sm:$0xff]
    %v1090 = vld [vmem:[#allocation17 + $0x570] sm:$0xff]
    %v1091 = vld [vmem:[#allocation17 + $0x578] sm:$0xff]
    %v1092 = vld [vmem:[#allocation17 + $0x580] sm:$0xff]
    %v1093 = vld [vmem:[#allocation17 + $0x588] sm:$0xff]
    %v1094 = vld [vmem:[#allocation17 + $0x590] sm:$0xff]
    %v1095 = vld [vmem:[#allocation17 + $0x598] sm:$0xff]
    %v1096 = vld [vmem:[#allocation17 + $0x5a0] sm:$0xff]
    %v1097 = vld [vmem:[#allocation17 + $0x5a8] sm:$0xff]
    %v1098 = vld [vmem:[#allocation17 + $0x5b0] sm:$0xff]
    %v1099 = vld [vmem:[#allocation17 + $0x5b8] sm:$0xff]
    %v1100 = vld [vmem:[#allocation17 + $0x5c0] sm:$0xff]
    %v1101 = vld [vmem:[#allocation17 + $0x5c8] sm:$0xff]
    %v1102 = vld [vmem:[#allocation17 + $0x5d0] sm:$0xff]
    %v1103 = vld [vmem:[#allocation17 + $0x5d8] sm:$0xff]
    %v1104 = vld [vmem:[#allocation17 + $0x5e0] sm:$0xff]
    %v1105 = vld [vmem:[#allocation17 + $0x5e8] sm:$0xff]
    %v1106 = vld [vmem:[#allocation17 + $0x5f0] sm:$0xff]
    %v1107 = vld [vmem:[#allocation17 + $0x5f8] sm:$0xff]
    %v1108 = vld [vmem:[#allocation17 + $0x600] sm:$0xff]
    %v1109 = vld [vmem:[#allocation17 + $0x608] sm:$0xff]
    %v1110 = vld [vmem:[#allocation17 + $0x610] sm:$0xff]
    %v1111 = vld [vmem:[#allocation17 + $0x618] sm:$0xff]
    %v1112 = vld [vmem:[#allocation17 + $0x620] sm:$0xff]
    %v1113 = vld [vmem:[#allocation17 + $0x628] sm:$0xff]
    %v1114 = vld [vmem:[#allocation17 + $0x630] sm:$0xff]
    %v1115 = vld [vmem:[#allocation17 + $0x638] sm:$0xff]
    %v1116 = vld [vmem:[#allocation17 + $0x640] sm:$0xff]
    %v1117 = vld [vmem:[#allocation17 + $0x648] sm:$0xff]
    %v1118 = vld [vmem:[#allocation17 + $0x650] sm:$0xff]
    %v1119 = vld [vmem:[#allocation17 + $0x658] sm:$0xff]
    %v1120 = vld [vmem:[#allocation17 + $0x660] sm:$0xff]
    %v1121 = vld [vmem:[#allocation17 + $0x668] sm:$0xff]
    %v1122 = vld [vmem:[#allocation17 + $0x670] sm:$0xff]
    %v1123 = vld [vmem:[#allocation17 + $0x678] sm:$0xff]
    %v1124 = vld [vmem:[#allocation17 + $0x680] sm:$0xff]
    %v1125 = vld [vmem:[#allocation17 + $0x688] sm:$0xff]
    %v1126 = vld [vmem:[#allocation17 + $0x690] sm:$0xff]
    %v1127 = vld [vmem:[#allocation17 + $0x698] sm:$0xff]
    %v1128 = vld [vmem:[#allocation17 + $0x6a0] sm:$0xff]
    %v1129 = vld [vmem:[#allocation17 + $0x6a8] sm:$0xff]
    %v1130 = vld [vmem:[#allocation17 + $0x6b0] sm:$0xff]
    %v1131 = vld [vmem:[#allocation17 + $0x6b8] sm:$0xff]
    %v1132 = vld [vmem:[#allocation17 + $0x6c0] sm:$0xff]
    %v1133 = vld [vmem:[#allocation17 + $0x6c8] sm:$0xff]
    %v1134 = vld [vmem:[#allocation17 + $0x6d0] sm:$0xff]
    %v1135 = vld [vmem:[#allocation17 + $0x6d8] sm:$0xff]
    %v1136 = vld [vmem:[#allocation17 + $0x6e0] sm:$0xff]
    %v1137 = vld [vmem:[#allocation17 + $0x6e8] sm:$0xff]
    %v1138 = vld [vmem:[#allocation17 + $0x6f0] sm:$0xff]
    %v1139 = vld [vmem:[#allocation17 + $0x6f8] sm:$0xff]
    %v1140 = vld [vmem:[#allocation17 + $0x700] sm:$0xff]
    %v1141 = vld [vmem:[#allocation17 + $0x708] sm:$0xff]
    %v1142 = vld [vmem:[#allocation17 + $0x710] sm:$0xff]
    %v1143 = vld [vmem:[#allocation17 + $0x718] sm:$0xff]
    %v1144 = vld [vmem:[#allocation17 + $0x720] sm:$0xff]
    %v1145 = vld [vmem:[#allocation17 + $0x728] sm:$0xff]
    %v1146 = vld [vmem:[#allocation17 + $0x730] sm:$0xff]
    %v1147 = vld [vmem:[#allocation17 + $0x738] sm:$0xff]
    %v1148 = vld [vmem:[#allocation17 + $0x740] sm:$0xff]
    %v1149 = vld [vmem:[#allocation17 + $0x748] sm:$0xff]
    %v1150 = vld [vmem:[#allocation17 + $0x750] sm:$0xff]
    %v1151 = vld [vmem:[#allocation17 + $0x758] sm:$0xff]
    %v1152 = vld [vmem:[#allocation17 + $0x760] sm:$0xff]
    %v1153 = vld [vmem:[#allocation17 + $0x768] sm:$0xff]
    %v1154 = vld [vmem:[#allocation17 + $0x770] sm:$0xff]
    %v1155 = vld [vmem:[#allocation17 + $0x778] sm:$0xff]
    %v1156 = vld [vmem:[#allocation17 + $0x780] sm:$0xff]
    %v1157 = vld [vmem:[#allocation17 + $0x788] sm:$0xff]
    %v1158 = vld [vmem:[#allocation17 + $0x790] sm:$0xff]
    %v1159 = vld [vmem:[#allocation17 + $0x798] sm:$0xff]
    %v1160 = vld [vmem:[#allocation17 + $0x7a0] sm:$0xff]
    %v1161 = vld [vmem:[#allocation17 + $0x7a8] sm:$0xff]
    %v1162 = vld [vmem:[#allocation17 + $0x7b0] sm:$0xff]
    %v1163 = vld [vmem:[#allocation17 + $0x7b8] sm:$0xff]
    %v1164 = vld [vmem:[#allocation17 + $0x7c0] sm:$0xff]
    %v1165 = vld [vmem:[#allocation17 + $0x7c8] sm:$0xff]
    %v1166 = vld [vmem:[#allocation17 + $0x7d0] sm:$0xff]
    %v1167 = vld [vmem:[#allocation17 + $0x7d8] sm:$0xff]
    %v1168 = vld [vmem:[#allocation17 + $0x7e0] sm:$0xff]
    %v1169 = vld [vmem:[#allocation17 + $0x7e8] sm:$0xff]
    %v1170 = vld [vmem:[#allocation17 + $0x7f0] sm:$0xff]
    %v1171 = vld [vmem:[#allocation17 + $0x7f8] sm:$0xff]
    %v1172 = vld [vmem:[#allocation4] sm:$0xff]
    %v1173 = vld [vmem:[#allocation4 + $0x8] sm:$0xff]
    %s1174 = smul.u32 0, 8
    %s1175 = smul.addr %s1174, 8
    %s1176 = scalar_lea.vmem [#allocation2], %s1175
    %v1177 = vld [vmem:[%s1176] sm:$0xff]
    %v1178 = vld [vmem:[%s1176 + $0x8] sm:$0xff]
    %v1179 = vld [vmem:[%s1176 + $0x10] sm:$0xff]
    %v1180 = vld [vmem:[%s1176 + $0x18] sm:$0xff]
    %v1181 = vld [vmem:[%s1176 + $0x20] sm:$0xff]
    %v1182 = vld [vmem:[%s1176 + $0x28] sm:$0xff]
    %v1183 = vld [vmem:[%s1176 + $0x30] sm:$0xff]
    %v1184 = vld [vmem:[%s1176 + $0x38] sm:$0xff]
    %1185 = vmatprep.subr.mxu0 %v917
    %1186 = vmatpush1.msra.mxu0 %v916
    %1187 = vmatprep.subr.mxu0 %v925
    %1188 = vmatpush1.msra.mxu0 %v924
    %1189 = vmatprep.subr.mxu0 %v933
    %1190 = vmatpush1.msra.mxu0 %v932
    %1191 = vmatprep.subr.mxu0 %v941
    %1192 = vmatpush1.msra.mxu0 %v940
    %1193 = vmatprep.subr.mxu0 %v949
    %1194 = vmatpush1.msra.mxu0 %v948
    %1195 = vmatprep.subr.mxu0 %v957
    %1196 = vmatpush1.msra.mxu0 %v956
    %1197 = vmatprep.subr.mxu0 %v965
    %1198 = vmatpush1.msra.mxu0 %v964
    %1199 = vmatprep.subr.mxu0 %v973
    %1200 = vmatpush1.msra.mxu0 %v972
    %1201 = vmatprep.subr.mxu0 %v981
    %1202 = vmatpush1.msra.mxu0 %v980
    %1203 = vmatprep.subr.mxu0 %v989
    %1204 = vmatpush1.msra.mxu0 %v988
    %1205 = vmatprep.subr.mxu0 %v997
    %1206 = vmatpush1.msra.mxu0 %v996
    %1207 = vmatprep.subr.mxu0 %v1005
    %1208 = vmatpush1.msra.mxu0 %v1004
    %1209 = vmatprep.subr.mxu0 %v1013
    %1210 = vmatpush1.msra.mxu0 %v1012
    %1211 = vmatprep.subr.mxu0 %v1021
    %1212 = vmatpush1.msra.mxu0 %v1020
    %1213 = vmatprep.subr.mxu0 %v1029
    %1214 = vmatpush1.msra.mxu0 %v1028
    %1215 = vmatprep.subr.mxu0 %v1037
    %1216 = vmatpush1.msra.mxu0 %v1036
    %1217 = vmatprep.subr.mxu0 %v1045
    %1218 = vmatpush1.msra.mxu0 %v1044
    %1219 = vmatprep.subr.mxu0 %v1053
    %1220 = vmatpush1.msra.mxu0 %v1052
    %1221 = vmatprep.subr.mxu0 %v1061
    %1222 = vmatpush1.msra.mxu0 %v1060
    %1223 = vmatprep.subr.mxu0 %v1069
    %1224 = vmatpush1.msra.mxu0 %v1068
    %1225 = vmatprep.subr.mxu0 %v1077
    %1226 = vmatpush1.msra.mxu0 %v1076
    %1227 = vmatprep.subr.mxu0 %v1085
    %1228 = vmatpush1.msra.mxu0 %v1084
    %1229 = vmatprep.subr.mxu0 %v1093
    %1230 = vmatpush1.msra.mxu0 %v1092
    %1231 = vmatprep.subr.mxu0 %v1101
    %1232 = vmatpush1.msra.mxu0 %v1100
    %1233 = vmatprep.subr.mxu0 %v1109
    %1234 = vmatpush1.msra.mxu0 %v1108
    %1235 = vmatprep.subr.mxu0 %v1117
    %1236 = vmatpush1.msra.mxu0 %v1116
    %1237 = vmatprep.subr.mxu0 %v1125
    %1238 = vmatpush1.msra.mxu0 %v1124
    %1239 = vmatprep.subr.mxu0 %v1133
    %1240 = vmatpush1.msra.mxu0 %v1132
    %1241 = vmatprep.subr.mxu0 %v1141
    %1242 = vmatpush1.msra.mxu0 %v1140
    %1243 = vmatprep.subr.mxu0 %v1149
    %1244 = vmatpush1.msra.mxu0 %v1148
    %1245 = vmatprep.subr.mxu0 %v1157
    %1246 = vmatpush1.msra.mxu0 %v1156
    %1247 = vmatprep.subr.mxu0 %v1165
    %1248 = vmatpush1.msra.mxu0 %v1164
    %1249 = vmatprep.mubr.f32.mxu0 %v1173
    %1250 = vmatmul.mubr.f32.gmra.mrb[0].mxu0 %v1172
    %v1251 = vpop.f32.mrb[0].mxu0
    %v1252 = vadd.f32 0.0, %v1251
    %v1253 = vpop.f32.mrb[0].mxu0
    %v1254 = vadd.f32 0.0, %v1253
    %1255 = vdwg.mxu0
    %1256 = vmatprep.subr.mxu0 %v919
    %1257 = vmatpush1.msra.mxu0 %v918
    %1258 = vmatprep.subr.mxu0 %v927
    %1259 = vmatpush1.msra.mxu0 %v926
    %1260 = vmatprep.subr.mxu0 %v935
    %1261 = vmatpush1.msra.mxu0 %v934
    %1262 = vmatprep.subr.mxu0 %v943
    %1263 = vmatpush1.msra.mxu0 %v942
    %1264 = vmatprep.subr.mxu0 %v951
    %1265 = vmatpush1.msra.mxu0 %v950
    %1266 = vmatprep.subr.mxu0 %v959
    %1267 = vmatpush1.msra.mxu0 %v958
    %1268 = vmatprep.subr.mxu0 %v967
    %1269 = vmatpush1.msra.mxu0 %v966
    %1270 = vmatprep.subr.mxu0 %v975
    %1271 = vmatpush1.msra.mxu0 %v974
    %1272 = vmatprep.subr.mxu0 %v983
    %1273 = vmatpush1.msra.mxu0 %v982
    %1274 = vmatprep.subr.mxu0 %v991
    %1275 = vmatpush1.msra.mxu0 %v990
    %1276 = vmatprep.subr.mxu0 %v999
    %1277 = vmatpush1.msra.mxu0 %v998
    %1278 = vmatprep.subr.mxu0 %v1007
    %1279 = vmatpush1.msra.mxu0 %v1006
    %1280 = vmatprep.subr.mxu0 %v1015
    %1281 = vmatpush1.msra.mxu0 %v1014
    %1282 = vmatprep.subr.mxu0 %v1023
    %1283 = vmatpush1.msra.mxu0 %v1022
    %1284 = vmatprep.subr.mxu0 %v1031
    %1285 = vmatpush1.msra.mxu0 %v1030
    %1286 = vmatprep.subr.mxu0 %v1039
    %1287 = vmatpush1.msra.mxu0 %v1038
    %1288 = vmatprep.subr.mxu0 %v1047
    %1289 = vmatpush1.msra.mxu0 %v1046
    %1290 = vmatprep.subr.mxu0 %v1055
    %1291 = vmatpush1.msra.mxu0 %v1054
    %1292 = vmatprep.subr.mxu0 %v1063
    %1293 = vmatpush1.msra.mxu0 %v1062
    %1294 = vmatprep.subr.mxu0 %v1071
    %1295 = vmatpush1.msra.mxu0 %v1070
    %1296 = vmatprep.subr.mxu0 %v1079
    %1297 = vmatpush1.msra.mxu0 %v1078
    %1298 = vmatprep.subr.mxu0 %v1087
    %1299 = vmatpush1.msra.mxu0 %v1086
    %1300 = vmatprep.subr.mxu0 %v1095
    %1301 = vmatpush1.msra.mxu0 %v1094
    %1302 = vmatprep.subr.mxu0 %v1103
    %1303 = vmatpush1.msra.mxu0 %v1102
    %1304 = vmatprep.subr.mxu0 %v1111
    %1305 = vmatpush1.msra.mxu0 %v1110
    %1306 = vmatprep.subr.mxu0 %v1119
    %1307 = vmatpush1.msra.mxu0 %v1118
    %1308 = vmatprep.subr.mxu0 %v1127
    %1309 = vmatpush1.msra.mxu0 %v1126
    %1310 = vmatprep.subr.mxu0 %v1135
    %1311 = vmatpush1.msra.mxu0 %v1134
    %1312 = vmatprep.subr.mxu0 %v1143
    %1313 = vmatpush1.msra.mxu0 %v1142
    %1314 = vmatprep.subr.mxu0 %v1151
    %1315 = vmatpush1.msra.mxu0 %v1150
    %1316 = vmatprep.subr.mxu0 %v1159
    %1317 = vmatpush1.msra.mxu0 %v1158
    %1318 = vmatprep.subr.mxu0 %v1167
    %1319 = vmatpush1.msra.mxu0 %v1166
    %1320 = vmatprep.mubr.f32.mxu0 %v1173
    %1321 = vmatmul.mubr.f32.gmra.mrb[0].mxu0 %v1172
    %v1322 = vpop.f32.mrb[0].mxu0
    %v1323 = vadd.f32 0.0, %v1322
    %v1324 = vpop.f32.mrb[0].mxu0
    %v1325 = vadd.f32 0.0, %v1324
    %1326 = vdwg.mxu0
    %1327 = vmatprep.subr.mxu0 %v921
    %1328 = vmatpush1.msra.mxu0 %v920
    %1329 = vmatprep.subr.mxu0 %v929
    %1330 = vmatpush1.msra.mxu0 %v928
    %1331 = vmatprep.subr.mxu0 %v937
    %1332 = vmatpush1.msra.mxu0 %v936
    %1333 = vmatprep.subr.mxu0 %v945
    %1334 = vmatpush1.msra.mxu0 %v944
    %1335 = vmatprep.subr.mxu0 %v953
    %1336 = vmatpush1.msra.mxu0 %v952
    %1337 = vmatprep.subr.mxu0 %v961
    %1338 = vmatpush1.msra.mxu0 %v960
    %1339 = vmatprep.subr.mxu0 %v969
    %1340 = vmatpush1.msra.mxu0 %v968
    %1341 = vmatprep.subr.mxu0 %v977
    %1342 = vmatpush1.msra.mxu0 %v976
    %1343 = vmatprep.subr.mxu0 %v985
    %1344 = vmatpush1.msra.mxu0 %v984
    %1345 = vmatprep.subr.mxu0 %v993
    %1346 = vmatpush1.msra.mxu0 %v992
    %1347 = vmatprep.subr.mxu0 %v1001
    %1348 = vmatpush1.msra.mxu0 %v1000
    %1349 = vmatprep.subr.mxu0 %v1009
    %1350 = vmatpush1.msra.mxu0 %v1008
    %1351 = vmatprep.subr.mxu0 %v1017
    %1352 = vmatpush1.msra.mxu0 %v1016
    %1353 = vmatprep.subr.mxu0 %v1025
    %1354 = vmatpush1.msra.mxu0 %v1024
    %1355 = vmatprep.subr.mxu0 %v1033
    %1356 = vmatpush1.msra.mxu0 %v1032
    %1357 = vmatprep.subr.mxu0 %v1041
    %1358 = vmatpush1.msra.mxu0 %v1040
    %1359 = vmatprep.subr.mxu0 %v1049
    %1360 = vmatpush1.msra.mxu0 %v1048
    %1361 = vmatprep.subr.mxu0 %v1057
    %1362 = vmatpush1.msra.mxu0 %v1056
    %1363 = vmatprep.subr.mxu0 %v1065
    %1364 = vmatpush1.msra.mxu0 %v1064
    %1365 = vmatprep.subr.mxu0 %v1073
    %1366 = vmatpush1.msra.mxu0 %v1072
    %1367 = vmatprep.subr.mxu0 %v1081
    %1368 = vmatpush1.msra.mxu0 %v1080
    %1369 = vmatprep.subr.mxu0 %v1089
    %1370 = vmatpush1.msra.mxu0 %v1088
    %1371 = vmatprep.subr.mxu0 %v1097
    %1372 = vmatpush1.msra.mxu0 %v1096
    %1373 = vmatprep.subr.mxu0 %v1105
    %1374 = vmatpush1.msra.mxu0 %v1104
    %1375 = vmatprep.subr.mxu0 %v1113
    %1376 = vmatpush1.msra.mxu0 %v1112
    %1377 = vmatprep.subr.mxu0 %v1121
    %1378 = vmatpush1.msra.mxu0 %v1120
    %1379 = vmatprep.subr.mxu0 %v1129
    %1380 = vmatpush1.msra.mxu0 %v1128
    %1381 = vmatprep.subr.mxu0 %v1137
    %1382 = vmatpush1.msra.mxu0 %v1136
    %1383 = vmatprep.subr.mxu0 %v1145
    %1384 = vmatpush1.msra.mxu0 %v1144
    %1385 = vmatprep.subr.mxu0 %v1153
    %1386 = vmatpush1.msra.mxu0 %v1152
    %1387 = vmatprep.subr.mxu0 %v1161
    %1388 = vmatpush1.msra.mxu0 %v1160
    %1389 = vmatprep.subr.mxu0 %v1169
    %1390 = vmatpush1.msra.mxu0 %v1168
    %1391 = vmatprep.mubr.f32.mxu0 %v1173
    %1392 = vmatmul.mubr.f32.gmra.mrb[0].mxu0 %v1172
    %v1393 = vpop.f32.mrb[0].mxu0
    %v1394 = vadd.f32 0.0, %v1393
    %v1395 = vpop.f32.mrb[0].mxu0
    %v1396 = vadd.f32 0.0, %v1395
    %1397 = vdwg.mxu0
    %1398 = vmatprep.subr.mxu0 %v923
    %1399 = vmatpush1.msra.mxu0 %v922
    %1400 = vmatprep.subr.mxu0 %v931
    %1401 = vmatpush1.msra.mxu0 %v930
    %1402 = vmatprep.subr.mxu0 %v939
    %1403 = vmatpush1.msra.mxu0 %v938
    %1404 = vmatprep.subr.mxu0 %v947
    %1405 = vmatpush1.msra.mxu0 %v946
    %1406 = vmatprep.subr.mxu0 %v955
    %1407 = vmatpush1.msra.mxu0 %v954
    %1408 = vmatprep.subr.mxu0 %v963
    %1409 = vmatpush1.msra.mxu0 %v962
    %1410 = vmatprep.subr.mxu0 %v971
    %1411 = vmatpush1.msra.mxu0 %v970
    %1412 = vmatprep.subr.mxu0 %v979
    %1413 = vmatpush1.msra.mxu0 %v978
    %1414 = vmatprep.subr.mxu0 %v987
    %1415 = vmatpush1.msra.mxu0 %v986
    %1416 = vmatprep.subr.mxu0 %v995
    %1417 = vmatpush1.msra.mxu0 %v994
    %1418 = vmatprep.subr.mxu0 %v1003
    %1419 = vmatpush1.msra.mxu0 %v1002
    %1420 = vmatprep.subr.mxu0 %v1011
    %1421 = vmatpush1.msra.mxu0 %v1010
    %1422 = vmatprep.subr.mxu0 %v1019
    %1423 = vmatpush1.msra.mxu0 %v1018
    %1424 = vmatprep.subr.mxu0 %v1027
    %1425 = vmatpush1.msra.mxu0 %v1026
    %1426 = vmatprep.subr.mxu0 %v1035
    %1427 = vmatpush1.msra.mxu0 %v1034
    %1428 = vmatprep.subr.mxu0 %v1043
    %1429 = vmatpush1.msra.mxu0 %v1042
    %1430 = vmatprep.subr.mxu0 %v1051
    %1431 = vmatpush1.msra.mxu0 %v1050
    %1432 = vmatprep.subr.mxu0 %v1059
    %1433 = vmatpush1.msra.mxu0 %v1058
    %1434 = vmatprep.subr.mxu0 %v1067
    %1435 = vmatpush1.msra.mxu0 %v1066
    %1436 = vmatprep.subr.mxu0 %v1075
    %1437 = vmatpush1.msra.mxu0 %v1074
    %1438 = vmatprep.subr.mxu0 %v1083
    %1439 = vmatpush1.msra.mxu0 %v1082
    %1440 = vmatprep.subr.mxu0 %v1091
    %1441 = vmatpush1.msra.mxu0 %v1090
    %1442 = vmatprep.subr.mxu0 %v1099
    %1443 = vmatpush1.msra.mxu0 %v1098
    %1444 = vmatprep.subr.mxu0 %v1107
    %1445 = vmatpush1.msra.mxu0 %v1106
    %1446 = vmatprep.subr.mxu0 %v1115
    %1447 = vmatpush1.msra.mxu0 %v1114
    %1448 = vmatprep.subr.mxu0 %v1123
    %1449 = vmatpush1.msra.mxu0 %v1122
    %1450 = vmatprep.subr.mxu0 %v1131
    %1451 = vmatpush1.msra.mxu0 %v1130
    %1452 = vmatprep.subr.mxu0 %v1139
    %1453 = vmatpush1.msra.mxu0 %v1138
    %1454 = vmatprep.subr.mxu0 %v1147
    %1455 = vmatpush1.msra.mxu0 %v1146
    %1456 = vmatprep.subr.mxu0 %v1155
    %1457 = vmatpush1.msra.mxu0 %v1154
    %1458 = vmatprep.subr.mxu0 %v1163
    %1459 = vmatpush1.msra.mxu0 %v1162
    %1460 = vmatprep.subr.mxu0 %v1171
    %1461 = vmatpush1.msra.mxu0 %v1170
    %1462 = vmatprep.mubr.f32.mxu0 %v1173
    %1463 = vmatmul.mubr.f32.gmra.mrb[0].mxu0 %v1172
    %v1464 = vpop.f32.mrb[0].mxu0
    %v1465 = vadd.f32 0.0, %v1464
    %v1466 = vpop.f32.mrb[0].mxu0
    %v1467 = vadd.f32 0.0, %v1466
    %1468 = vdwg.mxu0
    %v1469 = vadd.f32 %v1177, %v1252
    %v1470 = vadd.f32 %v1178, %v1254
    %v1471 = vadd.f32 %v1179, %v1323
    %v1472 = vadd.f32 %v1180, %v1325
    %v1473 = vadd.f32 %v1181, %v1394
    %v1474 = vadd.f32 %v1182, %v1396
    %v1475 = vadd.f32 %v1183, %v1465
    %v1476 = vadd.f32 %v1184, %v1467
    %v1477 = vxor.u32 %v1469, 2147483648
    %v1478 = vxor.u32 %v1470, 2147483648
    %v1479 = vmul.f32 %v1477, 1.442695
    %v1480 = vpow.pop %v1479
    %v1481 = vmul.f32 %v1478, 1.442695
    %v1482 = vpow.pop %v1481
    %v1483 = vadd.f32 %v1480, 1.0
    %v1484 = vadd.f32 %v1482, 1.0
    %v1485 = vrcp.pop %v1483
    %v1486 = vmul.f32 1.0, %v1485
    %v1487 = vrcp.pop %v1484
    %v1488 = vmul.f32 1.0, %v1487
    %v1489 = vxor.u32 %v1471, 2147483648
    %v1490 = vxor.u32 %v1472, 2147483648
    %v1491 = vmul.f32 %v1489, 1.442695
    %v1492 = vpow.pop %v1491
    %v1493 = vmul.f32 %v1490, 1.442695
    %v1494 = vpow.pop %v1493
    %v1495 = vadd.f32 %v1492, 1.0
    %v1496 = vadd.f32 %v1494, 1.0
    %v1497 = vrcp.pop %v1495
    %v1498 = vmul.f32 1.0, %v1497
    %v1499 = vrcp.pop %v1496
    %v1500 = vmul.f32 1.0, %v1499
    %v1501 = vtanh.pop %v1473
    %v1502 = vtanh.pop %v1474
    %v1503 = vxor.u32 %v1475, 2147483648
    %v1504 = vxor.u32 %v1476, 2147483648
    %v1505 = vmul.f32 %v1503, 1.442695
    %v1506 = vpow.pop %v1505
    %v1507 = vmul.f32 %v1504, 1.442695
    %v1508 = vpow.pop %v1507
    %v1509 = vadd.f32 %v1506, 1.0
    %v1510 = vadd.f32 %v1508, 1.0
    %v1511 = vrcp.pop %v1509
    %v1512 = vmul.f32 1.0, %v1511
    %v1513 = vrcp.pop %v1510
    %v1514 = vmul.f32 1.0, %v1513
    %v1515 = vld [vmem:[#allocation5] sm:$0xff]
    %v1516 = vld [vmem:[#allocation5 + $0x8] sm:$0xff]
    %v1517 = vmul.f32 %v1498, %v1515
    %v1518 = vmul.f32 %v1500, %v1516
    %v1519 = vmul.f32 %v1486, %v1501
    %v1520 = vmul.f32 %v1488, %v1502
    %v1521 = vadd.f32 %v1517, %v1519
    %v1522 = vadd.f32 %v1518, %v1520
    %v1523 = vtanh.pop %v1521
    %v1524 = vtanh.pop %v1522
    %v1525 = vmul.f32 %v1512, %v1523
    %v1526 = vmul.f32 %v1514, %v1524
    %1527 = vst [vmem:[#allocation4] sm:$0xff] %v1525
    %1528 = vst [vmem:[#allocation4 + $0x8] sm:$0xff] %v1526
    %1529 = vst [vmem:[#allocation5] sm:$0xff] %v1521
    %1530 = vst [vmem:[#allocation5 + $0x8] sm:$0xff] %v1522
    %s1531 = smul.u32 0, 2
    %s1532 = smul.addr %s1531, 8
    %s1533 = scalar_lea.vmem [#allocation3], %s1532
    %1534 = vst [vmem:[%s1533] sm:$0xff] %v1525
    %1535 = vst [vmem:[%s1533 + $0x8] sm:$0xff] %v1526
    %v1536 = vld [vmem:[#allocation4] sm:$0xff]
    %v1537 = vld [vmem:[#allocation4 + $0x8] sm:$0xff]
    %s1538 = smul.u32 1, 8
    %s1539 = smul.addr %s1538, 8
    %s1540 = scalar_lea.vmem [#allocation2], %s1539
    %v1541 = vld [vmem:[%s1540] sm:$0xff]
    %v1542 = vld [vmem:[%s1540 + $0x8] sm:$0xff]
    %v1543 = vld [vmem:[%s1540 + $0x10] sm:$0xff]
    %v1544 = vld [vmem:[%s1540 + $0x18] sm:$0xff]
    %v1545 = vld [vmem:[%s1540 + $0x20] sm:$0xff]
    %v1546 = vld [vmem:[%s1540 + $0x28] sm:$0xff]
    %v1547 = vld [vmem:[%s1540 + $0x30] sm:$0xff]
    %v1548 = vld [vmem:[%s1540 + $0x38] sm:$0xff]
    %1549 = vmatprep.subr.mxu0 %v917
    %1550 = vmatpush1.msra.mxu0 %v916
    %1551 = vmatprep.subr.mxu0 %v925
    %1552 = vmatpush1.msra.mxu0 %v924
    %1553 = vmatprep.subr.mxu0 %v933
    %1554 = vmatpush1.msra.mxu0 %v932
    %1555 = vmatprep.subr.mxu0 %v941
    %1556 = vmatpush1.msra.mxu0 %v940
    %1557 = vmatprep.subr.mxu0 %v949
    %1558 = vmatpush1.msra.mxu0 %v948
    %1559 = vmatprep.subr.mxu0 %v957
    %1560 = vmatpush1.msra.mxu0 %v956
    %1561 = vmatprep.subr.mxu0 %v965
    %1562 = vmatpush1.msra.mxu0 %v964
    %1563 = vmatprep.subr.mxu0 %v973
    %1564 = vmatpush1.msra.mxu0 %v972
    %1565 = vmatprep.subr.mxu0 %v981
    %1566 = vmatpush1.msra.mxu0 %v980
    %1567 = vmatprep.subr.mxu0 %v989
    %1568 = vmatpush1.msra.mxu0 %v988
    %1569 = vmatprep.subr.mxu0 %v997
    %1570 = vmatpush1.msra.mxu0 %v996
    %1571 = vmatprep.subr.mxu0 %v1005
    %1572 = vmatpush1.msra.mxu0 %v1004
    %1573 = vmatprep.subr.mxu0 %v1013
    %1574 = vmatpush1.msra.mxu0 %v1012
    %1575 = vmatprep.subr.mxu0 %v1021
    %1576 = vmatpush1.msra.mxu0 %v1020
    %1577 = vmatprep.subr.mxu0 %v1029
    %1578 = vmatpush1.msra.mxu0 %v1028
    %1579 = vmatprep.subr.mxu0 %v1037
    %1580 = vmatpush1.msra.mxu0 %v1036
    %1581 = vmatprep.subr.mxu0 %v1045
    %1582 = vmatpush1.msra.mxu0 %v1044
    %1583 = vmatprep.subr.mxu0 %v1053
    %1584 = vmatpush1.msra.mxu0 %v1052
    %1585 = vmatprep.subr.mxu0 %v1061
    %1586 = vmatpush1.msra.mxu0 %v1060
    %1587 = vmatprep.subr.mxu0 %v1069
    %1588 = vmatpush1.msra.mxu0 %v1068
    %1589 = vmatprep.subr.mxu0 %v1077
    %1590 = vmatpush1.msra.mxu0 %v1076
    %1591 = vmatprep.subr.mxu0 %v1085
    %1592 = vmatpush1.msra.mxu0 %v1084
    %1593 = vmatprep.subr.mxu0 %v1093
    %1594 = vmatpush1.msra.mxu0 %v1092
    %1595 = vmatprep.subr.mxu0 %v1101
    %1596 = vmatpush1.msra.mxu0 %v1100
    %1597 = vmatprep.subr.mxu0 %v1109
    %1598 = vmatpush1.msra.mxu0 %v1108
    %1599 = vmatprep.subr.mxu0 %v1117
    %1600 = vmatpush1.msra.mxu0 %v1116
    %1601 = vmatprep.subr.mxu0 %v1125
    %1602 = vmatpush1.msra.mxu0 %v1124
    %1603 = vmatprep.subr.mxu0 %v1133
    %1604 = vmatpush1.msra.mxu0 %v1132
    %1605 = vmatprep.subr.mxu0 %v1141
    %1606 = vmatpush1.msra.mxu0 %v1140
    %1607 = vmatprep.subr.mxu0 %v1149
    %1608 = vmatpush1.msra.mxu0 %v1148
    %1609 = vmatprep.subr.mxu0 %v1157
    %1610 = vmatpush1.msra.mxu0 %v1156
    %1611 = vmatprep.subr.mxu0 %v1165
    %1612 = vmatpush1.msra.mxu0 %v1164
    %1613 = vmatprep.mubr.f32.mxu0 %v1537
    %1614 = vmatmul.mubr.f32.gmra.mrb[0].mxu0 %v1536
    %v1615 = vpop.f32.mrb[0].mxu0
    %v1616 = vadd.f32 0.0, %v1615
    %v1617 = vpop.f32.mrb[0].mxu0
    %v1618 = vadd.f32 0.0, %v1617
    %1619 = vdwg.mxu0
    %1620 = vmatprep.subr.mxu0 %v919
    %1621 = vmatpush1.msra.mxu0 %v918
    %1622 = vmatprep.subr.mxu0 %v927
    %1623 = vmatpush1.msra.mxu0 %v926
    %1624 = vmatprep.subr.mxu0 %v935
    %1625 = vmatpush1.msra.mxu0 %v934
    %1626 = vmatprep.subr.mxu0 %v943
    %1627 = vmatpush1.msra.mxu0 %v942
    %1628 = vmatprep.subr.mxu0 %v951
    %1629 = vmatpush1.msra.mxu0 %v950
    %1630 = vmatprep.subr.mxu0 %v959
    %1631 = vmatpush1.msra.mxu0 %v958
    %1632 = vmatprep.subr.mxu0 %v967
    %1633 = vmatpush1.msra.mxu0 %v966
    %1634 = vmatprep.subr.mxu0 %v975
    %1635 = vmatpush1.msra.mxu0 %v974
    %1636 = vmatprep.subr.mxu0 %v983
    %1637 = vmatpush1.msra.mxu0 %v982
    %1638 = vmatprep.subr.mxu0 %v991
    %1639 = vmatpush1.msra.mxu0 %v990
    %1640 = vmatprep.subr.mxu0 %v999
    %1641 = vmatpush1.msra.mxu0 %v998
    %1642 = vmatprep.subr.mxu0 %v1007
    %1643 = vmatpush1.msra.mxu0 %v1006
    %1644 = vmatprep.subr.mxu0 %v1015
    %1645 = vmatpush1.msra.mxu0 %v1014
    %1646 = vmatprep.subr.mxu0 %v1023
    %1647 = vmatpush1.msra.mxu0 %v1022
    %1648 = vmatprep.subr.mxu0 %v1031
    %1649 = vmatpush1.msra.mxu0 %v1030
    %1650 = vmatprep.subr.mxu0 %v1039
    %1651 = vmatpush1.msra.mxu0 %v1038
    %1652 = vmatprep.subr.mxu0 %v1047
    %1653 = vmatpush1.msra.mxu0 %v1046
    %1654 = vmatprep.subr.mxu0 %v1055
    %1655 = vmatpush1.msra.mxu0 %v1054
    %1656 = vmatprep.subr.mxu0 %v1063
    %1657 = vmatpush1.msra.mxu0 %v1062
    %1658 = vmatprep.subr.mxu0 %v1071
    %1659 = vmatpush1.msra.mxu0 %v1070
    %1660 = vmatprep.subr.mxu0 %v1079
    %1661 = vmatpush1.msra.mxu0 %v1078
    %1662 = vmatprep.subr.mxu0 %v1087
    %1663 = vmatpush1.msra.mxu0 %v1086
    %1664 = vmatprep.subr.mxu0 %v1095
    %1665 = vmatpush1.msra.mxu0 %v1094
    %1666 = vmatprep.subr.mxu0 %v1103
    %1667 = vmatpush1.msra.mxu0 %v1102
    %1668 = vmatprep.subr.mxu0 %v1111
    %1669 = vmatpush1.msra.mxu0 %v1110
    %1670 = vmatprep.subr.mxu0 %v1119
    %1671 = vmatpush1.msra.mxu0 %v1118
    %1672 = vmatprep.subr.mxu0 %v1127
    %1673 = vmatpush1.msra.mxu0 %v1126
    %1674 = vmatprep.subr.mxu0 %v1135
    %1675 = vmatpush1.msra.mxu0 %v1134
    %1676 = vmatprep.subr.mxu0 %v1143
    %1677 = vmatpush1.msra.mxu0 %v1142
    %1678 = vmatprep.subr.mxu0 %v1151
    %1679 = vmatpush1.msra.mxu0 %v1150
    %1680 = vmatprep.subr.mxu0 %v1159
    %1681 = vmatpush1.msra.mxu0 %v1158
    %1682 = vmatprep.subr.mxu0 %v1167
    %1683 = vmatpush1.msra.mxu0 %v1166
    %1684 = vmatprep.mubr.f32.mxu0 %v1537
    %1685 = vmatmul.mubr.f32.gmra.mrb[0].mxu0 %v1536
    %v1686 = vpop.f32.mrb[0].mxu0
    %v1687 = vadd.f32 0.0, %v1686
    %v1688 = vpop.f32.mrb[0].mxu0
    %v1689 = vadd.f32 0.0, %v1688
    %1690 = vdwg.mxu0
    %1691 = vmatprep.subr.mxu0 %v921
    %1692 = vmatpush1.msra.mxu0 %v920
    %1693 = vmatprep.subr.mxu0 %v929
    %1694 = vmatpush1.msra.mxu0 %v928
    %1695 = vmatprep.subr.mxu0 %v937
    %1696 = vmatpush1.msra.mxu0 %v936
    %1697 = vmatprep.subr.mxu0 %v945
    %1698 = vmatpush1.msra.mxu0 %v944
    %1699 = vmatprep.subr.mxu0 %v953
    %1700 = vmatpush1.msra.mxu0 %v952
    %1701 = vmatprep.subr.mxu0 %v961
    %1702 = vmatpush1.msra.mxu0 %v960
    %1703 = vmatprep.subr.mxu0 %v969
    %1704 = vmatpush1.msra.mxu0 %v968
    %1705 = vmatprep.subr.mxu0 %v977
    %1706 = vmatpush1.msra.mxu0 %v976
    %1707 = vmatprep.subr.mxu0 %v985
    %1708 = vmatpush1.msra.mxu0 %v984
    %1709 = vmatprep.subr.mxu0 %v993
    %1710 = vmatpush1.msra.mxu0 %v992
    %1711 = vmatprep.subr.mxu0 %v1001
    %1712 = vmatpush1.msra.mxu0 %v1000
    %1713 = vmatprep.subr.mxu0 %v1009
    %1714 = vmatpush1.msra.mxu0 %v1008
    %1715 = vmatprep.subr.mxu0 %v1017
    %1716 = vmatpush1.msra.mxu0 %v1016
    %1717 = vmatprep.subr.mxu0 %v1025
    %1718 = vmatpush1.msra.mxu0 %v1024
    %1719 = vmatprep.subr.mxu0 %v1033
    %1720 = vmatpush1.msra.mxu0 %v1032
    %1721 = vmatprep.subr.mxu0 %v1041
    %1722 = vmatpush1.msra.mxu0 %v1040
    %1723 = vmatprep.subr.mxu0 %v1049
    %1724 = vmatpush1.msra.mxu0 %v1048
    %1725 = vmatprep.subr.mxu0 %v1057
    %1726 = vmatpush1.msra.mxu0 %v1056
    %1727 = vmatprep.subr.mxu0 %v1065
    %1728 = vmatpush1.msra.mxu0 %v1064
    %1729 = vmatprep.subr.mxu0 %v1073
    %1730 = vmatpush1.msra.mxu0 %v1072
    %1731 = vmatprep.subr.mxu0 %v1081
    %1732 = vmatpush1.msra.mxu0 %v1080
    %1733 = vmatprep.subr.mxu0 %v1089
    %1734 = vmatpush1.msra.mxu0 %v1088
    %1735 = vmatprep.subr.mxu0 %v1097
    %1736 = vmatpush1.msra.mxu0 %v1096
    %1737 = vmatprep.subr.mxu0 %v1105
    %1738 = vmatpush1.msra.mxu0 %v1104
    %1739 = vmatprep.subr.mxu0 %v1113
    %1740 = vmatpush1.msra.mxu0 %v1112
    %1741 = vmatprep.subr.mxu0 %v1121
    %1742 = vmatpush1.msra.mxu0 %v1120
    %1743 = vmatprep.subr.mxu0 %v1129
    %1744 = vmatpush1.msra.mxu0 %v1128
    %1745 = vmatprep.subr.mxu0 %v1137
    %1746 = vmatpush1.msra.mxu0 %v1136
    %1747 = vmatprep.subr.mxu0 %v1145
    %1748 = vmatpush1.msra.mxu0 %v1144
    %1749 = vmatprep.subr.mxu0 %v1153
    %1750 = vmatpush1.msra.mxu0 %v1152
    %1751 = vmatprep.subr.mxu0 %v1161
    %1752 = vmatpush1.msra.mxu0 %v1160
    %1753 = vmatprep.subr.mxu0 %v1169
    %1754 = vmatpush1.msra.mxu0 %v1168
    %1755 = vmatprep.mubr.f32.mxu0 %v1537
    %1756 = vmatmul.mubr.f32.gmra.mrb[0].mxu0 %v1536
    %v1757 = vpop.f32.mrb[0].mxu0
    %v1758 = vadd.f32 0.0, %v1757
    %v1759 = vpop.f32.mrb[0].mxu0
    %v1760 = vadd.f32 0.0, %v1759
    %1761 = vdwg.mxu0
    %1762 = vmatprep.subr.mxu0 %v923
    %1763 = vmatpush1.msra.mxu0 %v922
    %1764 = vmatprep.subr.mxu0 %v931
    %1765 = vmatpush1.msra.mxu0 %v930
    %1766 = vmatprep.subr.mxu0 %v939
    %1767 = vmatpush1.msra.mxu0 %v938
    %1768 = vmatprep.subr.mxu0 %v947
    %1769 = vmatpush1.msra.mxu0 %v946
    %1770 = vmatprep.subr.mxu0 %v955
    %1771 = vmatpush1.msra.mxu0 %v954
    %1772 = vmatprep.subr.mxu0 %v963
    %1773 = vmatpush1.msra.mxu0 %v962
    %1774 = vmatprep.subr.mxu0 %v971
    %1775 = vmatpush1.msra.mxu0 %v970
    %1776 = vmatprep.subr.mxu0 %v979
    %1777 = vmatpush1.msra.mxu0 %v978
    %1778 = vmatprep.subr.mxu0 %v987
    %1779 = vmatpush1.msra.mxu0 %v986
    %1780 = vmatprep.subr.mxu0 %v995
    %1781 = vmatpush1.msra.mxu0 %v994
    %1782 = vmatprep.subr.mxu0 %v1003
    %1783 = vmatpush1.msra.mxu0 %v1002
    %1784 = vmatprep.subr.mxu0 %v1011
    %1785 = vmatpush1.msra.mxu0 %v1010
    %1786 = vmatprep.subr.mxu0 %v1019
    %1787 = vmatpush1.msra.mxu0 %v1018
    %1788 = vmatprep.subr.mxu0 %v1027
    %1789 = vmatpush1.msra.mxu0 %v1026
    %1790 = vmatprep.subr.mxu0 %v1035
    %1791 = vmatpush1.msra.mxu0 %v1034
    %1792 = vmatprep.subr.mxu0 %v1043
    %1793 = vmatpush1.msra.mxu0 %v1042
    %1794 = vmatprep.subr.mxu0 %v1051
    %1795 = vmatpush1.msra.mxu0 %v1050
    %1796 = vmatprep.subr.mxu0 %v1059
    %1797 = vmatpush1.msra.mxu0 %v1058
    %1798 = vmatprep.subr.mxu0 %v1067
    %1799 = vmatpush1.msra.mxu0 %v1066
    %1800 = vmatprep.subr.mxu0 %v1075
    %1801 = vmatpush1.msra.mxu0 %v1074
    %1802 = vmatprep.subr.mxu0 %v1083
    %1803 = vmatpush1.msra.mxu0 %v1082
    %1804 = vmatprep.subr.mxu0 %v1091
    %1805 = vmatpush1.msra.mxu0 %v1090
    %1806 = vmatprep.subr.mxu0 %v1099
    %1807 = vmatpush1.msra.mxu0 %v1098
    %1808 = vmatprep.subr.mxu0 %v1107
    %1809 = vmatpush1.msra.mxu0 %v1106
    %1810 = vmatprep.subr.mxu0 %v1115
    %1811 = vmatpush1.msra.mxu0 %v1114
    %1812 = vmatprep.subr.mxu0 %v1123
    %1813 = vmatpush1.msra.mxu0 %v1122
    %1814 = vmatprep.subr.mxu0 %v1131
    %1815 = vmatpush1.msra.mxu0 %v1130
    %1816 = vmatprep.subr.mxu0 %v1139
    %1817 = vmatpush1.msra.mxu0 %v1138
    %1818 = vmatprep.subr.mxu0 %v1147
    %1819 = vmatpush1.msra.mxu0 %v1146
    %1820 = vmatprep.subr.mxu0 %v1155
    %1821 = vmatpush1.msra.mxu0 %v1154
    %1822 = vmatprep.subr.mxu0 %v1163
    %1823 = vmatpush1.msra.mxu0 %v1162
    %1824 = vmatprep.subr.mxu0 %v1171
    %1825 = vmatpush1.msra.mxu0 %v1170
    %1826 = vmatprep.mubr.f32.mxu0 %v1537
    %1827 = vmatmul.mubr.f32.gmra.mrb[0].mxu0 %v1536
    %v1828 = vpop.f32.mrb[0].mxu0
    %v1829 = vadd.f32 0.0, %v1828
    %v1830 = vpop.f32.mrb[0].mxu0
    %v1831 = vadd.f32 0.0, %v1830
    %1832 = vdwg.mxu0
    %v1833 = vadd.f32 %v1541, %v1616
    %v1834 = vadd.f32 %v1542, %v1618
    %v1835 = vadd.f32 %v1543, %v1687
    %v1836 = vadd.f32 %v1544, %v1689
    %v1837 = vadd.f32 %v1545, %v1758
    %v1838 = vadd.f32 %v1546, %v1760
    %v1839 = vadd.f32 %v1547, %v1829
    %v1840 = vadd.f32 %v1548, %v1831
    %v1841 = vxor.u32 %v1833, 2147483648
    %v1842 = vxor.u32 %v1834, 2147483648
    %v1843 = vmul.f32 %v1841, 1.442695
    %v1844 = vpow.pop %v1843
    %v1845 = vmul.f32 %v1842, 1.442695
    %v1846 = vpow.pop %v1845
    %v1847 = vadd.f32 %v1844, 1.0
    %v1848 = vadd.f32 %v1846, 1.0
    %v1849 = vrcp.pop %v1847
    %v1850 = vmul.f32 1.0, %v1849
    %v1851 = vrcp.pop %v1848
    %v1852 = vmul.f32 1.0, %v1851
    %v1853 = vxor.u32 %v1835, 2147483648
    %v1854 = vxor.u32 %v1836, 2147483648
    %v1855 = vmul.f32 %v1853, 1.442695
    %v1856 = vpow.pop %v1855
    %v1857 = vmul.f32 %v1854, 1.442695
    %v1858 = vpow.pop %v1857
    %v1859 = vadd.f32 %v1856, 1.0
    %v1860 = vadd.f32 %v1858, 1.0
    %v1861 = vrcp.pop %v1859
    %v1862 = vmul.f32 1.0, %v1861
    %v1863 = vrcp.pop %v1860
    %v1864 = vmul.f32 1.0, %v1863
    %v1865 = vtanh.pop %v1837
    %v1866 = vtanh.pop %v1838
    %v1867 = vxor.u32 %v1839, 2147483648
    %v1868 = vxor.u32 %v1840, 2147483648
    %v1869 = vmul.f32 %v1867, 1.442695
    %v1870 = vpow.pop %v1869
    %v1871 = vmul.f32 %v1868, 1.442695
    %v1872 = vpow.pop %v1871
    %v1873 = vadd.f32 %v1870, 1.0
    %v1874 = vadd.f32 %v1872, 1.0
    %v1875 = vrcp.pop %v1873
    %v1876 = vmul.f32 1.0, %v1875
    %v1877 = vrcp.pop %v1874
    %v1878 = vmul.f32 1.0, %v1877
    %v1879 = vld [vmem:[#allocation5] sm:$0xff]
    %v1880 = vld [vmem:[#allocation5 + $0x8] sm:$0xff]
    %v1881 = vmul.f32 %v1862, %v1879
    %v1882 = vmul.f32 %v1864, %v1880
    %v1883 = vmul.f32 %v1850, %v1865
    %v1884 = vmul.f32 %v1852, %v1866
    %v1885 = vadd.f32 %v1881, %v1883
    %v1886 = vadd.f32 %v1882, %v1884
    %v1887 = vtanh.pop %v1885
    %v1888 = vtanh.pop %v1886
    %v1889 = vmul.f32 %v1876, %v1887
    %v1890 = vmul.f32 %v1878, %v1888
    %1891 = vst [vmem:[#allocation4] sm:$0xff] %v1889
    %1892 = vst [vmem:[#allocation4 + $0x8] sm:$0xff] %v1890
    %1893 = vst [vmem:[#allocation5] sm:$0xff] %v1885
    %1894 = vst [vmem:[#allocation5 + $0x8] sm:$0xff] %v1886
    %s1895 = smul.u32 1, 2
    %s1896 = smul.addr %s1895, 8
    %s1897 = scalar_lea.vmem [#allocation3], %s1896
    %1898 = vst [vmem:[%s1897] sm:$0xff] %v1889
    %1899 = vst [vmem:[%s1897 + $0x8] sm:$0xff] %v1890
    %v1900 = vld [vmem:[#allocation4] sm:$0xff]
    %v1901 = vld [vmem:[#allocation4 + $0x8] sm:$0xff]
    %s1902 = smul.u32 2, 8
    %s1903 = smul.addr %s1902, 8
    %s1904 = scalar_lea.vmem [#allocation2], %s1903
    %v1905 = vld [vmem:[%s1904] sm:$0xff]
    %v1906 = vld [vmem:[%s1904 + $0x8] sm:$0xff]
    %v1907 = vld [vmem:[%s1904 + $0x10] sm:$0xff]
    %v1908 = vld [vmem:[%s1904 + $0x18] sm:$0xff]
    %v1909 = vld [vmem:[%s1904 + $0x20] sm:$0xff]
    %v1910 = vld [vmem:[%s1904 + $0x28] sm:$0xff]
    %v1911 = vld [vmem:[%s1904 + $0x30] sm:$0xff]
    %v1912 = vld [vmem:[%s1904 + $0x38] sm:$0xff]
    %1913 = vmatprep.subr.mxu0 %v917
    %1914 = vmatpush1.msra.mxu0 %v916
    %1915 = vmatprep.subr.mxu0 %v925
    %1916 = vmatpush1.msra.mxu0 %v924
    %1917 = vmatprep.subr.mxu0 %v933
    %1918 = vmatpush1.msra.mxu0 %v932
    %1919 = vmatprep.subr.mxu0 %v941
    %1920 = vmatpush1.msra.mxu0 %v940
    %1921 = vmatprep.subr.mxu0 %v949
    %1922 = vmatpush1.msra.mxu0 %v948
    %1923 = vmatprep.subr.mxu0 %v957
    %1924 = vmatpush1.msra.mxu0 %v956
    %1925 = vmatprep.subr.mxu0 %v965
    %1926 = vmatpush1.msra.mxu0 %v964
    %1927 = vmatprep.subr.mxu0 %v973
    %1928 = vmatpush1.msra.mxu0 %v972
    %1929 = vmatprep.subr.mxu0 %v981
    %1930 = vmatpush1.msra.mxu0 %v980
    %1931 = vmatprep.subr.mxu0 %v989
    %1932 = vmatpush1.msra.mxu0 %v988
    %1933 = vmatprep.subr.mxu0 %v997
    %1934 = vmatpush1.msra.mxu0 %v996
    %1935 = vmatprep.subr.mxu0 %v1005
    %1936 = vmatpush1.msra.mxu0 %v1004
    %1937 = vmatprep.subr.mxu0 %v1013
    %1938 = vmatpush1.msra.mxu0 %v1012
    %1939 = vmatprep.subr.mxu0 %v1021
    %1940 = vmatpush1.msra.mxu0 %v1020
    %1941 = vmatprep.subr.mxu0 %v1029
    %1942 = vmatpush1.msra.mxu0 %v1028
    %1943 = vmatprep.subr.mxu0 %v1037
    %1944 = vmatpush1.msra.mxu0 %v1036
    %1945 = vmatprep.subr.mxu0 %v1045
    %1946 = vmatpush1.msra.mxu0 %v1044
    %1947 = vmatprep.subr.mxu0 %v1053
    %1948 = vmatpush1.msra.mxu0 %v1052
    %1949 = vmatprep.subr.mxu0 %v1061
    %1950 = vmatpush1.msra.mxu0 %v1060
    %1951 = vmatprep.subr.mxu0 %v1069
    %1952 = vmatpush1.msra.mxu0 %v1068
    %1953 = vmatprep.subr.mxu0 %v1077
    %1954 = vmatpush1.msra.mxu0 %v1076
    %1955 = vmatprep.subr.mxu0 %v1085
    %1956 = vmatpush1.msra.mxu0 %v1084
    %1957 = vmatprep.subr.mxu0 %v1093
    %1958 = vmatpush1.msra.mxu0 %v1092
    %1959 = vmatprep.subr.mxu0 %v1101
    %1960 = vmatpush1.msra.mxu0 %v1100
    %1961 = vmatprep.subr.mxu0 %v1109
    %1962 = vmatpush1.msra.mxu0 %v1108
    %1963 = vmatprep.subr.mxu0 %v1117
    %1964 = vmatpush1.msra.mxu0 %v1116
    %1965 = vmatprep.subr.mxu0 %v1125
    %1966 = vmatpush1.msra.mxu0 %v1124
    %1967 = vmatprep.subr.mxu0 %v1133
    %1968 = vmatpush1.msra.mxu0 %v1132
    %1969 = vmatprep.subr.mxu0 %v1141
    %1970 = vmatpush1.msra.mxu0 %v1140
    %1971 = vmatprep.subr.mxu0 %v1149
    %1972 = vmatpush1.msra.mxu0 %v1148
    %1973 = vmatprep.subr.mxu0 %v1157
    %1974 = vmatpush1.msra.mxu0 %v1156
    %1975 = vmatprep.subr.mxu0 %v1165
    %1976 = vmatpush1.msra.mxu0 %v1164
    %1977 = vmatprep.mubr.f32.mxu0 %v1901
    %1978 = vmatmul.mubr.f32.gmra.mrb[0].mxu0 %v1900
    %v1979 = vpop.f32.mrb[0].mxu0
    %v1980 = vadd.f32 0.0, %v1979
    %v1981 = vpop.f32.mrb[0].mxu0
    %v1982 = vadd.f32 0.0, %v1981
    %1983 = vdwg.mxu0
    %1984 = vmatprep.subr.mxu0 %v919
    %1985 = vmatpush1.msra.mxu0 %v918
    %1986 = vmatprep.subr.mxu0 %v927
    %1987 = vmatpush1.msra.mxu0 %v926
    %1988 = vmatprep.subr.mxu0 %v935
    %1989 = vmatpush1.msra.mxu0 %v934
    %1990 = vmatprep.subr.mxu0 %v943
    %1991 = vmatpush1.msra.mxu0 %v942
    %1992 = vmatprep.subr.mxu0 %v951
    %1993 = vmatpush1.msra.mxu0 %v950
    %1994 = vmatprep.subr.mxu0 %v959
    %1995 = vmatpush1.msra.mxu0 %v958
    %1996 = vmatprep.subr.mxu0 %v967
    %1997 = vmatpush1.msra.mxu0 %v966
    %1998 = vmatprep.subr.mxu0 %v975
    %1999 = vmatpush1.msra.mxu0 %v974
    %2000 = vmatprep.subr.mxu0 %v983
    %2001 = vmatpush1.msra.mxu0 %v982
    %2002 = vmatprep.subr.mxu0 %v991
    %2003 = vmatpush1.msra.mxu0 %v990
    %2004 = vmatprep.subr.mxu0 %v999
    %2005 = vmatpush1.msra.mxu0 %v998
    %2006 = vmatprep.subr.mxu0 %v1007
    %2007 = vmatpush1.msra.mxu0 %v1006
    %2008 = vmatprep.subr.mxu0 %v1015
    %2009 = vmatpush1.msra.mxu0 %v1014
    %2010 = vmatprep.subr.mxu0 %v1023
    %2011 = vmatpush1.msra.mxu0 %v1022
    %2012 = vmatprep.subr.mxu0 %v1031
    %2013 = vmatpush1.msra.mxu0 %v1030
    %2014 = vmatprep.subr.mxu0 %v1039
    %2015 = vmatpush1.msra.mxu0 %v1038
    %2016 = vmatprep.subr.mxu0 %v1047
    %2017 = vmatpush1.msra.mxu0 %v1046
    %2018 = vmatprep.subr.mxu0 %v1055
    %2019 = vmatpush1.msra.mxu0 %v1054
    %2020 = vmatprep.subr.mxu0 %v1063
    %2021 = vmatpush1.msra.mxu0 %v1062
    %2022 = vmatprep.subr.mxu0 %v1071
    %2023 = vmatpush1.msra.mxu0 %v1070
    %2024 = vmatprep.subr.mxu0 %v1079
    %2025 = vmatpush1.msra.mxu0 %v1078
    %2026 = vmatprep.subr.mxu0 %v1087
    %2027 = vmatpush1.msra.mxu0 %v1086
    %2028 = vmatprep.subr.mxu0 %v1095
    %2029 = vmatpush1.msra.mxu0 %v1094
    %2030 = vmatprep.subr.mxu0 %v1103
    %2031 = vmatpush1.msra.mxu0 %v1102
    %2032 = vmatprep.subr.mxu0 %v1111
    %2033 = vmatpush1.msra.mxu0 %v1110
    %2034 = vmatprep.subr.mxu0 %v1119
    %2035 = vmatpush1.msra.mxu0 %v1118
    %2036 = vmatprep.subr.mxu0 %v1127
    %2037 = vmatpush1.msra.mxu0 %v1126
    %2038 = vmatprep.subr.mxu0 %v1135
    %2039 = vmatpush1.msra.mxu0 %v1134
    %2040 = vmatprep.subr.mxu0 %v1143
    %2041 = vmatpush1.msra.mxu0 %v1142
    %2042 = vmatprep.subr.mxu0 %v1151
    %2043 = vmatpush1.msra.mxu0 %v1150
    %2044 = vmatprep.subr.mxu0 %v1159
    %2045 = vmatpush1.msra.mxu0 %v1158
    %2046 = vmatprep.subr.mxu0 %v1167
    %2047 = vmatpush1.msra.mxu0 %v1166
    %2048 = vmatprep.mubr.f32.mxu0 %v1901
    %2049 = vmatmul.mubr.f32.gmra.mrb[0].mxu0 %v1900
    %v2050 = vpop.f32.mrb[0].mxu0
    %v2051 = vadd.f32 0.0, %v2050
    %v2052 = vpop.f32.mrb[0].mxu0
    %v2053 = vadd.f32 0.0, %v2052
    %2054 = vdwg.mxu0
    %2055 = vmatprep.subr.mxu0 %v921
    %2056 = vmatpush1.msra.mxu0 %v920
    %2057 = vmatprep.subr.mxu0 %v929
    %2058 = vmatpush1.msra.mxu0 %v928
    %2059 = vmatprep.subr.mxu0 %v937
    %2060 = vmatpush1.msra.mxu0 %v936
    %2061 = vmatprep.subr.mxu0 %v945
    %2062 = vmatpush1.msra.mxu0 %v944
    %2063 = vmatprep.subr.mxu0 %v953
    %2064 = vmatpush1.msra.mxu0 %v952
    %2065 = vmatprep.subr.mxu0 %v961
    %2066 = vmatpush1.msra.mxu0 %v960
    %2067 = vmatprep.subr.mxu0 %v969
    %2068 = vmatpush1.msra.mxu0 %v968
    %2069 = vmatprep.subr.mxu0 %v977
    %2070 = vmatpush1.msra.mxu0 %v976
    %2071 = vmatprep.subr.mxu0 %v985
    %2072 = vmatpush1.msra.mxu0 %v984
    %2073 = vmatprep.subr.mxu0 %v993
    %2074 = vmatpush1.msra.mxu0 %v992
    %2075 = vmatprep.subr.mxu0 %v1001
    %2076 = vmatpush1.msra.mxu0 %v1000
    %2077 = vmatprep.subr.mxu0 %v1009
    %2078 = vmatpush1.msra.mxu0 %v1008
    %2079 = vmatprep.subr.mxu0 %v1017
    %2080 = vmatpush1.msra.mxu0 %v1016
    %2081 = vmatprep.subr.mxu0 %v1025
    %2082 = vmatpush1.msra.mxu0 %v1024
    %2083 = vmatprep.subr.mxu0 %v1033
    %2084 = vmatpush1.msra.mxu0 %v1032
    %2085 = vmatprep.subr.mxu0 %v1041
    %2086 = vmatpush1.msra.mxu0 %v1040
    %2087 = vmatprep.subr.mxu0 %v1049
    %2088 = vmatpush1.msra.mxu0 %v1048
    %2089 = vmatprep.subr.mxu0 %v1057
    %2090 = vmatpush1.msra.mxu0 %v1056
    %2091 = vmatprep.subr.mxu0 %v1065
    %2092 = vmatpush1.msra.mxu0 %v1064
    %2093 = vmatprep.subr.mxu0 %v1073
    %2094 = vmatpush1.msra.mxu0 %v1072
    %2095 = vmatprep.subr.mxu0 %v1081
    %2096 = vmatpush1.msra.mxu0 %v1080
    %2097 = vmatprep.subr.mxu0 %v1089
    %2098 = vmatpush1.msra.mxu0 %v1088
    %2099 = vmatprep.subr.mxu0 %v1097
    %2100 = vmatpush1.msra.mxu0 %v1096
    %2101 = vmatprep.subr.mxu0 %v1105
    %2102 = vmatpush1.msra.mxu0 %v1104
    %2103 = vmatprep.subr.mxu0 %v1113
    %2104 = vmatpush1.msra.mxu0 %v1112
    %2105 = vmatprep.subr.mxu0 %v1121
    %2106 = vmatpush1.msra.mxu0 %v1120
    %2107 = vmatprep.subr.mxu0 %v1129
    %2108 = vmatpush1.msra.mxu0 %v1128
    %2109 = vmatprep.subr.mxu0 %v1137
    %2110 = vmatpush1.msra.mxu0 %v1136
    %2111 = vmatprep.subr.mxu0 %v1145
    %2112 = vmatpush1.msra.mxu0 %v1144
    %2113 = vmatprep.subr.mxu0 %v1153
    %2114 = vmatpush1.msra.mxu0 %v1152
    %2115 = vmatprep.subr.mxu0 %v1161
    %2116 = vmatpush1.msra.mxu0 %v1160
    %2117 = vmatprep.subr.mxu0 %v1169
    %2118 = vmatpush1.msra.mxu0 %v1168
    %2119 = vmatprep.mubr.f32.mxu0 %v1901
    %2120 = vmatmul.mubr.f32.gmra.mrb[0].mxu0 %v1900
    %v2121 = vpop.f32.mrb[0].mxu0
    %v2122 = vadd.f32 0.0, %v2121
    %v2123 = vpop.f32.mrb[0].mxu0
    %v2124 = vadd.f32 0.0, %v2123
    %2125 = vdwg.mxu0
    %2126 = vmatprep.subr.mxu0 %v923
    %2127 = vmatpush1.msra.mxu0 %v922
    %2128 = vmatprep.subr.mxu0 %v931
    %2129 = vmatpush1.msra.mxu0 %v930
    %2130 = vmatprep.subr.mxu0 %v939
    %2131 = vmatpush1.msra.mxu0 %v938
    %2132 = vmatprep.subr.mxu0 %v947
    %2133 = vmatpush1.msra.mxu0 %v946
    %2134 = vmatprep.subr.mxu0 %v955
    %2135 = vmatpush1.msra.mxu0 %v954
    %2136 = vmatprep.subr.mxu0 %v963
    %2137 = vmatpush1.msra.mxu0 %v962
    %2138 = vmatprep.subr.mxu0 %v971
    %2139 = vmatpush1.msra.mxu0 %v970
    %2140 = vmatprep.subr.mxu0 %v979
    %2141 = vmatpush1.msra.mxu0 %v978
    %2142 = vmatprep.subr.mxu0 %v987
    %2143 = vmatpush1.msra.mxu0 %v986
    %2144 = vmatprep.subr.mxu0 %v995
    %2145 = vmatpush1.msra.mxu0 %v994
    %2146 = vmatprep.subr.mxu0 %v1003
    %2147 = vmatpush1.msra.mxu0 %v1002
    %2148 = vmatprep.subr.mxu0 %v1011
    %2149 = vmatpush1.msra.mxu0 %v1010
    %2150 = vmatprep.subr.mxu0 %v1019
    %2151 = vmatpush1.msra.mxu0 %v1018
    %2152 = vmatprep.subr.mxu0 %v1027
    %2153 = vmatpush1.msra.mxu0 %v1026
    %2154 = vmatprep.subr.mxu0 %v1035
    %2155 = vmatpush1.msra.mxu0 %v1034
    %2156 = vmatprep.subr.mxu0 %v1043
    %2157 = vmatpush1.msra.mxu0 %v1042
    %2158 = vmatprep.subr.mxu0 %v1051
    %2159 = vmatpush1.msra.mxu0 %v1050
    %2160 = vmatprep.subr.mxu0 %v1059
    %2161 = vmatpush1.msra.mxu0 %v1058
    %2162 = vmatprep.subr.mxu0 %v1067
    %2163 = vmatpush1.msra.mxu0 %v1066
    %2164 = vmatprep.subr.mxu0 %v1075
    %2165 = vmatpush1.msra.mxu0 %v1074
    %2166 = vmatprep.subr.mxu0 %v1083
    %2167 = vmatpush1.msra.mxu0 %v1082
    %2168 = vmatprep.subr.mxu0 %v1091
    %2169 = vmatpush1.msra.mxu0 %v1090
    %2170 = vmatprep.subr.mxu0 %v1099
    %2171 = vmatpush1.msra.mxu0 %v1098
    %2172 = vmatprep.subr.mxu0 %v1107
    %2173 = vmatpush1.msra.mxu0 %v1106
    %2174 = vmatprep.subr.mxu0 %v1115
    %2175 = vmatpush1.msra.mxu0 %v1114
    %2176 = vmatprep.subr.mxu0 %v1123
    %2177 = vmatpush1.msra.mxu0 %v1122
    %2178 = vmatprep.subr.mxu0 %v1131
    %2179 = vmatpush1.msra.mxu0 %v1130
    %2180 = vmatprep.subr.mxu0 %v1139
    %2181 = vmatpush1.msra.mxu0 %v1138
    %2182 = vmatprep.subr.mxu0 %v1147
    %2183 = vmatpush1.msra.mxu0 %v1146
    %2184 = vmatprep.subr.mxu0 %v1155
    %2185 = vmatpush1.msra.mxu0 %v1154
    %2186 = vmatprep.subr.mxu0 %v1163
    %2187 = vmatpush1.msra.mxu0 %v1162
    %2188 = vmatprep.subr.mxu0 %v1171
    %2189 = vmatpush1.msra.mxu0 %v1170
    %2190 = vmatprep.mubr.f32.mxu0 %v1901
    %2191 = vmatmul.mubr.f32.gmra.mrb[0].mxu0 %v1900
    %v2192 = vpop.f32.mrb[0].mxu0
    %v2193 = vadd.f32 0.0, %v2192
    %v2194 = vpop.f32.mrb[0].mxu0
    %v2195 = vadd.f32 0.0, %v2194
    %2196 = vdwg.mxu0
    %v2197 = vadd.f32 %v1905, %v1980
    %v2198 = vadd.f32 %v1906, %v1982
    %v2199 = vadd.f32 %v1907, %v2051
    %v2200 = vadd.f32 %v1908, %v2053
    %v2201 = vadd.f32 %v1909, %v2122
    %v2202 = vadd.f32 %v1910, %v2124
    %v2203 = vadd.f32 %v1911, %v2193
    %v2204 = vadd.f32 %v1912, %v2195
    %v2205 = vxor.u32 %v2197, 2147483648
    %v2206 = vxor.u32 %v2198, 2147483648
    %v2207 = vmul.f32 %v2205, 1.442695
    %v2208 = vpow.pop %v2207
    %v2209 = vmul.f32 %v2206, 1.442695
    %v2210 = vpow.pop %v2209
    %v2211 = vadd.f32 %v2208, 1.0
    %v2212 = vadd.f32 %v2210, 1.0
    %v2213 = vrcp.pop %v2211
    %v2214 = vmul.f32 1.0, %v2213
    %v2215 = vrcp.pop %v2212
    %v2216 = vmul.f32 1.0, %v2215
    %v2217 = vxor.u32 %v2199, 2147483648
    %v2218 = vxor.u32 %v2200, 2147483648
    %v2219 = vmul.f32 %v2217, 1.442695
    %v2220 = vpow.pop %v2219
    %v2221 = vmul.f32 %v2218, 1.442695
    %v2222 = vpow.pop %v2221
    %v2223 = vadd.f32 %v2220, 1.0
    %v2224 = vadd.f32 %v2222, 1.0
    %v2225 = vrcp.pop %v2223
    %v2226 = vmul.f32 1.0, %v2225
    %v2227 = vrcp.pop %v2224
    %v2228 = vmul.f32 1.0, %v2227
    %v2229 = vtanh.pop %v2201
    %v2230 = vtanh.pop %v2202
    %v2231 = vxor.u32 %v2203, 2147483648
    %v2232 = vxor.u32 %v2204, 2147483648
    %v2233 = vmul.f32 %v2231, 1.442695
    %v2234 = vpow.pop %v2233
    %v2235 = vmul.f32 %v2232, 1.442695
    %v2236 = vpow.pop %v2235
    %v2237 = vadd.f32 %v2234, 1.0
    %v2238 = vadd.f32 %v2236, 1.0
    %v2239 = vrcp.pop %v2237
    %v2240 = vmul.f32 1.0, %v2239
    %v2241 = vrcp.pop %v2238
    %v2242 = vmul.f32 1.0, %v2241
    %v2243 = vld [vmem:[#allocation5] sm:$0xff]
    %v2244 = vld [vmem:[#allocation5 + $0x8] sm:$0xff]
    %v2245 = vmul.f32 %v2226, %v2243
    %v2246 = vmul.f32 %v2228, %v2244
    %v2247 = vmul.f32 %v2214, %v2229
    %v2248 = vmul.f32 %v2216, %v2230
    %v2249 = vadd.f32 %v2245, %v2247
    %v2250 = vadd.f32 %v2246, %v2248
    %v2251 = vtanh.pop %v2249
    %v2252 = vtanh.pop %v2250
    %v2253 = vmul.f32 %v2240, %v2251
    %v2254 = vmul.f32 %v2242, %v2252
    %2255 = vst [vmem:[#allocation4] sm:$0xff] %v2253
    %2256 = vst [vmem:[#allocation4 + $0x8] sm:$0xff] %v2254
    %2257 = vst [vmem:[#allocation5] sm:$0xff] %v2249
    %2258 = vst [vmem:[#allocation5 + $0x8] sm:$0xff] %v2250
    %s2259 = smul.u32 2, 2
    %s2260 = smul.addr %s2259, 8
    %s2261 = scalar_lea.vmem [#allocation3], %s2260
    %2262 = vst [vmem:[%s2261] sm:$0xff] %v2253
    %2263 = vst [vmem:[%s2261 + $0x8] sm:$0xff] %v2254
    %v2264 = vld [vmem:[#allocation4] sm:$0xff]
    %v2265 = vld [vmem:[#allocation4 + $0x8] sm:$0xff]
    %s2266 = smul.u32 3, 8
    %s2267 = smul.addr %s2266, 8
    %s2268 = scalar_lea.vmem [#allocation2], %s2267
    %v2269 = vld [vmem:[%s2268] sm:$0xff]
    %v2270 = vld [vmem:[%s2268 + $0x8] sm:$0xff]
    %v2271 = vld [vmem:[%s2268 + $0x10] sm:$0xff]
    %v2272 = vld [vmem:[%s2268 + $0x18] sm:$0xff]
    %v2273 = vld [vmem:[%s2268 + $0x20] sm:$0xff]
    %v2274 = vld [vmem:[%s2268 + $0x28] sm:$0xff]
    %v2275 = vld [vmem:[%s2268 + $0x30] sm:$0xff]
    %v2276 = vld [vmem:[%s2268 + $0x38] sm:$0xff]
    %2277 = vmatprep.subr.mxu0 %v917
    %2278 = vmatpush1.msra.mxu0 %v916
    %2279 = vmatprep.subr.mxu0 %v925
    %2280 = vmatpush1.msra.mxu0 %v924
    %2281 = vmatprep.subr.mxu0 %v933
    %2282 = vmatpush1.msra.mxu0 %v932
    %2283 = vmatprep.subr.mxu0 %v941
    %2284 = vmatpush1.msra.mxu0 %v940
    %2285 = vmatprep.subr.mxu0 %v949
    %2286 = vmatpush1.msra.mxu0 %v948
    %2287 = vmatprep.subr.mxu0 %v957
    %2288 = vmatpush1.msra.mxu0 %v956
    %2289 = vmatprep.subr.mxu0 %v965
    %2290 = vmatpush1.msra.mxu0 %v964
    %2291 = vmatprep.subr.mxu0 %v973
    %2292 = vmatpush1.msra.mxu0 %v972
    %2293 = vmatprep.subr.mxu0 %v981
    %2294 = vmatpush1.msra.mxu0 %v980
    %2295 = vmatprep.subr.mxu0 %v989
    %2296 = vmatpush1.msra.mxu0 %v988
    %2297 = vmatprep.subr.mxu0 %v997
    %2298 = vmatpush1.msra.mxu0 %v996
    %2299 = vmatprep.subr.mxu0 %v1005
    %2300 = vmatpush1.msra.mxu0 %v1004
    %2301 = vmatprep.subr.mxu0 %v1013
    %2302 = vmatpush1.msra.mxu0 %v1012
    %2303 = vmatprep.subr.mxu0 %v1021
    %2304 = vmatpush1.msra.mxu0 %v1020
    %2305 = vmatprep.subr.mxu0 %v1029
    %2306 = vmatpush1.msra.mxu0 %v1028
    %2307 = vmatprep.subr.mxu0 %v1037
    %2308 = vmatpush1.msra.mxu0 %v1036
    %2309 = vmatprep.subr.mxu0 %v1045
    %2310 = vmatpush1.msra.mxu0 %v1044
    %2311 = vmatprep.subr.mxu0 %v1053
    %2312 = vmatpush1.msra.mxu0 %v1052
    %2313 = vmatprep.subr.mxu0 %v1061
    %2314 = vmatpush1.msra.mxu0 %v1060
    %2315 = vmatprep.subr.mxu0 %v1069
    %2316 = vmatpush1.msra.mxu0 %v1068
    %2317 = vmatprep.subr.mxu0 %v1077
    %2318 = vmatpush1.msra.mxu0 %v1076
    %2319 = vmatprep.subr.mxu0 %v1085
    %2320 = vmatpush1.msra.mxu0 %v1084
    %2321 = vmatprep.subr.mxu0 %v1093
    %2322 = vmatpush1.msra.mxu0 %v1092
    %2323 = vmatprep.subr.mxu0 %v1101
    %2324 = vmatpush1.msra.mxu0 %v1100
    %2325 = vmatprep.subr.mxu0 %v1109
    %2326 = vmatpush1.msra.mxu0 %v1108
    %2327 = vmatprep.subr.mxu0 %v1117
    %2328 = vmatpush1.msra.mxu0 %v1116
    %2329 = vmatprep.subr.mxu0 %v1125
    %2330 = vmatpush1.msra.mxu0 %v1124
    %2331 = vmatprep.subr.mxu0 %v1133
    %2332 = vmatpush1.msra.mxu0 %v1132
    %2333 = vmatprep.subr.mxu0 %v1141
    %2334 = vmatpush1.msra.mxu0 %v1140
    %2335 = vmatprep.subr.mxu0 %v1149
    %2336 = vmatpush1.msra.mxu0 %v1148
    %2337 = vmatprep.subr.mxu0 %v1157
    %2338 = vmatpush1.msra.mxu0 %v1156
    %2339 = vmatprep.subr.mxu0 %v1165
    %2340 = vmatpush1.msra.mxu0 %v1164
    %2341 = vmatprep.mubr.f32.mxu0 %v2265
    %2342 = vmatmul.mubr.f32.gmra.mrb[0].mxu0 %v2264
    %v2343 = vpop.f32.mrb[0].mxu0
    %v2344 = vadd.f32 0.0, %v2343
    %v2345 = vpop.f32.mrb[0].mxu0
    %v2346 = vadd.f32 0.0, %v2345
    %2347 = vdwg.mxu0
    %2348 = vmatprep.subr.mxu0 %v919
    %2349 = vmatpush1.msra.mxu0 %v918
    %2350 = vmatprep.subr.mxu0 %v927
    %2351 = vmatpush1.msra.mxu0 %v926
    %2352 = vmatprep.subr.mxu0 %v935
    %2353 = vmatpush1.msra.mxu0 %v934
    %2354 = vmatprep.subr.mxu0 %v943
    %2355 = vmatpush1.msra.mxu0 %v942
    %2356 = vmatprep.subr.mxu0 %v951
    %2357 = vmatpush1.msra.mxu0 %v950
    %2358 = vmatprep.subr.mxu0 %v959
    %2359 = vmatpush1.msra.mxu0 %v958
    %2360 = vmatprep.subr.mxu0 %v967
    %2361 = vmatpush1.msra.mxu0 %v966
    %2362 = vmatprep.subr.mxu0 %v975
    %2363 = vmatpush1.msra.mxu0 %v974
    %2364 = vmatprep.subr.mxu0 %v983
    %2365 = vmatpush1.msra.mxu0 %v982
    %2366 = vmatprep.subr.mxu0 %v991
    %2367 = vmatpush1.msra.mxu0 %v990
    %2368 = vmatprep.subr.mxu0 %v999
    %2369 = vmatpush1.msra.mxu0 %v998
    %2370 = vmatprep.subr.mxu0 %v1007
    %2371 = vmatpush1.msra.mxu0 %v1006
    %2372 = vmatprep.subr.mxu0 %v1015
    %2373 = vmatpush1.msra.mxu0 %v1014
    %2374 = vmatprep.subr.mxu0 %v1023
    %2375 = vmatpush1.msra.mxu0 %v1022
    %2376 = vmatprep.subr.mxu0 %v1031
    %2377 = vmatpush1.msra.mxu0 %v1030
    %2378 = vmatprep.subr.mxu0 %v1039
    %2379 = vmatpush1.msra.mxu0 %v1038
    %2380 = vmatprep.subr.mxu0 %v1047
    %2381 = vmatpush1.msra.mxu0 %v1046
    %2382 = vmatprep.subr.mxu0 %v1055
    %2383 = vmatpush1.msra.mxu0 %v1054
    %2384 = vmatprep.subr.mxu0 %v1063
    %2385 = vmatpush1.msra.mxu0 %v1062
    %2386 = vmatprep.subr.mxu0 %v1071
    %2387 = vmatpush1.msra.mxu0 %v1070
    %2388 = vmatprep.subr.mxu0 %v1079
    %2389 = vmatpush1.msra.mxu0 %v1078
    %2390 = vmatprep.subr.mxu0 %v1087
    %2391 = vmatpush1.msra.mxu0 %v1086
    %2392 = vmatprep.subr.mxu0 %v1095
    %2393 = vmatpush1.msra.mxu0 %v1094
    %2394 = vmatprep.subr.mxu0 %v1103
    %2395 = vmatpush1.msra.mxu0 %v1102
    %2396 = vmatprep.subr.mxu0 %v1111
    %2397 = vmatpush1.msra.mxu0 %v1110
    %2398 = vmatprep.subr.mxu0 %v1119
    %2399 = vmatpush1.msra.mxu0 %v1118
    %2400 = vmatprep.subr.mxu0 %v1127
    %2401 = vmatpush1.msra.mxu0 %v1126
    %2402 = vmatprep.subr.mxu0 %v1135
    %2403 = vmatpush1.msra.mxu0 %v1134
    %2404 = vmatprep.subr.mxu0 %v1143
    %2405 = vmatpush1.msra.mxu0 %v1142
    %2406 = vmatprep.subr.mxu0 %v1151
    %2407 = vmatpush1.msra.mxu0 %v1150
    %2408 = vmatprep.subr.mxu0 %v1159
    %2409 = vmatpush1.msra.mxu0 %v1158
    %2410 = vmatprep.subr.mxu0 %v1167
    %2411 = vmatpush1.msra.mxu0 %v1166
    %2412 = vmatprep.mubr.f32.mxu0 %v2265
    %2413 = vmatmul.mubr.f32.gmra.mrb[0].mxu0 %v2264
    %v2414 = vpop.f32.mrb[0].mxu0
    %v2415 = vadd.f32 0.0, %v2414
    %v2416 = vpop.f32.mrb[0].mxu0
    %v2417 = vadd.f32 0.0, %v2416
    %2418 = vdwg.mxu0
    %2419 = vmatprep.subr.mxu0 %v921
    %2420 = vmatpush1.msra.mxu0 %v920
    %2421 = vmatprep.subr.mxu0 %v929
    %2422 = vmatpush1.msra.mxu0 %v928
    %2423 = vmatprep.subr.mxu0 %v937
    %2424 = vmatpush1.msra.mxu0 %v936
    %2425 = vmatprep.subr.mxu0 %v945
    %2426 = vmatpush1.msra.mxu0 %v944
    %2427 = vmatprep.subr.mxu0 %v953
    %2428 = vmatpush1.msra.mxu0 %v952
    %2429 = vmatprep.subr.mxu0 %v961
    %2430 = vmatpush1.msra.mxu0 %v960
    %2431 = vmatprep.subr.mxu0 %v969
    %2432 = vmatpush1.msra.mxu0 %v968
    %2433 = vmatprep.subr.mxu0 %v977
    %2434 = vmatpush1.msra.mxu0 %v976
    %2435 = vmatprep.subr.mxu0 %v985
    %2436 = vmatpush1.msra.mxu0 %v984
    %2437 = vmatprep.subr.mxu0 %v993
    %2438 = vmatpush1.msra.mxu0 %v992
    %2439 = vmatprep.subr.mxu0 %v1001
    %2440 = vmatpush1.msra.mxu0 %v1000
    %2441 = vmatprep.subr.mxu0 %v1009
    %2442 = vmatpush1.msra.mxu0 %v1008
    %2443 = vmatprep.subr.mxu0 %v1017
    %2444 = vmatpush1.msra.mxu0 %v1016
    %2445 = vmatprep.subr.mxu0 %v1025
    %2446 = vmatpush1.msra.mxu0 %v1024
    %2447 = vmatprep.subr.mxu0 %v1033
    %2448 = vmatpush1.msra.mxu0 %v1032
    %2449 = vmatprep.subr.mxu0 %v1041
    %2450 = vmatpush1.msra.mxu0 %v1040
    %2451 = vmatprep.subr.mxu0 %v1049
    %2452 = vmatpush1.msra.mxu0 %v1048
    %2453 = vmatprep.subr.mxu0 %v1057
    %2454 = vmatpush1.msra.mxu0 %v1056
    %2455 = vmatprep.subr.mxu0 %v1065
    %2456 = vmatpush1.msra.mxu0 %v1064
    %2457 = vmatprep.subr.mxu0 %v1073
    %2458 = vmatpush1.msra.mxu0 %v1072
    %2459 = vmatprep.subr.mxu0 %v1081
    %2460 = vmatpush1.msra.mxu0 %v1080
    %2461 = vmatprep.subr.mxu0 %v1089
    %2462 = vmatpush1.msra.mxu0 %v1088
    %2463 = vmatprep.subr.mxu0 %v1097
    %2464 = vmatpush1.msra.mxu0 %v1096
    %2465 = vmatprep.subr.mxu0 %v1105
    %2466 = vmatpush1.msra.mxu0 %v1104
    %2467 = vmatprep.subr.mxu0 %v1113
    %2468 = vmatpush1.msra.mxu0 %v1112
    %2469 = vmatprep.subr.mxu0 %v1121
    %2470 = vmatpush1.msra.mxu0 %v1120
    %2471 = vmatprep.subr.mxu0 %v1129
    %2472 = vmatpush1.msra.mxu0 %v1128
    %2473 = vmatprep.subr.mxu0 %v1137
    %2474 = vmatpush1.msra.mxu0 %v1136
    %2475 = vmatprep.subr.mxu0 %v1145
    %2476 = vmatpush1.msra.mxu0 %v1144
    %2477 = vmatprep.subr.mxu0 %v1153
    %2478 = vmatpush1.msra.mxu0 %v1152
    %2479 = vmatprep.subr.mxu0 %v1161
    %2480 = vmatpush1.msra.mxu0 %v1160
    %2481 = vmatprep.subr.mxu0 %v1169
    %2482 = vmatpush1.msra.mxu0 %v1168
    %2483 = vmatprep.mubr.f32.mxu0 %v2265
    %2484 = vmatmul.mubr.f32.gmra.mrb[0].mxu0 %v2264
    %v2485 = vpop.f32.mrb[0].mxu0
    %v2486 = vadd.f32 0.0, %v2485
    %v2487 = vpop.f32.mrb[0].mxu0
    %v2488 = vadd.f32 0.0, %v2487
    %2489 = vdwg.mxu0
    %2490 = vmatprep.subr.mxu0 %v923
    %2491 = vmatpush1.msra.mxu0 %v922
    %2492 = vmatprep.subr.mxu0 %v931
    %2493 = vmatpush1.msra.mxu0 %v930
    %2494 = vmatprep.subr.mxu0 %v939
    %2495 = vmatpush1.msra.mxu0 %v938
    %2496 = vmatprep.subr.mxu0 %v947
    %2497 = vmatpush1.msra.mxu0 %v946
    %2498 = vmatprep.subr.mxu0 %v955
    %2499 = vmatpush1.msra.mxu0 %v954
    %2500 = vmatprep.subr.mxu0 %v963
    %2501 = vmatpush1.msra.mxu0 %v962
    %2502 = vmatprep.subr.mxu0 %v971
    %2503 = vmatpush1.msra.mxu0 %v970
    %2504 = vmatprep.subr.mxu0 %v979
    %2505 = vmatpush1.msra.mxu0 %v978
    %2506 = vmatprep.subr.mxu0 %v987
    %2507 = vmatpush1.msra.mxu0 %v986
    %2508 = vmatprep.subr.mxu0 %v995
    %2509 = vmatpush1.msra.mxu0 %v994
    %2510 = vmatprep.subr.mxu0 %v1003
    %2511 = vmatpush1.msra.mxu0 %v1002
    %2512 = vmatprep.subr.mxu0 %v1011
    %2513 = vmatpush1.msra.mxu0 %v1010
    %2514 = vmatprep.subr.mxu0 %v1019
    %2515 = vmatpush1.msra.mxu0 %v1018
    %2516 = vmatprep.subr.mxu0 %v1027
    %2517 = vmatpush1.msra.mxu0 %v1026
    %2518 = vmatprep.subr.mxu0 %v1035
    %2519 = vmatpush1.msra.mxu0 %v1034
    %2520 = vmatprep.subr.mxu0 %v1043
    %2521 = vmatpush1.msra.mxu0 %v1042
    %2522 = vmatprep.subr.mxu0 %v1051
    %2523 = vmatpush1.msra.mxu0 %v1050
    %2524 = vmatprep.subr.mxu0 %v1059
    %2525 = vmatpush1.msra.mxu0 %v1058
    %2526 = vmatprep.subr.mxu0 %v1067
    %2527 = vmatpush1.msra.mxu0 %v1066
    %2528 = vmatprep.subr.mxu0 %v1075
    %2529 = vmatpush1.msra.mxu0 %v1074
    %2530 = vmatprep.subr.mxu0 %v1083
    %2531 = vmatpush1.msra.mxu0 %v1082
    %2532 = vmatprep.subr.mxu0 %v1091
    %2533 = vmatpush1.msra.mxu0 %v1090
    %2534 = vmatprep.subr.mxu0 %v1099
    %2535 = vmatpush1.msra.mxu0 %v1098
    %2536 = vmatprep.subr.mxu0 %v1107
    %2537 = vmatpush1.msra.mxu0 %v1106
    %2538 = vmatprep.subr.mxu0 %v1115
    %2539 = vmatpush1.msra.mxu0 %v1114
    %2540 = vmatprep.subr.mxu0 %v1123
    %2541 = vmatpush1.msra.mxu0 %v1122
    %2542 = vmatprep.subr.mxu0 %v1131
    %2543 = vmatpush1.msra.mxu0 %v1130
    %2544 = vmatprep.subr.mxu0 %v1139
    %2545 = vmatpush1.msra.mxu0 %v1138
    %2546 = vmatprep.subr.mxu0 %v1147
    %2547 = vmatpush1.msra.mxu0 %v1146
    %2548 = vmatprep.subr.mxu0 %v1155
    %2549 = vmatpush1.msra.mxu0 %v1154
    %2550 = vmatprep.subr.mxu0 %v1163
    %2551 = vmatpush1.msra.mxu0 %v1162
    %2552 = vmatprep.subr.mxu0 %v1171
    %2553 = vmatpush1.msra.mxu0 %v1170
    %2554 = vmatprep.mubr.f32.mxu0 %v2265
    %2555 = vmatmul.mubr.f32.gmra.mrb[0].mxu0 %v2264
    %v2556 = vpop.f32.mrb[0].mxu0
    %v2557 = vadd.f32 0.0, %v2556
    %v2558 = vpop.f32.mrb[0].mxu0
    %v2559 = vadd.f32 0.0, %v2558
    %2560 = vdwg.mxu0
    %v2561 = vadd.f32 %v2269, %v2344
    %v2562 = vadd.f32 %v2270, %v2346
    %v2563 = vadd.f32 %v2271, %v2415
    %v2564 = vadd.f32 %v2272, %v2417
    %v2565 = vadd.f32 %v2273, %v2486
    %v2566 = vadd.f32 %v2274, %v2488
    %v2567 = vadd.f32 %v2275, %v2557
    %v2568 = vadd.f32 %v2276, %v2559
    %v2569 = vxor.u32 %v2561, 2147483648
    %v2570 = vxor.u32 %v2562, 2147483648
    %v2571 = vmul.f32 %v2569, 1.442695
    %v2572 = vpow.pop %v2571
    %v2573 = vmul.f32 %v2570, 1.442695
    %v2574 = vpow.pop %v2573
    %v2575 = vadd.f32 %v2572, 1.0
    %v2576 = vadd.f32 %v2574, 1.0
    %v2577 = vrcp.pop %v2575
    %v2578 = vmul.f32 1.0, %v2577
    %v2579 = vrcp.pop %v2576
    %v2580 = vmul.f32 1.0, %v2579
    %v2581 = vxor.u32 %v2563, 2147483648
    %v2582 = vxor.u32 %v2564, 2147483648
    %v2583 = vmul.f32 %v2581, 1.442695
    %v2584 = vpow.pop %v2583
    %v2585 = vmul.f32 %v2582, 1.442695
    %v2586 = vpow.pop %v2585
    %v2587 = vadd.f32 %v2584, 1.0
    %v2588 = vadd.f32 %v2586, 1.0
    %v2589 = vrcp.pop %v2587
    %v2590 = vmul.f32 1.0, %v2589
    %v2591 = vrcp.pop %v2588
    %v2592 = vmul.f32 1.0, %v2591
    %v2593 = vtanh.pop %v2565
    %v2594 = vtanh.pop %v2566
    %v2595 = vxor.u32 %v2567, 2147483648
    %v2596 = vxor.u32 %v2568, 2147483648
    %v2597 = vmul.f32 %v2595, 1.442695
    %v2598 = vpow.pop %v2597
    %v2599 = vmul.f32 %v2596, 1.442695
    %v2600 = vpow.pop %v2599
    %v2601 = vadd.f32 %v2598, 1.0
    %v2602 = vadd.f32 %v2600, 1.0
    %v2603 = vrcp.pop %v2601
    %v2604 = vmul.f32 1.0, %v2603
    %v2605 = vrcp.pop %v2602
    %v2606 = vmul.f32 1.0, %v2605
    %v2607 = vld [vmem:[#allocation5] sm:$0xff]
    %v2608 = vld [vmem:[#allocation5 + $0x8] sm:$0xff]
    %v2609 = vmul.f32 %v2590, %v2607
    %v2610 = vmul.f32 %v2592, %v2608
    %v2611 = vmul.f32 %v2578, %v2593
    %v2612 = vmul.f32 %v2580, %v2594
    %v2613 = vadd.f32 %v2609, %v2611
    %v2614 = vadd.f32 %v2610, %v2612
    %v2615 = vtanh.pop %v2613
    %v2616 = vtanh.pop %v2614
    %v2617 = vmul.f32 %v2604, %v2615
    %v2618 = vmul.f32 %v2606, %v2616
    %2619 = vst [vmem:[#allocation4] sm:$0xff] %v2617
    %2620 = vst [vmem:[#allocation4 + $0x8] sm:$0xff] %v2618
    %2621 = vst [vmem:[#allocation5] sm:$0xff] %v2613
    %2622 = vst [vmem:[#allocation5 + $0x8] sm:$0xff] %v2614
    %s2623 = smul.u32 3, 2
    %s2624 = smul.addr %s2623, 8
    %s2625 = scalar_lea.vmem [#allocation3], %s2624
    %2626 = vst [vmem:[%s2625] sm:$0xff] %v2617
    %2627 = vst [vmem:[%s2625 + $0x8] sm:$0xff] %v2618
    %v2628 = vld [vmem:[#allocation4] sm:$0xff]
    %v2629 = vld [vmem:[#allocation4 + $0x8] sm:$0xff]
    %s2630 = smul.u32 4, 8
    %s2631 = smul.addr %s2630, 8
    %s2632 = scalar_lea.vmem [#allocation2], %s2631
    %v2633 = vld [vmem:[%s2632] sm:$0xff]
    %v2634 = vld [vmem:[%s2632 + $0x8] sm:$0xff]
    %v2635 = vld [vmem:[%s2632 + $0x10] sm:$0xff]
    %v2636 = vld [vmem:[%s2632 + $0x18] sm:$0xff]
    %v2637 = vld [vmem:[%s2632 + $0x20] sm:$0xff]
    %v2638 = vld [vmem:[%s2632 + $0x28] sm:$0xff]
    %v2639 = vld [vmem:[%s2632 + $0x30] sm:$0xff]
    %v2640 = vld [vmem:[%s2632 + $0x38] sm:$0xff]
    %2641 = vmatprep.subr.mxu0 %v917
    %2642 = vmatpush1.msra.mxu0 %v916
    %2643 = vmatprep.subr.mxu0 %v925
    %2644 = vmatpush1.msra.mxu0 %v924
    %2645 = vmatprep.subr.mxu0 %v933
    %2646 = vmatpush1.msra.mxu0 %v932
    %2647 = vmatprep.subr.mxu0 %v941
    %2648 = vmatpush1.msra.mxu0 %v940
    %2649 = vmatprep.subr.mxu0 %v949
    %2650 = vmatpush1.msra.mxu0 %v948
    %2651 = vmatprep.subr.mxu0 %v957
    %2652 = vmatpush1.msra.mxu0 %v956
    %2653 = vmatprep.subr.mxu0 %v965
    %2654 = vmatpush1.msra.mxu0 %v964
    %2655 = vmatprep.subr.mxu0 %v973
    %2656 = vmatpush1.msra.mxu0 %v972
    %2657 = vmatprep.subr.mxu0 %v981
    %2658 = vmatpush1.msra.mxu0 %v980
    %2659 = vmatprep.subr.mxu0 %v989
    %2660 = vmatpush1.msra.mxu0 %v988
    %2661 = vmatprep.subr.mxu0 %v997
    %2662 = vmatpush1.msra.mxu0 %v996
    %2663 = vmatprep.subr.mxu0 %v1005
    %2664 = vmatpush1.msra.mxu0 %v1004
    %2665 = vmatprep.subr.mxu0 %v1013
    %2666 = vmatpush1.msra.mxu0 %v1012
    %2667 = vmatprep.subr.mxu0 %v1021
    %2668 = vmatpush1.msra.mxu0 %v1020
    %2669 = vmatprep.subr.mxu0 %v1029
    %2670 = vmatpush1.msra.mxu0 %v1028
    %2671 = vmatprep.subr.mxu0 %v1037
    %2672 = vmatpush1.msra.mxu0 %v1036
    %2673 = vmatprep.subr.mxu0 %v1045
    %2674 = vmatpush1.msra.mxu0 %v1044
    %2675 = vmatprep.subr.mxu0 %v1053
    %2676 = vmatpush1.msra.mxu0 %v1052
    %2677 = vmatprep.subr.mxu0 %v1061
    %2678 = vmatpush1.msra.mxu0 %v1060
    %2679 = vmatprep.subr.mxu0 %v1069
    %2680 = vmatpush1.msra.mxu0 %v1068
    %2681 = vmatprep.subr.mxu0 %v1077
    %2682 = vmatpush1.msra.mxu0 %v1076
    %2683 = vmatprep.subr.mxu0 %v1085
    %2684 = vmatpush1.msra.mxu0 %v1084
    %2685 = vmatprep.subr.mxu0 %v1093
    %2686 = vmatpush1.msra.mxu0 %v1092
    %2687 = vmatprep.subr.mxu0 %v1101
    %2688 = vmatpush1.msra.mxu0 %v1100
    %2689 = vmatprep.subr.mxu0 %v1109
    %2690 = vmatpush1.msra.mxu0 %v1108
    %2691 = vmatprep.subr.mxu0 %v1117
    %2692 = vmatpush1.msra.mxu0 %v1116
    %2693 = vmatprep.subr.mxu0 %v1125
    %2694 = vmatpush1.msra.mxu0 %v1124
    %2695 = vmatprep.subr.mxu0 %v1133
    %2696 = vmatpush1.msra.mxu0 %v1132
    %2697 = vmatprep.subr.mxu0 %v1141
    %2698 = vmatpush1.msra.mxu0 %v1140
    %2699 = vmatprep.subr.mxu0 %v1149
    %2700 = vmatpush1.msra.mxu0 %v1148
    %2701 = vmatprep.subr.mxu0 %v1157
    %2702 = vmatpush1.msra.mxu0 %v1156
    %2703 = vmatprep.subr.mxu0 %v1165
    %2704 = vmatpush1.msra.mxu0 %v1164
    %2705 = vmatprep.mubr.f32.mxu0 %v2629
    %2706 = vmatmul.mubr.f32.gmra.mrb[0].mxu0 %v2628
    %v2707 = vpop.f32.mrb[0].mxu0
    %v2708 = vadd.f32 0.0, %v2707
    %v2709 = vpop.f32.mrb[0].mxu0
    %v2710 = vadd.f32 0.0, %v2709
    %2711 = vdwg.mxu0
    %2712 = vmatprep.subr.mxu0 %v919
    %2713 = vmatpush1.msra.mxu0 %v918
    %2714 = vmatprep.subr.mxu0 %v927
    %2715 = vmatpush1.msra.mxu0 %v926
    %2716 = vmatprep.subr.mxu0 %v935
    %2717 = vmatpush1.msra.mxu0 %v934
    %2718 = vmatprep.subr.mxu0 %v943
    %2719 = vmatpush1.msra.mxu0 %v942
    %2720 = vmatprep.subr.mxu0 %v951
    %2721 = vmatpush1.msra.mxu0 %v950
    %2722 = vmatprep.subr.mxu0 %v959
    %2723 = vmatpush1.msra.mxu0 %v958
    %2724 = vmatprep.subr.mxu0 %v967
    %2725 = vmatpush1.msra.mxu0 %v966
    %2726 = vmatprep.subr.mxu0 %v975
    %2727 = vmatpush1.msra.mxu0 %v974
    %2728 = vmatprep.subr.mxu0 %v983
    %2729 = vmatpush1.msra.mxu0 %v982
    %2730 = vmatprep.subr.mxu0 %v991
    %2731 = vmatpush1.msra.mxu0 %v990
    %2732 = vmatprep.subr.mxu0 %v999
    %2733 = vmatpush1.msra.mxu0 %v998
    %2734 = vmatprep.subr.mxu0 %v1007
    %2735 = vmatpush1.msra.mxu0 %v1006
    %2736 = vmatprep.subr.mxu0 %v1015
    %2737 = vmatpush1.msra.mxu0 %v1014
    %2738 = vmatprep.subr.mxu0 %v1023
    %2739 = vmatpush1.msra.mxu0 %v1022
    %2740 = vmatprep.subr.mxu0 %v1031
    %2741 = vmatpush1.msra.mxu0 %v1030
    %2742 = vmatprep.subr.mxu0 %v1039
    %2743 = vmatpush1.msra.mxu0 %v1038
    %2744 = vmatprep.subr.mxu0 %v1047
    %2745 = vmatpush1.msra.mxu0 %v1046
    %2746 = vmatprep.subr.mxu0 %v1055
    %2747 = vmatpush1.msra.mxu0 %v1054
    %2748 = vmatprep.subr.mxu0 %v1063
    %2749 = vmatpush1.msra.mxu0 %v1062
    %2750 = vmatprep.subr.mxu0 %v1071
    %2751 = vmatpush1.msra.mxu0 %v1070
    %2752 = vmatprep.subr.mxu0 %v1079
    %2753 = vmatpush1.msra.mxu0 %v1078
    %2754 = vmatprep.subr.mxu0 %v1087
    %2755 = vmatpush1.msra.mxu0 %v1086
    %2756 = vmatprep.subr.mxu0 %v1095
    %2757 = vmatpush1.msra.mxu0 %v1094
    %2758 = vmatprep.subr.mxu0 %v1103
    %2759 = vmatpush1.msra.mxu0 %v1102
    %2760 = vmatprep.subr.mxu0 %v1111
    %2761 = vmatpush1.msra.mxu0 %v1110
    %2762 = vmatprep.subr.mxu0 %v1119
    %2763 = vmatpush1.msra.mxu0 %v1118
    %2764 = vmatprep.subr.mxu0 %v1127
    %2765 = vmatpush1.msra.mxu0 %v1126
    %2766 = vmatprep.subr.mxu0 %v1135
    %2767 = vmatpush1.msra.mxu0 %v1134
    %2768 = vmatprep.subr.mxu0 %v1143
    %2769 = vmatpush1.msra.mxu0 %v1142
    %2770 = vmatprep.subr.mxu0 %v1151
    %2771 = vmatpush1.msra.mxu0 %v1150
    %2772 = vmatprep.subr.mxu0 %v1159
    %2773 = vmatpush1.msra.mxu0 %v1158
    %2774 = vmatprep.subr.mxu0 %v1167
    %2775 = vmatpush1.msra.mxu0 %v1166
    %2776 = vmatprep.mubr.f32.mxu0 %v2629
    %2777 = vmatmul.mubr.f32.gmra.mrb[0].mxu0 %v2628
    %v2778 = vpop.f32.mrb[0].mxu0
    %v2779 = vadd.f32 0.0, %v2778
    %v2780 = vpop.f32.mrb[0].mxu0
    %v2781 = vadd.f32 0.0, %v2780
    %2782 = vdwg.mxu0
    %2783 = vmatprep.subr.mxu0 %v921
    %2784 = vmatpush1.msra.mxu0 %v920
    %2785 = vmatprep.subr.mxu0 %v929
    %2786 = vmatpush1.msra.mxu0 %v928
    %2787 = vmatprep.subr.mxu0 %v937
    %2788 = vmatpush1.msra.mxu0 %v936
    %2789 = vmatprep.subr.mxu0 %v945
    %2790 = vmatpush1.msra.mxu0 %v944
    %2791 = vmatprep.subr.mxu0 %v953
    %2792 = vmatpush1.msra.mxu0 %v952
    %2793 = vmatprep.subr.mxu0 %v961
    %2794 = vmatpush1.msra.mxu0 %v960
    %2795 = vmatprep.subr.mxu0 %v969
    %2796 = vmatpush1.msra.mxu0 %v968
    %2797 = vmatprep.subr.mxu0 %v977
    %2798 = vmatpush1.msra.mxu0 %v976
    %2799 = vmatprep.subr.mxu0 %v985
    %2800 = vmatpush1.msra.mxu0 %v984
    %2801 = vmatprep.subr.mxu0 %v993
    %2802 = vmatpush1.msra.mxu0 %v992
    %2803 = vmatprep.subr.mxu0 %v1001
    %2804 = vmatpush1.msra.mxu0 %v1000
    %2805 = vmatprep.subr.mxu0 %v1009
    %2806 = vmatpush1.msra.mxu0 %v1008
    %2807 = vmatprep.subr.mxu0 %v1017
    %2808 = vmatpush1.msra.mxu0 %v1016
    %2809 = vmatprep.subr.mxu0 %v1025
    %2810 = vmatpush1.msra.mxu0 %v1024
    %2811 = vmatprep.subr.mxu0 %v1033
    %2812 = vmatpush1.msra.mxu0 %v1032
    %2813 = vmatprep.subr.mxu0 %v1041
    %2814 = vmatpush1.msra.mxu0 %v1040
    %2815 = vmatprep.subr.mxu0 %v1049
    %2816 = vmatpush1.msra.mxu0 %v1048
    %2817 = vmatprep.subr.mxu0 %v1057
    %2818 = vmatpush1.msra.mxu0 %v1056
    %2819 = vmatprep.subr.mxu0 %v1065
    %2820 = vmatpush1.msra.mxu0 %v1064
    %2821 = vmatprep.subr.mxu0 %v1073
    %2822 = vmatpush1.msra.mxu0 %v1072
    %2823 = vmatprep.subr.mxu0 %v1081
    %2824 = vmatpush1.msra.mxu0 %v1080
    %2825 = vmatprep.subr.mxu0 %v1089
    %2826 = vmatpush1.msra.mxu0 %v1088
    %2827 = vmatprep.subr.mxu0 %v1097
    %2828 = vmatpush1.msra.mxu0 %v1096
    %2829 = vmatprep.subr.mxu0 %v1105
    %2830 = vmatpush1.msra.mxu0 %v1104
    %2831 = vmatprep.subr.mxu0 %v1113
    %2832 = vmatpush1.msra.mxu0 %v1112
    %2833 = vmatprep.subr.mxu0 %v1121
    %2834 = vmatpush1.msra.mxu0 %v1120
    %2835 = vmatprep.subr.mxu0 %v1129
    %2836 = vmatpush1.msra.mxu0 %v1128
    %2837 = vmatprep.subr.mxu0 %v1137
    %2838 = vmatpush1.msra.mxu0 %v1136
    %2839 = vmatprep.subr.mxu0 %v1145
    %2840 = vmatpush1.msra.mxu0 %v1144
    %2841 = vmatprep.subr.mxu0 %v1153
    %2842 = vmatpush1.msra.mxu0 %v1152
    %2843 = vmatprep.subr.mxu0 %v1161
    %2844 = vmatpush1.msra.mxu0 %v1160
    %2845 = vmatprep.subr.mxu0 %v1169
    %2846 = vmatpush1.msra.mxu0 %v1168
    %2847 = vmatprep.mubr.f32.mxu0 %v2629
    %2848 = vmatmul.mubr.f32.gmra.mrb[0].mxu0 %v2628
    %v2849 = vpop.f32.mrb[0].mxu0
    %v2850 = vadd.f32 0.0, %v2849
    %v2851 = vpop.f32.mrb[0].mxu0
    %v2852 = vadd.f32 0.0, %v2851
    %2853 = vdwg.mxu0
    %2854 = vmatprep.subr.mxu0 %v923
    %2855 = vmatpush1.msra.mxu0 %v922
    %2856 = vmatprep.subr.mxu0 %v931
    %2857 = vmatpush1.msra.mxu0 %v930
    %2858 = vmatprep.subr.mxu0 %v939
    %2859 = vmatpush1.msra.mxu0 %v938
    %2860 = vmatprep.subr.mxu0 %v947
    %2861 = vmatpush1.msra.mxu0 %v946
    %2862 = vmatprep.subr.mxu0 %v955
    %2863 = vmatpush1.msra.mxu0 %v954
    %2864 = vmatprep.subr.mxu0 %v963
    %2865 = vmatpush1.msra.mxu0 %v962
    %2866 = vmatprep.subr.mxu0 %v971
    %2867 = vmatpush1.msra.mxu0 %v970
    %2868 = vmatprep.subr.mxu0 %v979
    %2869 = vmatpush1.msra.mxu0 %v978
    %2870 = vmatprep.subr.mxu0 %v987
    %2871 = vmatpush1.msra.mxu0 %v986
    %2872 = vmatprep.subr.mxu0 %v995
    %2873 = vmatpush1.msra.mxu0 %v994
    %2874 = vmatprep.subr.mxu0 %v1003
    %2875 = vmatpush1.msra.mxu0 %v1002
    %2876 = vmatprep.subr.mxu0 %v1011
    %2877 = vmatpush1.msra.mxu0 %v1010
    %2878 = vmatprep.subr.mxu0 %v1019
    %2879 = vmatpush1.msra.mxu0 %v1018
    %2880 = vmatprep.subr.mxu0 %v1027
    %2881 = vmatpush1.msra.mxu0 %v1026
    %2882 = vmatprep.subr.mxu0 %v1035
    %2883 = vmatpush1.msra.mxu0 %v1034
    %2884 = vmatprep.subr.mxu0 %v1043
    %2885 = vmatpush1.msra.mxu0 %v1042
    %2886 = vmatprep.subr.mxu0 %v1051
    %2887 = vmatpush1.msra.mxu0 %v1050
    %2888 = vmatprep.subr.mxu0 %v1059
    %2889 = vmatpush1.msra.mxu0 %v1058
    %2890 = vmatprep.subr.mxu0 %v1067
    %2891 = vmatpush1.msra.mxu0 %v1066
    %2892 = vmatprep.subr.mxu0 %v1075
    %2893 = vmatpush1.msra.mxu0 %v1074
    %2894 = vmatprep.subr.mxu0 %v1083
    %2895 = vmatpush1.msra.mxu0 %v1082
    %2896 = vmatprep.subr.mxu0 %v1091
    %2897 = vmatpush1.msra.mxu0 %v1090
    %2898 = vmatprep.subr.mxu0 %v1099
    %2899 = vmatpush1.msra.mxu0 %v1098
    %2900 = vmatprep.subr.mxu0 %v1107
    %2901 = vmatpush1.msra.mxu0 %v1106
    %2902 = vmatprep.subr.mxu0 %v1115
    %2903 = vmatpush1.msra.mxu0 %v1114
    %2904 = vmatprep.subr.mxu0 %v1123
    %2905 = vmatpush1.msra.mxu0 %v1122
    %2906 = vmatprep.subr.mxu0 %v1131
    %2907 = vmatpush1.msra.mxu0 %v1130
    %2908 = vmatprep.subr.mxu0 %v1139
    %2909 = vmatpush1.msra.mxu0 %v1138
    %2910 = vmatprep.subr.mxu0 %v1147
    %2911 = vmatpush1.msra.mxu0 %v1146
    %2912 = vmatprep.subr.mxu0 %v1155
    %2913 = vmatpush1.msra.mxu0 %v1154
    %2914 = vmatprep.subr.mxu0 %v1163
    %2915 = vmatpush1.msra.mxu0 %v1162
    %2916 = vmatprep.subr.mxu0 %v1171
    %2917 = vmatpush1.msra.mxu0 %v1170
    %2918 = vmatprep.mubr.f32.mxu0 %v2629
    %2919 = vmatmul.mubr.f32.gmra.mrb[0].mxu0 %v2628
    %v2920 = vpop.f32.mrb[0].mxu0
    %v2921 = vadd.f32 0.0, %v2920
    %v2922 = vpop.f32.mrb[0].mxu0
    %v2923 = vadd.f32 0.0, %v2922
    %2924 = vdwg.mxu0
    %v2925 = vadd.f32 %v2633, %v2708
    %v2926 = vadd.f32 %v2634, %v2710
    %v2927 = vadd.f32 %v2635, %v2779
    %v2928 = vadd.f32 %v2636, %v2781
    %v2929 = vadd.f32 %v2637, %v2850
    %v2930 = vadd.f32 %v2638, %v2852
    %v2931 = vadd.f32 %v2639, %v2921
    %v2932 = vadd.f32 %v2640, %v2923
    %v2933 = vxor.u32 %v2925, 2147483648
    %v2934 = vxor.u32 %v2926, 2147483648
    %v2935 = vmul.f32 %v2933, 1.442695
    %v2936 = vpow.pop %v2935
    %v2937 = vmul.f32 %v2934, 1.442695
    %v2938 = vpow.pop %v2937
    %v2939 = vadd.f32 %v2936, 1.0
    %v2940 = vadd.f32 %v2938, 1.0
    %v2941 = vrcp.pop %v2939
    %v2942 = vmul.f32 1.0, %v2941
    %v2943 = vrcp.pop %v2940
    %v2944 = vmul.f32 1.0, %v2943
    %v2945 = vxor.u32 %v2927, 2147483648
    %v2946 = vxor.u32 %v2928, 2147483648
    %v2947 = vmul.f32 %v2945, 1.442695
    %v2948 = vpow.pop %v2947
    %v2949 = vmul.f32 %v2946, 1.442695
    %v2950 = vpow.pop %v2949
    %v2951 = vadd.f32 %v2948, 1.0
    %v2952 = vadd.f32 %v2950, 1.0
    %v2953 = vrcp.pop %v2951
    %v2954 = vmul.f32 1.0, %v2953
    %v2955 = vrcp.pop %v2952
    %v2956 = vmul.f32 1.0, %v2955
    %v2957 = vtanh.pop %v2929
    %v2958 = vtanh.pop %v2930
    %v2959 = vxor.u32 %v2931, 2147483648
    %v2960 = vxor.u32 %v2932, 2147483648
    %v2961 = vmul.f32 %v2959, 1.442695
    %v2962 = vpow.pop %v2961
    %v2963 = vmul.f32 %v2960, 1.442695
    %v2964 = vpow.pop %v2963
    %v2965 = vadd.f32 %v2962, 1.0
    %v2966 = vadd.f32 %v2964, 1.0
    %v2967 = vrcp.pop %v2965
    %v2968 = vmul.f32 1.0, %v2967
    %v2969 = vrcp.pop %v2966
    %v2970 = vmul.f32 1.0, %v2969
    %v2971 = vld [vmem:[#allocation5] sm:$0xff]
    %v2972 = vld [vmem:[#allocation5 + $0x8] sm:$0xff]
    %v2973 = vmul.f32 %v2954, %v2971
    %v2974 = vmul.f32 %v2956, %v2972
    %v2975 = vmul.f32 %v2942, %v2957
    %v2976 = vmul.f32 %v2944, %v2958
    %v2977 = vadd.f32 %v2973, %v2975
    %v2978 = vadd.f32 %v2974, %v2976
    %v2979 = vtanh.pop %v2977
    %v2980 = vtanh.pop %v2978
    %v2981 = vmul.f32 %v2968, %v2979
    %v2982 = vmul.f32 %v2970, %v2980
    %2983 = vst [vmem:[#allocation4] sm:$0xff] %v2981
    %2984 = vst [vmem:[#allocation4 + $0x8] sm:$0xff] %v2982
    %2985 = vst [vmem:[#allocation5] sm:$0xff] %v2977
    %2986 = vst [vmem:[#allocation5 + $0x8] sm:$0xff] %v2978
    %s2987 = smul.u32 4, 2
    %s2988 = smul.addr %s2987, 8
    %s2989 = scalar_lea.vmem [#allocation3], %s2988
    %2990 = vst [vmem:[%s2989] sm:$0xff] %v2981
    %2991 = vst [vmem:[%s2989 + $0x8] sm:$0xff] %v2982
    %v2992 = vld [vmem:[#allocation4] sm:$0xff]
    %v2993 = vld [vmem:[#allocation4 + $0x8] sm:$0xff]
    %s2994 = smul.u32 5, 8
    %s2995 = smul.addr %s2994, 8
    %s2996 = scalar_lea.vmem [#allocation2], %s2995
    %v2997 = vld [vmem:[%s2996] sm:$0xff]
    %v2998 = vld [vmem:[%s2996 + $0x8] sm:$0xff]
    %v2999 = vld [vmem:[%s2996 + $0x10] sm:$0xff]
    %v3000 = vld [vmem:[%s2996 + $0x18] sm:$0xff]
    %v3001 = vld [vmem:[%s2996 + $0x20] sm:$0xff]
    %v3002 = vld [vmem:[%s2996 + $0x28] sm:$0xff]
    %v3003 = vld [vmem:[%s2996 + $0x30] sm:$0xff]
    %v3004 = vld [vmem:[%s2996 + $0x38] sm:$0xff]
    %3005 = vmatprep.subr.mxu0 %v917
    %3006 = vmatpush1.msra.mxu0 %v916
    %3007 = vmatprep.subr.mxu0 %v925
    %3008 = vmatpush1.msra.mxu0 %v924
    %3009 = vmatprep.subr.mxu0 %v933
    %3010 = vmatpush1.msra.mxu0 %v932
    %3011 = vmatprep.subr.mxu0 %v941
    %3012 = vmatpush1.msra.mxu0 %v940
    %3013 = vmatprep.subr.mxu0 %v949
    %3014 = vmatpush1.msra.mxu0 %v948
    %3015 = vmatprep.subr.mxu0 %v957
    %3016 = vmatpush1.msra.mxu0 %v956
    %3017 = vmatprep.subr.mxu0 %v965
    %3018 = vmatpush1.msra.mxu0 %v964
    %3019 = vmatprep.subr.mxu0 %v973
    %3020 = vmatpush1.msra.mxu0 %v972
    %3021 = vmatprep.subr.mxu0 %v981
    %3022 = vmatpush1.msra.mxu0 %v980
    %3023 = vmatprep.subr.mxu0 %v989
    %3024 = vmatpush1.msra.mxu0 %v988
    %3025 = vmatprep.subr.mxu0 %v997
    %3026 = vmatpush1.msra.mxu0 %v996
    %3027 = vmatprep.subr.mxu0 %v1005
    %3028 = vmatpush1.msra.mxu0 %v1004
    %3029 = vmatprep.subr.mxu0 %v1013
    %3030 = vmatpush1.msra.mxu0 %v1012
    %3031 = vmatprep.subr.mxu0 %v1021
    %3032 = vmatpush1.msra.mxu0 %v1020
    %3033 = vmatprep.subr.mxu0 %v1029
    %3034 = vmatpush1.msra.mxu0 %v1028
    %3035 = vmatprep.subr.mxu0 %v1037
    %3036 = vmatpush1.msra.mxu0 %v1036
    %3037 = vmatprep.subr.mxu0 %v1045
    %3038 = vmatpush1.msra.mxu0 %v1044
    %3039 = vmatprep.subr.mxu0 %v1053
    %3040 = vmatpush1.msra.mxu0 %v1052
    %3041 = vmatprep.subr.mxu0 %v1061
    %3042 = vmatpush1.msra.mxu0 %v1060
    %3043 = vmatprep.subr.mxu0 %v1069
    %3044 = vmatpush1.msra.mxu0 %v1068
    %3045 = vmatprep.subr.mxu0 %v1077
    %3046 = vmatpush1.msra.mxu0 %v1076
    %3047 = vmatprep.subr.mxu0 %v1085
    %3048 = vmatpush1.msra.mxu0 %v1084
    %3049 = vmatprep.subr.mxu0 %v1093
    %3050 = vmatpush1.msra.mxu0 %v1092
    %3051 = vmatprep.subr.mxu0 %v1101
    %3052 = vmatpush1.msra.mxu0 %v1100
    %3053 = vmatprep.subr.mxu0 %v1109
    %3054 = vmatpush1.msra.mxu0 %v1108
    %3055 = vmatprep.subr.mxu0 %v1117
    %3056 = vmatpush1.msra.mxu0 %v1116
    %3057 = vmatprep.subr.mxu0 %v1125
    %3058 = vmatpush1.msra.mxu0 %v1124
    %3059 = vmatprep.subr.mxu0 %v1133
    %3060 = vmatpush1.msra.mxu0 %v1132
    %3061 = vmatprep.subr.mxu0 %v1141
    %3062 = vmatpush1.msra.mxu0 %v1140
    %3063 = vmatprep.subr.mxu0 %v1149
    %3064 = vmatpush1.msra.mxu0 %v1148
    %3065 = vmatprep.subr.mxu0 %v1157
    %3066 = vmatpush1.msra.mxu0 %v1156
    %3067 = vmatprep.subr.mxu0 %v1165
    %3068 = vmatpush1.msra.mxu0 %v1164
    %3069 = vmatprep.mubr.f32.mxu0 %v2993
    %3070 = vmatmul.mubr.f32.gmra.mrb[0].mxu0 %v2992
    %v3071 = vpop.f32.mrb[0].mxu0
    %v3072 = vadd.f32 0.0, %v3071
    %v3073 = vpop.f32.mrb[0].mxu0
    %v3074 = vadd.f32 0.0, %v3073
    %3075 = vdwg.mxu0
    %3076 = vmatprep.subr.mxu0 %v919
    %3077 = vmatpush1.msra.mxu0 %v918
    %3078 = vmatprep.subr.mxu0 %v927
    %3079 = vmatpush1.msra.mxu0 %v926
    %3080 = vmatprep.subr.mxu0 %v935
    %3081 = vmatpush1.msra.mxu0 %v934
    %3082 = vmatprep.subr.mxu0 %v943
    %3083 = vmatpush1.msra.mxu0 %v942
    %3084 = vmatprep.subr.mxu0 %v951
    %3085 = vmatpush1.msra.mxu0 %v950
    %3086 = vmatprep.subr.mxu0 %v959
    %3087 = vmatpush1.msra.mxu0 %v958
    %3088 = vmatprep.subr.mxu0 %v967
    %3089 = vmatpush1.msra.mxu0 %v966
    %3090 = vmatprep.subr.mxu0 %v975
    %3091 = vmatpush1.msra.mxu0 %v974
    %3092 = vmatprep.subr.mxu0 %v983
    %3093 = vmatpush1.msra.mxu0 %v982
    %3094 = vmatprep.subr.mxu0 %v991
    %3095 = vmatpush1.msra.mxu0 %v990
    %3096 = vmatprep.subr.mxu0 %v999
    %3097 = vmatpush1.msra.mxu0 %v998
    %3098 = vmatprep.subr.mxu0 %v1007
    %3099 = vmatpush1.msra.mxu0 %v1006
    %3100 = vmatprep.subr.mxu0 %v1015
    %3101 = vmatpush1.msra.mxu0 %v1014
    %3102 = vmatprep.subr.mxu0 %v1023
    %3103 = vmatpush1.msra.mxu0 %v1022
    %3104 = vmatprep.subr.mxu0 %v1031
    %3105 = vmatpush1.msra.mxu0 %v1030
    %3106 = vmatprep.subr.mxu0 %v1039
    %3107 = vmatpush1.msra.mxu0 %v1038
    %3108 = vmatprep.subr.mxu0 %v1047
    %3109 = vmatpush1.msra.mxu0 %v1046
    %3110 = vmatprep.subr.mxu0 %v1055
    %3111 = vmatpush1.msra.mxu0 %v1054
    %3112 = vmatprep.subr.mxu0 %v1063
    %3113 = vmatpush1.msra.mxu0 %v1062
    %3114 = vmatprep.subr.mxu0 %v1071
    %3115 = vmatpush1.msra.mxu0 %v1070
    %3116 = vmatprep.subr.mxu0 %v1079
    %3117 = vmatpush1.msra.mxu0 %v1078
    %3118 = vmatprep.subr.mxu0 %v1087
    %3119 = vmatpush1.msra.mxu0 %v1086
    %3120 = vmatprep.subr.mxu0 %v1095
    %3121 = vmatpush1.msra.mxu0 %v1094
    %3122 = vmatprep.subr.mxu0 %v1103
    %3123 = vmatpush1.msra.mxu0 %v1102
    %3124 = vmatprep.subr.mxu0 %v1111
    %3125 = vmatpush1.msra.mxu0 %v1110
    %3126 = vmatprep.subr.mxu0 %v1119
    %3127 = vmatpush1.msra.mxu0 %v1118
    %3128 = vmatprep.subr.mxu0 %v1127
    %3129 = vmatpush1.msra.mxu0 %v1126
    %3130 = vmatprep.subr.mxu0 %v1135
    %3131 = vmatpush1.msra.mxu0 %v1134
    %3132 = vmatprep.subr.mxu0 %v1143
    %3133 = vmatpush1.msra.mxu0 %v1142
    %3134 = vmatprep.subr.mxu0 %v1151
    %3135 = vmatpush1.msra.mxu0 %v1150
    %3136 = vmatprep.subr.mxu0 %v1159
    %3137 = vmatpush1.msra.mxu0 %v1158
    %3138 = vmatprep.subr.mxu0 %v1167
    %3139 = vmatpush1.msra.mxu0 %v1166
    %3140 = vmatprep.mubr.f32.mxu0 %v2993
    %3141 = vmatmul.mubr.f32.gmra.mrb[0].mxu0 %v2992
    %v3142 = vpop.f32.mrb[0].mxu0
    %v3143 = vadd.f32 0.0, %v3142
    %v3144 = vpop.f32.mrb[0].mxu0
    %v3145 = vadd.f32 0.0, %v3144
    %3146 = vdwg.mxu0
    %3147 = vmatprep.subr.mxu0 %v921
    %3148 = vmatpush1.msra.mxu0 %v920
    %3149 = vmatprep.subr.mxu0 %v929
    %3150 = vmatpush1.msra.mxu0 %v928
    %3151 = vmatprep.subr.mxu0 %v937
    %3152 = vmatpush1.msra.mxu0 %v936
    %3153 = vmatprep.subr.mxu0 %v945
    %3154 = vmatpush1.msra.mxu0 %v944
    %3155 = vmatprep.subr.mxu0 %v953
    %3156 = vmatpush1.msra.mxu0 %v952
    %3157 = vmatprep.subr.mxu0 %v961
    %3158 = vmatpush1.msra.mxu0 %v960
    %3159 = vmatprep.subr.mxu0 %v969
    %3160 = vmatpush1.msra.mxu0 %v968
    %3161 = vmatprep.subr.mxu0 %v977
    %3162 = vmatpush1.msra.mxu0 %v976
    %3163 = vmatprep.subr.mxu0 %v985
    %3164 = vmatpush1.msra.mxu0 %v984
    %3165 = vmatprep.subr.mxu0 %v993
    %3166 = vmatpush1.msra.mxu0 %v992
    %3167 = vmatprep.subr.mxu0 %v1001
    %3168 = vmatpush1.msra.mxu0 %v1000
    %3169 = vmatprep.subr.mxu0 %v1009
    %3170 = vmatpush1.msra.mxu0 %v1008
    %3171 = vmatprep.subr.mxu0 %v1017
    %3172 = vmatpush1.msra.mxu0 %v1016
    %3173 = vmatprep.subr.mxu0 %v1025
    %3174 = vmatpush1.msra.mxu0 %v1024
    %3175 = vmatprep.subr.mxu0 %v1033
    %3176 = vmatpush1.msra.mxu0 %v1032
    %3177 = vmatprep.subr.mxu0 %v1041
    %3178 = vmatpush1.msra.mxu0 %v1040
    %3179 = vmatprep.subr.mxu0 %v1049
    %3180 = vmatpush1.msra.mxu0 %v1048
    %3181 = vmatprep.subr.mxu0 %v1057
    %3182 = vmatpush1.msra.mxu0 %v1056
    %3183 = vmatprep.subr.mxu0 %v1065
    %3184 = vmatpush1.msra.mxu0 %v1064
    %3185 = vmatprep.subr.mxu0 %v1073
    %3186 = vmatpush1.msra.mxu0 %v1072
    %3187 = vmatprep.subr.mxu0 %v1081
    %3188 = vmatpush1.msra.mxu0 %v1080
    %3189 = vmatprep.subr.mxu0 %v1089
    %3190 = vmatpush1.msra.mxu0 %v1088
    %3191 = vmatprep.subr.mxu0 %v1097
    %3192 = vmatpush1.msra.mxu0 %v1096
    %3193 = vmatprep.subr.mxu0 %v1105
    %3194 = vmatpush1.msra.mxu0 %v1104
    %3195 = vmatprep.subr.mxu0 %v1113
    %3196 = vmatpush1.msra.mxu0 %v1112
    %3197 = vmatprep.subr.mxu0 %v1121
    %3198 = vmatpush1.msra.mxu0 %v1120
    %3199 = vmatprep.subr.mxu0 %v1129
    %3200 = vmatpush1.msra.mxu0 %v1128
    %3201 = vmatprep.subr.mxu0 %v1137
    %3202 = vmatpush1.msra.mxu0 %v1136
    %3203 = vmatprep.subr.mxu0 %v1145
    %3204 = vmatpush1.msra.mxu0 %v1144
    %3205 = vmatprep.subr.mxu0 %v1153
    %3206 = vmatpush1.msra.mxu0 %v1152
    %3207 = vmatprep.subr.mxu0 %v1161
    %3208 = vmatpush1.msra.mxu0 %v1160
    %3209 = vmatprep.subr.mxu0 %v1169
    %3210 = vmatpush1.msra.mxu0 %v1168
    %3211 = vmatprep.mubr.f32.mxu0 %v2993
    %3212 = vmatmul.mubr.f32.gmra.mrb[0].mxu0 %v2992
    %v3213 = vpop.f32.mrb[0].mxu0
    %v3214 = vadd.f32 0.0, %v3213
    %v3215 = vpop.f32.mrb[0].mxu0
    %v3216 = vadd.f32 0.0, %v3215
    %3217 = vdwg.mxu0
    %3218 = vmatprep.subr.mxu0 %v923
    %3219 = vmatpush1.msra.mxu0 %v922
    %3220 = vmatprep.subr.mxu0 %v931
    %3221 = vmatpush1.msra.mxu0 %v930
    %3222 = vmatprep.subr.mxu0 %v939
    %3223 = vmatpush1.msra.mxu0 %v938
    %3224 = vmatprep.subr.mxu0 %v947
    %3225 = vmatpush1.msra.mxu0 %v946
    %3226 = vmatprep.subr.mxu0 %v955
    %3227 = vmatpush1.msra.mxu0 %v954
    %3228 = vmatprep.subr.mxu0 %v963
    %3229 = vmatpush1.msra.mxu0 %v962
    %3230 = vmatprep.subr.mxu0 %v971
    %3231 = vmatpush1.msra.mxu0 %v970
    %3232 = vmatprep.subr.mxu0 %v979
    %3233 = vmatpush1.msra.mxu0 %v978
    %3234 = vmatprep.subr.mxu0 %v987
    %3235 = vmatpush1.msra.mxu0 %v986
    %3236 = vmatprep.subr.mxu0 %v995
    %3237 = vmatpush1.msra.mxu0 %v994
    %3238 = vmatprep.subr.mxu0 %v1003
    %3239 = vmatpush1.msra.mxu0 %v1002
    %3240 = vmatprep.subr.mxu0 %v1011
    %3241 = vmatpush1.msra.mxu0 %v1010
    %3242 = vmatprep.subr.mxu0 %v1019
    %3243 = vmatpush1.msra.mxu0 %v1018
    %3244 = vmatprep.subr.mxu0 %v1027
    %3245 = vmatpush1.msra.mxu0 %v1026
    %3246 = vmatprep.subr.mxu0 %v1035
    %3247 = vmatpush1.msra.mxu0 %v1034
    %3248 = vmatprep.subr.mxu0 %v1043
    %3249 = vmatpush1.msra.mxu0 %v1042
    %3250 = vmatprep.subr.mxu0 %v1051
    %3251 = vmatpush1.msra.mxu0 %v1050
    %3252 = vmatprep.subr.mxu0 %v1059
    %3253 = vmatpush1.msra.mxu0 %v1058
    %3254 = vmatprep.subr.mxu0 %v1067
    %3255 = vmatpush1.msra.mxu0 %v1066
    %3256 = vmatprep.subr.mxu0 %v1075
    %3257 = vmatpush1.msra.mxu0 %v1074
    %3258 = vmatprep.subr.mxu0 %v1083
    %3259 = vmatpush1.msra.mxu0 %v1082
    %3260 = vmatprep.subr.mxu0 %v1091
    %3261 = vmatpush1.msra.mxu0 %v1090
    %3262 = vmatprep.subr.mxu0 %v1099
    %3263 = vmatpush1.msra.mxu0 %v1098
    %3264 = vmatprep.subr.mxu0 %v1107
    %3265 = vmatpush1.msra.mxu0 %v1106
    %3266 = vmatprep.subr.mxu0 %v1115
    %3267 = vmatpush1.msra.mxu0 %v1114
    %3268 = vmatprep.subr.mxu0 %v1123
    %3269 = vmatpush1.msra.mxu0 %v1122
    %3270 = vmatprep.subr.mxu0 %v1131
    %3271 = vmatpush1.msra.mxu0 %v1130
    %3272 = vmatprep.subr.mxu0 %v1139
    %3273 = vmatpush1.msra.mxu0 %v1138
    %3274 = vmatprep.subr.mxu0 %v1147
    %3275 = vmatpush1.msra.mxu0 %v1146
    %3276 = vmatprep.subr.mxu0 %v1155
    %3277 = vmatpush1.msra.mxu0 %v1154
    %3278 = vmatprep.subr.mxu0 %v1163
    %3279 = vmatpush1.msra.mxu0 %v1162
    %3280 = vmatprep.subr.mxu0 %v1171
    %3281 = vmatpush1.msra.mxu0 %v1170
    %3282 = vmatprep.mubr.f32.mxu0 %v2993
    %3283 = vmatmul.mubr.f32.gmra.mrb[0].mxu0 %v2992
    %v3284 = vpop.f32.mrb[0].mxu0
    %v3285 = vadd.f32 0.0, %v3284
    %v3286 = vpop.f32.mrb[0].mxu0
    %v3287 = vadd.f32 0.0, %v3286
    %3288 = vdwg.mxu0
    %v3289 = vadd.f32 %v2997, %v3072
    %v3290 = vadd.f32 %v2998, %v3074
    %v3291 = vadd.f32 %v2999, %v3143
    %v3292 = vadd.f32 %v3000, %v3145
    %v3293 = vadd.f32 %v3001, %v3214
    %v3294 = vadd.f32 %v3002, %v3216
    %v3295 = vadd.f32 %v3003, %v3285
    %v3296 = vadd.f32 %v3004, %v3287
    %v3297 = vxor.u32 %v3289, 2147483648
    %v3298 = vxor.u32 %v3290, 2147483648
    %v3299 = vmul.f32 %v3297, 1.442695
    %v3300 = vpow.pop %v3299
    %v3301 = vmul.f32 %v3298, 1.442695
    %v3302 = vpow.pop %v3301
    %v3303 = vadd.f32 %v3300, 1.0
    %v3304 = vadd.f32 %v3302, 1.0
    %v3305 = vrcp.pop %v3303
    %v3306 = vmul.f32 1.0, %v3305
    %v3307 = vrcp.pop %v3304
    %v3308 = vmul.f32 1.0, %v3307
    %v3309 = vxor.u32 %v3291, 2147483648
    %v3310 = vxor.u32 %v3292, 2147483648
    %v3311 = vmul.f32 %v3309, 1.442695
    %v3312 = vpow.pop %v3311
    %v3313 = vmul.f32 %v3310, 1.442695
    %v3314 = vpow.pop %v3313
    %v3315 = vadd.f32 %v3312, 1.0
    %v3316 = vadd.f32 %v3314, 1.0
    %v3317 = vrcp.pop %v3315
    %v3318 = vmul.f32 1.0, %v3317
    %v3319 = vrcp.pop %v3316
    %v3320 = vmul.f32 1.0, %v3319
    %v3321 = vtanh.pop %v3293
    %v3322 = vtanh.pop %v3294
    %v3323 = vxor.u32 %v3295, 2147483648
    %v3324 = vxor.u32 %v3296, 2147483648
    %v3325 = vmul.f32 %v3323, 1.442695
    %v3326 = vpow.pop %v3325
    %v3327 = vmul.f32 %v3324, 1.442695
    %v3328 = vpow.pop %v3327
    %v3329 = vadd.f32 %v3326, 1.0
    %v3330 = vadd.f32 %v3328, 1.0
    %v3331 = vrcp.pop %v3329
    %v3332 = vmul.f32 1.0, %v3331
    %v3333 = vrcp.pop %v3330
    %v3334 = vmul.f32 1.0, %v3333
    %v3335 = vld [vmem:[#allocation5] sm:$0xff]
    %v3336 = vld [vmem:[#allocation5 + $0x8] sm:$0xff]
    %v3337 = vmul.f32 %v3318, %v3335
    %v3338 = vmul.f32 %v3320, %v3336
    %v3339 = vmul.f32 %v3306, %v3321
    %v3340 = vmul.f32 %v3308, %v3322
    %v3341 = vadd.f32 %v3337, %v3339
    %v3342 = vadd.f32 %v3338, %v3340
    %v3343 = vtanh.pop %v3341
    %v3344 = vtanh.pop %v3342
    %v3345 = vmul.f32 %v3332, %v3343
    %v3346 = vmul.f32 %v3334, %v3344
    %3347 = vst [vmem:[#allocation4] sm:$0xff] %v3345
    %3348 = vst [vmem:[#allocation4 + $0x8] sm:$0xff] %v3346
    %3349 = vst [vmem:[#allocation5] sm:$0xff] %v3341
    %3350 = vst [vmem:[#allocation5 + $0x8] sm:$0xff] %v3342
    %s3351 = smul.u32 5, 2
    %s3352 = smul.addr %s3351, 8
    %s3353 = scalar_lea.vmem [#allocation3], %s3352
    %3354 = vst [vmem:[%s3353] sm:$0xff] %v3345
    %3355 = vst [vmem:[%s3353 + $0x8] sm:$0xff] %v3346
    %v3356 = vld [vmem:[#allocation4] sm:$0xff]
    %v3357 = vld [vmem:[#allocation4 + $0x8] sm:$0xff]
    %s3358 = smul.u32 6, 8
    %s3359 = smul.addr %s3358, 8
    %s3360 = scalar_lea.vmem [#allocation2], %s3359
    %v3361 = vld [vmem:[%s3360] sm:$0xff]
    %v3362 = vld [vmem:[%s3360 + $0x8] sm:$0xff]
    %v3363 = vld [vmem:[%s3360 + $0x10] sm:$0xff]
    %v3364 = vld [vmem:[%s3360 + $0x18] sm:$0xff]
    %v3365 = vld [vmem:[%s3360 + $0x20] sm:$0xff]
    %v3366 = vld [vmem:[%s3360 + $0x28] sm:$0xff]
    %v3367 = vld [vmem:[%s3360 + $0x30] sm:$0xff]
    %v3368 = vld [vmem:[%s3360 + $0x38] sm:$0xff]
    %3369 = vmatprep.subr.mxu0 %v917
    %3370 = vmatpush1.msra.mxu0 %v916
    %3371 = vmatprep.subr.mxu0 %v925
    %3372 = vmatpush1.msra.mxu0 %v924
    %3373 = vmatprep.subr.mxu0 %v933
    %3374 = vmatpush1.msra.mxu0 %v932
    %3375 = vmatprep.subr.mxu0 %v941
    %3376 = vmatpush1.msra.mxu0 %v940
    %3377 = vmatprep.subr.mxu0 %v949
    %3378 = vmatpush1.msra.mxu0 %v948
    %3379 = vmatprep.subr.mxu0 %v957
    %3380 = vmatpush1.msra.mxu0 %v956
    %3381 = vmatprep.subr.mxu0 %v965
    %3382 = vmatpush1.msra.mxu0 %v964
    %3383 = vmatprep.subr.mxu0 %v973
    %3384 = vmatpush1.msra.mxu0 %v972
    %3385 = vmatprep.subr.mxu0 %v981
    %3386 = vmatpush1.msra.mxu0 %v980
    %3387 = vmatprep.subr.mxu0 %v989
    %3388 = vmatpush1.msra.mxu0 %v988
    %3389 = vmatprep.subr.mxu0 %v997
    %3390 = vmatpush1.msra.mxu0 %v996
    %3391 = vmatprep.subr.mxu0 %v1005
    %3392 = vmatpush1.msra.mxu0 %v1004
    %3393 = vmatprep.subr.mxu0 %v1013
    %3394 = vmatpush1.msra.mxu0 %v1012
    %3395 = vmatprep.subr.mxu0 %v1021
    %3396 = vmatpush1.msra.mxu0 %v1020
    %3397 = vmatprep.subr.mxu0 %v1029
    %3398 = vmatpush1.msra.mxu0 %v1028
    %3399 = vmatprep.subr.mxu0 %v1037
    %3400 = vmatpush1.msra.mxu0 %v1036
    %3401 = vmatprep.subr.mxu0 %v1045
    %3402 = vmatpush1.msra.mxu0 %v1044
    %3403 = vmatprep.subr.mxu0 %v1053
    %3404 = vmatpush1.msra.mxu0 %v1052
    %3405 = vmatprep.subr.mxu0 %v1061
    %3406 = vmatpush1.msra.mxu0 %v1060
    %3407 = vmatprep.subr.mxu0 %v1069
    %3408 = vmatpush1.msra.mxu0 %v1068
    %3409 = vmatprep.subr.mxu0 %v1077
    %3410 = vmatpush1.msra.mxu0 %v1076
    %3411 = vmatprep.subr.mxu0 %v1085
    %3412 = vmatpush1.msra.mxu0 %v1084
    %3413 = vmatprep.subr.mxu0 %v1093
    %3414 = vmatpush1.msra.mxu0 %v1092
    %3415 = vmatprep.subr.mxu0 %v1101
    %3416 = vmatpush1.msra.mxu0 %v1100
    %3417 = vmatprep.subr.mxu0 %v1109
    %3418 = vmatpush1.msra.mxu0 %v1108
    %3419 = vmatprep.subr.mxu0 %v1117
    %3420 = vmatpush1.msra.mxu0 %v1116
    %3421 = vmatprep.subr.mxu0 %v1125
    %3422 = vmatpush1.msra.mxu0 %v1124
    %3423 = vmatprep.subr.mxu0 %v1133
    %3424 = vmatpush1.msra.mxu0 %v1132
    %3425 = vmatprep.subr.mxu0 %v1141
    %3426 = vmatpush1.msra.mxu0 %v1140
    %3427 = vmatprep.subr.mxu0 %v1149
    %3428 = vmatpush1.msra.mxu0 %v1148
    %3429 = vmatprep.subr.mxu0 %v1157
    %3430 = vmatpush1.msra.mxu0 %v1156
    %3431 = vmatprep.subr.mxu0 %v1165
    %3432 = vmatpush1.msra.mxu0 %v1164
    %3433 = vmatprep.mubr.f32.mxu0 %v3357
    %3434 = vmatmul.mubr.f32.gmra.mrb[0].mxu0 %v3356
    %v3435 = vpop.f32.mrb[0].mxu0
    %v3436 = vadd.f32 0.0, %v3435
    %v3437 = vpop.f32.mrb[0].mxu0
    %v3438 = vadd.f32 0.0, %v3437
    %3439 = vdwg.mxu0
    %3440 = vmatprep.subr.mxu0 %v919
    %3441 = vmatpush1.msra.mxu0 %v918
    %3442 = vmatprep.subr.mxu0 %v927
    %3443 = vmatpush1.msra.mxu0 %v926
    %3444 = vmatprep.subr.mxu0 %v935
    %3445 = vmatpush1.msra.mxu0 %v934
    %3446 = vmatprep.subr.mxu0 %v943
    %3447 = vmatpush1.msra.mxu0 %v942
    %3448 = vmatprep.subr.mxu0 %v951
    %3449 = vmatpush1.msra.mxu0 %v950
    %3450 = vmatprep.subr.mxu0 %v959
    %3451 = vmatpush1.msra.mxu0 %v958
    %3452 = vmatprep.subr.mxu0 %v967
    %3453 = vmatpush1.msra.mxu0 %v966
    %3454 = vmatprep.subr.mxu0 %v975
    %3455 = vmatpush1.msra.mxu0 %v974
    %3456 = vmatprep.subr.mxu0 %v983
    %3457 = vmatpush1.msra.mxu0 %v982
    %3458 = vmatprep.subr.mxu0 %v991
    %3459 = vmatpush1.msra.mxu0 %v990
    %3460 = vmatprep.subr.mxu0 %v999
    %3461 = vmatpush1.msra.mxu0 %v998
    %3462 = vmatprep.subr.mxu0 %v1007
    %3463 = vmatpush1.msra.mxu0 %v1006
    %3464 = vmatprep.subr.mxu0 %v1015
    %3465 = vmatpush1.msra.mxu0 %v1014
    %3466 = vmatprep.subr.mxu0 %v1023
    %3467 = vmatpush1.msra.mxu0 %v1022
    %3468 = vmatprep.subr.mxu0 %v1031
    %3469 = vmatpush1.msra.mxu0 %v1030
    %3470 = vmatprep.subr.mxu0 %v1039
    %3471 = vmatpush1.msra.mxu0 %v1038
    %3472 = vmatprep.subr.mxu0 %v1047
    %3473 = vmatpush1.msra.mxu0 %v1046
    %3474 = vmatprep.subr.mxu0 %v1055
    %3475 = vmatpush1.msra.mxu0 %v1054
    %3476 = vmatprep.subr.mxu0 %v1063
    %3477 = vmatpush1.msra.mxu0 %v1062
    %3478 = vmatprep.subr.mxu0 %v1071
    %3479 = vmatpush1.msra.mxu0 %v1070
    %3480 = vmatprep.subr.mxu0 %v1079
    %3481 = vmatpush1.msra.mxu0 %v1078
    %3482 = vmatprep.subr.mxu0 %v1087
    %3483 = vmatpush1.msra.mxu0 %v1086
    %3484 = vmatprep.subr.mxu0 %v1095
    %3485 = vmatpush1.msra.mxu0 %v1094
    %3486 = vmatprep.subr.mxu0 %v1103
    %3487 = vmatpush1.msra.mxu0 %v1102
    %3488 = vmatprep.subr.mxu0 %v1111
    %3489 = vmatpush1.msra.mxu0 %v1110
    %3490 = vmatprep.subr.mxu0 %v1119
    %3491 = vmatpush1.msra.mxu0 %v1118
    %3492 = vmatprep.subr.mxu0 %v1127
    %3493 = vmatpush1.msra.mxu0 %v1126
    %3494 = vmatprep.subr.mxu0 %v1135
    %3495 = vmatpush1.msra.mxu0 %v1134
    %3496 = vmatprep.subr.mxu0 %v1143
    %3497 = vmatpush1.msra.mxu0 %v1142
    %3498 = vmatprep.subr.mxu0 %v1151
    %3499 = vmatpush1.msra.mxu0 %v1150
    %3500 = vmatprep.subr.mxu0 %v1159
    %3501 = vmatpush1.msra.mxu0 %v1158
    %3502 = vmatprep.subr.mxu0 %v1167
    %3503 = vmatpush1.msra.mxu0 %v1166
    %3504 = vmatprep.mubr.f32.mxu0 %v3357
    %3505 = vmatmul.mubr.f32.gmra.mrb[0].mxu0 %v3356
    %v3506 = vpop.f32.mrb[0].mxu0
    %v3507 = vadd.f32 0.0, %v3506
    %v3508 = vpop.f32.mrb[0].mxu0
    %v3509 = vadd.f32 0.0, %v3508
    %3510 = vdwg.mxu0
    %3511 = vmatprep.subr.mxu0 %v921
    %3512 = vmatpush1.msra.mxu0 %v920
    %3513 = vmatprep.subr.mxu0 %v929
    %3514 = vmatpush1.msra.mxu0 %v928
    %3515 = vmatprep.subr.mxu0 %v937
    %3516 = vmatpush1.msra.mxu0 %v936
    %3517 = vmatprep.subr.mxu0 %v945
    %3518 = vmatpush1.msra.mxu0 %v944
    %3519 = vmatprep.subr.mxu0 %v953
    %3520 = vmatpush1.msra.mxu0 %v952
    %3521 = vmatprep.subr.mxu0 %v961
    %3522 = vmatpush1.msra.mxu0 %v960
    %3523 = vmatprep.subr.mxu0 %v969
    %3524 = vmatpush1.msra.mxu0 %v968
    %3525 = vmatprep.subr.mxu0 %v977
    %3526 = vmatpush1.msra.mxu0 %v976
    %3527 = vmatprep.subr.mxu0 %v985
    %3528 = vmatpush1.msra.mxu0 %v984
    %3529 = vmatprep.subr.mxu0 %v993
    %3530 = vmatpush1.msra.mxu0 %v992
    %3531 = vmatprep.subr.mxu0 %v1001
    %3532 = vmatpush1.msra.mxu0 %v1000
    %3533 = vmatprep.subr.mxu0 %v1009
    %3534 = vmatpush1.msra.mxu0 %v1008
    %3535 = vmatprep.subr.mxu0 %v1017
    %3536 = vmatpush1.msra.mxu0 %v1016
    %3537 = vmatprep.subr.mxu0 %v1025
    %3538 = vmatpush1.msra.mxu0 %v1024
    %3539 = vmatprep.subr.mxu0 %v1033
    %3540 = vmatpush1.msra.mxu0 %v1032
    %3541 = vmatprep.subr.mxu0 %v1041
    %3542 = vmatpush1.msra.mxu0 %v1040
    %3543 = vmatprep.subr.mxu0 %v1049
    %3544 = vmatpush1.msra.mxu0 %v1048
    %3545 = vmatprep.subr.mxu0 %v1057
    %3546 = vmatpush1.msra.mxu0 %v1056
    %3547 = vmatprep.subr.mxu0 %v1065
    %3548 = vmatpush1.msra.mxu0 %v1064
    %3549 = vmatprep.subr.mxu0 %v1073
    %3550 = vmatpush1.msra.mxu0 %v1072
    %3551 = vmatprep.subr.mxu0 %v1081
    %3552 = vmatpush1.msra.mxu0 %v1080
    %3553 = vmatprep.subr.mxu0 %v1089
    %3554 = vmatpush1.msra.mxu0 %v1088
    %3555 = vmatprep.subr.mxu0 %v1097
    %3556 = vmatpush1.msra.mxu0 %v1096
    %3557 = vmatprep.subr.mxu0 %v1105
    %3558 = vmatpush1.msra.mxu0 %v1104
    %3559 = vmatprep.subr.mxu0 %v1113
    %3560 = vmatpush1.msra.mxu0 %v1112
    %3561 = vmatprep.subr.mxu0 %v1121
    %3562 = vmatpush1.msra.mxu0 %v1120
    %3563 = vmatprep.subr.mxu0 %v1129
    %3564 = vmatpush1.msra.mxu0 %v1128
    %3565 = vmatprep.subr.mxu0 %v1137
    %3566 = vmatpush1.msra.mxu0 %v1136
    %3567 = vmatprep.subr.mxu0 %v1145
    %3568 = vmatpush1.msra.mxu0 %v1144
    %3569 = vmatprep.subr.mxu0 %v1153
    %3570 = vmatpush1.msra.mxu0 %v1152
    %3571 = vmatprep.subr.mxu0 %v1161
    %3572 = vmatpush1.msra.mxu0 %v1160
    %3573 = vmatprep.subr.mxu0 %v1169
    %3574 = vmatpush1.msra.mxu0 %v1168
    %3575 = vmatprep.mubr.f32.mxu0 %v3357
    %3576 = vmatmul.mubr.f32.gmra.mrb[0].mxu0 %v3356
    %v3577 = vpop.f32.mrb[0].mxu0
    %v3578 = vadd.f32 0.0, %v3577
    %v3579 = vpop.f32.mrb[0].mxu0
    %v3580 = vadd.f32 0.0, %v3579
    %3581 = vdwg.mxu0
    %3582 = vmatprep.subr.mxu0 %v923
    %3583 = vmatpush1.msra.mxu0 %v922
    %3584 = vmatprep.subr.mxu0 %v931
    %3585 = vmatpush1.msra.mxu0 %v930
    %3586 = vmatprep.subr.mxu0 %v939
    %3587 = vmatpush1.msra.mxu0 %v938
    %3588 = vmatprep.subr.mxu0 %v947
    %3589 = vmatpush1.msra.mxu0 %v946
    %3590 = vmatprep.subr.mxu0 %v955
    %3591 = vmatpush1.msra.mxu0 %v954
    %3592 = vmatprep.subr.mxu0 %v963
    %3593 = vmatpush1.msra.mxu0 %v962
    %3594 = vmatprep.subr.mxu0 %v971
    %3595 = vmatpush1.msra.mxu0 %v970
    %3596 = vmatprep.subr.mxu0 %v979
    %3597 = vmatpush1.msra.mxu0 %v978
    %3598 = vmatprep.subr.mxu0 %v987
    %3599 = vmatpush1.msra.mxu0 %v986
    %3600 = vmatprep.subr.mxu0 %v995
    %3601 = vmatpush1.msra.mxu0 %v994
    %3602 = vmatprep.subr.mxu0 %v1003
    %3603 = vmatpush1.msra.mxu0 %v1002
    %3604 = vmatprep.subr.mxu0 %v1011
    %3605 = vmatpush1.msra.mxu0 %v1010
    %3606 = vmatprep.subr.mxu0 %v1019
    %3607 = vmatpush1.msra.mxu0 %v1018
    %3608 = vmatprep.subr.mxu0 %v1027
    %3609 = vmatpush1.msra.mxu0 %v1026
    %3610 = vmatprep.subr.mxu0 %v1035
    %3611 = vmatpush1.msra.mxu0 %v1034
    %3612 = vmatprep.subr.mxu0 %v1043
    %3613 = vmatpush1.msra.mxu0 %v1042
    %3614 = vmatprep.subr.mxu0 %v1051
    %3615 = vmatpush1.msra.mxu0 %v1050
    %3616 = vmatprep.subr.mxu0 %v1059
    %3617 = vmatpush1.msra.mxu0 %v1058
    %3618 = vmatprep.subr.mxu0 %v1067
    %3619 = vmatpush1.msra.mxu0 %v1066
    %3620 = vmatprep.subr.mxu0 %v1075
    %3621 = vmatpush1.msra.mxu0 %v1074
    %3622 = vmatprep.subr.mxu0 %v1083
    %3623 = vmatpush1.msra.mxu0 %v1082
    %3624 = vmatprep.subr.mxu0 %v1091
    %3625 = vmatpush1.msra.mxu0 %v1090
    %3626 = vmatprep.subr.mxu0 %v1099
    %3627 = vmatpush1.msra.mxu0 %v1098
    %3628 = vmatprep.subr.mxu0 %v1107
    %3629 = vmatpush1.msra.mxu0 %v1106
    %3630 = vmatprep.subr.mxu0 %v1115
    %3631 = vmatpush1.msra.mxu0 %v1114
    %3632 = vmatprep.subr.mxu0 %v1123
    %3633 = vmatpush1.msra.mxu0 %v1122
    %3634 = vmatprep.subr.mxu0 %v1131
    %3635 = vmatpush1.msra.mxu0 %v1130
    %3636 = vmatprep.subr.mxu0 %v1139
    %3637 = vmatpush1.msra.mxu0 %v1138
    %3638 = vmatprep.subr.mxu0 %v1147
    %3639 = vmatpush1.msra.mxu0 %v1146
    %3640 = vmatprep.subr.mxu0 %v1155
    %3641 = vmatpush1.msra.mxu0 %v1154
    %3642 = vmatprep.subr.mxu0 %v1163
    %3643 = vmatpush1.msra.mxu0 %v1162
    %3644 = vmatprep.subr.mxu0 %v1171
    %3645 = vmatpush1.msra.mxu0 %v1170
    %3646 = vmatprep.mubr.f32.mxu0 %v3357
    %3647 = vmatmul.mubr.f32.gmra.mrb[0].mxu0 %v3356
    %v3648 = vpop.f32.mrb[0].mxu0
    %v3649 = vadd.f32 0.0, %v3648
    %v3650 = vpop.f32.mrb[0].mxu0
    %v3651 = vadd.f32 0.0, %v3650
    %3652 = vdwg.mxu0
    %v3653 = vadd.f32 %v3361, %v3436
    %v3654 = vadd.f32 %v3362, %v3438
    %v3655 = vadd.f32 %v3363, %v3507
    %v3656 = vadd.f32 %v3364, %v3509
    %v3657 = vadd.f32 %v3365, %v3578
    %v3658 = vadd.f32 %v3366, %v3580
    %v3659 = vadd.f32 %v3367, %v3649
    %v3660 = vadd.f32 %v3368, %v3651
    %v3661 = vxor.u32 %v3653, 2147483648
    %v3662 = vxor.u32 %v3654, 2147483648
    %v3663 = vmul.f32 %v3661, 1.442695
    %v3664 = vpow.pop %v3663
    %v3665 = vmul.f32 %v3662, 1.442695
    %v3666 = vpow.pop %v3665
    %v3667 = vadd.f32 %v3664, 1.0
    %v3668 = vadd.f32 %v3666, 1.0
    %v3669 = vrcp.pop %v3667
    %v3670 = vmul.f32 1.0, %v3669
    %v3671 = vrcp.pop %v3668
    %v3672 = vmul.f32 1.0, %v3671
    %v3673 = vxor.u32 %v3655, 2147483648
    %v3674 = vxor.u32 %v3656, 2147483648
    %v3675 = vmul.f32 %v3673, 1.442695
    %v3676 = vpow.pop %v3675
    %v3677 = vmul.f32 %v3674, 1.442695
    %v3678 = vpow.pop %v3677
    %v3679 = vadd.f32 %v3676, 1.0
    %v3680 = vadd.f32 %v3678, 1.0
    %v3681 = vrcp.pop %v3679
    %v3682 = vmul.f32 1.0, %v3681
    %v3683 = vrcp.pop %v3680
    %v3684 = vmul.f32 1.0, %v3683
    %v3685 = vtanh.pop %v3657
    %v3686 = vtanh.pop %v3658
    %v3687 = vxor.u32 %v3659, 2147483648
    %v3688 = vxor.u32 %v3660, 2147483648
    %v3689 = vmul.f32 %v3687, 1.442695
    %v3690 = vpow.pop %v3689
    %v3691 = vmul.f32 %v3688, 1.442695
    %v3692 = vpow.pop %v3691
    %v3693 = vadd.f32 %v3690, 1.0
    %v3694 = vadd.f32 %v3692, 1.0
    %v3695 = vrcp.pop %v3693
    %v3696 = vmul.f32 1.0, %v3695
    %v3697 = vrcp.pop %v3694
    %v3698 = vmul.f32 1.0, %v3697
    %v3699 = vld [vmem:[#allocation5] sm:$0xff]
    %v3700 = vld [vmem:[#allocation5 + $0x8] sm:$0xff]
    %v3701 = vmul.f32 %v3682, %v3699
    %v3702 = vmul.f32 %v3684, %v3700
    %v3703 = vmul.f32 %v3670, %v3685
    %v3704 = vmul.f32 %v3672, %v3686
    %v3705 = vadd.f32 %v3701, %v3703
    %v3706 = vadd.f32 %v3702, %v3704
    %v3707 = vtanh.pop %v3705
    %v3708 = vtanh.pop %v3706
    %v3709 = vmul.f32 %v3696, %v3707
    %v3710 = vmul.f32 %v3698, %v3708
    %3711 = vst [vmem:[#allocation4] sm:$0xff] %v3709
    %3712 = vst [vmem:[#allocation4 + $0x8] sm:$0xff] %v3710
    %3713 = vst [vmem:[#allocation5] sm:$0xff] %v3705
    %3714 = vst [vmem:[#allocation5 + $0x8] sm:$0xff] %v3706
    %s3715 = smul.u32 6, 2
    %s3716 = smul.addr %s3715, 8
    %s3717 = scalar_lea.vmem [#allocation3], %s3716
    %3718 = vst [vmem:[%s3717] sm:$0xff] %v3709
    %3719 = vst [vmem:[%s3717 + $0x8] sm:$0xff] %v3710
    %v3720 = vld [vmem:[#allocation4] sm:$0xff]
    %v3721 = vld [vmem:[#allocation4 + $0x8] sm:$0xff]
    %s3722 = smul.u32 7, 8
    %s3723 = smul.addr %s3722, 8
    %s3724 = scalar_lea.vmem [#allocation2], %s3723
    %v3725 = vld [vmem:[%s3724] sm:$0xff]
    %v3726 = vld [vmem:[%s3724 + $0x8] sm:$0xff]
    %v3727 = vld [vmem:[%s3724 + $0x10] sm:$0xff]
    %v3728 = vld [vmem:[%s3724 + $0x18] sm:$0xff]
    %v3729 = vld [vmem:[%s3724 + $0x20] sm:$0xff]
    %v3730 = vld [vmem:[%s3724 + $0x28] sm:$0xff]
    %v3731 = vld [vmem:[%s3724 + $0x30] sm:$0xff]
    %v3732 = vld [vmem:[%s3724 + $0x38] sm:$0xff]
    %3733 = vmatprep.subr.mxu0 %v917
    %3734 = vmatpush1.msra.mxu0 %v916
    %3735 = vmatprep.subr.mxu0 %v925
    %3736 = vmatpush1.msra.mxu0 %v924
    %3737 = vmatprep.subr.mxu0 %v933
    %3738 = vmatpush1.msra.mxu0 %v932
    %3739 = vmatprep.subr.mxu0 %v941
    %3740 = vmatpush1.msra.mxu0 %v940
    %3741 = vmatprep.subr.mxu0 %v949
    %3742 = vmatpush1.msra.mxu0 %v948
    %3743 = vmatprep.subr.mxu0 %v957
    %3744 = vmatpush1.msra.mxu0 %v956
    %3745 = vmatprep.subr.mxu0 %v965
    %3746 = vmatpush1.msra.mxu0 %v964
    %3747 = vmatprep.subr.mxu0 %v973
    %3748 = vmatpush1.msra.mxu0 %v972
    %3749 = vmatprep.subr.mxu0 %v981
    %3750 = vmatpush1.msra.mxu0 %v980
    %3751 = vmatprep.subr.mxu0 %v989
    %3752 = vmatpush1.msra.mxu0 %v988
    %3753 = vmatprep.subr.mxu0 %v997
    %3754 = vmatpush1.msra.mxu0 %v996
    %3755 = vmatprep.subr.mxu0 %v1005
    %3756 = vmatpush1.msra.mxu0 %v1004
    %3757 = vmatprep.subr.mxu0 %v1013
    %3758 = vmatpush1.msra.mxu0 %v1012
    %3759 = vmatprep.subr.mxu0 %v1021
    %3760 = vmatpush1.msra.mxu0 %v1020
    %3761 = vmatprep.subr.mxu0 %v1029
    %3762 = vmatpush1.msra.mxu0 %v1028
    %3763 = vmatprep.subr.mxu0 %v1037
    %3764 = vmatpush1.msra.mxu0 %v1036
    %3765 = vmatprep.subr.mxu0 %v1045
    %3766 = vmatpush1.msra.mxu0 %v1044
    %3767 = vmatprep.subr.mxu0 %v1053
    %3768 = vmatpush1.msra.mxu0 %v1052
    %3769 = vmatprep.subr.mxu0 %v1061
    %3770 = vmatpush1.msra.mxu0 %v1060
    %3771 = vmatprep.subr.mxu0 %v1069
    %3772 = vmatpush1.msra.mxu0 %v1068
    %3773 = vmatprep.subr.mxu0 %v1077
    %3774 = vmatpush1.msra.mxu0 %v1076
    %3775 = vmatprep.subr.mxu0 %v1085
    %3776 = vmatpush1.msra.mxu0 %v1084
    %3777 = vmatprep.subr.mxu0 %v1093
    %3778 = vmatpush1.msra.mxu0 %v1092
    %3779 = vmatprep.subr.mxu0 %v1101
    %3780 = vmatpush1.msra.mxu0 %v1100
    %3781 = vmatprep.subr.mxu0 %v1109
    %3782 = vmatpush1.msra.mxu0 %v1108
    %3783 = vmatprep.subr.mxu0 %v1117
    %3784 = vmatpush1.msra.mxu0 %v1116
    %3785 = vmatprep.subr.mxu0 %v1125
    %3786 = vmatpush1.msra.mxu0 %v1124
    %3787 = vmatprep.subr.mxu0 %v1133
    %3788 = vmatpush1.msra.mxu0 %v1132
    %3789 = vmatprep.subr.mxu0 %v1141
    %3790 = vmatpush1.msra.mxu0 %v1140
    %3791 = vmatprep.subr.mxu0 %v1149
    %3792 = vmatpush1.msra.mxu0 %v1148
    %3793 = vmatprep.subr.mxu0 %v1157
    %3794 = vmatpush1.msra.mxu0 %v1156
    %3795 = vmatprep.subr.mxu0 %v1165
    %3796 = vmatpush1.msra.mxu0 %v1164
    %3797 = vmatprep.mubr.f32.mxu0 %v3721
    %3798 = vmatmul.mubr.f32.gmra.mrb[0].mxu0 %v3720
    %v3799 = vpop.f32.mrb[0].mxu0
    %v3800 = vadd.f32 0.0, %v3799
    %v3801 = vpop.f32.mrb[0].mxu0
    %v3802 = vadd.f32 0.0, %v3801
    %3803 = vdwg.mxu0
    %3804 = vmatprep.subr.mxu0 %v919
    %3805 = vmatpush1.msra.mxu0 %v918
    %3806 = vmatprep.subr.mxu0 %v927
    %3807 = vmatpush1.msra.mxu0 %v926
    %3808 = vmatprep.subr.mxu0 %v935
    %3809 = vmatpush1.msra.mxu0 %v934
    %3810 = vmatprep.subr.mxu0 %v943
    %3811 = vmatpush1.msra.mxu0 %v942
    %3812 = vmatprep.subr.mxu0 %v951
    %3813 = vmatpush1.msra.mxu0 %v950
    %3814 = vmatprep.subr.mxu0 %v959
    %3815 = vmatpush1.msra.mxu0 %v958
    %3816 = vmatprep.subr.mxu0 %v967
    %3817 = vmatpush1.msra.mxu0 %v966
    %3818 = vmatprep.subr.mxu0 %v975
    %3819 = vmatpush1.msra.mxu0 %v974
    %3820 = vmatprep.subr.mxu0 %v983
    %3821 = vmatpush1.msra.mxu0 %v982
    %3822 = vmatprep.subr.mxu0 %v991
    %3823 = vmatpush1.msra.mxu0 %v990
    %3824 = vmatprep.subr.mxu0 %v999
    %3825 = vmatpush1.msra.mxu0 %v998
    %3826 = vmatprep.subr.mxu0 %v1007
    %3827 = vmatpush1.msra.mxu0 %v1006
    %3828 = vmatprep.subr.mxu0 %v1015
    %3829 = vmatpush1.msra.mxu0 %v1014
    %3830 = vmatprep.subr.mxu0 %v1023
    %3831 = vmatpush1.msra.mxu0 %v1022
    %3832 = vmatprep.subr.mxu0 %v1031
    %3833 = vmatpush1.msra.mxu0 %v1030
    %3834 = vmatprep.subr.mxu0 %v1039
    %3835 = vmatpush1.msra.mxu0 %v1038
    %3836 = vmatprep.subr.mxu0 %v1047
    %3837 = vmatpush1.msra.mxu0 %v1046
    %3838 = vmatprep.subr.mxu0 %v1055
    %3839 = vmatpush1.msra.mxu0 %v1054
    %3840 = vmatprep.subr.mxu0 %v1063
    %3841 = vmatpush1.msra.mxu0 %v1062
    %3842 = vmatprep.subr.mxu0 %v1071
    %3843 = vmatpush1.msra.mxu0 %v1070
    %3844 = vmatprep.subr.mxu0 %v1079
    %3845 = vmatpush1.msra.mxu0 %v1078
    %3846 = vmatprep.subr.mxu0 %v1087
    %3847 = vmatpush1.msra.mxu0 %v1086
    %3848 = vmatprep.subr.mxu0 %v1095
    %3849 = vmatpush1.msra.mxu0 %v1094
    %3850 = vmatprep.subr.mxu0 %v1103
    %3851 = vmatpush1.msra.mxu0 %v1102
    %3852 = vmatprep.subr.mxu0 %v1111
    %3853 = vmatpush1.msra.mxu0 %v1110
    %3854 = vmatprep.subr.mxu0 %v1119
    %3855 = vmatpush1.msra.mxu0 %v1118
    %3856 = vmatprep.subr.mxu0 %v1127
    %3857 = vmatpush1.msra.mxu0 %v1126
    %3858 = vmatprep.subr.mxu0 %v1135
    %3859 = vmatpush1.msra.mxu0 %v1134
    %3860 = vmatprep.subr.mxu0 %v1143
    %3861 = vmatpush1.msra.mxu0 %v1142
    %3862 = vmatprep.subr.mxu0 %v1151
    %3863 = vmatpush1.msra.mxu0 %v1150
    %3864 = vmatprep.subr.mxu0 %v1159
    %3865 = vmatpush1.msra.mxu0 %v1158
    %3866 = vmatprep.subr.mxu0 %v1167
    %3867 = vmatpush1.msra.mxu0 %v1166
    %3868 = vmatprep.mubr.f32.mxu0 %v3721
    %3869 = vmatmul.mubr.f32.gmra.mrb[0].mxu0 %v3720
    %v3870 = vpop.f32.mrb[0].mxu0
    %v3871 = vadd.f32 0.0, %v3870
    %v3872 = vpop.f32.mrb[0].mxu0
    %v3873 = vadd.f32 0.0, %v3872
    %3874 = vdwg.mxu0
    %3875 = vmatprep.subr.mxu0 %v921
    %3876 = vmatpush1.msra.mxu0 %v920
    %3877 = vmatprep.subr.mxu0 %v929
    %3878 = vmatpush1.msra.mxu0 %v928
    %3879 = vmatprep.subr.mxu0 %v937
    %3880 = vmatpush1.msra.mxu0 %v936
    %3881 = vmatprep.subr.mxu0 %v945
    %3882 = vmatpush1.msra.mxu0 %v944
    %3883 = vmatprep.subr.mxu0 %v953
    %3884 = vmatpush1.msra.mxu0 %v952
    %3885 = vmatprep.subr.mxu0 %v961
    %3886 = vmatpush1.msra.mxu0 %v960
    %3887 = vmatprep.subr.mxu0 %v969
    %3888 = vmatpush1.msra.mxu0 %v968
    %3889 = vmatprep.subr.mxu0 %v977
    %3890 = vmatpush1.msra.mxu0 %v976
    %3891 = vmatprep.subr.mxu0 %v985
    %3892 = vmatpush1.msra.mxu0 %v984
    %3893 = vmatprep.subr.mxu0 %v993
    %3894 = vmatpush1.msra.mxu0 %v992
    %3895 = vmatprep.subr.mxu0 %v1001
    %3896 = vmatpush1.msra.mxu0 %v1000
    %3897 = vmatprep.subr.mxu0 %v1009
    %3898 = vmatpush1.msra.mxu0 %v1008
    %3899 = vmatprep.subr.mxu0 %v1017
    %3900 = vmatpush1.msra.mxu0 %v1016
    %3901 = vmatprep.subr.mxu0 %v1025
    %3902 = vmatpush1.msra.mxu0 %v1024
    %3903 = vmatprep.subr.mxu0 %v1033
    %3904 = vmatpush1.msra.mxu0 %v1032
    %3905 = vmatprep.subr.mxu0 %v1041
    %3906 = vmatpush1.msra.mxu0 %v1040
    %3907 = vmatprep.subr.mxu0 %v1049
    %3908 = vmatpush1.msra.mxu0 %v1048
    %3909 = vmatprep.subr.mxu0 %v1057
    %3910 = vmatpush1.msra.mxu0 %v1056
    %3911 = vmatprep.subr.mxu0 %v1065
    %3912 = vmatpush1.msra.mxu0 %v1064
    %3913 = vmatprep.subr.mxu0 %v1073
    %3914 = vmatpush1.msra.mxu0 %v1072
    %3915 = vmatprep.subr.mxu0 %v1081
    %3916 = vmatpush1.msra.mxu0 %v1080
    %3917 = vmatprep.subr.mxu0 %v1089
    %3918 = vmatpush1.msra.mxu0 %v1088
    %3919 = vmatprep.subr.mxu0 %v1097
    %3920 = vmatpush1.msra.mxu0 %v1096
    %3921 = vmatprep.subr.mxu0 %v1105
    %3922 = vmatpush1.msra.mxu0 %v1104
    %3923 = vmatprep.subr.mxu0 %v1113
    %3924 = vmatpush1.msra.mxu0 %v1112
    %3925 = vmatprep.subr.mxu0 %v1121
    %3926 = vmatpush1.msra.mxu0 %v1120
    %3927 = vmatprep.subr.mxu0 %v1129
    %3928 = vmatpush1.msra.mxu0 %v1128
    %3929 = vmatprep.subr.mxu0 %v1137
    %3930 = vmatpush1.msra.mxu0 %v1136
    %3931 = vmatprep.subr.mxu0 %v1145
    %3932 = vmatpush1.msra.mxu0 %v1144
    %3933 = vmatprep.subr.mxu0 %v1153
    %3934 = vmatpush1.msra.mxu0 %v1152
    %3935 = vmatprep.subr.mxu0 %v1161
    %3936 = vmatpush1.msra.mxu0 %v1160
    %3937 = vmatprep.subr.mxu0 %v1169
    %3938 = vmatpush1.msra.mxu0 %v1168
    %3939 = vmatprep.mubr.f32.mxu0 %v3721
    %3940 = vmatmul.mubr.f32.gmra.mrb[0].mxu0 %v3720
    %v3941 = vpop.f32.mrb[0].mxu0
    %v3942 = vadd.f32 0.0, %v3941
    %v3943 = vpop.f32.mrb[0].mxu0
    %v3944 = vadd.f32 0.0, %v3943
    %3945 = vdwg.mxu0
    %3946 = vmatprep.subr.mxu0 %v923
    %3947 = vmatpush1.msra.mxu0 %v922
    %3948 = vmatprep.subr.mxu0 %v931
    %3949 = vmatpush1.msra.mxu0 %v930
    %3950 = vmatprep.subr.mxu0 %v939
    %3951 = vmatpush1.msra.mxu0 %v938
    %3952 = vmatprep.subr.mxu0 %v947
    %3953 = vmatpush1.msra.mxu0 %v946
    %3954 = vmatprep.subr.mxu0 %v955
    %3955 = vmatpush1.msra.mxu0 %v954
    %3956 = vmatprep.subr.mxu0 %v963
    %3957 = vmatpush1.msra.mxu0 %v962
    %3958 = vmatprep.subr.mxu0 %v971
    %3959 = vmatpush1.msra.mxu0 %v970
    %3960 = vmatprep.subr.mxu0 %v979
    %3961 = vmatpush1.msra.mxu0 %v978
    %3962 = vmatprep.subr.mxu0 %v987
    %3963 = vmatpush1.msra.mxu0 %v986
    %3964 = vmatprep.subr.mxu0 %v995
    %3965 = vmatpush1.msra.mxu0 %v994
    %3966 = vmatprep.subr.mxu0 %v1003
    %3967 = vmatpush1.msra.mxu0 %v1002
    %3968 = vmatprep.subr.mxu0 %v1011
    %3969 = vmatpush1.msra.mxu0 %v1010
    %3970 = vmatprep.subr.mxu0 %v1019
    %3971 = vmatpush1.msra.mxu0 %v1018
    %3972 = vmatprep.subr.mxu0 %v1027
    %3973 = vmatpush1.msra.mxu0 %v1026
    %3974 = vmatprep.subr.mxu0 %v1035
    %3975 = vmatpush1.msra.mxu0 %v1034
    %3976 = vmatprep.subr.mxu0 %v1043
    %3977 = vmatpush1.msra.mxu0 %v1042
    %3978 = vmatprep.subr.mxu0 %v1051
    %3979 = vmatpush1.msra.mxu0 %v1050
    %3980 = vmatprep.subr.mxu0 %v1059
    %3981 = vmatpush1.msra.mxu0 %v1058
    %3982 = vmatprep.subr.mxu0 %v1067
    %3983 = vmatpush1.msra.mxu0 %v1066
    %3984 = vmatprep.subr.mxu0 %v1075
    %3985 = vmatpush1.msra.mxu0 %v1074
    %3986 = vmatprep.subr.mxu0 %v1083
    %3987 = vmatpush1.msra.mxu0 %v1082
    %3988 = vmatprep.subr.mxu0 %v1091
    %3989 = vmatpush1.msra.mxu0 %v1090
    %3990 = vmatprep.subr.mxu0 %v1099
    %3991 = vmatpush1.msra.mxu0 %v1098
    %3992 = vmatprep.subr.mxu0 %v1107
    %3993 = vmatpush1.msra.mxu0 %v1106
    %3994 = vmatprep.subr.mxu0 %v1115
    %3995 = vmatpush1.msra.mxu0 %v1114
    %3996 = vmatprep.subr.mxu0 %v1123
    %3997 = vmatpush1.msra.mxu0 %v1122
    %3998 = vmatprep.subr.mxu0 %v1131
    %3999 = vmatpush1.msra.mxu0 %v1130
    %4000 = vmatprep.subr.mxu0 %v1139
    %4001 = vmatpush1.msra.mxu0 %v1138
    %4002 = vmatprep.subr.mxu0 %v1147
    %4003 = vmatpush1.msra.mxu0 %v1146
    %4004 = vmatprep.subr.mxu0 %v1155
    %4005 = vmatpush1.msra.mxu0 %v1154
    %4006 = vmatprep.subr.mxu0 %v1163
    %4007 = vmatpush1.msra.mxu0 %v1162
    %4008 = vmatprep.subr.mxu0 %v1171
    %4009 = vmatpush1.msra.mxu0 %v1170
    %4010 = vmatprep.mubr.f32.mxu0 %v3721
    %4011 = vmatmul.mubr.f32.gmra.mrb[0].mxu0 %v3720
    %v4012 = vpop.f32.mrb[0].mxu0
    %v4013 = vadd.f32 0.0, %v4012
    %v4014 = vpop.f32.mrb[0].mxu0
    %v4015 = vadd.f32 0.0, %v4014
    %4016 = vdwg.mxu0
    %v4017 = vadd.f32 %v3725, %v3800
    %v4018 = vadd.f32 %v3726, %v3802
    %v4019 = vadd.f32 %v3727, %v3871
    %v4020 = vadd.f32 %v3728, %v3873
    %v4021 = vadd.f32 %v3729, %v3942
    %v4022 = vadd.f32 %v3730, %v3944
    %v4023 = vadd.f32 %v3731, %v4013
    %v4024 = vadd.f32 %v3732, %v4015
    %v4025 = vxor.u32 %v4017, 2147483648
    %v4026 = vxor.u32 %v4018, 2147483648
    %v4027 = vmul.f32 %v4025, 1.442695
    %v4028 = vpow.pop %v4027
    %v4029 = vmul.f32 %v4026, 1.442695
    %v4030 = vpow.pop %v4029
    %v4031 = vadd.f32 %v4028, 1.0
    %v4032 = vadd.f32 %v4030, 1.0
    %v4033 = vrcp.pop %v4031
    %v4034 = vmul.f32 1.0, %v4033
    %v4035 = vrcp.pop %v4032
    %v4036 = vmul.f32 1.0, %v4035
    %v4037 = vxor.u32 %v4019, 2147483648
    %v4038 = vxor.u32 %v4020, 2147483648
    %v4039 = vmul.f32 %v4037, 1.442695
    %v4040 = vpow.pop %v4039
    %v4041 = vmul.f32 %v4038, 1.442695
    %v4042 = vpow.pop %v4041
    %v4043 = vadd.f32 %v4040, 1.0
    %v4044 = vadd.f32 %v4042, 1.0
    %v4045 = vrcp.pop %v4043
    %v4046 = vmul.f32 1.0, %v4045
    %v4047 = vrcp.pop %v4044
    %v4048 = vmul.f32 1.0, %v4047
    %v4049 = vtanh.pop %v4021
    %v4050 = vtanh.pop %v4022
    %v4051 = vxor.u32 %v4023, 2147483648
    %v4052 = vxor.u32 %v4024, 2147483648
    %v4053 = vmul.f32 %v4051, 1.442695
    %v4054 = vpow.pop %v4053
    %v4055 = vmul.f32 %v4052, 1.442695
    %v4056 = vpow.pop %v4055
    %v4057 = vadd.f32 %v4054, 1.0
    %v4058 = vadd.f32 %v4056, 1.0
    %v4059 = vrcp.pop %v4057
    %v4060 = vmul.f32 1.0, %v4059
    %v4061 = vrcp.pop %v4058
    %v4062 = vmul.f32 1.0, %v4061
    %v4063 = vld [vmem:[#allocation5] sm:$0xff]
    %v4064 = vld [vmem:[#allocation5 + $0x8] sm:$0xff]
    %v4065 = vmul.f32 %v4046, %v4063
    %v4066 = vmul.f32 %v4048, %v4064
    %v4067 = vmul.f32 %v4034, %v4049
    %v4068 = vmul.f32 %v4036, %v4050
    %v4069 = vadd.f32 %v4065, %v4067
    %v4070 = vadd.f32 %v4066, %v4068
    %v4071 = vtanh.pop %v4069
    %v4072 = vtanh.pop %v4070
    %v4073 = vmul.f32 %v4060, %v4071
    %v4074 = vmul.f32 %v4062, %v4072
    %4075 = vst [vmem:[#allocation4] sm:$0xff] %v4073
    %4076 = vst [vmem:[#allocation4 + $0x8] sm:$0xff] %v4074
    %4077 = vst [vmem:[#allocation5] sm:$0xff] %v4069
    %4078 = vst [vmem:[#allocation5 + $0x8] sm:$0xff] %v4070
    %s4079 = smul.u32 7, 2
    %s4080 = smul.addr %s4079, 8
    %s4081 = scalar_lea.vmem [#allocation3], %s4080
    %4082 = vst [vmem:[%s4081] sm:$0xff] %v4073
    %4083 = vst [vmem:[%s4081 + $0x8] sm:$0xff] %v4074
    %v4084 = vld [vmem:[#allocation4] sm:$0xff]
    %v4085 = vld [vmem:[#allocation4 + $0x8] sm:$0xff]
    %4086 = vst [vmem:[#allocation28] sm:$0xff] %v4084
    %4087 = vst [vmem:[#allocation28 + $0x8] sm:$0xff] %v4085
    %v4088 = vld [vmem:[#allocation5] sm:$0xff]
    %v4089 = vld [vmem:[#allocation5 + $0x8] sm:$0xff]
    %4090 = vst [vmem:[#allocation30] sm:$0xff] %v4088
    %4091 = vst [vmem:[#allocation30 + $0x8] sm:$0xff] %v4089
    %v4092 = vld [vmem:[#allocation3] sm:$0xff]
    %v4093 = vld [vmem:[#allocation3 + $0x8] sm:$0xff]
    %v4094 = vld [vmem:[#allocation3 + $0x10] sm:$0xff]
    %v4095 = vld [vmem:[#allocation3 + $0x18] sm:$0xff]
    %v4096 = vld [vmem:[#allocation3 + $0x20] sm:$0xff]
    %v4097 = vld [vmem:[#allocation3 + $0x28] sm:$0xff]
    %v4098 = vld [vmem:[#allocation3 + $0x30] sm:$0xff]
    %v4099 = vld [vmem:[#allocation3 + $0x38] sm:$0xff]
    %v4100 = vld [vmem:[#allocation3 + $0x40] sm:$0xff]
    %v4101 = vld [vmem:[#allocation3 + $0x48] sm:$0xff]
    %v4102 = vld [vmem:[#allocation3 + $0x50] sm:$0xff]
    %v4103 = vld [vmem:[#allocation3 + $0x58] sm:$0xff]
    %v4104 = vld [vmem:[#allocation3 + $0x60] sm:$0xff]
    %v4105 = vld [vmem:[#allocation3 + $0x68] sm:$0xff]
    %v4106 = vld [vmem:[#allocation3 + $0x70] sm:$0xff]
    %v4107 = vld [vmem:[#allocation3 + $0x78] sm:$0xff]
    %v4108 = vld [vmem:[#allocation20] sm:$0xff]
    %v4109 = vld [vmem:[#allocation20 + $0x8] sm:$0xff]
    %v4110 = vld [vmem:[#allocation20 + $0x10] sm:$0xff]
    %v4111 = vld [vmem:[#allocation20 + $0x18] sm:$0xff]
    %v4112 = vld [vmem:[#allocation20 + $0x20] sm:$0xff]
    %v4113 = vld [vmem:[#allocation20 + $0x28] sm:$0xff]
    %v4114 = vld [vmem:[#allocation20 + $0x30] sm:$0xff]
    %v4115 = vld [vmem:[#allocation20 + $0x38] sm:$0xff]
    %v4116 = vld [vmem:[#allocation20 + $0x40] sm:$0xff]
    %v4117 = vld [vmem:[#allocation20 + $0x48] sm:$0xff]
    %v4118 = vld [vmem:[#allocation20 + $0x50] sm:$0xff]
    %v4119 = vld [vmem:[#allocation20 + $0x58] sm:$0xff]
    %v4120 = vld [vmem:[#allocation20 + $0x60] sm:$0xff]
    %v4121 = vld [vmem:[#allocation20 + $0x68] sm:$0xff]
    %v4122 = vld [vmem:[#allocation20 + $0x70] sm:$0xff]
    %v4123 = vld [vmem:[#allocation20 + $0x78] sm:$0xff]
    %v4124 = vld [vmem:[#allocation20 + $0x80] sm:$0xff]
    %v4125 = vld [vmem:[#allocation20 + $0x88] sm:$0xff]
    %v4126 = vld [vmem:[#allocation20 + $0x90] sm:$0xff]
    %v4127 = vld [vmem:[#allocation20 + $0x98] sm:$0xff]
    %v4128 = vld [vmem:[#allocation20 + $0xa0] sm:$0xff]
    %v4129 = vld [vmem:[#allocation20 + $0xa8] sm:$0xff]
    %v4130 = vld [vmem:[#allocation20 + $0xb0] sm:$0xff]
    %v4131 = vld [vmem:[#allocation20 + $0xb8] sm:$0xff]
    %v4132 = vld [vmem:[#allocation20 + $0xc0] sm:$0xff]
    %v4133 = vld [vmem:[#allocation20 + $0xc8] sm:$0xff]
    %v4134 = vld [vmem:[#allocation20 + $0xd0] sm:$0xff]
    %v4135 = vld [vmem:[#allocation20 + $0xd8] sm:$0xff]
    %v4136 = vld [vmem:[#allocation20 + $0xe0] sm:$0xff]
    %v4137 = vld [vmem:[#allocation20 + $0xe8] sm:$0xff]
    %v4138 = vld [vmem:[#allocation20 + $0xf0] sm:$0xff]
    %v4139 = vld [vmem:[#allocation20 + $0xf8] sm:$0xff]
    %v4140 = vld [vmem:[#allocation20 + $0x100] sm:$0xff]
    %v4141 = vld [vmem:[#allocation20 + $0x108] sm:$0xff]
    %v4142 = vld [vmem:[#allocation20 + $0x110] sm:$0xff]
    %v4143 = vld [vmem:[#allocation20 + $0x118] sm:$0xff]
    %v4144 = vld [vmem:[#allocation20 + $0x120] sm:$0xff]
    %v4145 = vld [vmem:[#allocation20 + $0x128] sm:$0xff]
    %v4146 = vld [vmem:[#allocation20 + $0x130] sm:$0xff]
    %v4147 = vld [vmem:[#allocation20 + $0x138] sm:$0xff]
    %v4148 = vld [vmem:[#allocation20 + $0x140] sm:$0xff]
    %v4149 = vld [vmem:[#allocation20 + $0x148] sm:$0xff]
    %v4150 = vld [vmem:[#allocation20 + $0x150] sm:$0xff]
    %v4151 = vld [vmem:[#allocation20 + $0x158] sm:$0xff]
    %v4152 = vld [vmem:[#allocation20 + $0x160] sm:$0xff]
    %v4153 = vld [vmem:[#allocation20 + $0x168] sm:$0xff]
    %v4154 = vld [vmem:[#allocation20 + $0x170] sm:$0xff]
    %v4155 = vld [vmem:[#allocation20 + $0x178] sm:$0xff]
    %v4156 = vld [vmem:[#allocation20 + $0x180] sm:$0xff]
    %v4157 = vld [vmem:[#allocation20 + $0x188] sm:$0xff]
    %v4158 = vld [vmem:[#allocation20 + $0x190] sm:$0xff]
    %v4159 = vld [vmem:[#allocation20 + $0x198] sm:$0xff]
    %v4160 = vld [vmem:[#allocation20 + $0x1a0] sm:$0xff]
    %v4161 = vld [vmem:[#allocation20 + $0x1a8] sm:$0xff]
    %v4162 = vld [vmem:[#allocation20 + $0x1b0] sm:$0xff]
    %v4163 = vld [vmem:[#allocation20 + $0x1b8] sm:$0xff]
    %v4164 = vld [vmem:[#allocation20 + $0x1c0] sm:$0xff]
    %v4165 = vld [vmem:[#allocation20 + $0x1c8] sm:$0xff]
    %v4166 = vld [vmem:[#allocation20 + $0x1d0] sm:$0xff]
    %v4167 = vld [vmem:[#allocation20 + $0x1d8] sm:$0xff]
    %v4168 = vld [vmem:[#allocation20 + $0x1e0] sm:$0xff]
    %v4169 = vld [vmem:[#allocation20 + $0x1e8] sm:$0xff]
    %v4170 = vld [vmem:[#allocation20 + $0x1f0] sm:$0xff]
    %v4171 = vld [vmem:[#allocation20 + $0x1f8] sm:$0xff]
    %v4172 = vld [vmem:[#allocation20 + $0x200] sm:$0xff]
    %v4173 = vld [vmem:[#allocation20 + $0x208] sm:$0xff]
    %v4174 = vld [vmem:[#allocation20 + $0x210] sm:$0xff]
    %v4175 = vld [vmem:[#allocation20 + $0x218] sm:$0xff]
    %v4176 = vld [vmem:[#allocation20 + $0x220] sm:$0xff]
    %v4177 = vld [vmem:[#allocation20 + $0x228] sm:$0xff]
    %v4178 = vld [vmem:[#allocation20 + $0x230] sm:$0xff]
    %v4179 = vld [vmem:[#allocation20 + $0x238] sm:$0xff]
    %v4180 = vld [vmem:[#allocation20 + $0x240] sm:$0xff]
    %v4181 = vld [vmem:[#allocation20 + $0x248] sm:$0xff]
    %v4182 = vld [vmem:[#allocation20 + $0x250] sm:$0xff]
    %v4183 = vld [vmem:[#allocation20 + $0x258] sm:$0xff]
    %v4184 = vld [vmem:[#allocation20 + $0x260] sm:$0xff]
    %v4185 = vld [vmem:[#allocation20 + $0x268] sm:$0xff]
    %v4186 = vld [vmem:[#allocation20 + $0x270] sm:$0xff]
    %v4187 = vld [vmem:[#allocation20 + $0x278] sm:$0xff]
    %v4188 = vld [vmem:[#allocation20 + $0x280] sm:$0xff]
    %v4189 = vld [vmem:[#allocation20 + $0x288] sm:$0xff]
    %v4190 = vld [vmem:[#allocation20 + $0x290] sm:$0xff]
    %v4191 = vld [vmem:[#allocation20 + $0x298] sm:$0xff]
    %v4192 = vld [vmem:[#allocation20 + $0x2a0] sm:$0xff]
    %v4193 = vld [vmem:[#allocation20 + $0x2a8] sm:$0xff]
    %v4194 = vld [vmem:[#allocation20 + $0x2b0] sm:$0xff]
    %v4195 = vld [vmem:[#allocation20 + $0x2b8] sm:$0xff]
    %v4196 = vld [vmem:[#allocation20 + $0x2c0] sm:$0xff]
    %v4197 = vld [vmem:[#allocation20 + $0x2c8] sm:$0xff]
    %v4198 = vld [vmem:[#allocation20 + $0x2d0] sm:$0xff]
    %v4199 = vld [vmem:[#allocation20 + $0x2d8] sm:$0xff]
    %v4200 = vld [vmem:[#allocation20 + $0x2e0] sm:$0xff]
    %v4201 = vld [vmem:[#allocation20 + $0x2e8] sm:$0xff]
    %v4202 = vld [vmem:[#allocation20 + $0x2f0] sm:$0xff]
    %v4203 = vld [vmem:[#allocation20 + $0x2f8] sm:$0xff]
    %v4204 = vld [vmem:[#allocation20 + $0x300] sm:$0xff]
    %v4205 = vld [vmem:[#allocation20 + $0x308] sm:$0xff]
    %v4206 = vld [vmem:[#allocation20 + $0x310] sm:$0xff]
    %v4207 = vld [vmem:[#allocation20 + $0x318] sm:$0xff]
    %v4208 = vld [vmem:[#allocation20 + $0x320] sm:$0xff]
    %v4209 = vld [vmem:[#allocation20 + $0x328] sm:$0xff]
    %v4210 = vld [vmem:[#allocation20 + $0x330] sm:$0xff]
    %v4211 = vld [vmem:[#allocation20 + $0x338] sm:$0xff]
    %v4212 = vld [vmem:[#allocation20 + $0x340] sm:$0xff]
    %v4213 = vld [vmem:[#allocation20 + $0x348] sm:$0xff]
    %v4214 = vld [vmem:[#allocation20 + $0x350] sm:$0xff]
    %v4215 = vld [vmem:[#allocation20 + $0x358] sm:$0xff]
    %v4216 = vld [vmem:[#allocation20 + $0x360] sm:$0xff]
    %v4217 = vld [vmem:[#allocation20 + $0x368] sm:$0xff]
    %v4218 = vld [vmem:[#allocation20 + $0x370] sm:$0xff]
    %v4219 = vld [vmem:[#allocation20 + $0x378] sm:$0xff]
    %v4220 = vld [vmem:[#allocation20 + $0x380] sm:$0xff]
    %v4221 = vld [vmem:[#allocation20 + $0x388] sm:$0xff]
    %v4222 = vld [vmem:[#allocation20 + $0x390] sm:$0xff]
    %v4223 = vld [vmem:[#allocation20 + $0x398] sm:$0xff]
    %v4224 = vld [vmem:[#allocation20 + $0x3a0] sm:$0xff]
    %v4225 = vld [vmem:[#allocation20 + $0x3a8] sm:$0xff]
    %v4226 = vld [vmem:[#allocation20 + $0x3b0] sm:$0xff]
    %v4227 = vld [vmem:[#allocation20 + $0x3b8] sm:$0xff]
    %v4228 = vld [vmem:[#allocation20 + $0x3c0] sm:$0xff]
    %v4229 = vld [vmem:[#allocation20 + $0x3c8] sm:$0xff]
    %v4230 = vld [vmem:[#allocation20 + $0x3d0] sm:$0xff]
    %v4231 = vld [vmem:[#allocation20 + $0x3d8] sm:$0xff]
    %v4232 = vld [vmem:[#allocation20 + $0x3e0] sm:$0xff]
    %v4233 = vld [vmem:[#allocation20 + $0x3e8] sm:$0xff]
    %v4234 = vld [vmem:[#allocation20 + $0x3f0] sm:$0xff]
    %v4235 = vld [vmem:[#allocation20 + $0x3f8] sm:$0xff]
    %v4236 = vld [vmem:[#allocation20 + $0x400] sm:$0xff]
    %v4237 = vld [vmem:[#allocation20 + $0x408] sm:$0xff]
    %v4238 = vld [vmem:[#allocation20 + $0x410] sm:$0xff]
    %v4239 = vld [vmem:[#allocation20 + $0x418] sm:$0xff]
    %v4240 = vld [vmem:[#allocation20 + $0x420] sm:$0xff]
    %v4241 = vld [vmem:[#allocation20 + $0x428] sm:$0xff]
    %v4242 = vld [vmem:[#allocation20 + $0x430] sm:$0xff]
    %v4243 = vld [vmem:[#allocation20 + $0x438] sm:$0xff]
    %v4244 = vld [vmem:[#allocation20 + $0x440] sm:$0xff]
    %v4245 = vld [vmem:[#allocation20 + $0x448] sm:$0xff]
    %v4246 = vld [vmem:[#allocation20 + $0x450] sm:$0xff]
    %v4247 = vld [vmem:[#allocation20 + $0x458] sm:$0xff]
    %v4248 = vld [vmem:[#allocation20 + $0x460] sm:$0xff]
    %v4249 = vld [vmem:[#allocation20 + $0x468] sm:$0xff]
    %v4250 = vld [vmem:[#allocation20 + $0x470] sm:$0xff]
    %v4251 = vld [vmem:[#allocation20 + $0x478] sm:$0xff]
    %v4252 = vld [vmem:[#allocation20 + $0x480] sm:$0xff]
    %v4253 = vld [vmem:[#allocation20 + $0x488] sm:$0xff]
    %v4254 = vld [vmem:[#allocation20 + $0x490] sm:$0xff]
    %v4255 = vld [vmem:[#allocation20 + $0x498] sm:$0xff]
    %v4256 = vld [vmem:[#allocation20 + $0x4a0] sm:$0xff]
    %v4257 = vld [vmem:[#allocation20 + $0x4a8] sm:$0xff]
    %v4258 = vld [vmem:[#allocation20 + $0x4b0] sm:$0xff]
    %v4259 = vld [vmem:[#allocation20 + $0x4b8] sm:$0xff]
    %v4260 = vld [vmem:[#allocation20 + $0x4c0] sm:$0xff]
    %v4261 = vld [vmem:[#allocation20 + $0x4c8] sm:$0xff]
    %v4262 = vld [vmem:[#allocation20 + $0x4d0] sm:$0xff]
    %v4263 = vld [vmem:[#allocation20 + $0x4d8] sm:$0xff]
    %v4264 = vld [vmem:[#allocation20 + $0x4e0] sm:$0xff]
    %v4265 = vld [vmem:[#allocation20 + $0x4e8] sm:$0xff]
    %v4266 = vld [vmem:[#allocation20 + $0x4f0] sm:$0xff]
    %v4267 = vld [vmem:[#allocation20 + $0x4f8] sm:$0xff]
    %v4268 = vld [vmem:[#allocation20 + $0x500] sm:$0xff]
    %v4269 = vld [vmem:[#allocation20 + $0x508] sm:$0xff]
    %v4270 = vld [vmem:[#allocation20 + $0x510] sm:$0xff]
    %v4271 = vld [vmem:[#allocation20 + $0x518] sm:$0xff]
    %v4272 = vld [vmem:[#allocation20 + $0x520] sm:$0xff]
    %v4273 = vld [vmem:[#allocation20 + $0x528] sm:$0xff]
    %v4274 = vld [vmem:[#allocation20 + $0x530] sm:$0xff]
    %v4275 = vld [vmem:[#allocation20 + $0x538] sm:$0xff]
    %v4276 = vld [vmem:[#allocation20 + $0x540] sm:$0xff]
    %v4277 = vld [vmem:[#allocation20 + $0x548] sm:$0xff]
    %v4278 = vld [vmem:[#allocation20 + $0x550] sm:$0xff]
    %v4279 = vld [vmem:[#allocation20 + $0x558] sm:$0xff]
    %v4280 = vld [vmem:[#allocation20 + $0x560] sm:$0xff]
    %v4281 = vld [vmem:[#allocation20 + $0x568] sm:$0xff]
    %v4282 = vld [vmem:[#allocation20 + $0x570] sm:$0xff]
    %v4283 = vld [vmem:[#allocation20 + $0x578] sm:$0xff]
    %v4284 = vld [vmem:[#allocation20 + $0x580] sm:$0xff]
    %v4285 = vld [vmem:[#allocation20 + $0x588] sm:$0xff]
    %v4286 = vld [vmem:[#allocation20 + $0x590] sm:$0xff]
    %v4287 = vld [vmem:[#allocation20 + $0x598] sm:$0xff]
    %v4288 = vld [vmem:[#allocation20 + $0x5a0] sm:$0xff]
    %v4289 = vld [vmem:[#allocation20 + $0x5a8] sm:$0xff]
    %v4290 = vld [vmem:[#allocation20 + $0x5b0] sm:$0xff]
    %v4291 = vld [vmem:[#allocation20 + $0x5b8] sm:$0xff]
    %v4292 = vld [vmem:[#allocation20 + $0x5c0] sm:$0xff]
    %v4293 = vld [vmem:[#allocation20 + $0x5c8] sm:$0xff]
    %v4294 = vld [vmem:[#allocation20 + $0x5d0] sm:$0xff]
    %v4295 = vld [vmem:[#allocation20 + $0x5d8] sm:$0xff]
    %v4296 = vld [vmem:[#allocation20 + $0x5e0] sm:$0xff]
    %v4297 = vld [vmem:[#allocation20 + $0x5e8] sm:$0xff]
    %v4298 = vld [vmem:[#allocation20 + $0x5f0] sm:$0xff]
    %v4299 = vld [vmem:[#allocation20 + $0x5f8] sm:$0xff]
    %v4300 = vld [vmem:[#allocation20 + $0x600] sm:$0xff]
    %v4301 = vld [vmem:[#allocation20 + $0x608] sm:$0xff]
    %v4302 = vld [vmem:[#allocation20 + $0x610] sm:$0xff]
    %v4303 = vld [vmem:[#allocation20 + $0x618] sm:$0xff]
    %v4304 = vld [vmem:[#allocation20 + $0x620] sm:$0xff]
    %v4305 = vld [vmem:[#allocation20 + $0x628] sm:$0xff]
    %v4306 = vld [vmem:[#allocation20 + $0x630] sm:$0xff]
    %v4307 = vld [vmem:[#allocation20 + $0x638] sm:$0xff]
    %v4308 = vld [vmem:[#allocation20 + $0x640] sm:$0xff]
    %v4309 = vld [vmem:[#allocation20 + $0x648] sm:$0xff]
    %v4310 = vld [vmem:[#allocation20 + $0x650] sm:$0xff]
    %v4311 = vld [vmem:[#allocation20 + $0x658] sm:$0xff]
    %v4312 = vld [vmem:[#allocation20 + $0x660] sm:$0xff]
    %v4313 = vld [vmem:[#allocation20 + $0x668] sm:$0xff]
    %v4314 = vld [vmem:[#allocation20 + $0x670] sm:$0xff]
    %v4315 = vld [vmem:[#allocation20 + $0x678] sm:$0xff]
    %v4316 = vld [vmem:[#allocation20 + $0x680] sm:$0xff]
    %v4317 = vld [vmem:[#allocation20 + $0x688] sm:$0xff]
    %v4318 = vld [vmem:[#allocation20 + $0x690] sm:$0xff]
    %v4319 = vld [vmem:[#allocation20 + $0x698] sm:$0xff]
    %v4320 = vld [vmem:[#allocation20 + $0x6a0] sm:$0xff]
    %v4321 = vld [vmem:[#allocation20 + $0x6a8] sm:$0xff]
    %v4322 = vld [vmem:[#allocation20 + $0x6b0] sm:$0xff]
    %v4323 = vld [vmem:[#allocation20 + $0x6b8] sm:$0xff]
    %v4324 = vld [vmem:[#allocation20 + $0x6c0] sm:$0xff]
    %v4325 = vld [vmem:[#allocation20 + $0x6c8] sm:$0xff]
    %v4326 = vld [vmem:[#allocation20 + $0x6d0] sm:$0xff]
    %v4327 = vld [vmem:[#allocation20 + $0x6d8] sm:$0xff]
    %v4328 = vld [vmem:[#allocation20 + $0x6e0] sm:$0xff]
    %v4329 = vld [vmem:[#allocation20 + $0x6e8] sm:$0xff]
    %v4330 = vld [vmem:[#allocation20 + $0x6f0] sm:$0xff]
    %v4331 = vld [vmem:[#allocation20 + $0x6f8] sm:$0xff]
    %v4332 = vld [vmem:[#allocation20 + $0x700] sm:$0xff]
    %v4333 = vld [vmem:[#allocation20 + $0x708] sm:$0xff]
    %v4334 = vld [vmem:[#allocation20 + $0x710] sm:$0xff]
    %v4335 = vld [vmem:[#allocation20 + $0x718] sm:$0xff]
    %v4336 = vld [vmem:[#allocation20 + $0x720] sm:$0xff]
    %v4337 = vld [vmem:[#allocation20 + $0x728] sm:$0xff]
    %v4338 = vld [vmem:[#allocation20 + $0x730] sm:$0xff]
    %v4339 = vld [vmem:[#allocation20 + $0x738] sm:$0xff]
    %v4340 = vld [vmem:[#allocation20 + $0x740] sm:$0xff]
    %v4341 = vld [vmem:[#allocation20 + $0x748] sm:$0xff]
    %v4342 = vld [vmem:[#allocation20 + $0x750] sm:$0xff]
    %v4343 = vld [vmem:[#allocation20 + $0x758] sm:$0xff]
    %v4344 = vld [vmem:[#allocation20 + $0x760] sm:$0xff]
    %v4345 = vld [vmem:[#allocation20 + $0x768] sm:$0xff]
    %v4346 = vld [vmem:[#allocation20 + $0x770] sm:$0xff]
    %v4347 = vld [vmem:[#allocation20 + $0x778] sm:$0xff]
    %v4348 = vld [vmem:[#allocation20 + $0x780] sm:$0xff]
    %v4349 = vld [vmem:[#allocation20 + $0x788] sm:$0xff]
    %v4350 = vld [vmem:[#allocation20 + $0x790] sm:$0xff]
    %v4351 = vld [vmem:[#allocation20 + $0x798] sm:$0xff]
    %v4352 = vld [vmem:[#allocation20 + $0x7a0] sm:$0xff]
    %v4353 = vld [vmem:[#allocation20 + $0x7a8] sm:$0xff]
    %v4354 = vld [vmem:[#allocation20 + $0x7b0] sm:$0xff]
    %v4355 = vld [vmem:[#allocation20 + $0x7b8] sm:$0xff]
    %v4356 = vld [vmem:[#allocation20 + $0x7c0] sm:$0xff]
    %v4357 = vld [vmem:[#allocation20 + $0x7c8] sm:$0xff]
    %v4358 = vld [vmem:[#allocation20 + $0x7d0] sm:$0xff]
    %v4359 = vld [vmem:[#allocation20 + $0x7d8] sm:$0xff]
    %v4360 = vld [vmem:[#allocation20 + $0x7e0] sm:$0xff]
    %v4361 = vld [vmem:[#allocation20 + $0x7e8] sm:$0xff]
    %v4362 = vld [vmem:[#allocation20 + $0x7f0] sm:$0xff]
    %v4363 = vld [vmem:[#allocation20 + $0x7f8] sm:$0xff]
    %v4364 = vld [vmem:[#allocation23] sm:$0xff]
    %v4366 = vlaneseq
    %v4367 = vshrl.u32 %v4366, 7
    %v4368 = vsub.s32 0, %v4367
    %v4369 = vrot.slane %v4364, %v4368
    %v4370 = vlaneseq
    %v4371 = vshrl.u32 %v4370, 7
    %v4372 = vsub.s32 1, %v4371
    %v4373 = vrot.slane %v4364, %v4372
    %v4374 = vlaneseq
    %v4375 = vshrl.u32 %v4374, 7
    %v4376 = vsub.s32 2, %v4375
    %v4377 = vrot.slane %v4364, %v4376
    %v4378 = vlaneseq
    %v4379 = vshrl.u32 %v4378, 7
    %v4380 = vsub.s32 3, %v4379
    %v4381 = vrot.slane %v4364, %v4380
    %v4382 = vlaneseq
    %v4383 = vshrl.u32 %v4382, 7
    %v4384 = vsub.s32 4, %v4383
    %v4385 = vrot.slane %v4364, %v4384
    %v4386 = vlaneseq
    %v4387 = vshrl.u32 %v4386, 7
    %v4388 = vsub.s32 5, %v4387
    %v4389 = vrot.slane %v4364, %v4388
    %v4390 = vlaneseq
    %v4391 = vshrl.u32 %v4390, 7
    %v4392 = vsub.s32 6, %v4391
    %v4393 = vrot.slane %v4364, %v4392
    %v4394 = vlaneseq
    %v4395 = vshrl.u32 %v4394, 7
    %v4396 = vsub.s32 7, %v4395
    %v4397 = vrot.slane %v4364, %v4396
    %4406 = vmatprep.subr.mxu0 %v4109
    %4407 = vmatpush1.msra.mxu0 %v4108
    %4408 = vmatprep.subr.mxu0 %v4117
    %4409 = vmatpush1.msra.mxu0 %v4116
    %4410 = vmatprep.subr.mxu0 %v4125
    %4411 = vmatpush1.msra.mxu0 %v4124
    %4412 = vmatprep.subr.mxu0 %v4133
    %4413 = vmatpush1.msra.mxu0 %v4132
    %4414 = vmatprep.subr.mxu0 %v4141
    %4415 = vmatpush1.msra.mxu0 %v4140
    %4416 = vmatprep.subr.mxu0 %v4149
    %4417 = vmatpush1.msra.mxu0 %v4148
    %4418 = vmatprep.subr.mxu0 %v4157
    %4419 = vmatpush1.msra.mxu0 %v4156
    %4420 = vmatprep.subr.mxu0 %v4165
    %4421 = vmatpush1.msra.mxu0 %v4164
    %4422 = vmatprep.subr.mxu0 %v4173
    %4423 = vmatpush1.msra.mxu0 %v4172
    %4424 = vmatprep.subr.mxu0 %v4181
    %4425 = vmatpush1.msra.mxu0 %v4180
    %4426 = vmatprep.subr.mxu0 %v4189
    %4427 = vmatpush1.msra.mxu0 %v4188
    %4428 = vmatprep.subr.mxu0 %v4197
    %4429 = vmatpush1.msra.mxu0 %v4196
    %4430 = vmatprep.subr.mxu0 %v4205
    %4431 = vmatpush1.msra.mxu0 %v4204
    %4432 = vmatprep.subr.mxu0 %v4213
    %4433 = vmatpush1.msra.mxu0 %v4212
    %4434 = vmatprep.subr.mxu0 %v4221
    %4435 = vmatpush1.msra.mxu0 %v4220
    %4436 = vmatprep.subr.mxu0 %v4229
    %4437 = vmatpush1.msra.mxu0 %v4228
    %4438 = vmatprep.subr.mxu0 %v4237
    %4439 = vmatpush1.msra.mxu0 %v4236
    %4440 = vmatprep.subr.mxu0 %v4245
    %4441 = vmatpush1.msra.mxu0 %v4244
    %4442 = vmatprep.subr.mxu0 %v4253
    %4443 = vmatpush1.msra.mxu0 %v4252
    %4444 = vmatprep.subr.mxu0 %v4261
    %4445 = vmatpush1.msra.mxu0 %v4260
    %4446 = vmatprep.subr.mxu0 %v4269
    %4447 = vmatpush1.msra.mxu0 %v4268
    %4448 = vmatprep.subr.mxu0 %v4277
    %4449 = vmatpush1.msra.mxu0 %v4276
    %4450 = vmatprep.subr.mxu0 %v4285
    %4451 = vmatpush1.msra.mxu0 %v4284
    %4452 = vmatprep.subr.mxu0 %v4293
    %4453 = vmatpush1.msra.mxu0 %v4292
    %4454 = vmatprep.subr.mxu0 %v4301
    %4455 = vmatpush1.msra.mxu0 %v4300
    %4456 = vmatprep.subr.mxu0 %v4309
    %4457 = vmatpush1.msra.mxu0 %v4308
    %4458 = vmatprep.subr.mxu0 %v4317
    %4459 = vmatpush1.msra.mxu0 %v4316
    %4460 = vmatprep.subr.mxu0 %v4325
    %4461 = vmatpush1.msra.mxu0 %v4324
    %4462 = vmatprep.subr.mxu0 %v4333
    %4463 = vmatpush1.msra.mxu0 %v4332
    %4464 = vmatprep.subr.mxu0 %v4341
    %4465 = vmatpush1.msra.mxu0 %v4340
    %4466 = vmatprep.subr.mxu0 %v4349
    %4467 = vmatpush1.msra.mxu0 %v4348
    %4468 = vmatprep.subr.mxu0 %v4357
    %4469 = vmatpush1.msra.mxu0 %v4356
    %4470 = vmatprep.mubr.f32.mxu0 %v4093
    %4471 = vmatmul.mubr.f32.gmra.mrb[0].mxu0 %v4092
    %v4472 = vpop.f32.mrb[0].mxu0
    %v4473 = vadd.f32 %v4369, %v4472
    %v4474 = vpop.f32.mrb[0].mxu0
    %v4475 = vadd.f32 %v4373, %v4474
    %4476 = vmatprep.mubr.f32.mxu0 %v4095
    %4477 = vmatmul.mubr.f32.gmra.mrb[0].mxu0 %v4094
    %v4478 = vpop.f32.mrb[0].mxu0
    %v4479 = vadd.f32 %v4369, %v4478
    %v4480 = vpop.f32.mrb[0].mxu0
    %v4481 = vadd.f32 %v4373, %v4480
    %4482 = vmatprep.mubr.f32.mxu0 %v4097
    %4483 = vmatmul.mubr.f32.gmra.mrb[0].mxu0 %v4096
    %v4484 = vpop.f32.mrb[0].mxu0
    %v4485 = vadd.f32 %v4369, %v4484
    %v4486 = vpop.f32.mrb[0].mxu0
    %v4487 = vadd.f32 %v4373, %v4486
    %4488 = vmatprep.mubr.f32.mxu0 %v4099
    %4489 = vmatmul.mubr.f32.gmra.mrb[0].mxu0 %v4098
    %v4490 = vpop.f32.mrb[0].mxu0
    %v4491 = vadd.f32 %v4369, %v4490
    %v4492 = vpop.f32.mrb[0].mxu0
    %v4493 = vadd.f32 %v4373, %v4492
    %4494 = vmatprep.mubr.f32.mxu0 %v4101
    %4495 = vmatmul.mubr.f32.gmra.mrb[0].mxu0 %v4100
    %v4496 = vpop.f32.mrb[0].mxu0
    %v4497 = vadd.f32 %v4369, %v4496
    %v4498 = vpop.f32.mrb[0].mxu0
    %v4499 = vadd.f32 %v4373, %v4498
    %4500 = vmatprep.mubr.f32.mxu0 %v4103
    %4501 = vmatmul.mubr.f32.gmra.mrb[0].mxu0 %v4102
    %v4502 = vpop.f32.mrb[0].mxu0
    %v4503 = vadd.f32 %v4369, %v4502
    %v4504 = vpop.f32.mrb[0].mxu0
    %v4505 = vadd.f32 %v4373, %v4504
    %4506 = vmatprep.mubr.f32.mxu0 %v4105
    %4507 = vmatmul.mubr.f32.gmra.mrb[0].mxu0 %v4104
    %v4508 = vpop.f32.mrb[0].mxu0
    %v4509 = vadd.f32 %v4369, %v4508
    %v4510 = vpop.f32.mrb[0].mxu0
    %v4511 = vadd.f32 %v4373, %v4510
    %4512 = vmatprep.mubr.f32.mxu0 %v4107
    %4513 = vmatmul.mubr.f32.gmra.mrb[0].mxu0 %v4106
    %v4514 = vpop.f32.mrb[0].mxu0
    %v4515 = vadd.f32 %v4369, %v4514
    %v4516 = vpop.f32.mrb[0].mxu0
    %v4517 = vadd.f32 %v4373, %v4516
    %4518 = vdwg.mxu0
    %4519 = vmatprep.subr.mxu0 %v4111
    %4520 = vmatpush1.msra.mxu0 %v4110
    %4521 = vmatprep.subr.mxu0 %v4119
    %4522 = vmatpush1.msra.mxu0 %v4118
    %4523 = vmatprep.subr.mxu0 %v4127
    %4524 = vmatpush1.msra.mxu0 %v4126
    %4525 = vmatprep.subr.mxu0 %v4135
    %4526 = vmatpush1.msra.mxu0 %v4134
    %4527 = vmatprep.subr.mxu0 %v4143
    %4528 = vmatpush1.msra.mxu0 %v4142
    %4529 = vmatprep.subr.mxu0 %v4151
    %4530 = vmatpush1.msra.mxu0 %v4150
    %4531 = vmatprep.subr.mxu0 %v4159
    %4532 = vmatpush1.msra.mxu0 %v4158
    %4533 = vmatprep.subr.mxu0 %v4167
    %4534 = vmatpush1.msra.mxu0 %v4166
    %4535 = vmatprep.subr.mxu0 %v4175
    %4536 = vmatpush1.msra.mxu0 %v4174
    %4537 = vmatprep.subr.mxu0 %v4183
    %4538 = vmatpush1.msra.mxu0 %v4182
    %4539 = vmatprep.subr.mxu0 %v4191
    %4540 = vmatpush1.msra.mxu0 %v4190
    %4541 = vmatprep.subr.mxu0 %v4199
    %4542 = vmatpush1.msra.mxu0 %v4198
    %4543 = vmatprep.subr.mxu0 %v4207
    %4544 = vmatpush1.msra.mxu0 %v4206
    %4545 = vmatprep.subr.mxu0 %v4215
    %4546 = vmatpush1.msra.mxu0 %v4214
    %4547 = vmatprep.subr.mxu0 %v4223
    %4548 = vmatpush1.msra.mxu0 %v4222
    %4549 = vmatprep.subr.mxu0 %v4231
    %4550 = vmatpush1.msra.mxu0 %v4230
    %4551 = vmatprep.subr.mxu0 %v4239
    %4552 = vmatpush1.msra.mxu0 %v4238
    %4553 = vmatprep.subr.mxu0 %v4247
    %4554 = vmatpush1.msra.mxu0 %v4246
    %4555 = vmatprep.subr.mxu0 %v4255
    %4556 = vmatpush1.msra.mxu0 %v4254
    %4557 = vmatprep.subr.mxu0 %v4263
    %4558 = vmatpush1.msra.mxu0 %v4262
    %4559 = vmatprep.subr.mxu0 %v4271
    %4560 = vmatpush1.msra.mxu0 %v4270
    %4561 = vmatprep.subr.mxu0 %v4279
    %4562 = vmatpush1.msra.mxu0 %v4278
    %4563 = vmatprep.subr.mxu0 %v4287
    %4564 = vmatpush1.msra.mxu0 %v4286
    %4565 = vmatprep.subr.mxu0 %v4295
    %4566 = vmatpush1.msra.mxu0 %v4294
    %4567 = vmatprep.subr.mxu0 %v4303
    %4568 = vmatpush1.msra.mxu0 %v4302
    %4569 = vmatprep.subr.mxu0 %v4311
    %4570 = vmatpush1.msra.mxu0 %v4310
    %4571 = vmatprep.subr.mxu0 %v4319
    %4572 = vmatpush1.msra.mxu0 %v4318
    %4573 = vmatprep.subr.mxu0 %v4327
    %4574 = vmatpush1.msra.mxu0 %v4326
    %4575 = vmatprep.subr.mxu0 %v4335
    %4576 = vmatpush1.msra.mxu0 %v4334
    %4577 = vmatprep.subr.mxu0 %v4343
    %4578 = vmatpush1.msra.mxu0 %v4342
    %4579 = vmatprep.subr.mxu0 %v4351
    %4580 = vmatpush1.msra.mxu0 %v4350
    %4581 = vmatprep.subr.mxu0 %v4359
    %4582 = vmatpush1.msra.mxu0 %v4358
    %4583 = vmatprep.mubr.f32.mxu0 %v4093
    %4584 = vmatmul.mubr.f32.gmra.mrb[0].mxu0 %v4092
    %v4585 = vpop.f32.mrb[0].mxu0
    %v4586 = vadd.f32 %v4377, %v4585
    %v4587 = vpop.f32.mrb[0].mxu0
    %v4588 = vadd.f32 %v4381, %v4587
    %4589 = vmatprep.mubr.f32.mxu0 %v4095
    %4590 = vmatmul.mubr.f32.gmra.mrb[0].mxu0 %v4094
    %v4591 = vpop.f32.mrb[0].mxu0
    %v4592 = vadd.f32 %v4377, %v4591
    %v4593 = vpop.f32.mrb[0].mxu0
    %v4594 = vadd.f32 %v4381, %v4593
    %4595 = vmatprep.mubr.f32.mxu0 %v4097
    %4596 = vmatmul.mubr.f32.gmra.mrb[0].mxu0 %v4096
    %v4597 = vpop.f32.mrb[0].mxu0
    %v4598 = vadd.f32 %v4377, %v4597
    %v4599 = vpop.f32.mrb[0].mxu0
    %v4600 = vadd.f32 %v4381, %v4599
    %4601 = vmatprep.mubr.f32.mxu0 %v4099
    %4602 = vmatmul.mubr.f32.gmra.mrb[0].mxu0 %v4098
    %v4603 = vpop.f32.mrb[0].mxu0
    %v4604 = vadd.f32 %v4377, %v4603
    %v4605 = vpop.f32.mrb[0].mxu0
    %v4606 = vadd.f32 %v4381, %v4605
    %4607 = vmatprep.mubr.f32.mxu0 %v4101
    %4608 = vmatmul.mubr.f32.gmra.mrb[0].mxu0 %v4100
    %v4609 = vpop.f32.mrb[0].mxu0
    %v4610 = vadd.f32 %v4377, %v4609
    %v4611 = vpop.f32.mrb[0].mxu0
    %v4612 = vadd.f32 %v4381, %v4611
    %4613 = vmatprep.mubr.f32.mxu0 %v4103
    %4614 = vmatmul.mubr.f32.gmra.mrb[0].mxu0 %v4102
    %v4615 = vpop.f32.mrb[0].mxu0
    %v4616 = vadd.f32 %v4377, %v4615
    %v4617 = vpop.f32.mrb[0].mxu0
    %v4618 = vadd.f32 %v4381, %v4617
    %4619 = vmatprep.mubr.f32.mxu0 %v4105
    %4620 = vmatmul.mubr.f32.gmra.mrb[0].mxu0 %v4104
    %v4621 = vpop.f32.mrb[0].mxu0
    %v4622 = vadd.f32 %v4377, %v4621
    %v4623 = vpop.f32.mrb[0].mxu0
    %v4624 = vadd.f32 %v4381, %v4623
    %4625 = vmatprep.mubr.f32.mxu0 %v4107
    %4626 = vmatmul.mubr.f32.gmra.mrb[0].mxu0 %v4106
    %v4627 = vpop.f32.mrb[0].mxu0
    %v4628 = vadd.f32 %v4377, %v4627
    %v4629 = vpop.f32.mrb[0].mxu0
    %v4630 = vadd.f32 %v4381, %v4629
    %4631 = vdwg.mxu0
    %4632 = vmatprep.subr.mxu0 %v4113
    %4633 = vmatpush1.msra.mxu0 %v4112
    %4634 = vmatprep.subr.mxu0 %v4121
    %4635 = vmatpush1.msra.mxu0 %v4120
    %4636 = vmatprep.subr.mxu0 %v4129
    %4637 = vmatpush1.msra.mxu0 %v4128
    %4638 = vmatprep.subr.mxu0 %v4137
    %4639 = vmatpush1.msra.mxu0 %v4136
    %4640 = vmatprep.subr.mxu0 %v4145
    %4641 = vmatpush1.msra.mxu0 %v4144
    %4642 = vmatprep.subr.mxu0 %v4153
    %4643 = vmatpush1.msra.mxu0 %v4152
    %4644 = vmatprep.subr.mxu0 %v4161
    %4645 = vmatpush1.msra.mxu0 %v4160
    %4646 = vmatprep.subr.mxu0 %v4169
    %4647 = vmatpush1.msra.mxu0 %v4168
    %4648 = vmatprep.subr.mxu0 %v4177
    %4649 = vmatpush1.msra.mxu0 %v4176
    %4650 = vmatprep.subr.mxu0 %v4185
    %4651 = vmatpush1.msra.mxu0 %v4184
    %4652 = vmatprep.subr.mxu0 %v4193
    %4653 = vmatpush1.msra.mxu0 %v4192
    %4654 = vmatprep.subr.mxu0 %v4201
    %4655 = vmatpush1.msra.mxu0 %v4200
    %4656 = vmatprep.subr.mxu0 %v4209
    %4657 = vmatpush1.msra.mxu0 %v4208
    %4658 = vmatprep.subr.mxu0 %v4217
    %4659 = vmatpush1.msra.mxu0 %v4216
    %4660 = vmatprep.subr.mxu0 %v4225
    %4661 = vmatpush1.msra.mxu0 %v4224
    %4662 = vmatprep.subr.mxu0 %v4233
    %4663 = vmatpush1.msra.mxu0 %v4232
    %4664 = vmatprep.subr.mxu0 %v4241
    %4665 = vmatpush1.msra.mxu0 %v4240
    %4666 = vmatprep.subr.mxu0 %v4249
    %4667 = vmatpush1.msra.mxu0 %v4248
    %4668 = vmatprep.subr.mxu0 %v4257
    %4669 = vmatpush1.msra.mxu0 %v4256
    %4670 = vmatprep.subr.mxu0 %v4265
    %4671 = vmatpush1.msra.mxu0 %v4264
    %4672 = vmatprep.subr.mxu0 %v4273
    %4673 = vmatpush1.msra.mxu0 %v4272
    %4674 = vmatprep.subr.mxu0 %v4281
    %4675 = vmatpush1.msra.mxu0 %v4280
    %4676 = vmatprep.subr.mxu0 %v4289
    %4677 = vmatpush1.msra.mxu0 %v4288
    %4678 = vmatprep.subr.mxu0 %v4297
    %4679 = vmatpush1.msra.mxu0 %v4296
    %4680 = vmatprep.subr.mxu0 %v4305
    %4681 = vmatpush1.msra.mxu0 %v4304
    %4682 = vmatprep.subr.mxu0 %v4313
    %4683 = vmatpush1.msra.mxu0 %v4312
    %4684 = vmatprep.subr.mxu0 %v4321
    %4685 = vmatpush1.msra.mxu0 %v4320
    %4686 = vmatprep.subr.mxu0 %v4329
    %4687 = vmatpush1.msra.mxu0 %v4328
    %4688 = vmatprep.subr.mxu0 %v4337
    %4689 = vmatpush1.msra.mxu0 %v4336
    %4690 = vmatprep.subr.mxu0 %v4345
    %4691 = vmatpush1.msra.mxu0 %v4344
    %4692 = vmatprep.subr.mxu0 %v4353
    %4693 = vmatpush1.msra.mxu0 %v4352
    %4694 = vmatprep.subr.mxu0 %v4361
    %4695 = vmatpush1.msra.mxu0 %v4360
    %4696 = vmatprep.mubr.f32.mxu0 %v4093
    %4697 = vmatmul.mubr.f32.gmra.mrb[0].mxu0 %v4092
    %v4698 = vpop.f32.mrb[0].mxu0
    %v4699 = vadd.f32 %v4385, %v4698
    %v4700 = vpop.f32.mrb[0].mxu0
    %v4701 = vadd.f32 %v4389, %v4700
    %4702 = vmatprep.mubr.f32.mxu0 %v4095
    %4703 = vmatmul.mubr.f32.gmra.mrb[0].mxu0 %v4094
    %v4704 = vpop.f32.mrb[0].mxu0
    %v4705 = vadd.f32 %v4385, %v4704
    %v4706 = vpop.f32.mrb[0].mxu0
    %v4707 = vadd.f32 %v4389, %v4706
    %4708 = vmatprep.mubr.f32.mxu0 %v4097
    %4709 = vmatmul.mubr.f32.gmra.mrb[0].mxu0 %v4096
    %v4710 = vpop.f32.mrb[0].mxu0
    %v4711 = vadd.f32 %v4385, %v4710
    %v4712 = vpop.f32.mrb[0].mxu0
    %v4713 = vadd.f32 %v4389, %v4712
    %4714 = vmatprep.mubr.f32.mxu0 %v4099
    %4715 = vmatmul.mubr.f32.gmra.mrb[0].mxu0 %v4098
    %v4716 = vpop.f32.mrb[0].mxu0
    %v4717 = vadd.f32 %v4385, %v4716
    %v4718 = vpop.f32.mrb[0].mxu0
    %v4719 = vadd.f32 %v4389, %v4718
    %4720 = vmatprep.mubr.f32.mxu0 %v4101
    %4721 = vmatmul.mubr.f32.gmra.mrb[0].mxu0 %v4100
    %v4722 = vpop.f32.mrb[0].mxu0
    %v4723 = vadd.f32 %v4385, %v4722
    %v4724 = vpop.f32.mrb[0].mxu0
    %v4725 = vadd.f32 %v4389, %v4724
    %4726 = vmatprep.mubr.f32.mxu0 %v4103
    %4727 = vmatmul.mubr.f32.gmra.mrb[0].mxu0 %v4102
    %v4728 = vpop.f32.mrb[0].mxu0
    %v4729 = vadd.f32 %v4385, %v4728
    %v4730 = vpop.f32.mrb[0].mxu0
    %v4731 = vadd.f32 %v4389, %v4730
    %4732 = vmatprep.mubr.f32.mxu0 %v4105
    %4733 = vmatmul.mubr.f32.gmra.mrb[0].mxu0 %v4104
    %v4734 = vpop.f32.mrb[0].mxu0
    %v4735 = vadd.f32 %v4385, %v4734
    %v4736 = vpop.f32.mrb[0].mxu0
    %v4737 = vadd.f32 %v4389, %v4736
    %4738 = vmatprep.mubr.f32.mxu0 %v4107
    %4739 = vmatmul.mubr.f32.gmra.mrb[0].mxu0 %v4106
    %v4740 = vpop.f32.mrb[0].mxu0
    %v4741 = vadd.f32 %v4385, %v4740
    %v4742 = vpop.f32.mrb[0].mxu0
    %v4743 = vadd.f32 %v4389, %v4742
    %4744 = vdwg.mxu0
    %4745 = vmatprep.subr.mxu0 %v4115
    %4746 = vmatpush1.msra.mxu0 %v4114
    %4747 = vmatprep.subr.mxu0 %v4123
    %4748 = vmatpush1.msra.mxu0 %v4122
    %4749 = vmatprep.subr.mxu0 %v4131
    %4750 = vmatpush1.msra.mxu0 %v4130
    %4751 = vmatprep.subr.mxu0 %v4139
    %4752 = vmatpush1.msra.mxu0 %v4138
    %4753 = vmatprep.subr.mxu0 %v4147
    %4754 = vmatpush1.msra.mxu0 %v4146
    %4755 = vmatprep.subr.mxu0 %v4155
    %4756 = vmatpush1.msra.mxu0 %v4154
    %4757 = vmatprep.subr.mxu0 %v4163
    %4758 = vmatpush1.msra.mxu0 %v4162
    %4759 = vmatprep.subr.mxu0 %v4171
    %4760 = vmatpush1.msra.mxu0 %v4170
    %4761 = vmatprep.subr.mxu0 %v4179
    %4762 = vmatpush1.msra.mxu0 %v4178
    %4763 = vmatprep.subr.mxu0 %v4187
    %4764 = vmatpush1.msra.mxu0 %v4186
    %4765 = vmatprep.subr.mxu0 %v4195
    %4766 = vmatpush1.msra.mxu0 %v4194
    %4767 = vmatprep.subr.mxu0 %v4203
    %4768 = vmatpush1.msra.mxu0 %v4202
    %4769 = vmatprep.subr.mxu0 %v4211
    %4770 = vmatpush1.msra.mxu0 %v4210
    %4771 = vmatprep.subr.mxu0 %v4219
    %4772 = vmatpush1.msra.mxu0 %v4218
    %4773 = vmatprep.subr.mxu0 %v4227
    %4774 = vmatpush1.msra.mxu0 %v4226
    %4775 = vmatprep.subr.mxu0 %v4235
    %4776 = vmatpush1.msra.mxu0 %v4234
    %4777 = vmatprep.subr.mxu0 %v4243
    %4778 = vmatpush1.msra.mxu0 %v4242
    %4779 = vmatprep.subr.mxu0 %v4251
    %4780 = vmatpush1.msra.mxu0 %v4250
    %4781 = vmatprep.subr.mxu0 %v4259
    %4782 = vmatpush1.msra.mxu0 %v4258
    %4783 = vmatprep.subr.mxu0 %v4267
    %4784 = vmatpush1.msra.mxu0 %v4266
    %4785 = vmatprep.subr.mxu0 %v4275
    %4786 = vmatpush1.msra.mxu0 %v4274
    %4787 = vmatprep.subr.mxu0 %v4283
    %4788 = vmatpush1.msra.mxu0 %v4282
    %4789 = vmatprep.subr.mxu0 %v4291
    %4790 = vmatpush1.msra.mxu0 %v4290
    %4791 = vmatprep.subr.mxu0 %v4299
    %4792 = vmatpush1.msra.mxu0 %v4298
    %4793 = vmatprep.subr.mxu0 %v4307
    %4794 = vmatpush1.msra.mxu0 %v4306
    %4795 = vmatprep.subr.mxu0 %v4315
    %4796 = vmatpush1.msra.mxu0 %v4314
    %4797 = vmatprep.subr.mxu0 %v4323
    %4798 = vmatpush1.msra.mxu0 %v4322
    %4799 = vmatprep.subr.mxu0 %v4331
    %4800 = vmatpush1.msra.mxu0 %v4330
    %4801 = vmatprep.subr.mxu0 %v4339
    %4802 = vmatpush1.msra.mxu0 %v4338
    %4803 = vmatprep.subr.mxu0 %v4347
    %4804 = vmatpush1.msra.mxu0 %v4346
    %4805 = vmatprep.subr.mxu0 %v4355
    %4806 = vmatpush1.msra.mxu0 %v4354
    %4807 = vmatprep.subr.mxu0 %v4363
    %4808 = vmatpush1.msra.mxu0 %v4362
    %4809 = vmatprep.mubr.f32.mxu0 %v4093
    %4810 = vmatmul.mubr.f32.gmra.mrb[0].mxu0 %v4092
    %v4811 = vpop.f32.mrb[0].mxu0
    %v4812 = vadd.f32 %v4393, %v4811
    %v4813 = vpop.f32.mrb[0].mxu0
    %v4814 = vadd.f32 %v4397, %v4813
    %4815 = vmatprep.mubr.f32.mxu0 %v4095
    %4816 = vmatmul.mubr.f32.gmra.mrb[0].mxu0 %v4094
    %v4817 = vpop.f32.mrb[0].mxu0
    %v4818 = vadd.f32 %v4393, %v4817
    %v4819 = vpop.f32.mrb[0].mxu0
    %v4820 = vadd.f32 %v4397, %v4819
    %4821 = vmatprep.mubr.f32.mxu0 %v4097
    %4822 = vmatmul.mubr.f32.gmra.mrb[0].mxu0 %v4096
    %v4823 = vpop.f32.mrb[0].mxu0
    %v4824 = vadd.f32 %v4393, %v4823
    %v4825 = vpop.f32.mrb[0].mxu0
    %v4826 = vadd.f32 %v4397, %v4825
    %4827 = vmatprep.mubr.f32.mxu0 %v4099
    %4828 = vmatmul.mubr.f32.gmra.mrb[0].mxu0 %v4098
    %v4829 = vpop.f32.mrb[0].mxu0
    %v4830 = vadd.f32 %v4393, %v4829
    %v4831 = vpop.f32.mrb[0].mxu0
    %v4832 = vadd.f32 %v4397, %v4831
    %4833 = vmatprep.mubr.f32.mxu0 %v4101
    %4834 = vmatmul.mubr.f32.gmra.mrb[0].mxu0 %v4100
    %v4835 = vpop.f32.mrb[0].mxu0
    %v4836 = vadd.f32 %v4393, %v4835
    %v4837 = vpop.f32.mrb[0].mxu0
    %v4838 = vadd.f32 %v4397, %v4837
    %4839 = vmatprep.mubr.f32.mxu0 %v4103
    %4840 = vmatmul.mubr.f32.gmra.mrb[0].mxu0 %v4102
    %v4841 = vpop.f32.mrb[0].mxu0
    %v4842 = vadd.f32 %v4393, %v4841
    %v4843 = vpop.f32.mrb[0].mxu0
    %v4844 = vadd.f32 %v4397, %v4843
    %4845 = vmatprep.mubr.f32.mxu0 %v4105
    %4846 = vmatmul.mubr.f32.gmra.mrb[0].mxu0 %v4104
    %v4847 = vpop.f32.mrb[0].mxu0
    %v4848 = vadd.f32 %v4393, %v4847
    %v4849 = vpop.f32.mrb[0].mxu0
    %v4850 = vadd.f32 %v4397, %v4849
    %4851 = vmatprep.mubr.f32.mxu0 %v4107
    %4852 = vmatmul.mubr.f32.gmra.mrb[0].mxu0 %v4106
    %v4853 = vpop.f32.mrb[0].mxu0
    %v4854 = vadd.f32 %v4393, %v4853
    %v4855 = vpop.f32.mrb[0].mxu0
    %v4856 = vadd.f32 %v4397, %v4855
    %4857 = vdwg.mxu0
    %4858 = vst [vmem:[#allocation2] sm:$0xff] %v4473
    %4859 = vst [vmem:[#allocation2 + $0x8] sm:$0xff] %v4475
    %4860 = vst [vmem:[#allocation2 + $0x10] sm:$0xff] %v4586
    %4861 = vst [vmem:[#allocation2 + $0x18] sm:$0xff] %v4588
    %4862 = vst [vmem:[#allocation2 + $0x20] sm:$0xff] %v4699
    %4863 = vst [vmem:[#allocation2 + $0x28] sm:$0xff] %v4701
    %4864 = vst [vmem:[#allocation2 + $0x30] sm:$0xff] %v4812
    %4865 = vst [vmem:[#allocation2 + $0x38] sm:$0xff] %v4814
    %4866 = vst [vmem:[#allocation2 + $0x40] sm:$0xff] %v4479
    %4867 = vst [vmem:[#allocation2 + $0x48] sm:$0xff] %v4481
    %4868 = vst [vmem:[#allocation2 + $0x50] sm:$0xff] %v4592
    %4869 = vst [vmem:[#allocation2 + $0x58] sm:$0xff] %v4594
    %4870 = vst [vmem:[#allocation2 + $0x60] sm:$0xff] %v4705
    %4871 = vst [vmem:[#allocation2 + $0x68] sm:$0xff] %v4707
    %4872 = vst [vmem:[#allocation2 + $0x70] sm:$0xff] %v4818
    %4873 = vst [vmem:[#allocation2 + $0x78] sm:$0xff] %v4820
    %4874 = vst [vmem:[#allocation2 + $0x80] sm:$0xff] %v4485
    %4875 = vst [vmem:[#allocation2 + $0x88] sm:$0xff] %v4487
    %4876 = vst [vmem:[#allocation2 + $0x90] sm:$0xff] %v4598
    %4877 = vst [vmem:[#allocation2 + $0x98] sm:$0xff] %v4600
    %4878 = vst [vmem:[#allocation2 + $0xa0] sm:$0xff] %v4711
    %4879 = vst [vmem:[#allocation2 + $0xa8] sm:$0xff] %v4713
    %4880 = vst [vmem:[#allocation2 + $0xb0] sm:$0xff] %v4824
    %4881 = vst [vmem:[#allocation2 + $0xb8] sm:$0xff] %v4826
    %4882 = vst [vmem:[#allocation2 + $0xc0] sm:$0xff] %v4491
    %4883 = vst [vmem:[#allocation2 + $0xc8] sm:$0xff] %v4493
    %4884 = vst [vmem:[#allocation2 + $0xd0] sm:$0xff] %v4604
    %4885 = vst [vmem:[#allocation2 + $0xd8] sm:$0xff] %v4606
    %4886 = vst [vmem:[#allocation2 + $0xe0] sm:$0xff] %v4717
    %4887 = vst [vmem:[#allocation2 + $0xe8] sm:$0xff] %v4719
    %4888 = vst [vmem:[#allocation2 + $0xf0] sm:$0xff] %v4830
    %4889 = vst [vmem:[#allocation2 + $0xf8] sm:$0xff] %v4832
    %4890 = vst [vmem:[#allocation2 + $0x100] sm:$0xff] %v4497
    %4891 = vst [vmem:[#allocation2 + $0x108] sm:$0xff] %v4499
    %4892 = vst [vmem:[#allocation2 + $0x110] sm:$0xff] %v4610
    %4893 = vst [vmem:[#allocation2 + $0x118] sm:$0xff] %v4612
    %4894 = vst [vmem:[#allocation2 + $0x120] sm:$0xff] %v4723
    %4895 = vst [vmem:[#allocation2 + $0x128] sm:$0xff] %v4725
    %4896 = vst [vmem:[#allocation2 + $0x130] sm:$0xff] %v4836
    %4897 = vst [vmem:[#allocation2 + $0x138] sm:$0xff] %v4838
    %4898 = vst [vmem:[#allocation2 + $0x140] sm:$0xff] %v4503
    %4899 = vst [vmem:[#allocation2 + $0x148] sm:$0xff] %v4505
    %4900 = vst [vmem:[#allocation2 + $0x150] sm:$0xff] %v4616
    %4901 = vst [vmem:[#allocation2 + $0x158] sm:$0xff] %v4618
    %4902 = vst [vmem:[#allocation2 + $0x160] sm:$0xff] %v4729
    %4903 = vst [vmem:[#allocation2 + $0x168] sm:$0xff] %v4731
    %4904 = vst [vmem:[#allocation2 + $0x170] sm:$0xff] %v4842
    %4905 = vst [vmem:[#allocation2 + $0x178] sm:$0xff] %v4844
    %4906 = vst [vmem:[#allocation2 + $0x180] sm:$0xff] %v4509
    %4907 = vst [vmem:[#allocation2 + $0x188] sm:$0xff] %v4511
    %4908 = vst [vmem:[#allocation2 + $0x190] sm:$0xff] %v4622
    %4909 = vst [vmem:[#allocation2 + $0x198] sm:$0xff] %v4624
    %4910 = vst [vmem:[#allocation2 + $0x1a0] sm:$0xff] %v4735
    %4911 = vst [vmem:[#allocation2 + $0x1a8] sm:$0xff] %v4737
    %4912 = vst [vmem:[#allocation2 + $0x1b0] sm:$0xff] %v4848
    %4913 = vst [vmem:[#allocation2 + $0x1b8] sm:$0xff] %v4850
    %4914 = vst [vmem:[#allocation2 + $0x1c0] sm:$0xff] %v4515
    %4915 = vst [vmem:[#allocation2 + $0x1c8] sm:$0xff] %v4517
    %4916 = vst [vmem:[#allocation2 + $0x1d0] sm:$0xff] %v4628
    %4917 = vst [vmem:[#allocation2 + $0x1d8] sm:$0xff] %v4630
    %4918 = vst [vmem:[#allocation2 + $0x1e0] sm:$0xff] %v4741
    %4919 = vst [vmem:[#allocation2 + $0x1e8] sm:$0xff] %v4743
    %4920 = vst [vmem:[#allocation2 + $0x1f0] sm:$0xff] %v4854
    %4921 = vst [vmem:[#allocation2 + $0x1f8] sm:$0xff] %v4856
    %v4922 = vld [vmem:[#allocation12] sm:$0xff]
    %v4923 = vld [vmem:[#allocation12 + $0x8] sm:$0xff]
    %4924 = vst [vmem:[#allocation4] sm:$0xff] %v4922
    %4925 = vst [vmem:[#allocation4 + $0x8] sm:$0xff] %v4923
    %v4926 = vld [vmem:[#allocation14] sm:$0xff]
    %v4927 = vld [vmem:[#allocation14 + $0x8] sm:$0xff]
    %4928 = vst [vmem:[#allocation5] sm:$0xff] %v4926
    %4929 = vst [vmem:[#allocation5 + $0x8] sm:$0xff] %v4927
    %v4930 = vld [vmem:[#allocation21] sm:$0xff]
    %v4931 = vld [vmem:[#allocation21 + $0x8] sm:$0xff]
    %v4932 = vld [vmem:[#allocation21 + $0x10] sm:$0xff]
    %v4933 = vld [vmem:[#allocation21 + $0x18] sm:$0xff]
    %v4934 = vld [vmem:[#allocation21 + $0x20] sm:$0xff]
    %v4935 = vld [vmem:[#allocation21 + $0x28] sm:$0xff]
    %v4936 = vld [vmem:[#allocation21 + $0x30] sm:$0xff]
    %v4937 = vld [vmem:[#allocation21 + $0x38] sm:$0xff]
    %v4938 = vld [vmem:[#allocation21 + $0x40] sm:$0xff]
    %v4939 = vld [vmem:[#allocation21 + $0x48] sm:$0xff]
    %v4940 = vld [vmem:[#allocation21 + $0x50] sm:$0xff]
    %v4941 = vld [vmem:[#allocation21 + $0x58] sm:$0xff]
    %v4942 = vld [vmem:[#allocation21 + $0x60] sm:$0xff]
    %v4943 = vld [vmem:[#allocation21 + $0x68] sm:$0xff]
    %v4944 = vld [vmem:[#allocation21 + $0x70] sm:$0xff]
    %v4945 = vld [vmem:[#allocation21 + $0x78] sm:$0xff]
    %v4946 = vld [vmem:[#allocation21 + $0x80] sm:$0xff]
    %v4947 = vld [vmem:[#allocation21 + $0x88] sm:$0xff]
    %v4948 = vld [vmem:[#allocation21 + $0x90] sm:$0xff]
    %v4949 = vld [vmem:[#allocation21 + $0x98] sm:$0xff]
    %v4950 = vld [vmem:[#allocation21 + $0xa0] sm:$0xff]
    %v4951 = vld [vmem:[#allocation21 + $0xa8] sm:$0xff]
    %v4952 = vld [vmem:[#allocation21 + $0xb0] sm:$0xff]
    %v4953 = vld [vmem:[#allocation21 + $0xb8] sm:$0xff]
    %v4954 = vld [vmem:[#allocation21 + $0xc0] sm:$0xff]
    %v4955 = vld [vmem:[#allocation21 + $0xc8] sm:$0xff]
    %v4956 = vld [vmem:[#allocation21 + $0xd0] sm:$0xff]
    %v4957 = vld [vmem:[#allocation21 + $0xd8] sm:$0xff]
    %v4958 = vld [vmem:[#allocation21 + $0xe0] sm:$0xff]
    %v4959 = vld [vmem:[#allocation21 + $0xe8] sm:$0xff]
    %v4960 = vld [vmem:[#allocation21 + $0xf0] sm:$0xff]
    %v4961 = vld [vmem:[#allocation21 + $0xf8] sm:$0xff]
    %v4962 = vld [vmem:[#allocation21 + $0x100] sm:$0xff]
    %v4963 = vld [vmem:[#allocation21 + $0x108] sm:$0xff]
    %v4964 = vld [vmem:[#allocation21 + $0x110] sm:$0xff]
    %v4965 = vld [vmem:[#allocation21 + $0x118] sm:$0xff]
    %v4966 = vld [vmem:[#allocation21 + $0x120] sm:$0xff]
    %v4967 = vld [vmem:[#allocation21 + $0x128] sm:$0xff]
    %v4968 = vld [vmem:[#allocation21 + $0x130] sm:$0xff]
    %v4969 = vld [vmem:[#allocation21 + $0x138] sm:$0xff]
    %v4970 = vld [vmem:[#allocation21 + $0x140] sm:$0xff]
    %v4971 = vld [vmem:[#allocation21 + $0x148] sm:$0xff]
    %v4972 = vld [vmem:[#allocation21 + $0x150] sm:$0xff]
    %v4973 = vld [vmem:[#allocation21 + $0x158] sm:$0xff]
    %v4974 = vld [vmem:[#allocation21 + $0x160] sm:$0xff]
    %v4975 = vld [vmem:[#allocation21 + $0x168] sm:$0xff]
    %v4976 = vld [vmem:[#allocation21 + $0x170] sm:$0xff]
    %v4977 = vld [vmem:[#allocation21 + $0x178] sm:$0xff]
    %v4978 = vld [vmem:[#allocation21 + $0x180] sm:$0xff]
    %v4979 = vld [vmem:[#allocation21 + $0x188] sm:$0xff]
    %v4980 = vld [vmem:[#allocation21 + $0x190] sm:$0xff]
    %v4981 = vld [vmem:[#allocation21 + $0x198] sm:$0xff]
    %v4982 = vld [vmem:[#allocation21 + $0x1a0] sm:$0xff]
    %v4983 = vld [vmem:[#allocation21 + $0x1a8] sm:$0xff]
    %v4984 = vld [vmem:[#allocation21 + $0x1b0] sm:$0xff]
    %v4985 = vld [vmem:[#allocation21 + $0x1b8] sm:$0xff]
    %v4986 = vld [vmem:[#allocation21 + $0x1c0] sm:$0xff]
    %v4987 = vld [vmem:[#allocation21 + $0x1c8] sm:$0xff]
    %v4988 = vld [vmem:[#allocation21 + $0x1d0] sm:$0xff]
    %v4989 = vld [vmem:[#allocation21 + $0x1d8] sm:$0xff]
    %v4990 = vld [vmem:[#allocation21 + $0x1e0] sm:$0xff]
    %v4991 = vld [vmem:[#allocation21 + $0x1e8] sm:$0xff]
    %v4992 = vld [vmem:[#allocation21 + $0x1f0] sm:$0xff]
    %v4993 = vld [vmem:[#allocation21 + $0x1f8] sm:$0xff]
    %v4994 = vld [vmem:[#allocation21 + $0x200] sm:$0xff]
    %v4995 = vld [vmem:[#allocation21 + $0x208] sm:$0xff]
    %v4996 = vld [vmem:[#allocation21 + $0x210] sm:$0xff]
    %v4997 = vld [vmem:[#allocation21 + $0x218] sm:$0xff]
    %v4998 = vld [vmem:[#allocation21 + $0x220] sm:$0xff]
    %v4999 = vld [vmem:[#allocation21 + $0x228] sm:$0xff]
    %v5000 = vld [vmem:[#allocation21 + $0x230] sm:$0xff]
    %v5001 = vld [vmem:[#allocation21 + $0x238] sm:$0xff]
    %v5002 = vld [vmem:[#allocation21 + $0x240] sm:$0xff]
    %v5003 = vld [vmem:[#allocation21 + $0x248] sm:$0xff]
    %v5004 = vld [vmem:[#allocation21 + $0x250] sm:$0xff]
    %v5005 = vld [vmem:[#allocation21 + $0x258] sm:$0xff]
    %v5006 = vld [vmem:[#allocation21 + $0x260] sm:$0xff]
    %v5007 = vld [vmem:[#allocation21 + $0x268] sm:$0xff]
    %v5008 = vld [vmem:[#allocation21 + $0x270] sm:$0xff]
    %v5009 = vld [vmem:[#allocation21 + $0x278] sm:$0xff]
    %v5010 = vld [vmem:[#allocation21 + $0x280] sm:$0xff]
    %v5011 = vld [vmem:[#allocation21 + $0x288] sm:$0xff]
    %v5012 = vld [vmem:[#allocation21 + $0x290] sm:$0xff]
    %v5013 = vld [vmem:[#allocation21 + $0x298] sm:$0xff]
    %v5014 = vld [vmem:[#allocation21 + $0x2a0] sm:$0xff]
    %v5015 = vld [vmem:[#allocation21 + $0x2a8] sm:$0xff]
    %v5016 = vld [vmem:[#allocation21 + $0x2b0] sm:$0xff]
    %v5017 = vld [vmem:[#allocation21 + $0x2b8] sm:$0xff]
    %v5018 = vld [vmem:[#allocation21 + $0x2c0] sm:$0xff]
    %v5019 = vld [vmem:[#allocation21 + $0x2c8] sm:$0xff]
    %v5020 = vld [vmem:[#allocation21 + $0x2d0] sm:$0xff]
    %v5021 = vld [vmem:[#allocation21 + $0x2d8] sm:$0xff]
    %v5022 = vld [vmem:[#allocation21 + $0x2e0] sm:$0xff]
    %v5023 = vld [vmem:[#allocation21 + $0x2e8] sm:$0xff]
    %v5024 = vld [vmem:[#allocation21 + $0x2f0] sm:$0xff]
    %v5025 = vld [vmem:[#allocation21 + $0x2f8] sm:$0xff]
    %v5026 = vld [vmem:[#allocation21 + $0x300] sm:$0xff]
    %v5027 = vld [vmem:[#allocation21 + $0x308] sm:$0xff]
    %v5028 = vld [vmem:[#allocation21 + $0x310] sm:$0xff]
    %v5029 = vld [vmem:[#allocation21 + $0x318] sm:$0xff]
    %v5030 = vld [vmem:[#allocation21 + $0x320] sm:$0xff]
    %v5031 = vld [vmem:[#allocation21 + $0x328] sm:$0xff]
    %v5032 = vld [vmem:[#allocation21 + $0x330] sm:$0xff]
    %v5033 = vld [vmem:[#allocation21 + $0x338] sm:$0xff]
    %v5034 = vld [vmem:[#allocation21 + $0x340] sm:$0xff]
    %v5035 = vld [vmem:[#allocation21 + $0x348] sm:$0xff]
    %v5036 = vld [vmem:[#allocation21 + $0x350] sm:$0xff]
    %v5037 = vld [vmem:[#allocation21 + $0x358] sm:$0xff]
    %v5038 = vld [vmem:[#allocation21 + $0x360] sm:$0xff]
    %v5039 = vld [vmem:[#allocation21 + $0x368] sm:$0xff]
    %v5040 = vld [vmem:[#allocation21 + $0x370] sm:$0xff]
    %v5041 = vld [vmem:[#allocation21 + $0x378] sm:$0xff]
    %v5042 = vld [vmem:[#allocation21 + $0x380] sm:$0xff]
    %v5043 = vld [vmem:[#allocation21 + $0x388] sm:$0xff]
    %v5044 = vld [vmem:[#allocation21 + $0x390] sm:$0xff]
    %v5045 = vld [vmem:[#allocation21 + $0x398] sm:$0xff]
    %v5046 = vld [vmem:[#allocation21 + $0x3a0] sm:$0xff]
    %v5047 = vld [vmem:[#allocation21 + $0x3a8] sm:$0xff]
    %v5048 = vld [vmem:[#allocation21 + $0x3b0] sm:$0xff]
    %v5049 = vld [vmem:[#allocation21 + $0x3b8] sm:$0xff]
    %v5050 = vld [vmem:[#allocation21 + $0x3c0] sm:$0xff]
    %v5051 = vld [vmem:[#allocation21 + $0x3c8] sm:$0xff]
    %v5052 = vld [vmem:[#allocation21 + $0x3d0] sm:$0xff]
    %v5053 = vld [vmem:[#allocation21 + $0x3d8] sm:$0xff]
    %v5054 = vld [vmem:[#allocation21 + $0x3e0] sm:$0xff]
    %v5055 = vld [vmem:[#allocation21 + $0x3e8] sm:$0xff]
    %v5056 = vld [vmem:[#allocation21 + $0x3f0] sm:$0xff]
    %v5057 = vld [vmem:[#allocation21 + $0x3f8] sm:$0xff]
    %v5058 = vld [vmem:[#allocation21 + $0x400] sm:$0xff]
    %v5059 = vld [vmem:[#allocation21 + $0x408] sm:$0xff]
    %v5060 = vld [vmem:[#allocation21 + $0x410] sm:$0xff]
    %v5061 = vld [vmem:[#allocation21 + $0x418] sm:$0xff]
    %v5062 = vld [vmem:[#allocation21 + $0x420] sm:$0xff]
    %v5063 = vld [vmem:[#allocation21 + $0x428] sm:$0xff]
    %v5064 = vld [vmem:[#allocation21 + $0x430] sm:$0xff]
    %v5065 = vld [vmem:[#allocation21 + $0x438] sm:$0xff]
    %v5066 = vld [vmem:[#allocation21 + $0x440] sm:$0xff]
    %v5067 = vld [vmem:[#allocation21 + $0x448] sm:$0xff]
    %v5068 = vld [vmem:[#allocation21 + $0x450] sm:$0xff]
    %v5069 = vld [vmem:[#allocation21 + $0x458] sm:$0xff]
    %v5070 = vld [vmem:[#allocation21 + $0x460] sm:$0xff]
    %v5071 = vld [vmem:[#allocation21 + $0x468] sm:$0xff]
    %v5072 = vld [vmem:[#allocation21 + $0x470] sm:$0xff]
    %v5073 = vld [vmem:[#allocation21 + $0x478] sm:$0xff]
    %v5074 = vld [vmem:[#allocation21 + $0x480] sm:$0xff]
    %v5075 = vld [vmem:[#allocation21 + $0x488] sm:$0xff]
    %v5076 = vld [vmem:[#allocation21 + $0x490] sm:$0xff]
    %v5077 = vld [vmem:[#allocation21 + $0x498] sm:$0xff]
    %v5078 = vld [vmem:[#allocation21 + $0x4a0] sm:$0xff]
    %v5079 = vld [vmem:[#allocation21 + $0x4a8] sm:$0xff]
    %v5080 = vld [vmem:[#allocation21 + $0x4b0] sm:$0xff]
    %v5081 = vld [vmem:[#allocation21 + $0x4b8] sm:$0xff]
    %v5082 = vld [vmem:[#allocation21 + $0x4c0] sm:$0xff]
    %v5083 = vld [vmem:[#allocation21 + $0x4c8] sm:$0xff]
    %v5084 = vld [vmem:[#allocation21 + $0x4d0] sm:$0xff]
    %v5085 = vld [vmem:[#allocation21 + $0x4d8] sm:$0xff]
    %v5086 = vld [vmem:[#allocation21 + $0x4e0] sm:$0xff]
    %v5087 = vld [vmem:[#allocation21 + $0x4e8] sm:$0xff]
    %v5088 = vld [vmem:[#allocation21 + $0x4f0] sm:$0xff]
    %v5089 = vld [vmem:[#allocation21 + $0x4f8] sm:$0xff]
    %v5090 = vld [vmem:[#allocation21 + $0x500] sm:$0xff]
    %v5091 = vld [vmem:[#allocation21 + $0x508] sm:$0xff]
    %v5092 = vld [vmem:[#allocation21 + $0x510] sm:$0xff]
    %v5093 = vld [vmem:[#allocation21 + $0x518] sm:$0xff]
    %v5094 = vld [vmem:[#allocation21 + $0x520] sm:$0xff]
    %v5095 = vld [vmem:[#allocation21 + $0x528] sm:$0xff]
    %v5096 = vld [vmem:[#allocation21 + $0x530] sm:$0xff]
    %v5097 = vld [vmem:[#allocation21 + $0x538] sm:$0xff]
    %v5098 = vld [vmem:[#allocation21 + $0x540] sm:$0xff]
    %v5099 = vld [vmem:[#allocation21 + $0x548] sm:$0xff]
    %v5100 = vld [vmem:[#allocation21 + $0x550] sm:$0xff]
    %v5101 = vld [vmem:[#allocation21 + $0x558] sm:$0xff]
    %v5102 = vld [vmem:[#allocation21 + $0x560] sm:$0xff]
    %v5103 = vld [vmem:[#allocation21 + $0x568] sm:$0xff]
    %v5104 = vld [vmem:[#allocation21 + $0x570] sm:$0xff]
    %v5105 = vld [vmem:[#allocation21 + $0x578] sm:$0xff]
    %v5106 = vld [vmem:[#allocation21 + $0x580] sm:$0xff]
    %v5107 = vld [vmem:[#allocation21 + $0x588] sm:$0xff]
    %v5108 = vld [vmem:[#allocation21 + $0x590] sm:$0xff]
    %v5109 = vld [vmem:[#allocation21 + $0x598] sm:$0xff]
    %v5110 = vld [vmem:[#allocation21 + $0x5a0] sm:$0xff]
    %v5111 = vld [vmem:[#allocation21 + $0x5a8] sm:$0xff]
    %v5112 = vld [vmem:[#allocation21 + $0x5b0] sm:$0xff]
    %v5113 = vld [vmem:[#allocation21 + $0x5b8] sm:$0xff]
    %v5114 = vld [vmem:[#allocation21 + $0x5c0] sm:$0xff]
    %v5115 = vld [vmem:[#allocation21 + $0x5c8] sm:$0xff]
    %v5116 = vld [vmem:[#allocation21 + $0x5d0] sm:$0xff]
    %v5117 = vld [vmem:[#allocation21 + $0x5d8] sm:$0xff]
    %v5118 = vld [vmem:[#allocation21 + $0x5e0] sm:$0xff]
    %v5119 = vld [vmem:[#allocation21 + $0x5e8] sm:$0xff]
    %v5120 = vld [vmem:[#allocation21 + $0x5f0] sm:$0xff]
    %v5121 = vld [vmem:[#allocation21 + $0x5f8] sm:$0xff]
    %v5122 = vld [vmem:[#allocation21 + $0x600] sm:$0xff]
    %v5123 = vld [vmem:[#allocation21 + $0x608] sm:$0xff]
    %v5124 = vld [vmem:[#allocation21 + $0x610] sm:$0xff]
    %v5125 = vld [vmem:[#allocation21 + $0x618] sm:$0xff]
    %v5126 = vld [vmem:[#allocation21 + $0x620] sm:$0xff]
    %v5127 = vld [vmem:[#allocation21 + $0x628] sm:$0xff]
    %v5128 = vld [vmem:[#allocation21 + $0x630] sm:$0xff]
    %v5129 = vld [vmem:[#allocation21 + $0x638] sm:$0xff]
    %v5130 = vld [vmem:[#allocation21 + $0x640] sm:$0xff]
    %v5131 = vld [vmem:[#allocation21 + $0x648] sm:$0xff]
    %v5132 = vld [vmem:[#allocation21 + $0x650] sm:$0xff]
    %v5133 = vld [vmem:[#allocation21 + $0x658] sm:$0xff]
    %v5134 = vld [vmem:[#allocation21 + $0x660] sm:$0xff]
    %v5135 = vld [vmem:[#allocation21 + $0x668] sm:$0xff]
    %v5136 = vld [vmem:[#allocation21 + $0x670] sm:$0xff]
    %v5137 = vld [vmem:[#allocation21 + $0x678] sm:$0xff]
    %v5138 = vld [vmem:[#allocation21 + $0x680] sm:$0xff]
    %v5139 = vld [vmem:[#allocation21 + $0x688] sm:$0xff]
    %v5140 = vld [vmem:[#allocation21 + $0x690] sm:$0xff]
    %v5141 = vld [vmem:[#allocation21 + $0x698] sm:$0xff]
    %v5142 = vld [vmem:[#allocation21 + $0x6a0] sm:$0xff]
    %v5143 = vld [vmem:[#allocation21 + $0x6a8] sm:$0xff]
    %v5144 = vld [vmem:[#allocation21 + $0x6b0] sm:$0xff]
    %v5145 = vld [vmem:[#allocation21 + $0x6b8] sm:$0xff]
    %v5146 = vld [vmem:[#allocation21 + $0x6c0] sm:$0xff]
    %v5147 = vld [vmem:[#allocation21 + $0x6c8] sm:$0xff]
    %v5148 = vld [vmem:[#allocation21 + $0x6d0] sm:$0xff]
    %v5149 = vld [vmem:[#allocation21 + $0x6d8] sm:$0xff]
    %v5150 = vld [vmem:[#allocation21 + $0x6e0] sm:$0xff]
    %v5151 = vld [vmem:[#allocation21 + $0x6e8] sm:$0xff]
    %v5152 = vld [vmem:[#allocation21 + $0x6f0] sm:$0xff]
    %v5153 = vld [vmem:[#allocation21 + $0x6f8] sm:$0xff]
    %v5154 = vld [vmem:[#allocation21 + $0x700] sm:$0xff]
    %v5155 = vld [vmem:[#allocation21 + $0x708] sm:$0xff]
    %v5156 = vld [vmem:[#allocation21 + $0x710] sm:$0xff]
    %v5157 = vld [vmem:[#allocation21 + $0x718] sm:$0xff]
    %v5158 = vld [vmem:[#allocation21 + $0x720] sm:$0xff]
    %v5159 = vld [vmem:[#allocation21 + $0x728] sm:$0xff]
    %v5160 = vld [vmem:[#allocation21 + $0x730] sm:$0xff]
    %v5161 = vld [vmem:[#allocation21 + $0x738] sm:$0xff]
    %v5162 = vld [vmem:[#allocation21 + $0x740] sm:$0xff]
    %v5163 = vld [vmem:[#allocation21 + $0x748] sm:$0xff]
    %v5164 = vld [vmem:[#allocation21 + $0x750] sm:$0xff]
    %v5165 = vld [vmem:[#allocation21 + $0x758] sm:$0xff]
    %v5166 = vld [vmem:[#allocation21 + $0x760] sm:$0xff]
    %v5167 = vld [vmem:[#allocation21 + $0x768] sm:$0xff]
    %v5168 = vld [vmem:[#allocation21 + $0x770] sm:$0xff]
    %v5169 = vld [vmem:[#allocation21 + $0x778] sm:$0xff]
    %v5170 = vld [vmem:[#allocation21 + $0x780] sm:$0xff]
    %v5171 = vld [vmem:[#allocation21 + $0x788] sm:$0xff]
    %v5172 = vld [vmem:[#allocation21 + $0x790] sm:$0xff]
    %v5173 = vld [vmem:[#allocation21 + $0x798] sm:$0xff]
    %v5174 = vld [vmem:[#allocation21 + $0x7a0] sm:$0xff]
    %v5175 = vld [vmem:[#allocation21 + $0x7a8] sm:$0xff]
    %v5176 = vld [vmem:[#allocation21 + $0x7b0] sm:$0xff]
    %v5177 = vld [vmem:[#allocation21 + $0x7b8] sm:$0xff]
    %v5178 = vld [vmem:[#allocation21 + $0x7c0] sm:$0xff]
    %v5179 = vld [vmem:[#allocation21 + $0x7c8] sm:$0xff]
    %v5180 = vld [vmem:[#allocation21 + $0x7d0] sm:$0xff]
    %v5181 = vld [vmem:[#allocation21 + $0x7d8] sm:$0xff]
    %v5182 = vld [vmem:[#allocation21 + $0x7e0] sm:$0xff]
    %v5183 = vld [vmem:[#allocation21 + $0x7e8] sm:$0xff]
    %v5184 = vld [vmem:[#allocation21 + $0x7f0] sm:$0xff]
    %v5185 = vld [vmem:[#allocation21 + $0x7f8] sm:$0xff]
    %v5186 = vld [vmem:[#allocation4] sm:$0xff]
    %v5187 = vld [vmem:[#allocation4 + $0x8] sm:$0xff]
    %v5188 = vld [vmem:[%s1176] sm:$0xff]
    %v5189 = vld [vmem:[%s1176 + $0x8] sm:$0xff]
    %v5190 = vld [vmem:[%s1176 + $0x10] sm:$0xff]
    %v5191 = vld [vmem:[%s1176 + $0x18] sm:$0xff]
    %v5192 = vld [vmem:[%s1176 + $0x20] sm:$0xff]
    %v5193 = vld [vmem:[%s1176 + $0x28] sm:$0xff]
    %v5194 = vld [vmem:[%s1176 + $0x30] sm:$0xff]
    %v5195 = vld [vmem:[%s1176 + $0x38] sm:$0xff]
    %5196 = vmatprep.subr.mxu0 %v4931
    %5197 = vmatpush1.msra.mxu0 %v4930
    %5198 = vmatprep.subr.mxu0 %v4939
    %5199 = vmatpush1.msra.mxu0 %v4938
    %5200 = vmatprep.subr.mxu0 %v4947
    %5201 = vmatpush1.msra.mxu0 %v4946
    %5202 = vmatprep.subr.mxu0 %v4955
    %5203 = vmatpush1.msra.mxu0 %v4954
    %5204 = vmatprep.subr.mxu0 %v4963
    %5205 = vmatpush1.msra.mxu0 %v4962
    %5206 = vmatprep.subr.mxu0 %v4971
    %5207 = vmatpush1.msra.mxu0 %v4970
    %5208 = vmatprep.subr.mxu0 %v4979
    %5209 = vmatpush1.msra.mxu0 %v4978
    %5210 = vmatprep.subr.mxu0 %v4987
    %5211 = vmatpush1.msra.mxu0 %v4986
    %5212 = vmatprep.subr.mxu0 %v4995
    %5213 = vmatpush1.msra.mxu0 %v4994
    %5214 = vmatprep.subr.mxu0 %v5003
    %5215 = vmatpush1.msra.mxu0 %v5002
    %5216 = vmatprep.subr.mxu0 %v5011
    %5217 = vmatpush1.msra.mxu0 %v5010
    %5218 = vmatprep.subr.mxu0 %v5019
    %5219 = vmatpush1.msra.mxu0 %v5018
    %5220 = vmatprep.subr.mxu0 %v5027
    %5221 = vmatpush1.msra.mxu0 %v5026
    %5222 = vmatprep.subr.mxu0 %v5035
    %5223 = vmatpush1.msra.mxu0 %v5034
    %5224 = vmatprep.subr.mxu0 %v5043
    %5225 = vmatpush1.msra.mxu0 %v5042
    %5226 = vmatprep.subr.mxu0 %v5051
    %5227 = vmatpush1.msra.mxu0 %v5050
    %5228 = vmatprep.subr.mxu0 %v5059
    %5229 = vmatpush1.msra.mxu0 %v5058
    %5230 = vmatprep.subr.mxu0 %v5067
    %5231 = vmatpush1.msra.mxu0 %v5066
    %5232 = vmatprep.subr.mxu0 %v5075
    %5233 = vmatpush1.msra.mxu0 %v5074
    %5234 = vmatprep.subr.mxu0 %v5083
    %5235 = vmatpush1.msra.mxu0 %v5082
    %5236 = vmatprep.subr.mxu0 %v5091
    %5237 = vmatpush1.msra.mxu0 %v5090
    %5238 = vmatprep.subr.mxu0 %v5099
    %5239 = vmatpush1.msra.mxu0 %v5098
    %5240 = vmatprep.subr.mxu0 %v5107
    %5241 = vmatpush1.msra.mxu0 %v5106
    %5242 = vmatprep.subr.mxu0 %v5115
    %5243 = vmatpush1.msra.mxu0 %v5114
    %5244 = vmatprep.subr.mxu0 %v5123
    %5245 = vmatpush1.msra.mxu0 %v5122
    %5246 = vmatprep.subr.mxu0 %v5131
    %5247 = vmatpush1.msra.mxu0 %v5130
    %5248 = vmatprep.subr.mxu0 %v5139
    %5249 = vmatpush1.msra.mxu0 %v5138
    %5250 = vmatprep.subr.mxu0 %v5147
    %5251 = vmatpush1.msra.mxu0 %v5146
    %5252 = vmatprep.subr.mxu0 %v5155
    %5253 = vmatpush1.msra.mxu0 %v5154
    %5254 = vmatprep.subr.mxu0 %v5163
    %5255 = vmatpush1.msra.mxu0 %v5162
    %5256 = vmatprep.subr.mxu0 %v5171
    %5257 = vmatpush1.msra.mxu0 %v5170
    %5258 = vmatprep.subr.mxu0 %v5179
    %5259 = vmatpush1.msra.mxu0 %v5178
    %5260 = vmatprep.mubr.f32.mxu0 %v5187
    %5261 = vmatmul.mubr.f32.gmra.mrb[0].mxu0 %v5186
    %v5262 = vpop.f32.mrb[0].mxu0
    %v5263 = vadd.f32 0.0, %v5262
    %v5264 = vpop.f32.mrb[0].mxu0
    %v5265 = vadd.f32 0.0, %v5264
    %5266 = vdwg.mxu0
    %5267 = vmatprep.subr.mxu0 %v4933
    %5268 = vmatpush1.msra.mxu0 %v4932
    %5269 = vmatprep.subr.mxu0 %v4941
    %5270 = vmatpush1.msra.mxu0 %v4940
    %5271 = vmatprep.subr.mxu0 %v4949
    %5272 = vmatpush1.msra.mxu0 %v4948
    %5273 = vmatprep.subr.mxu0 %v4957
    %5274 = vmatpush1.msra.mxu0 %v4956
    %5275 = vmatprep.subr.mxu0 %v4965
    %5276 = vmatpush1.msra.mxu0 %v4964
    %5277 = vmatprep.subr.mxu0 %v4973
    %5278 = vmatpush1.msra.mxu0 %v4972
    %5279 = vmatprep.subr.mxu0 %v4981
    %5280 = vmatpush1.msra.mxu0 %v4980
    %5281 = vmatprep.subr.mxu0 %v4989
    %5282 = vmatpush1.msra.mxu0 %v4988
    %5283 = vmatprep.subr.mxu0 %v4997
    %5284 = vmatpush1.msra.mxu0 %v4996
    %5285 = vmatprep.subr.mxu0 %v5005
    %5286 = vmatpush1.msra.mxu0 %v5004
    %5287 = vmatprep.subr.mxu0 %v5013
    %5288 = vmatpush1.msra.mxu0 %v5012
    %5289 = vmatprep.subr.mxu0 %v5021
    %5290 = vmatpush1.msra.mxu0 %v5020
    %5291 = vmatprep.subr.mxu0 %v5029
    %5292 = vmatpush1.msra.mxu0 %v5028
    %5293 = vmatprep.subr.mxu0 %v5037
    %5294 = vmatpush1.msra.mxu0 %v5036
    %5295 = vmatprep.subr.mxu0 %v5045
    %5296 = vmatpush1.msra.mxu0 %v5044
    %5297 = vmatprep.subr.mxu0 %v5053
    %5298 = vmatpush1.msra.mxu0 %v5052
    %5299 = vmatprep.subr.mxu0 %v5061
    %5300 = vmatpush1.msra.mxu0 %v5060
    %5301 = vmatprep.subr.mxu0 %v5069
    %5302 = vmatpush1.msra.mxu0 %v5068
    %5303 = vmatprep.subr.mxu0 %v5077
    %5304 = vmatpush1.msra.mxu0 %v5076
    %5305 = vmatprep.subr.mxu0 %v5085
    %5306 = vmatpush1.msra.mxu0 %v5084
    %5307 = vmatprep.subr.mxu0 %v5093
    %5308 = vmatpush1.msra.mxu0 %v5092
    %5309 = vmatprep.subr.mxu0 %v5101
    %5310 = vmatpush1.msra.mxu0 %v5100
    %5311 = vmatprep.subr.mxu0 %v5109
    %5312 = vmatpush1.msra.mxu0 %v5108
    %5313 = vmatprep.subr.mxu0 %v5117
    %5314 = vmatpush1.msra.mxu0 %v5116
    %5315 = vmatprep.subr.mxu0 %v5125
    %5316 = vmatpush1.msra.mxu0 %v5124
    %5317 = vmatprep.subr.mxu0 %v5133
    %5318 = vmatpush1.msra.mxu0 %v5132
    %5319 = vmatprep.subr.mxu0 %v5141
    %5320 = vmatpush1.msra.mxu0 %v5140
    %5321 = vmatprep.subr.mxu0 %v5149
    %5322 = vmatpush1.msra.mxu0 %v5148
    %5323 = vmatprep.subr.mxu0 %v5157
    %5324 = vmatpush1.msra.mxu0 %v5156
    %5325 = vmatprep.subr.mxu0 %v5165
    %5326 = vmatpush1.msra.mxu0 %v5164
    %5327 = vmatprep.subr.mxu0 %v5173
    %5328 = vmatpush1.msra.mxu0 %v5172
    %5329 = vmatprep.subr.mxu0 %v5181
    %5330 = vmatpush1.msra.mxu0 %v5180
    %5331 = vmatprep.mubr.f32.mxu0 %v5187
    %5332 = vmatmul.mubr.f32.gmra.mrb[0].mxu0 %v5186
    %v5333 = vpop.f32.mrb[0].mxu0
    %v5334 = vadd.f32 0.0, %v5333
    %v5335 = vpop.f32.mrb[0].mxu0
    %v5336 = vadd.f32 0.0, %v5335
    %5337 = vdwg.mxu0
    %5338 = vmatprep.subr.mxu0 %v4935
    %5339 = vmatpush1.msra.mxu0 %v4934
    %5340 = vmatprep.subr.mxu0 %v4943
    %5341 = vmatpush1.msra.mxu0 %v4942
    %5342 = vmatprep.subr.mxu0 %v4951
    %5343 = vmatpush1.msra.mxu0 %v4950
    %5344 = vmatprep.subr.mxu0 %v4959
    %5345 = vmatpush1.msra.mxu0 %v4958
    %5346 = vmatprep.subr.mxu0 %v4967
    %5347 = vmatpush1.msra.mxu0 %v4966
    %5348 = vmatprep.subr.mxu0 %v4975
    %5349 = vmatpush1.msra.mxu0 %v4974
    %5350 = vmatprep.subr.mxu0 %v4983
    %5351 = vmatpush1.msra.mxu0 %v4982
    %5352 = vmatprep.subr.mxu0 %v4991
    %5353 = vmatpush1.msra.mxu0 %v4990
    %5354 = vmatprep.subr.mxu0 %v4999
    %5355 = vmatpush1.msra.mxu0 %v4998
    %5356 = vmatprep.subr.mxu0 %v5007
    %5357 = vmatpush1.msra.mxu0 %v5006
    %5358 = vmatprep.subr.mxu0 %v5015
    %5359 = vmatpush1.msra.mxu0 %v5014
    %5360 = vmatprep.subr.mxu0 %v5023
    %5361 = vmatpush1.msra.mxu0 %v5022
    %5362 = vmatprep.subr.mxu0 %v5031
    %5363 = vmatpush1.msra.mxu0 %v5030
    %5364 = vmatprep.subr.mxu0 %v5039
    %5365 = vmatpush1.msra.mxu0 %v5038
    %5366 = vmatprep.subr.mxu0 %v5047
    %5367 = vmatpush1.msra.mxu0 %v5046
    %5368 = vmatprep.subr.mxu0 %v5055
    %5369 = vmatpush1.msra.mxu0 %v5054
    %5370 = vmatprep.subr.mxu0 %v5063
    %5371 = vmatpush1.msra.mxu0 %v5062
    %5372 = vmatprep.subr.mxu0 %v5071
    %5373 = vmatpush1.msra.mxu0 %v5070
    %5374 = vmatprep.subr.mxu0 %v5079
    %5375 = vmatpush1.msra.mxu0 %v5078
    %5376 = vmatprep.subr.mxu0 %v5087
    %5377 = vmatpush1.msra.mxu0 %v5086
    %5378 = vmatprep.subr.mxu0 %v5095
    %5379 = vmatpush1.msra.mxu0 %v5094
    %5380 = vmatprep.subr.mxu0 %v5103
    %5381 = vmatpush1.msra.mxu0 %v5102
    %5382 = vmatprep.subr.mxu0 %v5111
    %5383 = vmatpush1.msra.mxu0 %v5110
    %5384 = vmatprep.subr.mxu0 %v5119
    %5385 = vmatpush1.msra.mxu0 %v5118
    %5386 = vmatprep.subr.mxu0 %v5127
    %5387 = vmatpush1.msra.mxu0 %v5126
    %5388 = vmatprep.subr.mxu0 %v5135
    %5389 = vmatpush1.msra.mxu0 %v5134
    %5390 = vmatprep.subr.mxu0 %v5143
    %5391 = vmatpush1.msra.mxu0 %v5142
    %5392 = vmatprep.subr.mxu0 %v5151
    %5393 = vmatpush1.msra.mxu0 %v5150
    %5394 = vmatprep.subr.mxu0 %v5159
    %5395 = vmatpush1.msra.mxu0 %v5158
    %5396 = vmatprep.subr.mxu0 %v5167
    %5397 = vmatpush1.msra.mxu0 %v5166
    %5398 = vmatprep.subr.mxu0 %v5175
    %5399 = vmatpush1.msra.mxu0 %v5174
    %5400 = vmatprep.subr.mxu0 %v5183
    %5401 = vmatpush1.msra.mxu0 %v5182
    %5402 = vmatprep.mubr.f32.mxu0 %v5187
    %5403 = vmatmul.mubr.f32.gmra.mrb[0].mxu0 %v5186
    %v5404 = vpop.f32.mrb[0].mxu0
    %v5405 = vadd.f32 0.0, %v5404
    %v5406 = vpop.f32.mrb[0].mxu0
    %v5407 = vadd.f32 0.0, %v5406
    %5408 = vdwg.mxu0
    %5409 = vmatprep.subr.mxu0 %v4937
    %5410 = vmatpush1.msra.mxu0 %v4936
    %5411 = vmatprep.subr.mxu0 %v4945
    %5412 = vmatpush1.msra.mxu0 %v4944
    %5413 = vmatprep.subr.mxu0 %v4953
    %5414 = vmatpush1.msra.mxu0 %v4952
    %5415 = vmatprep.subr.mxu0 %v4961
    %5416 = vmatpush1.msra.mxu0 %v4960
    %5417 = vmatprep.subr.mxu0 %v4969
    %5418 = vmatpush1.msra.mxu0 %v4968
    %5419 = vmatprep.subr.mxu0 %v4977
    %5420 = vmatpush1.msra.mxu0 %v4976
    %5421 = vmatprep.subr.mxu0 %v4985
    %5422 = vmatpush1.msra.mxu0 %v4984
    %5423 = vmatprep.subr.mxu0 %v4993
    %5424 = vmatpush1.msra.mxu0 %v4992
    %5425 = vmatprep.subr.mxu0 %v5001
    %5426 = vmatpush1.msra.mxu0 %v5000
    %5427 = vmatprep.subr.mxu0 %v5009
    %5428 = vmatpush1.msra.mxu0 %v5008
    %5429 = vmatprep.subr.mxu0 %v5017
    %5430 = vmatpush1.msra.mxu0 %v5016
    %5431 = vmatprep.subr.mxu0 %v5025
    %5432 = vmatpush1.msra.mxu0 %v5024
    %5433 = vmatprep.subr.mxu0 %v5033
    %5434 = vmatpush1.msra.mxu0 %v5032
    %5435 = vmatprep.subr.mxu0 %v5041
    %5436 = vmatpush1.msra.mxu0 %v5040
    %5437 = vmatprep.subr.mxu0 %v5049
    %5438 = vmatpush1.msra.mxu0 %v5048
    %5439 = vmatprep.subr.mxu0 %v5057
    %5440 = vmatpush1.msra.mxu0 %v5056
    %5441 = vmatprep.subr.mxu0 %v5065
    %5442 = vmatpush1.msra.mxu0 %v5064
    %5443 = vmatprep.subr.mxu0 %v5073
    %5444 = vmatpush1.msra.mxu0 %v5072
    %5445 = vmatprep.subr.mxu0 %v5081
    %5446 = vmatpush1.msra.mxu0 %v5080
    %5447 = vmatprep.subr.mxu0 %v5089
    %5448 = vmatpush1.msra.mxu0 %v5088
    %5449 = vmatprep.subr.mxu0 %v5097
    %5450 = vmatpush1.msra.mxu0 %v5096
    %5451 = vmatprep.subr.mxu0 %v5105
    %5452 = vmatpush1.msra.mxu0 %v5104
    %5453 = vmatprep.subr.mxu0 %v5113
    %5454 = vmatpush1.msra.mxu0 %v5112
    %5455 = vmatprep.subr.mxu0 %v5121
    %5456 = vmatpush1.msra.mxu0 %v5120
    %5457 = vmatprep.subr.mxu0 %v5129
    %5458 = vmatpush1.msra.mxu0 %v5128
    %5459 = vmatprep.subr.mxu0 %v5137
    %5460 = vmatpush1.msra.mxu0 %v5136
    %5461 = vmatprep.subr.mxu0 %v5145
    %5462 = vmatpush1.msra.mxu0 %v5144
    %5463 = vmatprep.subr.mxu0 %v5153
    %5464 = vmatpush1.msra.mxu0 %v5152
    %5465 = vmatprep.subr.mxu0 %v5161
    %5466 = vmatpush1.msra.mxu0 %v5160
    %5467 = vmatprep.subr.mxu0 %v5169
    %5468 = vmatpush1.msra.mxu0 %v5168
    %5469 = vmatprep.subr.mxu0 %v5177
    %5470 = vmatpush1.msra.mxu0 %v5176
    %5471 = vmatprep.subr.mxu0 %v5185
    %5472 = vmatpush1.msra.mxu0 %v5184
    %5473 = vmatprep.mubr.f32.mxu0 %v5187
    %5474 = vmatmul.mubr.f32.gmra.mrb[0].mxu0 %v5186
    %v5475 = vpop.f32.mrb[0].mxu0
    %v5476 = vadd.f32 0.0, %v5475
    %v5477 = vpop.f32.mrb[0].mxu0
    %v5478 = vadd.f32 0.0, %v5477
    %5479 = vdwg.mxu0
    %v5480 = vadd.f32 %v5188, %v5263
    %v5481 = vadd.f32 %v5189, %v5265
    %v5482 = vadd.f32 %v5190, %v5334
    %v5483 = vadd.f32 %v5191, %v5336
    %v5484 = vadd.f32 %v5192, %v5405
    %v5485 = vadd.f32 %v5193, %v5407
    %v5486 = vadd.f32 %v5194, %v5476
    %v5487 = vadd.f32 %v5195, %v5478
    %v5488 = vxor.u32 %v5480, 2147483648
    %v5489 = vxor.u32 %v5481, 2147483648
    %v5490 = vmul.f32 %v5488, 1.442695
    %v5491 = vpow.pop %v5490
    %v5492 = vmul.f32 %v5489, 1.442695
    %v5493 = vpow.pop %v5492
    %v5494 = vadd.f32 %v5491, 1.0
    %v5495 = vadd.f32 %v5493, 1.0
    %v5496 = vrcp.pop %v5494
    %v5497 = vmul.f32 1.0, %v5496
    %v5498 = vrcp.pop %v5495
    %v5499 = vmul.f32 1.0, %v5498
    %v5500 = vxor.u32 %v5482, 2147483648
    %v5501 = vxor.u32 %v5483, 2147483648
    %v5502 = vmul.f32 %v5500, 1.442695
    %v5503 = vpow.pop %v5502
    %v5504 = vmul.f32 %v5501, 1.442695
    %v5505 = vpow.pop %v5504
    %v5506 = vadd.f32 %v5503, 1.0
    %v5507 = vadd.f32 %v5505, 1.0
    %v5508 = vrcp.pop %v5506
    %v5509 = vmul.f32 1.0, %v5508
    %v5510 = vrcp.pop %v5507
    %v5511 = vmul.f32 1.0, %v5510
    %v5512 = vtanh.pop %v5484
    %v5513 = vtanh.pop %v5485
    %v5514 = vxor.u32 %v5486, 2147483648
    %v5515 = vxor.u32 %v5487, 2147483648
    %v5516 = vmul.f32 %v5514, 1.442695
    %v5517 = vpow.pop %v5516
    %v5518 = vmul.f32 %v5515, 1.442695
    %v5519 = vpow.pop %v5518
    %v5520 = vadd.f32 %v5517, 1.0
    %v5521 = vadd.f32 %v5519, 1.0
    %v5522 = vrcp.pop %v5520
    %v5523 = vmul.f32 1.0, %v5522
    %v5524 = vrcp.pop %v5521
    %v5525 = vmul.f32 1.0, %v5524
    %v5526 = vld [vmem:[#allocation5] sm:$0xff]
    %v5527 = vld [vmem:[#allocation5 + $0x8] sm:$0xff]
    %v5528 = vmul.f32 %v5509, %v5526
    %v5529 = vmul.f32 %v5511, %v5527
    %v5530 = vmul.f32 %v5497, %v5512
    %v5531 = vmul.f32 %v5499, %v5513
    %v5532 = vadd.f32 %v5528, %v5530
    %v5533 = vadd.f32 %v5529, %v5531
    %v5534 = vtanh.pop %v5532
    %v5535 = vtanh.pop %v5533
    %v5536 = vmul.f32 %v5523, %v5534
    %v5537 = vmul.f32 %v5525, %v5535
    %5538 = vst [vmem:[#allocation4] sm:$0xff] %v5536
    %5539 = vst [vmem:[#allocation4 + $0x8] sm:$0xff] %v5537
    %5540 = vst [vmem:[#allocation5] sm:$0xff] %v5532
    %5541 = vst [vmem:[#allocation5 + $0x8] sm:$0xff] %v5533
    %5542 = vst [vmem:[%s1533] sm:$0xff] %v5536
    %5543 = vst [vmem:[%s1533 + $0x8] sm:$0xff] %v5537
    %v5544 = vld [vmem:[#allocation4] sm:$0xff]
    %v5545 = vld [vmem:[#allocation4 + $0x8] sm:$0xff]
    %v5546 = vld [vmem:[%s1540] sm:$0xff]
    %v5547 = vld [vmem:[%s1540 + $0x8] sm:$0xff]
    %v5548 = vld [vmem:[%s1540 + $0x10] sm:$0xff]
    %v5549 = vld [vmem:[%s1540 + $0x18] sm:$0xff]
    %v5550 = vld [vmem:[%s1540 + $0x20] sm:$0xff]
    %v5551 = vld [vmem:[%s1540 + $0x28] sm:$0xff]
    %v5552 = vld [vmem:[%s1540 + $0x30] sm:$0xff]
    %v5553 = vld [vmem:[%s1540 + $0x38] sm:$0xff]
    %5554 = vmatprep.subr.mxu0 %v4931
    %5555 = vmatpush1.msra.mxu0 %v4930
    %5556 = vmatprep.subr.mxu0 %v4939
    %5557 = vmatpush1.msra.mxu0 %v4938
    %5558 = vmatprep.subr.mxu0 %v4947
    %5559 = vmatpush1.msra.mxu0 %v4946
    %5560 = vmatprep.subr.mxu0 %v4955
    %5561 = vmatpush1.msra.mxu0 %v4954
    %5562 = vmatprep.subr.mxu0 %v4963
    %5563 = vmatpush1.msra.mxu0 %v4962
    %5564 = vmatprep.subr.mxu0 %v4971
    %5565 = vmatpush1.msra.mxu0 %v4970
    %5566 = vmatprep.subr.mxu0 %v4979
    %5567 = vmatpush1.msra.mxu0 %v4978
    %5568 = vmatprep.subr.mxu0 %v4987
    %5569 = vmatpush1.msra.mxu0 %v4986
    %5570 = vmatprep.subr.mxu0 %v4995
    %5571 = vmatpush1.msra.mxu0 %v4994
    %5572 = vmatprep.subr.mxu0 %v5003
    %5573 = vmatpush1.msra.mxu0 %v5002
    %5574 = vmatprep.subr.mxu0 %v5011
    %5575 = vmatpush1.msra.mxu0 %v5010
    %5576 = vmatprep.subr.mxu0 %v5019
    %5577 = vmatpush1.msra.mxu0 %v5018
    %5578 = vmatprep.subr.mxu0 %v5027
    %5579 = vmatpush1.msra.mxu0 %v5026
    %5580 = vmatprep.subr.mxu0 %v5035
    %5581 = vmatpush1.msra.mxu0 %v5034
    %5582 = vmatprep.subr.mxu0 %v5043
    %5583 = vmatpush1.msra.mxu0 %v5042
    %5584 = vmatprep.subr.mxu0 %v5051
    %5585 = vmatpush1.msra.mxu0 %v5050
    %5586 = vmatprep.subr.mxu0 %v5059
    %5587 = vmatpush1.msra.mxu0 %v5058
    %5588 = vmatprep.subr.mxu0 %v5067
    %5589 = vmatpush1.msra.mxu0 %v5066
    %5590 = vmatprep.subr.mxu0 %v5075
    %5591 = vmatpush1.msra.mxu0 %v5074
    %5592 = vmatprep.subr.mxu0 %v5083
    %5593 = vmatpush1.msra.mxu0 %v5082
    %5594 = vmatprep.subr.mxu0 %v5091
    %5595 = vmatpush1.msra.mxu0 %v5090
    %5596 = vmatprep.subr.mxu0 %v5099
    %5597 = vmatpush1.msra.mxu0 %v5098
    %5598 = vmatprep.subr.mxu0 %v5107
    %5599 = vmatpush1.msra.mxu0 %v5106
    %5600 = vmatprep.subr.mxu0 %v5115
    %5601 = vmatpush1.msra.mxu0 %v5114
    %5602 = vmatprep.subr.mxu0 %v5123
    %5603 = vmatpush1.msra.mxu0 %v5122
    %5604 = vmatprep.subr.mxu0 %v5131
    %5605 = vmatpush1.msra.mxu0 %v5130
    %5606 = vmatprep.subr.mxu0 %v5139
    %5607 = vmatpush1.msra.mxu0 %v5138
    %5608 = vmatprep.subr.mxu0 %v5147
    %5609 = vmatpush1.msra.mxu0 %v5146
    %5610 = vmatprep.subr.mxu0 %v5155
    %5611 = vmatpush1.msra.mxu0 %v5154
    %5612 = vmatprep.subr.mxu0 %v5163
    %5613 = vmatpush1.msra.mxu0 %v5162
    %5614 = vmatprep.subr.mxu0 %v5171
    %5615 = vmatpush1.msra.mxu0 %v5170
    %5616 = vmatprep.subr.mxu0 %v5179
    %5617 = vmatpush1.msra.mxu0 %v5178
    %5618 = vmatprep.mubr.f32.mxu0 %v5545
    %5619 = vmatmul.mubr.f32.gmra.mrb[0].mxu0 %v5544
    %v5620 = vpop.f32.mrb[0].mxu0
    %v5621 = vadd.f32 0.0, %v5620
    %v5622 = vpop.f32.mrb[0].mxu0
    %v5623 = vadd.f32 0.0, %v5622
    %5624 = vdwg.mxu0
    %5625 = vmatprep.subr.mxu0 %v4933
    %5626 = vmatpush1.msra.mxu0 %v4932
    %5627 = vmatprep.subr.mxu0 %v4941
    %5628 = vmatpush1.msra.mxu0 %v4940
    %5629 = vmatprep.subr.mxu0 %v4949
    %5630 = vmatpush1.msra.mxu0 %v4948
    %5631 = vmatprep.subr.mxu0 %v4957
    %5632 = vmatpush1.msra.mxu0 %v4956
    %5633 = vmatprep.subr.mxu0 %v4965
    %5634 = vmatpush1.msra.mxu0 %v4964
    %5635 = vmatprep.subr.mxu0 %v4973
    %5636 = vmatpush1.msra.mxu0 %v4972
    %5637 = vmatprep.subr.mxu0 %v4981
    %5638 = vmatpush1.msra.mxu0 %v4980
    %5639 = vmatprep.subr.mxu0 %v4989
    %5640 = vmatpush1.msra.mxu0 %v4988
    %5641 = vmatprep.subr.mxu0 %v4997
    %5642 = vmatpush1.msra.mxu0 %v4996
    %5643 = vmatprep.subr.mxu0 %v5005
    %5644 = vmatpush1.msra.mxu0 %v5004
    %5645 = vmatprep.subr.mxu0 %v5013
    %5646 = vmatpush1.msra.mxu0 %v5012
    %5647 = vmatprep.subr.mxu0 %v5021
    %5648 = vmatpush1.msra.mxu0 %v5020
    %5649 = vmatprep.subr.mxu0 %v5029
    %5650 = vmatpush1.msra.mxu0 %v5028
    %5651 = vmatprep.subr.mxu0 %v5037
    %5652 = vmatpush1.msra.mxu0 %v5036
    %5653 = vmatprep.subr.mxu0 %v5045
    %5654 = vmatpush1.msra.mxu0 %v5044
    %5655 = vmatprep.subr.mxu0 %v5053
    %5656 = vmatpush1.msra.mxu0 %v5052
    %5657 = vmatprep.subr.mxu0 %v5061
    %5658 = vmatpush1.msra.mxu0 %v5060
    %5659 = vmatprep.subr.mxu0 %v5069
    %5660 = vmatpush1.msra.mxu0 %v5068
    %5661 = vmatprep.subr.mxu0 %v5077
    %5662 = vmatpush1.msra.mxu0 %v5076
    %5663 = vmatprep.subr.mxu0 %v5085
    %5664 = vmatpush1.msra.mxu0 %v5084
    %5665 = vmatprep.subr.mxu0 %v5093
    %5666 = vmatpush1.msra.mxu0 %v5092
    %5667 = vmatprep.subr.mxu0 %v5101
    %5668 = vmatpush1.msra.mxu0 %v5100
    %5669 = vmatprep.subr.mxu0 %v5109
    %5670 = vmatpush1.msra.mxu0 %v5108
    %5671 = vmatprep.subr.mxu0 %v5117
    %5672 = vmatpush1.msra.mxu0 %v5116
    %5673 = vmatprep.subr.mxu0 %v5125
    %5674 = vmatpush1.msra.mxu0 %v5124
    %5675 = vmatprep.subr.mxu0 %v5133
    %5676 = vmatpush1.msra.mxu0 %v5132
    %5677 = vmatprep.subr.mxu0 %v5141
    %5678 = vmatpush1.msra.mxu0 %v5140
    %5679 = vmatprep.subr.mxu0 %v5149
    %5680 = vmatpush1.msra.mxu0 %v5148
    %5681 = vmatprep.subr.mxu0 %v5157
    %5682 = vmatpush1.msra.mxu0 %v5156
    %5683 = vmatprep.subr.mxu0 %v5165
    %5684 = vmatpush1.msra.mxu0 %v5164
    %5685 = vmatprep.subr.mxu0 %v5173
    %5686 = vmatpush1.msra.mxu0 %v5172
    %5687 = vmatprep.subr.mxu0 %v5181
    %5688 = vmatpush1.msra.mxu0 %v5180
    %5689 = vmatprep.mubr.f32.mxu0 %v5545
    %5690 = vmatmul.mubr.f32.gmra.mrb[0].mxu0 %v5544
    %v5691 = vpop.f32.mrb[0].mxu0
    %v5692 = vadd.f32 0.0, %v5691
    %v5693 = vpop.f32.mrb[0].mxu0
    %v5694 = vadd.f32 0.0, %v5693
    %5695 = vdwg.mxu0
    %5696 = vmatprep.subr.mxu0 %v4935
    %5697 = vmatpush1.msra.mxu0 %v4934
    %5698 = vmatprep.subr.mxu0 %v4943
    %5699 = vmatpush1.msra.mxu0 %v4942
    %5700 = vmatprep.subr.mxu0 %v4951
    %5701 = vmatpush1.msra.mxu0 %v4950
    %5702 = vmatprep.subr.mxu0 %v4959
    %5703 = vmatpush1.msra.mxu0 %v4958
    %5704 = vmatprep.subr.mxu0 %v4967
    %5705 = vmatpush1.msra.mxu0 %v4966
    %5706 = vmatprep.subr.mxu0 %v4975
    %5707 = vmatpush1.msra.mxu0 %v4974
    %5708 = vmatprep.subr.mxu0 %v4983
    %5709 = vmatpush1.msra.mxu0 %v4982
    %5710 = vmatprep.subr.mxu0 %v4991
    %5711 = vmatpush1.msra.mxu0 %v4990
    %5712 = vmatprep.subr.mxu0 %v4999
    %5713 = vmatpush1.msra.mxu0 %v4998
    %5714 = vmatprep.subr.mxu0 %v5007
    %5715 = vmatpush1.msra.mxu0 %v5006
    %5716 = vmatprep.subr.mxu0 %v5015
    %5717 = vmatpush1.msra.mxu0 %v5014
    %5718 = vmatprep.subr.mxu0 %v5023
    %5719 = vmatpush1.msra.mxu0 %v5022
    %5720 = vmatprep.subr.mxu0 %v5031
    %5721 = vmatpush1.msra.mxu0 %v5030
    %5722 = vmatprep.subr.mxu0 %v5039
    %5723 = vmatpush1.msra.mxu0 %v5038
    %5724 = vmatprep.subr.mxu0 %v5047
    %5725 = vmatpush1.msra.mxu0 %v5046
    %5726 = vmatprep.subr.mxu0 %v5055
    %5727 = vmatpush1.msra.mxu0 %v5054
    %5728 = vmatprep.subr.mxu0 %v5063
    %5729 = vmatpush1.msra.mxu0 %v5062
    %5730 = vmatprep.subr.mxu0 %v5071
    %5731 = vmatpush1.msra.mxu0 %v5070
    %5732 = vmatprep.subr.mxu0 %v5079
    %5733 = vmatpush1.msra.mxu0 %v5078
    %5734 = vmatprep.subr.mxu0 %v5087
    %5735 = vmatpush1.msra.mxu0 %v5086
    %5736 = vmatprep.subr.mxu0 %v5095
    %5737 = vmatpush1.msra.mxu0 %v5094
    %5738 = vmatprep.subr.mxu0 %v5103
    %5739 = vmatpush1.msra.mxu0 %v5102
    %5740 = vmatprep.subr.mxu0 %v5111
    %5741 = vmatpush1.msra.mxu0 %v5110
    %5742 = vmatprep.subr.mxu0 %v5119
    %5743 = vmatpush1.msra.mxu0 %v5118
    %5744 = vmatprep.subr.mxu0 %v5127
    %5745 = vmatpush1.msra.mxu0 %v5126
    %5746 = vmatprep.subr.mxu0 %v5135
    %5747 = vmatpush1.msra.mxu0 %v5134
    %5748 = vmatprep.subr.mxu0 %v5143
    %5749 = vmatpush1.msra.mxu0 %v5142
    %5750 = vmatprep.subr.mxu0 %v5151
    %5751 = vmatpush1.msra.mxu0 %v5150
    %5752 = vmatprep.subr.mxu0 %v5159
    %5753 = vmatpush1.msra.mxu0 %v5158
    %5754 = vmatprep.subr.mxu0 %v5167
    %5755 = vmatpush1.msra.mxu0 %v5166
    %5756 = vmatprep.subr.mxu0 %v5175
    %5757 = vmatpush1.msra.mxu0 %v5174
    %5758 = vmatprep.subr.mxu0 %v5183
    %5759 = vmatpush1.msra.mxu0 %v5182
    %5760 = vmatprep.mubr.f32.mxu0 %v5545
    %5761 = vmatmul.mubr.f32.gmra.mrb[0].mxu0 %v5544
    %v5762 = vpop.f32.mrb[0].mxu0
    %v5763 = vadd.f32 0.0, %v5762
    %v5764 = vpop.f32.mrb[0].mxu0
    %v5765 = vadd.f32 0.0, %v5764
    %5766 = vdwg.mxu0
    %5767 = vmatprep.subr.mxu0 %v4937
    %5768 = vmatpush1.msra.mxu0 %v4936
    %5769 = vmatprep.subr.mxu0 %v4945
    %5770 = vmatpush1.msra.mxu0 %v4944
    %5771 = vmatprep.subr.mxu0 %v4953
    %5772 = vmatpush1.msra.mxu0 %v4952
    %5773 = vmatprep.subr.mxu0 %v4961
    %5774 = vmatpush1.msra.mxu0 %v4960
    %5775 = vmatprep.subr.mxu0 %v4969
    %5776 = vmatpush1.msra.mxu0 %v4968
    %5777 = vmatprep.subr.mxu0 %v4977
    %5778 = vmatpush1.msra.mxu0 %v4976
    %5779 = vmatprep.subr.mxu0 %v4985
    %5780 = vmatpush1.msra.mxu0 %v4984
    %5781 = vmatprep.subr.mxu0 %v4993
    %5782 = vmatpush1.msra.mxu0 %v4992
    %5783 = vmatprep.subr.mxu0 %v5001
    %5784 = vmatpush1.msra.mxu0 %v5000
    %5785 = vmatprep.subr.mxu0 %v5009
    %5786 = vmatpush1.msra.mxu0 %v5008
    %5787 = vmatprep.subr.mxu0 %v5017
    %5788 = vmatpush1.msra.mxu0 %v5016
    %5789 = vmatprep.subr.mxu0 %v5025
    %5790 = vmatpush1.msra.mxu0 %v5024
    %5791 = vmatprep.subr.mxu0 %v5033
    %5792 = vmatpush1.msra.mxu0 %v5032
    %5793 = vmatprep.subr.mxu0 %v5041
    %5794 = vmatpush1.msra.mxu0 %v5040
    %5795 = vmatprep.subr.mxu0 %v5049
    %5796 = vmatpush1.msra.mxu0 %v5048
    %5797 = vmatprep.subr.mxu0 %v5057
    %5798 = vmatpush1.msra.mxu0 %v5056
    %5799 = vmatprep.subr.mxu0 %v5065
    %5800 = vmatpush1.msra.mxu0 %v5064
    %5801 = vmatprep.subr.mxu0 %v5073
    %5802 = vmatpush1.msra.mxu0 %v5072
    %5803 = vmatprep.subr.mxu0 %v5081
    %5804 = vmatpush1.msra.mxu0 %v5080
    %5805 = vmatprep.subr.mxu0 %v5089
    %5806 = vmatpush1.msra.mxu0 %v5088
    %5807 = vmatprep.subr.mxu0 %v5097
    %5808 = vmatpush1.msra.mxu0 %v5096
    %5809 = vmatprep.subr.mxu0 %v5105
    %5810 = vmatpush1.msra.mxu0 %v5104
    %5811 = vmatprep.subr.mxu0 %v5113
    %5812 = vmatpush1.msra.mxu0 %v5112
    %5813 = vmatprep.subr.mxu0 %v5121
    %5814 = vmatpush1.msra.mxu0 %v5120
    %5815 = vmatprep.subr.mxu0 %v5129
    %5816 = vmatpush1.msra.mxu0 %v5128
    %5817 = vmatprep.subr.mxu0 %v5137
    %5818 = vmatpush1.msra.mxu0 %v5136
    %5819 = vmatprep.subr.mxu0 %v5145
    %5820 = vmatpush1.msra.mxu0 %v5144
    %5821 = vmatprep.subr.mxu0 %v5153
    %5822 = vmatpush1.msra.mxu0 %v5152
    %5823 = vmatprep.subr.mxu0 %v5161
    %5824 = vmatpush1.msra.mxu0 %v5160
    %5825 = vmatprep.subr.mxu0 %v5169
    %5826 = vmatpush1.msra.mxu0 %v5168
    %5827 = vmatprep.subr.mxu0 %v5177
    %5828 = vmatpush1.msra.mxu0 %v5176
    %5829 = vmatprep.subr.mxu0 %v5185
    %5830 = vmatpush1.msra.mxu0 %v5184
    %5831 = vmatprep.mubr.f32.mxu0 %v5545
    %5832 = vmatmul.mubr.f32.gmra.mrb[0].mxu0 %v5544
    %v5833 = vpop.f32.mrb[0].mxu0
    %v5834 = vadd.f32 0.0, %v5833
    %v5835 = vpop.f32.mrb[0].mxu0
    %v5836 = vadd.f32 0.0, %v5835
    %5837 = vdwg.mxu0
    %v5838 = vadd.f32 %v5546, %v5621
    %v5839 = vadd.f32 %v5547, %v5623
    %v5840 = vadd.f32 %v5548, %v5692
    %v5841 = vadd.f32 %v5549, %v5694
    %v5842 = vadd.f32 %v5550, %v5763
    %v5843 = vadd.f32 %v5551, %v5765
    %v5844 = vadd.f32 %v5552, %v5834
    %v5845 = vadd.f32 %v5553, %v5836
    %v5846 = vxor.u32 %v5838, 2147483648
    %v5847 = vxor.u32 %v5839, 2147483648
    %v5848 = vmul.f32 %v5846, 1.442695
    %v5849 = vpow.pop %v5848
    %v5850 = vmul.f32 %v5847, 1.442695
    %v5851 = vpow.pop %v5850
    %v5852 = vadd.f32 %v5849, 1.0
    %v5853 = vadd.f32 %v5851, 1.0
    %v5854 = vrcp.pop %v5852
    %v5855 = vmul.f32 1.0, %v5854
    %v5856 = vrcp.pop %v5853
    %v5857 = vmul.f32 1.0, %v5856
    %v5858 = vxor.u32 %v5840, 2147483648
    %v5859 = vxor.u32 %v5841, 2147483648
    %v5860 = vmul.f32 %v5858, 1.442695
    %v5861 = vpow.pop %v5860
    %v5862 = vmul.f32 %v5859, 1.442695
    %v5863 = vpow.pop %v5862
    %v5864 = vadd.f32 %v5861, 1.0
    %v5865 = vadd.f32 %v5863, 1.0
    %v5866 = vrcp.pop %v5864
    %v5867 = vmul.f32 1.0, %v5866
    %v5868 = vrcp.pop %v5865
    %v5869 = vmul.f32 1.0, %v5868
    %v5870 = vtanh.pop %v5842
    %v5871 = vtanh.pop %v5843
    %v5872 = vxor.u32 %v5844, 2147483648
    %v5873 = vxor.u32 %v5845, 2147483648
    %v5874 = vmul.f32 %v5872, 1.442695
    %v5875 = vpow.pop %v5874
    %v5876 = vmul.f32 %v5873, 1.442695
    %v5877 = vpow.pop %v5876
    %v5878 = vadd.f32 %v5875, 1.0
    %v5879 = vadd.f32 %v5877, 1.0
    %v5880 = vrcp.pop %v5878
    %v5881 = vmul.f32 1.0, %v5880
    %v5882 = vrcp.pop %v5879
    %v5883 = vmul.f32 1.0, %v5882
    %v5884 = vld [vmem:[#allocation5] sm:$0xff]
    %v5885 = vld [vmem:[#allocation5 + $0x8] sm:$0xff]
    %v5886 = vmul.f32 %v5867, %v5884
    %v5887 = vmul.f32 %v5869, %v5885
    %v5888 = vmul.f32 %v5855, %v5870
    %v5889 = vmul.f32 %v5857, %v5871
    %v5890 = vadd.f32 %v5886, %v5888
    %v5891 = vadd.f32 %v5887, %v5889
    %v5892 = vtanh.pop %v5890
    %v5893 = vtanh.pop %v5891
    %v5894 = vmul.f32 %v5881, %v5892
    %v5895 = vmul.f32 %v5883, %v5893
    %5896 = vst [vmem:[#allocation4] sm:$0xff] %v5894
    %5897 = vst [vmem:[#allocation4 + $0x8] sm:$0xff] %v5895
    %5898 = vst [vmem:[#allocation5] sm:$0xff] %v5890
    %5899 = vst [vmem:[#allocation5 + $0x8] sm:$0xff] %v5891
    %5900 = vst [vmem:[%s1897] sm:$0xff] %v5894
    %5901 = vst [vmem:[%s1897 + $0x8] sm:$0xff] %v5895
    %v5902 = vld [vmem:[#allocation4] sm:$0xff]
    %v5903 = vld [vmem:[#allocation4 + $0x8] sm:$0xff]
    %v5904 = vld [vmem:[%s1904] sm:$0xff]
    %v5905 = vld [vmem:[%s1904 + $0x8] sm:$0xff]
    %v5906 = vld [vmem:[%s1904 + $0x10] sm:$0xff]
    %v5907 = vld [vmem:[%s1904 + $0x18] sm:$0xff]
    %v5908 = vld [vmem:[%s1904 + $0x20] sm:$0xff]
    %v5909 = vld [vmem:[%s1904 + $0x28] sm:$0xff]
    %v5910 = vld [vmem:[%s1904 + $0x30] sm:$0xff]
    %v5911 = vld [vmem:[%s1904 + $0x38] sm:$0xff]
    %5912 = vmatprep.subr.mxu0 %v4931
    %5913 = vmatpush1.msra.mxu0 %v4930
    %5914 = vmatprep.subr.mxu0 %v4939
    %5915 = vmatpush1.msra.mxu0 %v4938
    %5916 = vmatprep.subr.mxu0 %v4947
    %5917 = vmatpush1.msra.mxu0 %v4946
    %5918 = vmatprep.subr.mxu0 %v4955
    %5919 = vmatpush1.msra.mxu0 %v4954
    %5920 = vmatprep.subr.mxu0 %v4963
    %5921 = vmatpush1.msra.mxu0 %v4962
    %5922 = vmatprep.subr.mxu0 %v4971
    %5923 = vmatpush1.msra.mxu0 %v4970
    %5924 = vmatprep.subr.mxu0 %v4979
    %5925 = vmatpush1.msra.mxu0 %v4978
    %5926 = vmatprep.subr.mxu0 %v4987
    %5927 = vmatpush1.msra.mxu0 %v4986
    %5928 = vmatprep.subr.mxu0 %v4995
    %5929 = vmatpush1.msra.mxu0 %v4994
    %5930 = vmatprep.subr.mxu0 %v5003
    %5931 = vmatpush1.msra.mxu0 %v5002
    %5932 = vmatprep.subr.mxu0 %v5011
    %5933 = vmatpush1.msra.mxu0 %v5010
    %5934 = vmatprep.subr.mxu0 %v5019
    %5935 = vmatpush1.msra.mxu0 %v5018
    %5936 = vmatprep.subr.mxu0 %v5027
    %5937 = vmatpush1.msra.mxu0 %v5026
    %5938 = vmatprep.subr.mxu0 %v5035
    %5939 = vmatpush1.msra.mxu0 %v5034
    %5940 = vmatprep.subr.mxu0 %v5043
    %5941 = vmatpush1.msra.mxu0 %v5042
    %5942 = vmatprep.subr.mxu0 %v5051
    %5943 = vmatpush1.msra.mxu0 %v5050
    %5944 = vmatprep.subr.mxu0 %v5059
    %5945 = vmatpush1.msra.mxu0 %v5058
    %5946 = vmatprep.subr.mxu0 %v5067
    %5947 = vmatpush1.msra.mxu0 %v5066
    %5948 = vmatprep.subr.mxu0 %v5075
    %5949 = vmatpush1.msra.mxu0 %v5074
    %5950 = vmatprep.subr.mxu0 %v5083
    %5951 = vmatpush1.msra.mxu0 %v5082
    %5952 = vmatprep.subr.mxu0 %v5091
    %5953 = vmatpush1.msra.mxu0 %v5090
    %5954 = vmatprep.subr.mxu0 %v5099
    %5955 = vmatpush1.msra.mxu0 %v5098
    %5956 = vmatprep.subr.mxu0 %v5107
    %5957 = vmatpush1.msra.mxu0 %v5106
    %5958 = vmatprep.subr.mxu0 %v5115
    %5959 = vmatpush1.msra.mxu0 %v5114
    %5960 = vmatprep.subr.mxu0 %v5123
    %5961 = vmatpush1.msra.mxu0 %v5122
    %5962 = vmatprep.subr.mxu0 %v5131
    %5963 = vmatpush1.msra.mxu0 %v5130
    %5964 = vmatprep.subr.mxu0 %v5139
    %5965 = vmatpush1.msra.mxu0 %v5138
    %5966 = vmatprep.subr.mxu0 %v5147
    %5967 = vmatpush1.msra.mxu0 %v5146
    %5968 = vmatprep.subr.mxu0 %v5155
    %5969 = vmatpush1.msra.mxu0 %v5154
    %5970 = vmatprep.subr.mxu0 %v5163
    %5971 = vmatpush1.msra.mxu0 %v5162
    %5972 = vmatprep.subr.mxu0 %v5171
    %5973 = vmatpush1.msra.mxu0 %v5170
    %5974 = vmatprep.subr.mxu0 %v5179
    %5975 = vmatpush1.msra.mxu0 %v5178
    %5976 = vmatprep.mubr.f32.mxu0 %v5903
    %5977 = vmatmul.mubr.f32.gmra.mrb[0].mxu0 %v5902
    %v5978 = vpop.f32.mrb[0].mxu0
    %v5979 = vadd.f32 0.0, %v5978
    %v5980 = vpop.f32.mrb[0].mxu0
    %v5981 = vadd.f32 0.0, %v5980
    %5982 = vdwg.mxu0
    %5983 = vmatprep.subr.mxu0 %v4933
    %5984 = vmatpush1.msra.mxu0 %v4932
    %5985 = vmatprep.subr.mxu0 %v4941
    %5986 = vmatpush1.msra.mxu0 %v4940
    %5987 = vmatprep.subr.mxu0 %v4949
    %5988 = vmatpush1.msra.mxu0 %v4948
    %5989 = vmatprep.subr.mxu0 %v4957
    %5990 = vmatpush1.msra.mxu0 %v4956
    %5991 = vmatprep.subr.mxu0 %v4965
    %5992 = vmatpush1.msra.mxu0 %v4964
    %5993 = vmatprep.subr.mxu0 %v4973
    %5994 = vmatpush1.msra.mxu0 %v4972
    %5995 = vmatprep.subr.mxu0 %v4981
    %5996 = vmatpush1.msra.mxu0 %v4980
    %5997 = vmatprep.subr.mxu0 %v4989
    %5998 = vmatpush1.msra.mxu0 %v4988
    %5999 = vmatprep.subr.mxu0 %v4997
    %6000 = vmatpush1.msra.mxu0 %v4996
    %6001 = vmatprep.subr.mxu0 %v5005
    %6002 = vmatpush1.msra.mxu0 %v5004
    %6003 = vmatprep.subr.mxu0 %v5013
    %6004 = vmatpush1.msra.mxu0 %v5012
    %6005 = vmatprep.subr.mxu0 %v5021
    %6006 = vmatpush1.msra.mxu0 %v5020
    %6007 = vmatprep.subr.mxu0 %v5029
    %6008 = vmatpush1.msra.mxu0 %v5028
    %6009 = vmatprep.subr.mxu0 %v5037
    %6010 = vmatpush1.msra.mxu0 %v5036
    %6011 = vmatprep.subr.mxu0 %v5045
    %6012 = vmatpush1.msra.mxu0 %v5044
    %6013 = vmatprep.subr.mxu0 %v5053
    %6014 = vmatpush1.msra.mxu0 %v5052
    %6015 = vmatprep.subr.mxu0 %v5061
    %6016 = vmatpush1.msra.mxu0 %v5060
    %6017 = vmatprep.subr.mxu0 %v5069
    %6018 = vmatpush1.msra.mxu0 %v5068
    %6019 = vmatprep.subr.mxu0 %v5077
    %6020 = vmatpush1.msra.mxu0 %v5076
    %6021 = vmatprep.subr.mxu0 %v5085
    %6022 = vmatpush1.msra.mxu0 %v5084
    %6023 = vmatprep.subr.mxu0 %v5093
    %6024 = vmatpush1.msra.mxu0 %v5092
    %6025 = vmatprep.subr.mxu0 %v5101
    %6026 = vmatpush1.msra.mxu0 %v5100
    %6027 = vmatprep.subr.mxu0 %v5109
    %6028 = vmatpush1.msra.mxu0 %v5108
    %6029 = vmatprep.subr.mxu0 %v5117
    %6030 = vmatpush1.msra.mxu0 %v5116
    %6031 = vmatprep.subr.mxu0 %v5125
    %6032 = vmatpush1.msra.mxu0 %v5124
    %6033 = vmatprep.subr.mxu0 %v5133
    %6034 = vmatpush1.msra.mxu0 %v5132
    %6035 = vmatprep.subr.mxu0 %v5141
    %6036 = vmatpush1.msra.mxu0 %v5140
    %6037 = vmatprep.subr.mxu0 %v5149
    %6038 = vmatpush1.msra.mxu0 %v5148
    %6039 = vmatprep.subr.mxu0 %v5157
    %6040 = vmatpush1.msra.mxu0 %v5156
    %6041 = vmatprep.subr.mxu0 %v5165
    %6042 = vmatpush1.msra.mxu0 %v5164
    %6043 = vmatprep.subr.mxu0 %v5173
    %6044 = vmatpush1.msra.mxu0 %v5172
    %6045 = vmatprep.subr.mxu0 %v5181
    %6046 = vmatpush1.msra.mxu0 %v5180
    %6047 = vmatprep.mubr.f32.mxu0 %v5903
    %6048 = vmatmul.mubr.f32.gmra.mrb[0].mxu0 %v5902
    %v6049 = vpop.f32.mrb[0].mxu0
    %v6050 = vadd.f32 0.0, %v6049
    %v6051 = vpop.f32.mrb[0].mxu0
    %v6052 = vadd.f32 0.0, %v6051
    %6053 = vdwg.mxu0
    %6054 = vmatprep.subr.mxu0 %v4935
    %6055 = vmatpush1.msra.mxu0 %v4934
    %6056 = vmatprep.subr.mxu0 %v4943
    %6057 = vmatpush1.msra.mxu0 %v4942
    %6058 = vmatprep.subr.mxu0 %v4951
    %6059 = vmatpush1.msra.mxu0 %v4950
    %6060 = vmatprep.subr.mxu0 %v4959
    %6061 = vmatpush1.msra.mxu0 %v4958
    %6062 = vmatprep.subr.mxu0 %v4967
    %6063 = vmatpush1.msra.mxu0 %v4966
    %6064 = vmatprep.subr.mxu0 %v4975
    %6065 = vmatpush1.msra.mxu0 %v4974
    %6066 = vmatprep.subr.mxu0 %v4983
    %6067 = vmatpush1.msra.mxu0 %v4982
    %6068 = vmatprep.subr.mxu0 %v4991
    %6069 = vmatpush1.msra.mxu0 %v4990
    %6070 = vmatprep.subr.mxu0 %v4999
    %6071 = vmatpush1.msra.mxu0 %v4998
    %6072 = vmatprep.subr.mxu0 %v5007
    %6073 = vmatpush1.msra.mxu0 %v5006
    %6074 = vmatprep.subr.mxu0 %v5015
    %6075 = vmatpush1.msra.mxu0 %v5014
    %6076 = vmatprep.subr.mxu0 %v5023
    %6077 = vmatpush1.msra.mxu0 %v5022
    %6078 = vmatprep.subr.mxu0 %v5031
    %6079 = vmatpush1.msra.mxu0 %v5030
    %6080 = vmatprep.subr.mxu0 %v5039
    %6081 = vmatpush1.msra.mxu0 %v5038
    %6082 = vmatprep.subr.mxu0 %v5047
    %6083 = vmatpush1.msra.mxu0 %v5046
    %6084 = vmatprep.subr.mxu0 %v5055
    %6085 = vmatpush1.msra.mxu0 %v5054
    %6086 = vmatprep.subr.mxu0 %v5063
    %6087 = vmatpush1.msra.mxu0 %v5062
    %6088 = vmatprep.subr.mxu0 %v5071
    %6089 = vmatpush1.msra.mxu0 %v5070
    %6090 = vmatprep.subr.mxu0 %v5079
    %6091 = vmatpush1.msra.mxu0 %v5078
    %6092 = vmatprep.subr.mxu0 %v5087
    %6093 = vmatpush1.msra.mxu0 %v5086
    %6094 = vmatprep.subr.mxu0 %v5095
    %6095 = vmatpush1.msra.mxu0 %v5094
    %6096 = vmatprep.subr.mxu0 %v5103
    %6097 = vmatpush1.msra.mxu0 %v5102
    %6098 = vmatprep.subr.mxu0 %v5111
    %6099 = vmatpush1.msra.mxu0 %v5110
    %6100 = vmatprep.subr.mxu0 %v5119
    %6101 = vmatpush1.msra.mxu0 %v5118
    %6102 = vmatprep.subr.mxu0 %v5127
    %6103 = vmatpush1.msra.mxu0 %v5126
    %6104 = vmatprep.subr.mxu0 %v5135
    %6105 = vmatpush1.msra.mxu0 %v5134
    %6106 = vmatprep.subr.mxu0 %v5143
    %6107 = vmatpush1.msra.mxu0 %v5142
    %6108 = vmatprep.subr.mxu0 %v5151
    %6109 = vmatpush1.msra.mxu0 %v5150
    %6110 = vmatprep.subr.mxu0 %v5159
    %6111 = vmatpush1.msra.mxu0 %v5158
    %6112 = vmatprep.subr.mxu0 %v5167
    %6113 = vmatpush1.msra.mxu0 %v5166
    %6114 = vmatprep.subr.mxu0 %v5175
    %6115 = vmatpush1.msra.mxu0 %v5174
    %6116 = vmatprep.subr.mxu0 %v5183
    %6117 = vmatpush1.msra.mxu0 %v5182
    %6118 = vmatprep.mubr.f32.mxu0 %v5903
    %6119 = vmatmul.mubr.f32.gmra.mrb[0].mxu0 %v5902
    %v6120 = vpop.f32.mrb[0].mxu0
    %v6121 = vadd.f32 0.0, %v6120
    %v6122 = vpop.f32.mrb[0].mxu0
    %v6123 = vadd.f32 0.0, %v6122
    %6124 = vdwg.mxu0
    %6125 = vmatprep.subr.mxu0 %v4937
    %6126 = vmatpush1.msra.mxu0 %v4936
    %6127 = vmatprep.subr.mxu0 %v4945
    %6128 = vmatpush1.msra.mxu0 %v4944
    %6129 = vmatprep.subr.mxu0 %v4953
    %6130 = vmatpush1.msra.mxu0 %v4952
    %6131 = vmatprep.subr.mxu0 %v4961
    %6132 = vmatpush1.msra.mxu0 %v4960
    %6133 = vmatprep.subr.mxu0 %v4969
    %6134 = vmatpush1.msra.mxu0 %v4968
    %6135 = vmatprep.subr.mxu0 %v4977
    %6136 = vmatpush1.msra.mxu0 %v4976
    %6137 = vmatprep.subr.mxu0 %v4985
    %6138 = vmatpush1.msra.mxu0 %v4984
    %6139 = vmatprep.subr.mxu0 %v4993
    %6140 = vmatpush1.msra.mxu0 %v4992
    %6141 = vmatprep.subr.mxu0 %v5001
    %6142 = vmatpush1.msra.mxu0 %v5000
    %6143 = vmatprep.subr.mxu0 %v5009
    %6144 = vmatpush1.msra.mxu0 %v5008
    %6145 = vmatprep.subr.mxu0 %v5017
    %6146 = vmatpush1.msra.mxu0 %v5016
    %6147 = vmatprep.subr.mxu0 %v5025
    %6148 = vmatpush1.msra.mxu0 %v5024
    %6149 = vmatprep.subr.mxu0 %v5033
    %6150 = vmatpush1.msra.mxu0 %v5032
    %6151 = vmatprep.subr.mxu0 %v5041
    %6152 = vmatpush1.msra.mxu0 %v5040
    %6153 = vmatprep.subr.mxu0 %v5049
    %6154 = vmatpush1.msra.mxu0 %v5048
    %6155 = vmatprep.subr.mxu0 %v5057
    %6156 = vmatpush1.msra.mxu0 %v5056
    %6157 = vmatprep.subr.mxu0 %v5065
    %6158 = vmatpush1.msra.mxu0 %v5064
    %6159 = vmatprep.subr.mxu0 %v5073
    %6160 = vmatpush1.msra.mxu0 %v5072
    %6161 = vmatprep.subr.mxu0 %v5081
    %6162 = vmatpush1.msra.mxu0 %v5080
    %6163 = vmatprep.subr.mxu0 %v5089
    %6164 = vmatpush1.msra.mxu0 %v5088
    %6165 = vmatprep.subr.mxu0 %v5097
    %6166 = vmatpush1.msra.mxu0 %v5096
    %6167 = vmatprep.subr.mxu0 %v5105
    %6168 = vmatpush1.msra.mxu0 %v5104
    %6169 = vmatprep.subr.mxu0 %v5113
    %6170 = vmatpush1.msra.mxu0 %v5112
    %6171 = vmatprep.subr.mxu0 %v5121
    %6172 = vmatpush1.msra.mxu0 %v5120
    %6173 = vmatprep.subr.mxu0 %v5129
    %6174 = vmatpush1.msra.mxu0 %v5128
    %6175 = vmatprep.subr.mxu0 %v5137
    %6176 = vmatpush1.msra.mxu0 %v5136
    %6177 = vmatprep.subr.mxu0 %v5145
    %6178 = vmatpush1.msra.mxu0 %v5144
    %6179 = vmatprep.subr.mxu0 %v5153
    %6180 = vmatpush1.msra.mxu0 %v5152
    %6181 = vmatprep.subr.mxu0 %v5161
    %6182 = vmatpush1.msra.mxu0 %v5160
    %6183 = vmatprep.subr.mxu0 %v5169
    %6184 = vmatpush1.msra.mxu0 %v5168
    %6185 = vmatprep.subr.mxu0 %v5177
    %6186 = vmatpush1.msra.mxu0 %v5176
    %6187 = vmatprep.subr.mxu0 %v5185
    %6188 = vmatpush1.msra.mxu0 %v5184
    %6189 = vmatprep.mubr.f32.mxu0 %v5903
    %6190 = vmatmul.mubr.f32.gmra.mrb[0].mxu0 %v5902
    %v6191 = vpop.f32.mrb[0].mxu0
    %v6192 = vadd.f32 0.0, %v6191
    %v6193 = vpop.f32.mrb[0].mxu0
    %v6194 = vadd.f32 0.0, %v6193
    %6195 = vdwg.mxu0
    %v6196 = vadd.f32 %v5904, %v5979
    %v6197 = vadd.f32 %v5905, %v5981
    %v6198 = vadd.f32 %v5906, %v6050
    %v6199 = vadd.f32 %v5907, %v6052
    %v6200 = vadd.f32 %v5908, %v6121
    %v6201 = vadd.f32 %v5909, %v6123
    %v6202 = vadd.f32 %v5910, %v6192
    %v6203 = vadd.f32 %v5911, %v6194
    %v6204 = vxor.u32 %v6196, 2147483648
    %v6205 = vxor.u32 %v6197, 2147483648
    %v6206 = vmul.f32 %v6204, 1.442695
    %v6207 = vpow.pop %v6206
    %v6208 = vmul.f32 %v6205, 1.442695
    %v6209 = vpow.pop %v6208
    %v6210 = vadd.f32 %v6207, 1.0
    %v6211 = vadd.f32 %v6209, 1.0
    %v6212 = vrcp.pop %v6210
    %v6213 = vmul.f32 1.0, %v6212
    %v6214 = vrcp.pop %v6211
    %v6215 = vmul.f32 1.0, %v6214
    %v6216 = vxor.u32 %v6198, 2147483648
    %v6217 = vxor.u32 %v6199, 2147483648
    %v6218 = vmul.f32 %v6216, 1.442695
    %v6219 = vpow.pop %v6218
    %v6220 = vmul.f32 %v6217, 1.442695
    %v6221 = vpow.pop %v6220
    %v6222 = vadd.f32 %v6219, 1.0
    %v6223 = vadd.f32 %v6221, 1.0
    %v6224 = vrcp.pop %v6222
    %v6225 = vmul.f32 1.0, %v6224
    %v6226 = vrcp.pop %v6223
    %v6227 = vmul.f32 1.0, %v6226
    %v6228 = vtanh.pop %v6200
    %v6229 = vtanh.pop %v6201
    %v6230 = vxor.u32 %v6202, 2147483648
    %v6231 = vxor.u32 %v6203, 2147483648
    %v6232 = vmul.f32 %v6230, 1.442695
    %v6233 = vpow.pop %v6232
    %v6234 = vmul.f32 %v6231, 1.442695
    %v6235 = vpow.pop %v6234
    %v6236 = vadd.f32 %v6233, 1.0
    %v6237 = vadd.f32 %v6235, 1.0
    %v6238 = vrcp.pop %v6236
    %v6239 = vmul.f32 1.0, %v6238
    %v6240 = vrcp.pop %v6237
    %v6241 = vmul.f32 1.0, %v6240
    %v6242 = vld [vmem:[#allocation5] sm:$0xff]
    %v6243 = vld [vmem:[#allocation5 + $0x8] sm:$0xff]
    %v6244 = vmul.f32 %v6225, %v6242
    %v6245 = vmul.f32 %v6227, %v6243
    %v6246 = vmul.f32 %v6213, %v6228
    %v6247 = vmul.f32 %v6215, %v6229
    %v6248 = vadd.f32 %v6244, %v6246
    %v6249 = vadd.f32 %v6245, %v6247
    %v6250 = vtanh.pop %v6248
    %v6251 = vtanh.pop %v6249
    %v6252 = vmul.f32 %v6239, %v6250
    %v6253 = vmul.f32 %v6241, %v6251
    %6254 = vst [vmem:[#allocation4] sm:$0xff] %v6252
    %6255 = vst [vmem:[#allocation4 + $0x8] sm:$0xff] %v6253
    %6256 = vst [vmem:[#allocation5] sm:$0xff] %v6248
    %6257 = vst [vmem:[#allocation5 + $0x8] sm:$0xff] %v6249
    %6258 = vst [vmem:[%s2261] sm:$0xff] %v6252
    %6259 = vst [vmem:[%s2261 + $0x8] sm:$0xff] %v6253
    %v6260 = vld [vmem:[#allocation4] sm:$0xff]
    %v6261 = vld [vmem:[#allocation4 + $0x8] sm:$0xff]
    %v6262 = vld [vmem:[%s2268] sm:$0xff]
    %v6263 = vld [vmem:[%s2268 + $0x8] sm:$0xff]
    %v6264 = vld [vmem:[%s2268 + $0x10] sm:$0xff]
    %v6265 = vld [vmem:[%s2268 + $0x18] sm:$0xff]
    %v6266 = vld [vmem:[%s2268 + $0x20] sm:$0xff]
    %v6267 = vld [vmem:[%s2268 + $0x28] sm:$0xff]
    %v6268 = vld [vmem:[%s2268 + $0x30] sm:$0xff]
    %v6269 = vld [vmem:[%s2268 + $0x38] sm:$0xff]
    %6270 = vmatprep.subr.mxu0 %v4931
    %6271 = vmatpush1.msra.mxu0 %v4930
    %6272 = vmatprep.subr.mxu0 %v4939
    %6273 = vmatpush1.msra.mxu0 %v4938
    %6274 = vmatprep.subr.mxu0 %v4947
    %6275 = vmatpush1.msra.mxu0 %v4946
    %6276 = vmatprep.subr.mxu0 %v4955
    %6277 = vmatpush1.msra.mxu0 %v4954
    %6278 = vmatprep.subr.mxu0 %v4963
    %6279 = vmatpush1.msra.mxu0 %v4962
    %6280 = vmatprep.subr.mxu0 %v4971
    %6281 = vmatpush1.msra.mxu0 %v4970
    %6282 = vmatprep.subr.mxu0 %v4979
    %6283 = vmatpush1.msra.mxu0 %v4978
    %6284 = vmatprep.subr.mxu0 %v4987
    %6285 = vmatpush1.msra.mxu0 %v4986
    %6286 = vmatprep.subr.mxu0 %v4995
    %6287 = vmatpush1.msra.mxu0 %v4994
    %6288 = vmatprep.subr.mxu0 %v5003
    %6289 = vmatpush1.msra.mxu0 %v5002
    %6290 = vmatprep.subr.mxu0 %v5011
    %6291 = vmatpush1.msra.mxu0 %v5010
    %6292 = vmatprep.subr.mxu0 %v5019
    %6293 = vmatpush1.msra.mxu0 %v5018
    %6294 = vmatprep.subr.mxu0 %v5027
    %6295 = vmatpush1.msra.mxu0 %v5026
    %6296 = vmatprep.subr.mxu0 %v5035
    %6297 = vmatpush1.msra.mxu0 %v5034
    %6298 = vmatprep.subr.mxu0 %v5043
    %6299 = vmatpush1.msra.mxu0 %v5042
    %6300 = vmatprep.subr.mxu0 %v5051
    %6301 = vmatpush1.msra.mxu0 %v5050
    %6302 = vmatprep.subr.mxu0 %v5059
    %6303 = vmatpush1.msra.mxu0 %v5058
    %6304 = vmatprep.subr.mxu0 %v5067
    %6305 = vmatpush1.msra.mxu0 %v5066
    %6306 = vmatprep.subr.mxu0 %v5075
    %6307 = vmatpush1.msra.mxu0 %v5074
    %6308 = vmatprep.subr.mxu0 %v5083
    %6309 = vmatpush1.msra.mxu0 %v5082
    %6310 = vmatprep.subr.mxu0 %v5091
    %6311 = vmatpush1.msra.mxu0 %v5090
    %6312 = vmatprep.subr.mxu0 %v5099
    %6313 = vmatpush1.msra.mxu0 %v5098
    %6314 = vmatprep.subr.mxu0 %v5107
    %6315 = vmatpush1.msra.mxu0 %v5106
    %6316 = vmatprep.subr.mxu0 %v5115
    %6317 = vmatpush1.msra.mxu0 %v5114
    %6318 = vmatprep.subr.mxu0 %v5123
    %6319 = vmatpush1.msra.mxu0 %v5122
    %6320 = vmatprep.subr.mxu0 %v5131
    %6321 = vmatpush1.msra.mxu0 %v5130
    %6322 = vmatprep.subr.mxu0 %v5139
    %6323 = vmatpush1.msra.mxu0 %v5138
    %6324 = vmatprep.subr.mxu0 %v5147
    %6325 = vmatpush1.msra.mxu0 %v5146
    %6326 = vmatprep.subr.mxu0 %v5155
    %6327 = vmatpush1.msra.mxu0 %v5154
    %6328 = vmatprep.subr.mxu0 %v5163
    %6329 = vmatpush1.msra.mxu0 %v5162
    %6330 = vmatprep.subr.mxu0 %v5171
    %6331 = vmatpush1.msra.mxu0 %v5170
    %6332 = vmatprep.subr.mxu0 %v5179
    %6333 = vmatpush1.msra.mxu0 %v5178
    %6334 = vmatprep.mubr.f32.mxu0 %v6261
    %6335 = vmatmul.mubr.f32.gmra.mrb[0].mxu0 %v6260
    %v6336 = vpop.f32.mrb[0].mxu0
    %v6337 = vadd.f32 0.0, %v6336
    %v6338 = vpop.f32.mrb[0].mxu0
    %v6339 = vadd.f32 0.0, %v6338
    %6340 = vdwg.mxu0
    %6341 = vmatprep.subr.mxu0 %v4933
    %6342 = vmatpush1.msra.mxu0 %v4932
    %6343 = vmatprep.subr.mxu0 %v4941
    %6344 = vmatpush1.msra.mxu0 %v4940
    %6345 = vmatprep.subr.mxu0 %v4949
    %6346 = vmatpush1.msra.mxu0 %v4948
    %6347 = vmatprep.subr.mxu0 %v4957
    %6348 = vmatpush1.msra.mxu0 %v4956
    %6349 = vmatprep.subr.mxu0 %v4965
    %6350 = vmatpush1.msra.mxu0 %v4964
    %6351 = vmatprep.subr.mxu0 %v4973
    %6352 = vmatpush1.msra.mxu0 %v4972
    %6353 = vmatprep.subr.mxu0 %v4981
    %6354 = vmatpush1.msra.mxu0 %v4980
    %6355 = vmatprep.subr.mxu0 %v4989
    %6356 = vmatpush1.msra.mxu0 %v4988
    %6357 = vmatprep.subr.mxu0 %v4997
    %6358 = vmatpush1.msra.mxu0 %v4996
    %6359 = vmatprep.subr.mxu0 %v5005
    %6360 = vmatpush1.msra.mxu0 %v5004
    %6361 = vmatprep.subr.mxu0 %v5013
    %6362 = vmatpush1.msra.mxu0 %v5012
    %6363 = vmatprep.subr.mxu0 %v5021
    %6364 = vmatpush1.msra.mxu0 %v5020
    %6365 = vmatprep.subr.mxu0 %v5029
    %6366 = vmatpush1.msra.mxu0 %v5028
    %6367 = vmatprep.subr.mxu0 %v5037
    %6368 = vmatpush1.msra.mxu0 %v5036
    %6369 = vmatprep.subr.mxu0 %v5045
    %6370 = vmatpush1.msra.mxu0 %v5044
    %6371 = vmatprep.subr.mxu0 %v5053
    %6372 = vmatpush1.msra.mxu0 %v5052
    %6373 = vmatprep.subr.mxu0 %v5061
    %6374 = vmatpush1.msra.mxu0 %v5060
    %6375 = vmatprep.subr.mxu0 %v5069
    %6376 = vmatpush1.msra.mxu0 %v5068
    %6377 = vmatprep.subr.mxu0 %v5077
    %6378 = vmatpush1.msra.mxu0 %v5076
    %6379 = vmatprep.subr.mxu0 %v5085
    %6380 = vmatpush1.msra.mxu0 %v5084
    %6381 = vmatprep.subr.mxu0 %v5093
    %6382 = vmatpush1.msra.mxu0 %v5092
    %6383 = vmatprep.subr.mxu0 %v5101
    %6384 = vmatpush1.msra.mxu0 %v5100
    %6385 = vmatprep.subr.mxu0 %v5109
    %6386 = vmatpush1.msra.mxu0 %v5108
    %6387 = vmatprep.subr.mxu0 %v5117
    %6388 = vmatpush1.msra.mxu0 %v5116
    %6389 = vmatprep.subr.mxu0 %v5125
    %6390 = vmatpush1.msra.mxu0 %v5124
    %6391 = vmatprep.subr.mxu0 %v5133
    %6392 = vmatpush1.msra.mxu0 %v5132
    %6393 = vmatprep.subr.mxu0 %v5141
    %6394 = vmatpush1.msra.mxu0 %v5140
    %6395 = vmatprep.subr.mxu0 %v5149
    %6396 = vmatpush1.msra.mxu0 %v5148
    %6397 = vmatprep.subr.mxu0 %v5157
    %6398 = vmatpush1.msra.mxu0 %v5156
    %6399 = vmatprep.subr.mxu0 %v5165
    %6400 = vmatpush1.msra.mxu0 %v5164
    %6401 = vmatprep.subr.mxu0 %v5173
    %6402 = vmatpush1.msra.mxu0 %v5172
    %6403 = vmatprep.subr.mxu0 %v5181
    %6404 = vmatpush1.msra.mxu0 %v5180
    %6405 = vmatprep.mubr.f32.mxu0 %v6261
    %6406 = vmatmul.mubr.f32.gmra.mrb[0].mxu0 %v6260
    %v6407 = vpop.f32.mrb[0].mxu0
    %v6408 = vadd.f32 0.0, %v6407
    %v6409 = vpop.f32.mrb[0].mxu0
    %v6410 = vadd.f32 0.0, %v6409
    %6411 = vdwg.mxu0
    %6412 = vmatprep.subr.mxu0 %v4935
    %6413 = vmatpush1.msra.mxu0 %v4934
    %6414 = vmatprep.subr.mxu0 %v4943
    %6415 = vmatpush1.msra.mxu0 %v4942
    %6416 = vmatprep.subr.mxu0 %v4951
    %6417 = vmatpush1.msra.mxu0 %v4950
    %6418 = vmatprep.subr.mxu0 %v4959
    %6419 = vmatpush1.msra.mxu0 %v4958
    %6420 = vmatprep.subr.mxu0 %v4967
    %6421 = vmatpush1.msra.mxu0 %v4966
    %6422 = vmatprep.subr.mxu0 %v4975
    %6423 = vmatpush1.msra.mxu0 %v4974
    %6424 = vmatprep.subr.mxu0 %v4983
    %6425 = vmatpush1.msra.mxu0 %v4982
    %6426 = vmatprep.subr.mxu0 %v4991
    %6427 = vmatpush1.msra.mxu0 %v4990
    %6428 = vmatprep.subr.mxu0 %v4999
    %6429 = vmatpush1.msra.mxu0 %v4998
    %6430 = vmatprep.subr.mxu0 %v5007
    %6431 = vmatpush1.msra.mxu0 %v5006
    %6432 = vmatprep.subr.mxu0 %v5015
    %6433 = vmatpush1.msra.mxu0 %v5014
    %6434 = vmatprep.subr.mxu0 %v5023
    %6435 = vmatpush1.msra.mxu0 %v5022
    %6436 = vmatprep.subr.mxu0 %v5031
    %6437 = vmatpush1.msra.mxu0 %v5030
    %6438 = vmatprep.subr.mxu0 %v5039
    %6439 = vmatpush1.msra.mxu0 %v5038
    %6440 = vmatprep.subr.mxu0 %v5047
    %6441 = vmatpush1.msra.mxu0 %v5046
    %6442 = vmatprep.subr.mxu0 %v5055
    %6443 = vmatpush1.msra.mxu0 %v5054
    %6444 = vmatprep.subr.mxu0 %v5063
    %6445 = vmatpush1.msra.mxu0 %v5062
    %6446 = vmatprep.subr.mxu0 %v5071
    %6447 = vmatpush1.msra.mxu0 %v5070
    %6448 = vmatprep.subr.mxu0 %v5079
    %6449 = vmatpush1.msra.mxu0 %v5078
    %6450 = vmatprep.subr.mxu0 %v5087
    %6451 = vmatpush1.msra.mxu0 %v5086
    %6452 = vmatprep.subr.mxu0 %v5095
    %6453 = vmatpush1.msra.mxu0 %v5094
    %6454 = vmatprep.subr.mxu0 %v5103
    %6455 = vmatpush1.msra.mxu0 %v5102
    %6456 = vmatprep.subr.mxu0 %v5111
    %6457 = vmatpush1.msra.mxu0 %v5110
    %6458 = vmatprep.subr.mxu0 %v5119
    %6459 = vmatpush1.msra.mxu0 %v5118
    %6460 = vmatprep.subr.mxu0 %v5127
    %6461 = vmatpush1.msra.mxu0 %v5126
    %6462 = vmatprep.subr.mxu0 %v5135
    %6463 = vmatpush1.msra.mxu0 %v5134
    %6464 = vmatprep.subr.mxu0 %v5143
    %6465 = vmatpush1.msra.mxu0 %v5142
    %6466 = vmatprep.subr.mxu0 %v5151
    %6467 = vmatpush1.msra.mxu0 %v5150
    %6468 = vmatprep.subr.mxu0 %v5159
    %6469 = vmatpush1.msra.mxu0 %v5158
    %6470 = vmatprep.subr.mxu0 %v5167
    %6471 = vmatpush1.msra.mxu0 %v5166
    %6472 = vmatprep.subr.mxu0 %v5175
    %6473 = vmatpush1.msra.mxu0 %v5174
    %6474 = vmatprep.subr.mxu0 %v5183
    %6475 = vmatpush1.msra.mxu0 %v5182
    %6476 = vmatprep.mubr.f32.mxu0 %v6261
    %6477 = vmatmul.mubr.f32.gmra.mrb[0].mxu0 %v6260
    %v6478 = vpop.f32.mrb[0].mxu0
    %v6479 = vadd.f32 0.0, %v6478
    %v6480 = vpop.f32.mrb[0].mxu0
    %v6481 = vadd.f32 0.0, %v6480
    %6482 = vdwg.mxu0
    %6483 = vmatprep.subr.mxu0 %v4937
    %6484 = vmatpush1.msra.mxu0 %v4936
    %6485 = vmatprep.subr.mxu0 %v4945
    %6486 = vmatpush1.msra.mxu0 %v4944
    %6487 = vmatprep.subr.mxu0 %v4953
    %6488 = vmatpush1.msra.mxu0 %v4952
    %6489 = vmatprep.subr.mxu0 %v4961
    %6490 = vmatpush1.msra.mxu0 %v4960
    %6491 = vmatprep.subr.mxu0 %v4969
    %6492 = vmatpush1.msra.mxu0 %v4968
    %6493 = vmatprep.subr.mxu0 %v4977
    %6494 = vmatpush1.msra.mxu0 %v4976
    %6495 = vmatprep.subr.mxu0 %v4985
    %6496 = vmatpush1.msra.mxu0 %v4984
    %6497 = vmatprep.subr.mxu0 %v4993
    %6498 = vmatpush1.msra.mxu0 %v4992
    %6499 = vmatprep.subr.mxu0 %v5001
    %6500 = vmatpush1.msra.mxu0 %v5000
    %6501 = vmatprep.subr.mxu0 %v5009
    %6502 = vmatpush1.msra.mxu0 %v5008
    %6503 = vmatprep.subr.mxu0 %v5017
    %6504 = vmatpush1.msra.mxu0 %v5016
    %6505 = vmatprep.subr.mxu0 %v5025
    %6506 = vmatpush1.msra.mxu0 %v5024
    %6507 = vmatprep.subr.mxu0 %v5033
    %6508 = vmatpush1.msra.mxu0 %v5032
    %6509 = vmatprep.subr.mxu0 %v5041
    %6510 = vmatpush1.msra.mxu0 %v5040
    %6511 = vmatprep.subr.mxu0 %v5049
    %6512 = vmatpush1.msra.mxu0 %v5048
    %6513 = vmatprep.subr.mxu0 %v5057
    %6514 = vmatpush1.msra.mxu0 %v5056
    %6515 = vmatprep.subr.mxu0 %v5065
    %6516 = vmatpush1.msra.mxu0 %v5064
    %6517 = vmatprep.subr.mxu0 %v5073
    %6518 = vmatpush1.msra.mxu0 %v5072
    %6519 = vmatprep.subr.mxu0 %v5081
    %6520 = vmatpush1.msra.mxu0 %v5080
    %6521 = vmatprep.subr.mxu0 %v5089
    %6522 = vmatpush1.msra.mxu0 %v5088
    %6523 = vmatprep.subr.mxu0 %v5097
    %6524 = vmatpush1.msra.mxu0 %v5096
    %6525 = vmatprep.subr.mxu0 %v5105
    %6526 = vmatpush1.msra.mxu0 %v5104
    %6527 = vmatprep.subr.mxu0 %v5113
    %6528 = vmatpush1.msra.mxu0 %v5112
    %6529 = vmatprep.subr.mxu0 %v5121
    %6530 = vmatpush1.msra.mxu0 %v5120
    %6531 = vmatprep.subr.mxu0 %v5129
    %6532 = vmatpush1.msra.mxu0 %v5128
    %6533 = vmatprep.subr.mxu0 %v5137
    %6534 = vmatpush1.msra.mxu0 %v5136
    %6535 = vmatprep.subr.mxu0 %v5145
    %6536 = vmatpush1.msra.mxu0 %v5144
    %6537 = vmatprep.subr.mxu0 %v5153
    %6538 = vmatpush1.msra.mxu0 %v5152
    %6539 = vmatprep.subr.mxu0 %v5161
    %6540 = vmatpush1.msra.mxu0 %v5160
    %6541 = vmatprep.subr.mxu0 %v5169
    %6542 = vmatpush1.msra.mxu0 %v5168
    %6543 = vmatprep.subr.mxu0 %v5177
    %6544 = vmatpush1.msra.mxu0 %v5176
    %6545 = vmatprep.subr.mxu0 %v5185
    %6546 = vmatpush1.msra.mxu0 %v5184
    %6547 = vmatprep.mubr.f32.mxu0 %v6261
    %6548 = vmatmul.mubr.f32.gmra.mrb[0].mxu0 %v6260
    %v6549 = vpop.f32.mrb[0].mxu0
    %v6550 = vadd.f32 0.0, %v6549
    %v6551 = vpop.f32.mrb[0].mxu0
    %v6552 = vadd.f32 0.0, %v6551
    %6553 = vdwg.mxu0
    %v6554 = vadd.f32 %v6262, %v6337
    %v6555 = vadd.f32 %v6263, %v6339
    %v6556 = vadd.f32 %v6264, %v6408
    %v6557 = vadd.f32 %v6265, %v6410
    %v6558 = vadd.f32 %v6266, %v6479
    %v6559 = vadd.f32 %v6267, %v6481
    %v6560 = vadd.f32 %v6268, %v6550
    %v6561 = vadd.f32 %v6269, %v6552
    %v6562 = vxor.u32 %v6554, 2147483648
    %v6563 = vxor.u32 %v6555, 2147483648
    %v6564 = vmul.f32 %v6562, 1.442695
    %v6565 = vpow.pop %v6564
    %v6566 = vmul.f32 %v6563, 1.442695
    %v6567 = vpow.pop %v6566
    %v6568 = vadd.f32 %v6565, 1.0
    %v6569 = vadd.f32 %v6567, 1.0
    %v6570 = vrcp.pop %v6568
    %v6571 = vmul.f32 1.0, %v6570
    %v6572 = vrcp.pop %v6569
    %v6573 = vmul.f32 1.0, %v6572
    %v6574 = vxor.u32 %v6556, 2147483648
    %v6575 = vxor.u32 %v6557, 2147483648
    %v6576 = vmul.f32 %v6574, 1.442695
    %v6577 = vpow.pop %v6576
    %v6578 = vmul.f32 %v6575, 1.442695
    %v6579 = vpow.pop %v6578
    %v6580 = vadd.f32 %v6577, 1.0
    %v6581 = vadd.f32 %v6579, 1.0
    %v6582 = vrcp.pop %v6580
    %v6583 = vmul.f32 1.0, %v6582
    %v6584 = vrcp.pop %v6581
    %v6585 = vmul.f32 1.0, %v6584
    %v6586 = vtanh.pop %v6558
    %v6587 = vtanh.pop %v6559
    %v6588 = vxor.u32 %v6560, 2147483648
    %v6589 = vxor.u32 %v6561, 2147483648
    %v6590 = vmul.f32 %v6588, 1.442695
    %v6591 = vpow.pop %v6590
    %v6592 = vmul.f32 %v6589, 1.442695
    %v6593 = vpow.pop %v6592
    %v6594 = vadd.f32 %v6591, 1.0
    %v6595 = vadd.f32 %v6593, 1.0
    %v6596 = vrcp.pop %v6594
    %v6597 = vmul.f32 1.0, %v6596
    %v6598 = vrcp.pop %v6595
    %v6599 = vmul.f32 1.0, %v6598
    %v6600 = vld [vmem:[#allocation5] sm:$0xff]
    %v6601 = vld [vmem:[#allocation5 + $0x8] sm:$0xff]
    %v6602 = vmul.f32 %v6583, %v6600
    %v6603 = vmul.f32 %v6585, %v6601
    %v6604 = vmul.f32 %v6571, %v6586
    %v6605 = vmul.f32 %v6573, %v6587
    %v6606 = vadd.f32 %v6602, %v6604
    %v6607 = vadd.f32 %v6603, %v6605
    %v6608 = vtanh.pop %v6606
    %v6609 = vtanh.pop %v6607
    %v6610 = vmul.f32 %v6597, %v6608
    %v6611 = vmul.f32 %v6599, %v6609
    %6612 = vst [vmem:[#allocation4] sm:$0xff] %v6610
    %6613 = vst [vmem:[#allocation4 + $0x8] sm:$0xff] %v6611
    %6614 = vst [vmem:[#allocation5] sm:$0xff] %v6606
    %6615 = vst [vmem:[#allocation5 + $0x8] sm:$0xff] %v6607
    %6616 = vst [vmem:[%s2625] sm:$0xff] %v6610
    %6617 = vst [vmem:[%s2625 + $0x8] sm:$0xff] %v6611
    %v6618 = vld [vmem:[#allocation4] sm:$0xff]
    %v6619 = vld [vmem:[#allocation4 + $0x8] sm:$0xff]
    %v6620 = vld [vmem:[%s2632] sm:$0xff]
    %v6621 = vld [vmem:[%s2632 + $0x8] sm:$0xff]
    %v6622 = vld [vmem:[%s2632 + $0x10] sm:$0xff]
    %v6623 = vld [vmem:[%s2632 + $0x18] sm:$0xff]
    %v6624 = vld [vmem:[%s2632 + $0x20] sm:$0xff]
    %v6625 = vld [vmem:[%s2632 + $0x28] sm:$0xff]
    %v6626 = vld [vmem:[%s2632 + $0x30] sm:$0xff]
    %v6627 = vld [vmem:[%s2632 + $0x38] sm:$0xff]
    %6628 = vmatprep.subr.mxu0 %v4931
    %6629 = vmatpush1.msra.mxu0 %v4930
    %6630 = vmatprep.subr.mxu0 %v4939
    %6631 = vmatpush1.msra.mxu0 %v4938
    %6632 = vmatprep.subr.mxu0 %v4947
    %6633 = vmatpush1.msra.mxu0 %v4946
    %6634 = vmatprep.subr.mxu0 %v4955
    %6635 = vmatpush1.msra.mxu0 %v4954
    %6636 = vmatprep.subr.mxu0 %v4963
    %6637 = vmatpush1.msra.mxu0 %v4962
    %6638 = vmatprep.subr.mxu0 %v4971
    %6639 = vmatpush1.msra.mxu0 %v4970
    %6640 = vmatprep.subr.mxu0 %v4979
    %6641 = vmatpush1.msra.mxu0 %v4978
    %6642 = vmatprep.subr.mxu0 %v4987
    %6643 = vmatpush1.msra.mxu0 %v4986
    %6644 = vmatprep.subr.mxu0 %v4995
    %6645 = vmatpush1.msra.mxu0 %v4994
    %6646 = vmatprep.subr.mxu0 %v5003
    %6647 = vmatpush1.msra.mxu0 %v5002
    %6648 = vmatprep.subr.mxu0 %v5011
    %6649 = vmatpush1.msra.mxu0 %v5010
    %6650 = vmatprep.subr.mxu0 %v5019
    %6651 = vmatpush1.msra.mxu0 %v5018
    %6652 = vmatprep.subr.mxu0 %v5027
    %6653 = vmatpush1.msra.mxu0 %v5026
    %6654 = vmatprep.subr.mxu0 %v5035
    %6655 = vmatpush1.msra.mxu0 %v5034
    %6656 = vmatprep.subr.mxu0 %v5043
    %6657 = vmatpush1.msra.mxu0 %v5042
    %6658 = vmatprep.subr.mxu0 %v5051
    %6659 = vmatpush1.msra.mxu0 %v5050
    %6660 = vmatprep.subr.mxu0 %v5059
    %6661 = vmatpush1.msra.mxu0 %v5058
    %6662 = vmatprep.subr.mxu0 %v5067
    %6663 = vmatpush1.msra.mxu0 %v5066
    %6664 = vmatprep.subr.mxu0 %v5075
    %6665 = vmatpush1.msra.mxu0 %v5074
    %6666 = vmatprep.subr.mxu0 %v5083
    %6667 = vmatpush1.msra.mxu0 %v5082
    %6668 = vmatprep.subr.mxu0 %v5091
    %6669 = vmatpush1.msra.mxu0 %v5090
    %6670 = vmatprep.subr.mxu0 %v5099
    %6671 = vmatpush1.msra.mxu0 %v5098
    %6672 = vmatprep.subr.mxu0 %v5107
    %6673 = vmatpush1.msra.mxu0 %v5106
    %6674 = vmatprep.subr.mxu0 %v5115
    %6675 = vmatpush1.msra.mxu0 %v5114
    %6676 = vmatprep.subr.mxu0 %v5123
    %6677 = vmatpush1.msra.mxu0 %v5122
    %6678 = vmatprep.subr.mxu0 %v5131
    %6679 = vmatpush1.msra.mxu0 %v5130
    %6680 = vmatprep.subr.mxu0 %v5139
    %6681 = vmatpush1.msra.mxu0 %v5138
    %6682 = vmatprep.subr.mxu0 %v5147
    %6683 = vmatpush1.msra.mxu0 %v5146
    %6684 = vmatprep.subr.mxu0 %v5155
    %6685 = vmatpush1.msra.mxu0 %v5154
    %6686 = vmatprep.subr.mxu0 %v5163
    %6687 = vmatpush1.msra.mxu0 %v5162
    %6688 = vmatprep.subr.mxu0 %v5171
    %6689 = vmatpush1.msra.mxu0 %v5170
    %6690 = vmatprep.subr.mxu0 %v5179
    %6691 = vmatpush1.msra.mxu0 %v5178
    %6692 = vmatprep.mubr.f32.mxu0 %v6619
    %6693 = vmatmul.mubr.f32.gmra.mrb[0].mxu0 %v6618
    %v6694 = vpop.f32.mrb[0].mxu0
    %v6695 = vadd.f32 0.0, %v6694
    %v6696 = vpop.f32.mrb[0].mxu0
    %v6697 = vadd.f32 0.0, %v6696
    %6698 = vdwg.mxu0
    %6699 = vmatprep.subr.mxu0 %v4933
    %6700 = vmatpush1.msra.mxu0 %v4932
    %6701 = vmatprep.subr.mxu0 %v4941
    %6702 = vmatpush1.msra.mxu0 %v4940
    %6703 = vmatprep.subr.mxu0 %v4949
    %6704 = vmatpush1.msra.mxu0 %v4948
    %6705 = vmatprep.subr.mxu0 %v4957
    %6706 = vmatpush1.msra.mxu0 %v4956
    %6707 = vmatprep.subr.mxu0 %v4965
    %6708 = vmatpush1.msra.mxu0 %v4964
    %6709 = vmatprep.subr.mxu0 %v4973
    %6710 = vmatpush1.msra.mxu0 %v4972
    %6711 = vmatprep.subr.mxu0 %v4981
    %6712 = vmatpush1.msra.mxu0 %v4980
    %6713 = vmatprep.subr.mxu0 %v4989
    %6714 = vmatpush1.msra.mxu0 %v4988
    %6715 = vmatprep.subr.mxu0 %v4997
    %6716 = vmatpush1.msra.mxu0 %v4996
    %6717 = vmatprep.subr.mxu0 %v5005
    %6718 = vmatpush1.msra.mxu0 %v5004
    %6719 = vmatprep.subr.mxu0 %v5013
    %6720 = vmatpush1.msra.mxu0 %v5012
    %6721 = vmatprep.subr.mxu0 %v5021
    %6722 = vmatpush1.msra.mxu0 %v5020
    %6723 = vmatprep.subr.mxu0 %v5029
    %6724 = vmatpush1.msra.mxu0 %v5028
    %6725 = vmatprep.subr.mxu0 %v5037
    %6726 = vmatpush1.msra.mxu0 %v5036
    %6727 = vmatprep.subr.mxu0 %v5045
    %6728 = vmatpush1.msra.mxu0 %v5044
    %6729 = vmatprep.subr.mxu0 %v5053
    %6730 = vmatpush1.msra.mxu0 %v5052
    %6731 = vmatprep.subr.mxu0 %v5061
    %6732 = vmatpush1.msra.mxu0 %v5060
    %6733 = vmatprep.subr.mxu0 %v5069
    %6734 = vmatpush1.msra.mxu0 %v5068
    %6735 = vmatprep.subr.mxu0 %v5077
    %6736 = vmatpush1.msra.mxu0 %v5076
    %6737 = vmatprep.subr.mxu0 %v5085
    %6738 = vmatpush1.msra.mxu0 %v5084
    %6739 = vmatprep.subr.mxu0 %v5093
    %6740 = vmatpush1.msra.mxu0 %v5092
    %6741 = vmatprep.subr.mxu0 %v5101
    %6742 = vmatpush1.msra.mxu0 %v5100
    %6743 = vmatprep.subr.mxu0 %v5109
    %6744 = vmatpush1.msra.mxu0 %v5108
    %6745 = vmatprep.subr.mxu0 %v5117
    %6746 = vmatpush1.msra.mxu0 %v5116
    %6747 = vmatprep.subr.mxu0 %v5125
    %6748 = vmatpush1.msra.mxu0 %v5124
    %6749 = vmatprep.subr.mxu0 %v5133
    %6750 = vmatpush1.msra.mxu0 %v5132
    %6751 = vmatprep.subr.mxu0 %v5141
    %6752 = vmatpush1.msra.mxu0 %v5140
    %6753 = vmatprep.subr.mxu0 %v5149
    %6754 = vmatpush1.msra.mxu0 %v5148
    %6755 = vmatprep.subr.mxu0 %v5157
    %6756 = vmatpush1.msra.mxu0 %v5156
    %6757 = vmatprep.subr.mxu0 %v5165
    %6758 = vmatpush1.msra.mxu0 %v5164
    %6759 = vmatprep.subr.mxu0 %v5173
    %6760 = vmatpush1.msra.mxu0 %v5172
    %6761 = vmatprep.subr.mxu0 %v5181
    %6762 = vmatpush1.msra.mxu0 %v5180
    %6763 = vmatprep.mubr.f32.mxu0 %v6619
    %6764 = vmatmul.mubr.f32.gmra.mrb[0].mxu0 %v6618
    %v6765 = vpop.f32.mrb[0].mxu0
    %v6766 = vadd.f32 0.0, %v6765
    %v6767 = vpop.f32.mrb[0].mxu0
    %v6768 = vadd.f32 0.0, %v6767
    %6769 = vdwg.mxu0
    %6770 = vmatprep.subr.mxu0 %v4935
    %6771 = vmatpush1.msra.mxu0 %v4934
    %6772 = vmatprep.subr.mxu0 %v4943
    %6773 = vmatpush1.msra.mxu0 %v4942
    %6774 = vmatprep.subr.mxu0 %v4951
    %6775 = vmatpush1.msra.mxu0 %v4950
    %6776 = vmatprep.subr.mxu0 %v4959
    %6777 = vmatpush1.msra.mxu0 %v4958
    %6778 = vmatprep.subr.mxu0 %v4967
    %6779 = vmatpush1.msra.mxu0 %v4966
    %6780 = vmatprep.subr.mxu0 %v4975
    %6781 = vmatpush1.msra.mxu0 %v4974
    %6782 = vmatprep.subr.mxu0 %v4983
    %6783 = vmatpush1.msra.mxu0 %v4982
    %6784 = vmatprep.subr.mxu0 %v4991
    %6785 = vmatpush1.msra.mxu0 %v4990
    %6786 = vmatprep.subr.mxu0 %v4999
    %6787 = vmatpush1.msra.mxu0 %v4998
    %6788 = vmatprep.subr.mxu0 %v5007
    %6789 = vmatpush1.msra.mxu0 %v5006
    %6790 = vmatprep.subr.mxu0 %v5015
    %6791 = vmatpush1.msra.mxu0 %v5014
    %6792 = vmatprep.subr.mxu0 %v5023
    %6793 = vmatpush1.msra.mxu0 %v5022
    %6794 = vmatprep.subr.mxu0 %v5031
    %6795 = vmatpush1.msra.mxu0 %v5030
    %6796 = vmatprep.subr.mxu0 %v5039
    %6797 = vmatpush1.msra.mxu0 %v5038
    %6798 = vmatprep.subr.mxu0 %v5047
    %6799 = vmatpush1.msra.mxu0 %v5046
    %6800 = vmatprep.subr.mxu0 %v5055
    %6801 = vmatpush1.msra.mxu0 %v5054
    %6802 = vmatprep.subr.mxu0 %v5063
    %6803 = vmatpush1.msra.mxu0 %v5062
    %6804 = vmatprep.subr.mxu0 %v5071
    %6805 = vmatpush1.msra.mxu0 %v5070
    %6806 = vmatprep.subr.mxu0 %v5079
    %6807 = vmatpush1.msra.mxu0 %v5078
    %6808 = vmatprep.subr.mxu0 %v5087
    %6809 = vmatpush1.msra.mxu0 %v5086
    %6810 = vmatprep.subr.mxu0 %v5095
    %6811 = vmatpush1.msra.mxu0 %v5094
    %6812 = vmatprep.subr.mxu0 %v5103
    %6813 = vmatpush1.msra.mxu0 %v5102
    %6814 = vmatprep.subr.mxu0 %v5111
    %6815 = vmatpush1.msra.mxu0 %v5110
    %6816 = vmatprep.subr.mxu0 %v5119
    %6817 = vmatpush1.msra.mxu0 %v5118
    %6818 = vmatprep.subr.mxu0 %v5127
    %6819 = vmatpush1.msra.mxu0 %v5126
    %6820 = vmatprep.subr.mxu0 %v5135
    %6821 = vmatpush1.msra.mxu0 %v5134
    %6822 = vmatprep.subr.mxu0 %v5143
    %6823 = vmatpush1.msra.mxu0 %v5142
    %6824 = vmatprep.subr.mxu0 %v5151
    %6825 = vmatpush1.msra.mxu0 %v5150
    %6826 = vmatprep.subr.mxu0 %v5159
    %6827 = vmatpush1.msra.mxu0 %v5158
    %6828 = vmatprep.subr.mxu0 %v5167
    %6829 = vmatpush1.msra.mxu0 %v5166
    %6830 = vmatprep.subr.mxu0 %v5175
    %6831 = vmatpush1.msra.mxu0 %v5174
    %6832 = vmatprep.subr.mxu0 %v5183
    %6833 = vmatpush1.msra.mxu0 %v5182
    %6834 = vmatprep.mubr.f32.mxu0 %v6619
    %6835 = vmatmul.mubr.f32.gmra.mrb[0].mxu0 %v6618
    %v6836 = vpop.f32.mrb[0].mxu0
    %v6837 = vadd.f32 0.0, %v6836
    %v6838 = vpop.f32.mrb[0].mxu0
    %v6839 = vadd.f32 0.0, %v6838
    %6840 = vdwg.mxu0
    %6841 = vmatprep.subr.mxu0 %v4937
    %6842 = vmatpush1.msra.mxu0 %v4936
    %6843 = vmatprep.subr.mxu0 %v4945
    %6844 = vmatpush1.msra.mxu0 %v4944
    %6845 = vmatprep.subr.mxu0 %v4953
    %6846 = vmatpush1.msra.mxu0 %v4952
    %6847 = vmatprep.subr.mxu0 %v4961
    %6848 = vmatpush1.msra.mxu0 %v4960
    %6849 = vmatprep.subr.mxu0 %v4969
    %6850 = vmatpush1.msra.mxu0 %v4968
    %6851 = vmatprep.subr.mxu0 %v4977
    %6852 = vmatpush1.msra.mxu0 %v4976
    %6853 = vmatprep.subr.mxu0 %v4985
    %6854 = vmatpush1.msra.mxu0 %v4984
    %6855 = vmatprep.subr.mxu0 %v4993
    %6856 = vmatpush1.msra.mxu0 %v4992
    %6857 = vmatprep.subr.mxu0 %v5001
    %6858 = vmatpush1.msra.mxu0 %v5000
    %6859 = vmatprep.subr.mxu0 %v5009
    %6860 = vmatpush1.msra.mxu0 %v5008
    %6861 = vmatprep.subr.mxu0 %v5017
    %6862 = vmatpush1.msra.mxu0 %v5016
    %6863 = vmatprep.subr.mxu0 %v5025
    %6864 = vmatpush1.msra.mxu0 %v5024
    %6865 = vmatprep.subr.mxu0 %v5033
    %6866 = vmatpush1.msra.mxu0 %v5032
    %6867 = vmatprep.subr.mxu0 %v5041
    %6868 = vmatpush1.msra.mxu0 %v5040
    %6869 = vmatprep.subr.mxu0 %v5049
    %6870 = vmatpush1.msra.mxu0 %v5048
    %6871 = vmatprep.subr.mxu0 %v5057
    %6872 = vmatpush1.msra.mxu0 %v5056
    %6873 = vmatprep.subr.mxu0 %v5065
    %6874 = vmatpush1.msra.mxu0 %v5064
    %6875 = vmatprep.subr.mxu0 %v5073
    %6876 = vmatpush1.msra.mxu0 %v5072
    %6877 = vmatprep.subr.mxu0 %v5081
    %6878 = vmatpush1.msra.mxu0 %v5080
    %6879 = vmatprep.subr.mxu0 %v5089
    %6880 = vmatpush1.msra.mxu0 %v5088
    %6881 = vmatprep.subr.mxu0 %v5097
    %6882 = vmatpush1.msra.mxu0 %v5096
    %6883 = vmatprep.subr.mxu0 %v5105
    %6884 = vmatpush1.msra.mxu0 %v5104
    %6885 = vmatprep.subr.mxu0 %v5113
    %6886 = vmatpush1.msra.mxu0 %v5112
    %6887 = vmatprep.subr.mxu0 %v5121
    %6888 = vmatpush1.msra.mxu0 %v5120
    %6889 = vmatprep.subr.mxu0 %v5129
    %6890 = vmatpush1.msra.mxu0 %v5128
    %6891 = vmatprep.subr.mxu0 %v5137
    %6892 = vmatpush1.msra.mxu0 %v5136
    %6893 = vmatprep.subr.mxu0 %v5145
    %6894 = vmatpush1.msra.mxu0 %v5144
    %6895 = vmatprep.subr.mxu0 %v5153
    %6896 = vmatpush1.msra.mxu0 %v5152
    %6897 = vmatprep.subr.mxu0 %v5161
    %6898 = vmatpush1.msra.mxu0 %v5160
    %6899 = vmatprep.subr.mxu0 %v5169
    %6900 = vmatpush1.msra.mxu0 %v5168
    %6901 = vmatprep.subr.mxu0 %v5177
    %6902 = vmatpush1.msra.mxu0 %v5176
    %6903 = vmatprep.subr.mxu0 %v5185
    %6904 = vmatpush1.msra.mxu0 %v5184
    %6905 = vmatprep.mubr.f32.mxu0 %v6619
    %6906 = vmatmul.mubr.f32.gmra.mrb[0].mxu0 %v6618
    %v6907 = vpop.f32.mrb[0].mxu0
    %v6908 = vadd.f32 0.0, %v6907
    %v6909 = vpop.f32.mrb[0].mxu0
    %v6910 = vadd.f32 0.0, %v6909
    %6911 = vdwg.mxu0
    %v6912 = vadd.f32 %v6620, %v6695
    %v6913 = vadd.f32 %v6621, %v6697
    %v6914 = vadd.f32 %v6622, %v6766
    %v6915 = vadd.f32 %v6623, %v6768
    %v6916 = vadd.f32 %v6624, %v6837
    %v6917 = vadd.f32 %v6625, %v6839
    %v6918 = vadd.f32 %v6626, %v6908
    %v6919 = vadd.f32 %v6627, %v6910
    %v6920 = vxor.u32 %v6912, 2147483648
    %v6921 = vxor.u32 %v6913, 2147483648
    %v6922 = vmul.f32 %v6920, 1.442695
    %v6923 = vpow.pop %v6922
    %v6924 = vmul.f32 %v6921, 1.442695
    %v6925 = vpow.pop %v6924
    %v6926 = vadd.f32 %v6923, 1.0
    %v6927 = vadd.f32 %v6925, 1.0
    %v6928 = vrcp.pop %v6926
    %v6929 = vmul.f32 1.0, %v6928
    %v6930 = vrcp.pop %v6927
    %v6931 = vmul.f32 1.0, %v6930
    %v6932 = vxor.u32 %v6914, 2147483648
    %v6933 = vxor.u32 %v6915, 2147483648
    %v6934 = vmul.f32 %v6932, 1.442695
    %v6935 = vpow.pop %v6934
    %v6936 = vmul.f32 %v6933, 1.442695
    %v6937 = vpow.pop %v6936
    %v6938 = vadd.f32 %v6935, 1.0
    %v6939 = vadd.f32 %v6937, 1.0
    %v6940 = vrcp.pop %v6938
    %v6941 = vmul.f32 1.0, %v6940
    %v6942 = vrcp.pop %v6939
    %v6943 = vmul.f32 1.0, %v6942
    %v6944 = vtanh.pop %v6916
    %v6945 = vtanh.pop %v6917
    %v6946 = vxor.u32 %v6918, 2147483648
    %v6947 = vxor.u32 %v6919, 2147483648
    %v6948 = vmul.f32 %v6946, 1.442695
    %v6949 = vpow.pop %v6948
    %v6950 = vmul.f32 %v6947, 1.442695
    %v6951 = vpow.pop %v6950
    %v6952 = vadd.f32 %v6949, 1.0
    %v6953 = vadd.f32 %v6951, 1.0
    %v6954 = vrcp.pop %v6952
    %v6955 = vmul.f32 1.0, %v6954
    %v6956 = vrcp.pop %v6953
    %v6957 = vmul.f32 1.0, %v6956
    %v6958 = vld [vmem:[#allocation5] sm:$0xff]
    %v6959 = vld [vmem:[#allocation5 + $0x8] sm:$0xff]
    %v6960 = vmul.f32 %v6941, %v6958
    %v6961 = vmul.f32 %v6943, %v6959
    %v6962 = vmul.f32 %v6929, %v6944
    %v6963 = vmul.f32 %v6931, %v6945
    %v6964 = vadd.f32 %v6960, %v6962
    %v6965 = vadd.f32 %v6961, %v6963
    %v6966 = vtanh.pop %v6964
    %v6967 = vtanh.pop %v6965
    %v6968 = vmul.f32 %v6955, %v6966
    %v6969 = vmul.f32 %v6957, %v6967
    %6970 = vst [vmem:[#allocation4] sm:$0xff] %v6968
    %6971 = vst [vmem:[#allocation4 + $0x8] sm:$0xff] %v6969
    %6972 = vst [vmem:[#allocation5] sm:$0xff] %v6964
    %6973 = vst [vmem:[#allocation5 + $0x8] sm:$0xff] %v6965
    %6974 = vst [vmem:[%s2989] sm:$0xff] %v6968
    %6975 = vst [vmem:[%s2989 + $0x8] sm:$0xff] %v6969
    %v6976 = vld [vmem:[#allocation4] sm:$0xff]
    %v6977 = vld [vmem:[#allocation4 + $0x8] sm:$0xff]
    %v6978 = vld [vmem:[%s2996] sm:$0xff]
    %v6979 = vld [vmem:[%s2996 + $0x8] sm:$0xff]
    %v6980 = vld [vmem:[%s2996 + $0x10] sm:$0xff]
    %v6981 = vld [vmem:[%s2996 + $0x18] sm:$0xff]
    %v6982 = vld [vmem:[%s2996 + $0x20] sm:$0xff]
    %v6983 = vld [vmem:[%s2996 + $0x28] sm:$0xff]
    %v6984 = vld [vmem:[%s2996 + $0x30] sm:$0xff]
    %v6985 = vld [vmem:[%s2996 + $0x38] sm:$0xff]
    %6986 = vmatprep.subr.mxu0 %v4931
    %6987 = vmatpush1.msra.mxu0 %v4930
    %6988 = vmatprep.subr.mxu0 %v4939
    %6989 = vmatpush1.msra.mxu0 %v4938
    %6990 = vmatprep.subr.mxu0 %v4947
    %6991 = vmatpush1.msra.mxu0 %v4946
    %6992 = vmatprep.subr.mxu0 %v4955
    %6993 = vmatpush1.msra.mxu0 %v4954
    %6994 = vmatprep.subr.mxu0 %v4963
    %6995 = vmatpush1.msra.mxu0 %v4962
    %6996 = vmatprep.subr.mxu0 %v4971
    %6997 = vmatpush1.msra.mxu0 %v4970
    %6998 = vmatprep.subr.mxu0 %v4979
    %6999 = vmatpush1.msra.mxu0 %v4978
    %7000 = vmatprep.subr.mxu0 %v4987
    %7001 = vmatpush1.msra.mxu0 %v4986
    %7002 = vmatprep.subr.mxu0 %v4995
    %7003 = vmatpush1.msra.mxu0 %v4994
    %7004 = vmatprep.subr.mxu0 %v5003
    %7005 = vmatpush1.msra.mxu0 %v5002
    %7006 = vmatprep.subr.mxu0 %v5011
    %7007 = vmatpush1.msra.mxu0 %v5010
    %7008 = vmatprep.subr.mxu0 %v5019
    %7009 = vmatpush1.msra.mxu0 %v5018
    %7010 = vmatprep.subr.mxu0 %v5027
    %7011 = vmatpush1.msra.mxu0 %v5026
    %7012 = vmatprep.subr.mxu0 %v5035
    %7013 = vmatpush1.msra.mxu0 %v5034
    %7014 = vmatprep.subr.mxu0 %v5043
    %7015 = vmatpush1.msra.mxu0 %v5042
    %7016 = vmatprep.subr.mxu0 %v5051
    %7017 = vmatpush1.msra.mxu0 %v5050
    %7018 = vmatprep.subr.mxu0 %v5059
    %7019 = vmatpush1.msra.mxu0 %v5058
    %7020 = vmatprep.subr.mxu0 %v5067
    %7021 = vmatpush1.msra.mxu0 %v5066
    %7022 = vmatprep.subr.mxu0 %v5075
    %7023 = vmatpush1.msra.mxu0 %v5074
    %7024 = vmatprep.subr.mxu0 %v5083
    %7025 = vmatpush1.msra.mxu0 %v5082
    %7026 = vmatprep.subr.mxu0 %v5091
    %7027 = vmatpush1.msra.mxu0 %v5090
    %7028 = vmatprep.subr.mxu0 %v5099
    %7029 = vmatpush1.msra.mxu0 %v5098
    %7030 = vmatprep.subr.mxu0 %v5107
    %7031 = vmatpush1.msra.mxu0 %v5106
    %7032 = vmatprep.subr.mxu0 %v5115
    %7033 = vmatpush1.msra.mxu0 %v5114
    %7034 = vmatprep.subr.mxu0 %v5123
    %7035 = vmatpush1.msra.mxu0 %v5122
    %7036 = vmatprep.subr.mxu0 %v5131
    %7037 = vmatpush1.msra.mxu0 %v5130
    %7038 = vmatprep.subr.mxu0 %v5139
    %7039 = vmatpush1.msra.mxu0 %v5138
    %7040 = vmatprep.subr.mxu0 %v5147
    %7041 = vmatpush1.msra.mxu0 %v5146
    %7042 = vmatprep.subr.mxu0 %v5155
    %7043 = vmatpush1.msra.mxu0 %v5154
    %7044 = vmatprep.subr.mxu0 %v5163
    %7045 = vmatpush1.msra.mxu0 %v5162
    %7046 = vmatprep.subr.mxu0 %v5171
    %7047 = vmatpush1.msra.mxu0 %v5170
    %7048 = vmatprep.subr.mxu0 %v5179
    %7049 = vmatpush1.msra.mxu0 %v5178
    %7050 = vmatprep.mubr.f32.mxu0 %v6977
    %7051 = vmatmul.mubr.f32.gmra.mrb[0].mxu0 %v6976
    %v7052 = vpop.f32.mrb[0].mxu0
    %v7053 = vadd.f32 0.0, %v7052
    %v7054 = vpop.f32.mrb[0].mxu0
    %v7055 = vadd.f32 0.0, %v7054
    %7056 = vdwg.mxu0
    %7057 = vmatprep.subr.mxu0 %v4933
    %7058 = vmatpush1.msra.mxu0 %v4932
    %7059 = vmatprep.subr.mxu0 %v4941
    %7060 = vmatpush1.msra.mxu0 %v4940
    %7061 = vmatprep.subr.mxu0 %v4949
    %7062 = vmatpush1.msra.mxu0 %v4948
    %7063 = vmatprep.subr.mxu0 %v4957
    %7064 = vmatpush1.msra.mxu0 %v4956
    %7065 = vmatprep.subr.mxu0 %v4965
    %7066 = vmatpush1.msra.mxu0 %v4964
    %7067 = vmatprep.subr.mxu0 %v4973
    %7068 = vmatpush1.msra.mxu0 %v4972
    %7069 = vmatprep.subr.mxu0 %v4981
    %7070 = vmatpush1.msra.mxu0 %v4980
    %7071 = vmatprep.subr.mxu0 %v4989
    %7072 = vmatpush1.msra.mxu0 %v4988
    %7073 = vmatprep.subr.mxu0 %v4997
    %7074 = vmatpush1.msra.mxu0 %v4996
    %7075 = vmatprep.subr.mxu0 %v5005
    %7076 = vmatpush1.msra.mxu0 %v5004
    %7077 = vmatprep.subr.mxu0 %v5013
    %7078 = vmatpush1.msra.mxu0 %v5012
    %7079 = vmatprep.subr.mxu0 %v5021
    %7080 = vmatpush1.msra.mxu0 %v5020
    %7081 = vmatprep.subr.mxu0 %v5029
    %7082 = vmatpush1.msra.mxu0 %v5028
    %7083 = vmatprep.subr.mxu0 %v5037
    %7084 = vmatpush1.msra.mxu0 %v5036
    %7085 = vmatprep.subr.mxu0 %v5045
    %7086 = vmatpush1.msra.mxu0 %v5044
    %7087 = vmatprep.subr.mxu0 %v5053
    %7088 = vmatpush1.msra.mxu0 %v5052
    %7089 = vmatprep.subr.mxu0 %v5061
    %7090 = vmatpush1.msra.mxu0 %v5060
    %7091 = vmatprep.subr.mxu0 %v5069
    %7092 = vmatpush1.msra.mxu0 %v5068
    %7093 = vmatprep.subr.mxu0 %v5077
    %7094 = vmatpush1.msra.mxu0 %v5076
    %7095 = vmatprep.subr.mxu0 %v5085
    %7096 = vmatpush1.msra.mxu0 %v5084
    %7097 = vmatprep.subr.mxu0 %v5093
    %7098 = vmatpush1.msra.mxu0 %v5092
    %7099 = vmatprep.subr.mxu0 %v5101
    %7100 = vmatpush1.msra.mxu0 %v5100
    %7101 = vmatprep.subr.mxu0 %v5109
    %7102 = vmatpush1.msra.mxu0 %v5108
    %7103 = vmatprep.subr.mxu0 %v5117
    %7104 = vmatpush1.msra.mxu0 %v5116
    %7105 = vmatprep.subr.mxu0 %v5125
    %7106 = vmatpush1.msra.mxu0 %v5124
    %7107 = vmatprep.subr.mxu0 %v5133
    %7108 = vmatpush1.msra.mxu0 %v5132
    %7109 = vmatprep.subr.mxu0 %v5141
    %7110 = vmatpush1.msra.mxu0 %v5140
    %7111 = vmatprep.subr.mxu0 %v5149
    %7112 = vmatpush1.msra.mxu0 %v5148
    %7113 = vmatprep.subr.mxu0 %v5157
    %7114 = vmatpush1.msra.mxu0 %v5156
    %7115 = vmatprep.subr.mxu0 %v5165
    %7116 = vmatpush1.msra.mxu0 %v5164
    %7117 = vmatprep.subr.mxu0 %v5173
    %7118 = vmatpush1.msra.mxu0 %v5172
    %7119 = vmatprep.subr.mxu0 %v5181
    %7120 = vmatpush1.msra.mxu0 %v5180
    %7121 = vmatprep.mubr.f32.mxu0 %v6977
    %7122 = vmatmul.mubr.f32.gmra.mrb[0].mxu0 %v6976
    %v7123 = vpop.f32.mrb[0].mxu0
    %v7124 = vadd.f32 0.0, %v7123
    %v7125 = vpop.f32.mrb[0].mxu0
    %v7126 = vadd.f32 0.0, %v7125
    %7127 = vdwg.mxu0
    %7128 = vmatprep.subr.mxu0 %v4935
    %7129 = vmatpush1.msra.mxu0 %v4934
    %7130 = vmatprep.subr.mxu0 %v4943
    %7131 = vmatpush1.msra.mxu0 %v4942
    %7132 = vmatprep.subr.mxu0 %v4951
    %7133 = vmatpush1.msra.mxu0 %v4950
    %7134 = vmatprep.subr.mxu0 %v4959
    %7135 = vmatpush1.msra.mxu0 %v4958
    %7136 = vmatprep.subr.mxu0 %v4967
    %7137 = vmatpush1.msra.mxu0 %v4966
    %7138 = vmatprep.subr.mxu0 %v4975
    %7139 = vmatpush1.msra.mxu0 %v4974
    %7140 = vmatprep.subr.mxu0 %v4983
    %7141 = vmatpush1.msra.mxu0 %v4982
    %7142 = vmatprep.subr.mxu0 %v4991
    %7143 = vmatpush1.msra.mxu0 %v4990
    %7144 = vmatprep.subr.mxu0 %v4999
    %7145 = vmatpush1.msra.mxu0 %v4998
    %7146 = vmatprep.subr.mxu0 %v5007
    %7147 = vmatpush1.msra.mxu0 %v5006
    %7148 = vmatprep.subr.mxu0 %v5015
    %7149 = vmatpush1.msra.mxu0 %v5014
    %7150 = vmatprep.subr.mxu0 %v5023
    %7151 = vmatpush1.msra.mxu0 %v5022
    %7152 = vmatprep.subr.mxu0 %v5031
    %7153 = vmatpush1.msra.mxu0 %v5030
    %7154 = vmatprep.subr.mxu0 %v5039
    %7155 = vmatpush1.msra.mxu0 %v5038
    %7156 = vmatprep.subr.mxu0 %v5047
    %7157 = vmatpush1.msra.mxu0 %v5046
    %7158 = vmatprep.subr.mxu0 %v5055
    %7159 = vmatpush1.msra.mxu0 %v5054
    %7160 = vmatprep.subr.mxu0 %v5063
    %7161 = vmatpush1.msra.mxu0 %v5062
    %7162 = vmatprep.subr.mxu0 %v5071
    %7163 = vmatpush1.msra.mxu0 %v5070
    %7164 = vmatprep.subr.mxu0 %v5079
    %7165 = vmatpush1.msra.mxu0 %v5078
    %7166 = vmatprep.subr.mxu0 %v5087
    %7167 = vmatpush1.msra.mxu0 %v5086
    %7168 = vmatprep.subr.mxu0 %v5095
    %7169 = vmatpush1.msra.mxu0 %v5094
    %7170 = vmatprep.subr.mxu0 %v5103
    %7171 = vmatpush1.msra.mxu0 %v5102
    %7172 = vmatprep.subr.mxu0 %v5111
    %7173 = vmatpush1.msra.mxu0 %v5110
    %7174 = vmatprep.subr.mxu0 %v5119
    %7175 = vmatpush1.msra.mxu0 %v5118
    %7176 = vmatprep.subr.mxu0 %v5127
    %7177 = vmatpush1.msra.mxu0 %v5126
    %7178 = vmatprep.subr.mxu0 %v5135
    %7179 = vmatpush1.msra.mxu0 %v5134
    %7180 = vmatprep.subr.mxu0 %v5143
    %7181 = vmatpush1.msra.mxu0 %v5142
    %7182 = vmatprep.subr.mxu0 %v5151
    %7183 = vmatpush1.msra.mxu0 %v5150
    %7184 = vmatprep.subr.mxu0 %v5159
    %7185 = vmatpush1.msra.mxu0 %v5158
    %7186 = vmatprep.subr.mxu0 %v5167
    %7187 = vmatpush1.msra.mxu0 %v5166
    %7188 = vmatprep.subr.mxu0 %v5175
    %7189 = vmatpush1.msra.mxu0 %v5174
    %7190 = vmatprep.subr.mxu0 %v5183
    %7191 = vmatpush1.msra.mxu0 %v5182
    %7192 = vmatprep.mubr.f32.mxu0 %v6977
    %7193 = vmatmul.mubr.f32.gmra.mrb[0].mxu0 %v6976
    %v7194 = vpop.f32.mrb[0].mxu0
    %v7195 = vadd.f32 0.0, %v7194
    %v7196 = vpop.f32.mrb[0].mxu0
    %v7197 = vadd.f32 0.0, %v7196
    %7198 = vdwg.mxu0
    %7199 = vmatprep.subr.mxu0 %v4937
    %7200 = vmatpush1.msra.mxu0 %v4936
    %7201 = vmatprep.subr.mxu0 %v4945
    %7202 = vmatpush1.msra.mxu0 %v4944
    %7203 = vmatprep.subr.mxu0 %v4953
    %7204 = vmatpush1.msra.mxu0 %v4952
    %7205 = vmatprep.subr.mxu0 %v4961
    %7206 = vmatpush1.msra.mxu0 %v4960
    %7207 = vmatprep.subr.mxu0 %v4969
    %7208 = vmatpush1.msra.mxu0 %v4968
    %7209 = vmatprep.subr.mxu0 %v4977
    %7210 = vmatpush1.msra.mxu0 %v4976
    %7211 = vmatprep.subr.mxu0 %v4985
    %7212 = vmatpush1.msra.mxu0 %v4984
    %7213 = vmatprep.subr.mxu0 %v4993
    %7214 = vmatpush1.msra.mxu0 %v4992
    %7215 = vmatprep.subr.mxu0 %v5001
    %7216 = vmatpush1.msra.mxu0 %v5000
    %7217 = vmatprep.subr.mxu0 %v5009
    %7218 = vmatpush1.msra.mxu0 %v5008
    %7219 = vmatprep.subr.mxu0 %v5017
    %7220 = vmatpush1.msra.mxu0 %v5016
    %7221 = vmatprep.subr.mxu0 %v5025
    %7222 = vmatpush1.msra.mxu0 %v5024
    %7223 = vmatprep.subr.mxu0 %v5033
    %7224 = vmatpush1.msra.mxu0 %v5032
    %7225 = vmatprep.subr.mxu0 %v5041
    %7226 = vmatpush1.msra.mxu0 %v5040
    %7227 = vmatprep.subr.mxu0 %v5049
    %7228 = vmatpush1.msra.mxu0 %v5048
    %7229 = vmatprep.subr.mxu0 %v5057
    %7230 = vmatpush1.msra.mxu0 %v5056
    %7231 = vmatprep.subr.mxu0 %v5065
    %7232 = vmatpush1.msra.mxu0 %v5064
    %7233 = vmatprep.subr.mxu0 %v5073
    %7234 = vmatpush1.msra.mxu0 %v5072
    %7235 = vmatprep.subr.mxu0 %v5081
    %7236 = vmatpush1.msra.mxu0 %v5080
    %7237 = vmatprep.subr.mxu0 %v5089
    %7238 = vmatpush1.msra.mxu0 %v5088
    %7239 = vmatprep.subr.mxu0 %v5097
    %7240 = vmatpush1.msra.mxu0 %v5096
    %7241 = vmatprep.subr.mxu0 %v5105
    %7242 = vmatpush1.msra.mxu0 %v5104
    %7243 = vmatprep.subr.mxu0 %v5113
    %7244 = vmatpush1.msra.mxu0 %v5112
    %7245 = vmatprep.subr.mxu0 %v5121
    %7246 = vmatpush1.msra.mxu0 %v5120
    %7247 = vmatprep.subr.mxu0 %v5129
    %7248 = vmatpush1.msra.mxu0 %v5128
    %7249 = vmatprep.subr.mxu0 %v5137
    %7250 = vmatpush1.msra.mxu0 %v5136
    %7251 = vmatprep.subr.mxu0 %v5145
    %7252 = vmatpush1.msra.mxu0 %v5144
    %7253 = vmatprep.subr.mxu0 %v5153
    %7254 = vmatpush1.msra.mxu0 %v5152
    %7255 = vmatprep.subr.mxu0 %v5161
    %7256 = vmatpush1.msra.mxu0 %v5160
    %7257 = vmatprep.subr.mxu0 %v5169
    %7258 = vmatpush1.msra.mxu0 %v5168
    %7259 = vmatprep.subr.mxu0 %v5177
    %7260 = vmatpush1.msra.mxu0 %v5176
    %7261 = vmatprep.subr.mxu0 %v5185
    %7262 = vmatpush1.msra.mxu0 %v5184
    %7263 = vmatprep.mubr.f32.mxu0 %v6977
    %7264 = vmatmul.mubr.f32.gmra.mrb[0].mxu0 %v6976
    %v7265 = vpop.f32.mrb[0].mxu0
    %v7266 = vadd.f32 0.0, %v7265
    %v7267 = vpop.f32.mrb[0].mxu0
    %v7268 = vadd.f32 0.0, %v7267
    %7269 = vdwg.mxu0
    %v7270 = vadd.f32 %v6978, %v7053
    %v7271 = vadd.f32 %v6979, %v7055
    %v7272 = vadd.f32 %v6980, %v7124
    %v7273 = vadd.f32 %v6981, %v7126
    %v7274 = vadd.f32 %v6982, %v7195
    %v7275 = vadd.f32 %v6983, %v7197
    %v7276 = vadd.f32 %v6984, %v7266
    %v7277 = vadd.f32 %v6985, %v7268
    %v7278 = vxor.u32 %v7270, 2147483648
    %v7279 = vxor.u32 %v7271, 2147483648
    %v7280 = vmul.f32 %v7278, 1.442695
    %v7281 = vpow.pop %v7280
    %v7282 = vmul.f32 %v7279, 1.442695
    %v7283 = vpow.pop %v7282
    %v7284 = vadd.f32 %v7281, 1.0
    %v7285 = vadd.f32 %v7283, 1.0
    %v7286 = vrcp.pop %v7284
    %v7287 = vmul.f32 1.0, %v7286
    %v7288 = vrcp.pop %v7285
    %v7289 = vmul.f32 1.0, %v7288
    %v7290 = vxor.u32 %v7272, 2147483648
    %v7291 = vxor.u32 %v7273, 2147483648
    %v7292 = vmul.f32 %v7290, 1.442695
    %v7293 = vpow.pop %v7292
    %v7294 = vmul.f32 %v7291, 1.442695
    %v7295 = vpow.pop %v7294
    %v7296 = vadd.f32 %v7293, 1.0
    %v7297 = vadd.f32 %v7295, 1.0
    %v7298 = vrcp.pop %v7296
    %v7299 = vmul.f32 1.0, %v7298
    %v7300 = vrcp.pop %v7297
    %v7301 = vmul.f32 1.0, %v7300
    %v7302 = vtanh.pop %v7274
    %v7303 = vtanh.pop %v7275
    %v7304 = vxor.u32 %v7276, 2147483648
    %v7305 = vxor.u32 %v7277, 2147483648
    %v7306 = vmul.f32 %v7304, 1.442695
    %v7307 = vpow.pop %v7306
    %v7308 = vmul.f32 %v7305, 1.442695
    %v7309 = vpow.pop %v7308
    %v7310 = vadd.f32 %v7307, 1.0
    %v7311 = vadd.f32 %v7309, 1.0
    %v7312 = vrcp.pop %v7310
    %v7313 = vmul.f32 1.0, %v7312
    %v7314 = vrcp.pop %v7311
    %v7315 = vmul.f32 1.0, %v7314
    %v7316 = vld [vmem:[#allocation5] sm:$0xff]
    %v7317 = vld [vmem:[#allocation5 + $0x8] sm:$0xff]
    %v7318 = vmul.f32 %v7299, %v7316
    %v7319 = vmul.f32 %v7301, %v7317
    %v7320 = vmul.f32 %v7287, %v7302
    %v7321 = vmul.f32 %v7289, %v7303
    %v7322 = vadd.f32 %v7318, %v7320
    %v7323 = vadd.f32 %v7319, %v7321
    %v7324 = vtanh.pop %v7322
    %v7325 = vtanh.pop %v7323
    %v7326 = vmul.f32 %v7313, %v7324
    %v7327 = vmul.f32 %v7315, %v7325
    %7328 = vst [vmem:[#allocation4] sm:$0xff] %v7326
    %7329 = vst [vmem:[#allocation4 + $0x8] sm:$0xff] %v7327
    %7330 = vst [vmem:[#allocation5] sm:$0xff] %v7322
    %7331 = vst [vmem:[#allocation5 + $0x8] sm:$0xff] %v7323
    %7332 = vst [vmem:[%s3353] sm:$0xff] %v7326
    %7333 = vst [vmem:[%s3353 + $0x8] sm:$0xff] %v7327
    %v7334 = vld [vmem:[#allocation4] sm:$0xff]
    %v7335 = vld [vmem:[#allocation4 + $0x8] sm:$0xff]
    %v7336 = vld [vmem:[%s3360] sm:$0xff]
    %v7337 = vld [vmem:[%s3360 + $0x8] sm:$0xff]
    %v7338 = vld [vmem:[%s3360 + $0x10] sm:$0xff]
    %v7339 = vld [vmem:[%s3360 + $0x18] sm:$0xff]
    %v7340 = vld [vmem:[%s3360 + $0x20] sm:$0xff]
    %v7341 = vld [vmem:[%s3360 + $0x28] sm:$0xff]
    %v7342 = vld [vmem:[%s3360 + $0x30] sm:$0xff]
    %v7343 = vld [vmem:[%s3360 + $0x38] sm:$0xff]
    %7344 = vmatprep.subr.mxu0 %v4931
    %7345 = vmatpush1.msra.mxu0 %v4930
    %7346 = vmatprep.subr.mxu0 %v4939
    %7347 = vmatpush1.msra.mxu0 %v4938
    %7348 = vmatprep.subr.mxu0 %v4947
    %7349 = vmatpush1.msra.mxu0 %v4946
    %7350 = vmatprep.subr.mxu0 %v4955
    %7351 = vmatpush1.msra.mxu0 %v4954
    %7352 = vmatprep.subr.mxu0 %v4963
    %7353 = vmatpush1.msra.mxu0 %v4962
    %7354 = vmatprep.subr.mxu0 %v4971
    %7355 = vmatpush1.msra.mxu0 %v4970
    %7356 = vmatprep.subr.mxu0 %v4979
    %7357 = vmatpush1.msra.mxu0 %v4978
    %7358 = vmatprep.subr.mxu0 %v4987
    %7359 = vmatpush1.msra.mxu0 %v4986
    %7360 = vmatprep.subr.mxu0 %v4995
    %7361 = vmatpush1.msra.mxu0 %v4994
    %7362 = vmatprep.subr.mxu0 %v5003
    %7363 = vmatpush1.msra.mxu0 %v5002
    %7364 = vmatprep.subr.mxu0 %v5011
    %7365 = vmatpush1.msra.mxu0 %v5010
    %7366 = vmatprep.subr.mxu0 %v5019
    %7367 = vmatpush1.msra.mxu0 %v5018
    %7368 = vmatprep.subr.mxu0 %v5027
    %7369 = vmatpush1.msra.mxu0 %v5026
    %7370 = vmatprep.subr.mxu0 %v5035
    %7371 = vmatpush1.msra.mxu0 %v5034
    %7372 = vmatprep.subr.mxu0 %v5043
    %7373 = vmatpush1.msra.mxu0 %v5042
    %7374 = vmatprep.subr.mxu0 %v5051
    %7375 = vmatpush1.msra.mxu0 %v5050
    %7376 = vmatprep.subr.mxu0 %v5059
    %7377 = vmatpush1.msra.mxu0 %v5058
    %7378 = vmatprep.subr.mxu0 %v5067
    %7379 = vmatpush1.msra.mxu0 %v5066
    %7380 = vmatprep.subr.mxu0 %v5075
    %7381 = vmatpush1.msra.mxu0 %v5074
    %7382 = vmatprep.subr.mxu0 %v5083
    %7383 = vmatpush1.msra.mxu0 %v5082
    %7384 = vmatprep.subr.mxu0 %v5091
    %7385 = vmatpush1.msra.mxu0 %v5090
    %7386 = vmatprep.subr.mxu0 %v5099
    %7387 = vmatpush1.msra.mxu0 %v5098
    %7388 = vmatprep.subr.mxu0 %v5107
    %7389 = vmatpush1.msra.mxu0 %v5106
    %7390 = vmatprep.subr.mxu0 %v5115
    %7391 = vmatpush1.msra.mxu0 %v5114
    %7392 = vmatprep.subr.mxu0 %v5123
    %7393 = vmatpush1.msra.mxu0 %v5122
    %7394 = vmatprep.subr.mxu0 %v5131
    %7395 = vmatpush1.msra.mxu0 %v5130
    %7396 = vmatprep.subr.mxu0 %v5139
    %7397 = vmatpush1.msra.mxu0 %v5138
    %7398 = vmatprep.subr.mxu0 %v5147
    %7399 = vmatpush1.msra.mxu0 %v5146
    %7400 = vmatprep.subr.mxu0 %v5155
    %7401 = vmatpush1.msra.mxu0 %v5154
    %7402 = vmatprep.subr.mxu0 %v5163
    %7403 = vmatpush1.msra.mxu0 %v5162
    %7404 = vmatprep.subr.mxu0 %v5171
    %7405 = vmatpush1.msra.mxu0 %v5170
    %7406 = vmatprep.subr.mxu0 %v5179
    %7407 = vmatpush1.msra.mxu0 %v5178
    %7408 = vmatprep.mubr.f32.mxu0 %v7335
    %7409 = vmatmul.mubr.f32.gmra.mrb[0].mxu0 %v7334
    %v7410 = vpop.f32.mrb[0].mxu0
    %v7411 = vadd.f32 0.0, %v7410
    %v7412 = vpop.f32.mrb[0].mxu0
    %v7413 = vadd.f32 0.0, %v7412
    %7414 = vdwg.mxu0
    %7415 = vmatprep.subr.mxu0 %v4933
    %7416 = vmatpush1.msra.mxu0 %v4932
    %7417 = vmatprep.subr.mxu0 %v4941
    %7418 = vmatpush1.msra.mxu0 %v4940
    %7419 = vmatprep.subr.mxu0 %v4949
    %7420 = vmatpush1.msra.mxu0 %v4948
    %7421 = vmatprep.subr.mxu0 %v4957
    %7422 = vmatpush1.msra.mxu0 %v4956
    %7423 = vmatprep.subr.mxu0 %v4965
    %7424 = vmatpush1.msra.mxu0 %v4964
    %7425 = vmatprep.subr.mxu0 %v4973
    %7426 = vmatpush1.msra.mxu0 %v4972
    %7427 = vmatprep.subr.mxu0 %v4981
    %7428 = vmatpush1.msra.mxu0 %v4980
    %7429 = vmatprep.subr.mxu0 %v4989
    %7430 = vmatpush1.msra.mxu0 %v4988
    %7431 = vmatprep.subr.mxu0 %v4997
    %7432 = vmatpush1.msra.mxu0 %v4996
    %7433 = vmatprep.subr.mxu0 %v5005
    %7434 = vmatpush1.msra.mxu0 %v5004
    %7435 = vmatprep.subr.mxu0 %v5013
    %7436 = vmatpush1.msra.mxu0 %v5012
    %7437 = vmatprep.subr.mxu0 %v5021
    %7438 = vmatpush1.msra.mxu0 %v5020
    %7439 = vmatprep.subr.mxu0 %v5029
    %7440 = vmatpush1.msra.mxu0 %v5028
    %7441 = vmatprep.subr.mxu0 %v5037
    %7442 = vmatpush1.msra.mxu0 %v5036
    %7443 = vmatprep.subr.mxu0 %v5045
    %7444 = vmatpush1.msra.mxu0 %v5044
    %7445 = vmatprep.subr.mxu0 %v5053
    %7446 = vmatpush1.msra.mxu0 %v5052
    %7447 = vmatprep.subr.mxu0 %v5061
    %7448 = vmatpush1.msra.mxu0 %v5060
    %7449 = vmatprep.subr.mxu0 %v5069
    %7450 = vmatpush1.msra.mxu0 %v5068
    %7451 = vmatprep.subr.mxu0 %v5077
    %7452 = vmatpush1.msra.mxu0 %v5076
    %7453 = vmatprep.subr.mxu0 %v5085
    %7454 = vmatpush1.msra.mxu0 %v5084
    %7455 = vmatprep.subr.mxu0 %v5093
    %7456 = vmatpush1.msra.mxu0 %v5092
    %7457 = vmatprep.subr.mxu0 %v5101
    %7458 = vmatpush1.msra.mxu0 %v5100
    %7459 = vmatprep.subr.mxu0 %v5109
    %7460 = vmatpush1.msra.mxu0 %v5108
    %7461 = vmatprep.subr.mxu0 %v5117
    %7462 = vmatpush1.msra.mxu0 %v5116
    %7463 = vmatprep.subr.mxu0 %v5125
    %7464 = vmatpush1.msra.mxu0 %v5124
    %7465 = vmatprep.subr.mxu0 %v5133
    %7466 = vmatpush1.msra.mxu0 %v5132
    %7467 = vmatprep.subr.mxu0 %v5141
    %7468 = vmatpush1.msra.mxu0 %v5140
    %7469 = vmatprep.subr.mxu0 %v5149
    %7470 = vmatpush1.msra.mxu0 %v5148
    %7471 = vmatprep.subr.mxu0 %v5157
    %7472 = vmatpush1.msra.mxu0 %v5156
    %7473 = vmatprep.subr.mxu0 %v5165
    %7474 = vmatpush1.msra.mxu0 %v5164
    %7475 = vmatprep.subr.mxu0 %v5173
    %7476 = vmatpush1.msra.mxu0 %v5172
    %7477 = vmatprep.subr.mxu0 %v5181
    %7478 = vmatpush1.msra.mxu0 %v5180
    %7479 = vmatprep.mubr.f32.mxu0 %v7335
    %7480 = vmatmul.mubr.f32.gmra.mrb[0].mxu0 %v7334
    %v7481 = vpop.f32.mrb[0].mxu0
    %v7482 = vadd.f32 0.0, %v7481
    %v7483 = vpop.f32.mrb[0].mxu0
    %v7484 = vadd.f32 0.0, %v7483
    %7485 = vdwg.mxu0
    %7486 = vmatprep.subr.mxu0 %v4935
    %7487 = vmatpush1.msra.mxu0 %v4934
    %7488 = vmatprep.subr.mxu0 %v4943
    %7489 = vmatpush1.msra.mxu0 %v4942
    %7490 = vmatprep.subr.mxu0 %v4951
    %7491 = vmatpush1.msra.mxu0 %v4950
    %7492 = vmatprep.subr.mxu0 %v4959
    %7493 = vmatpush1.msra.mxu0 %v4958
    %7494 = vmatprep.subr.mxu0 %v4967
    %7495 = vmatpush1.msra.mxu0 %v4966
    %7496 = vmatprep.subr.mxu0 %v4975
    %7497 = vmatpush1.msra.mxu0 %v4974
    %7498 = vmatprep.subr.mxu0 %v4983
    %7499 = vmatpush1.msra.mxu0 %v4982
    %7500 = vmatprep.subr.mxu0 %v4991
    %7501 = vmatpush1.msra.mxu0 %v4990
    %7502 = vmatprep.subr.mxu0 %v4999
    %7503 = vmatpush1.msra.mxu0 %v4998
    %7504 = vmatprep.subr.mxu0 %v5007
    %7505 = vmatpush1.msra.mxu0 %v5006
    %7506 = vmatprep.subr.mxu0 %v5015
    %7507 = vmatpush1.msra.mxu0 %v5014
    %7508 = vmatprep.subr.mxu0 %v5023
    %7509 = vmatpush1.msra.mxu0 %v5022
    %7510 = vmatprep.subr.mxu0 %v5031
    %7511 = vmatpush1.msra.mxu0 %v5030
    %7512 = vmatprep.subr.mxu0 %v5039
    %7513 = vmatpush1.msra.mxu0 %v5038
    %7514 = vmatprep.subr.mxu0 %v5047
    %7515 = vmatpush1.msra.mxu0 %v5046
    %7516 = vmatprep.subr.mxu0 %v5055
    %7517 = vmatpush1.msra.mxu0 %v5054
    %7518 = vmatprep.subr.mxu0 %v5063
    %7519 = vmatpush1.msra.mxu0 %v5062
    %7520 = vmatprep.subr.mxu0 %v5071
    %7521 = vmatpush1.msra.mxu0 %v5070
    %7522 = vmatprep.subr.mxu0 %v5079
    %7523 = vmatpush1.msra.mxu0 %v5078
    %7524 = vmatprep.subr.mxu0 %v5087
    %7525 = vmatpush1.msra.mxu0 %v5086
    %7526 = vmatprep.subr.mxu0 %v5095
    %7527 = vmatpush1.msra.mxu0 %v5094
    %7528 = vmatprep.subr.mxu0 %v5103
    %7529 = vmatpush1.msra.mxu0 %v5102
    %7530 = vmatprep.subr.mxu0 %v5111
    %7531 = vmatpush1.msra.mxu0 %v5110
    %7532 = vmatprep.subr.mxu0 %v5119
    %7533 = vmatpush1.msra.mxu0 %v5118
    %7534 = vmatprep.subr.mxu0 %v5127
    %7535 = vmatpush1.msra.mxu0 %v5126
    %7536 = vmatprep.subr.mxu0 %v5135
    %7537 = vmatpush1.msra.mxu0 %v5134
    %7538 = vmatprep.subr.mxu0 %v5143
    %7539 = vmatpush1.msra.mxu0 %v5142
    %7540 = vmatprep.subr.mxu0 %v5151
    %7541 = vmatpush1.msra.mxu0 %v5150
    %7542 = vmatprep.subr.mxu0 %v5159
    %7543 = vmatpush1.msra.mxu0 %v5158
    %7544 = vmatprep.subr.mxu0 %v5167
    %7545 = vmatpush1.msra.mxu0 %v5166
    %7546 = vmatprep.subr.mxu0 %v5175
    %7547 = vmatpush1.msra.mxu0 %v5174
    %7548 = vmatprep.subr.mxu0 %v5183
    %7549 = vmatpush1.msra.mxu0 %v5182
    %7550 = vmatprep.mubr.f32.mxu0 %v7335
    %7551 = vmatmul.mubr.f32.gmra.mrb[0].mxu0 %v7334
    %v7552 = vpop.f32.mrb[0].mxu0
    %v7553 = vadd.f32 0.0, %v7552
    %v7554 = vpop.f32.mrb[0].mxu0
    %v7555 = vadd.f32 0.0, %v7554
    %7556 = vdwg.mxu0
    %7557 = vmatprep.subr.mxu0 %v4937
    %7558 = vmatpush1.msra.mxu0 %v4936
    %7559 = vmatprep.subr.mxu0 %v4945
    %7560 = vmatpush1.msra.mxu0 %v4944
    %7561 = vmatprep.subr.mxu0 %v4953
    %7562 = vmatpush1.msra.mxu0 %v4952
    %7563 = vmatprep.subr.mxu0 %v4961
    %7564 = vmatpush1.msra.mxu0 %v4960
    %7565 = vmatprep.subr.mxu0 %v4969
    %7566 = vmatpush1.msra.mxu0 %v4968
    %7567 = vmatprep.subr.mxu0 %v4977
    %7568 = vmatpush1.msra.mxu0 %v4976
    %7569 = vmatprep.subr.mxu0 %v4985
    %7570 = vmatpush1.msra.mxu0 %v4984
    %7571 = vmatprep.subr.mxu0 %v4993
    %7572 = vmatpush1.msra.mxu0 %v4992
    %7573 = vmatprep.subr.mxu0 %v5001
    %7574 = vmatpush1.msra.mxu0 %v5000
    %7575 = vmatprep.subr.mxu0 %v5009
    %7576 = vmatpush1.msra.mxu0 %v5008
    %7577 = vmatprep.subr.mxu0 %v5017
    %7578 = vmatpush1.msra.mxu0 %v5016
    %7579 = vmatprep.subr.mxu0 %v5025
    %7580 = vmatpush1.msra.mxu0 %v5024
    %7581 = vmatprep.subr.mxu0 %v5033
    %7582 = vmatpush1.msra.mxu0 %v5032
    %7583 = vmatprep.subr.mxu0 %v5041
    %7584 = vmatpush1.msra.mxu0 %v5040
    %7585 = vmatprep.subr.mxu0 %v5049
    %7586 = vmatpush1.msra.mxu0 %v5048
    %7587 = vmatprep.subr.mxu0 %v5057
    %7588 = vmatpush1.msra.mxu0 %v5056
    %7589 = vmatprep.subr.mxu0 %v5065
    %7590 = vmatpush1.msra.mxu0 %v5064
    %7591 = vmatprep.subr.mxu0 %v5073
    %7592 = vmatpush1.msra.mxu0 %v5072
    %7593 = vmatprep.subr.mxu0 %v5081
    %7594 = vmatpush1.msra.mxu0 %v5080
    %7595 = vmatprep.subr.mxu0 %v5089
    %7596 = vmatpush1.msra.mxu0 %v5088
    %7597 = vmatprep.subr.mxu0 %v5097
    %7598 = vmatpush1.msra.mxu0 %v5096
    %7599 = vmatprep.subr.mxu0 %v5105
    %7600 = vmatpush1.msra.mxu0 %v5104
    %7601 = vmatprep.subr.mxu0 %v5113
    %7602 = vmatpush1.msra.mxu0 %v5112
    %7603 = vmatprep.subr.mxu0 %v5121
    %7604 = vmatpush1.msra.mxu0 %v5120
    %7605 = vmatprep.subr.mxu0 %v5129
    %7606 = vmatpush1.msra.mxu0 %v5128
    %7607 = vmatprep.subr.mxu0 %v5137
    %7608 = vmatpush1.msra.mxu0 %v5136
    %7609 = vmatprep.subr.mxu0 %v5145
    %7610 = vmatpush1.msra.mxu0 %v5144
    %7611 = vmatprep.subr.mxu0 %v5153
    %7612 = vmatpush1.msra.mxu0 %v5152
    %7613 = vmatprep.subr.mxu0 %v5161
    %7614 = vmatpush1.msra.mxu0 %v5160
    %7615 = vmatprep.subr.mxu0 %v5169
    %7616 = vmatpush1.msra.mxu0 %v5168
    %7617 = vmatprep.subr.mxu0 %v5177
    %7618 = vmatpush1.msra.mxu0 %v5176
    %7619 = vmatprep.subr.mxu0 %v5185
    %7620 = vmatpush1.msra.mxu0 %v5184
    %7621 = vmatprep.mubr.f32.mxu0 %v7335
    %7622 = vmatmul.mubr.f32.gmra.mrb[0].mxu0 %v7334
    %v7623 = vpop.f32.mrb[0].mxu0
    %v7624 = vadd.f32 0.0, %v7623
    %v7625 = vpop.f32.mrb[0].mxu0
    %v7626 = vadd.f32 0.0, %v7625
    %7627 = vdwg.mxu0
    %v7628 = vadd.f32 %v7336, %v7411
    %v7629 = vadd.f32 %v7337, %v7413
    %v7630 = vadd.f32 %v7338, %v7482
    %v7631 = vadd.f32 %v7339, %v7484
    %v7632 = vadd.f32 %v7340, %v7553
    %v7633 = vadd.f32 %v7341, %v7555
    %v7634 = vadd.f32 %v7342, %v7624
    %v7635 = vadd.f32 %v7343, %v7626
    %v7636 = vxor.u32 %v7628, 2147483648
    %v7637 = vxor.u32 %v7629, 2147483648
    %v7638 = vmul.f32 %v7636, 1.442695
    %v7639 = vpow.pop %v7638
    %v7640 = vmul.f32 %v7637, 1.442695
    %v7641 = vpow.pop %v7640
    %v7642 = vadd.f32 %v7639, 1.0
    %v7643 = vadd.f32 %v7641, 1.0
    %v7644 = vrcp.pop %v7642
    %v7645 = vmul.f32 1.0, %v7644
    %v7646 = vrcp.pop %v7643
    %v7647 = vmul.f32 1.0, %v7646
    %v7648 = vxor.u32 %v7630, 2147483648
    %v7649 = vxor.u32 %v7631, 2147483648
    %v7650 = vmul.f32 %v7648, 1.442695
    %v7651 = vpow.pop %v7650
    %v7652 = vmul.f32 %v7649, 1.442695
    %v7653 = vpow.pop %v7652
    %v7654 = vadd.f32 %v7651, 1.0
    %v7655 = vadd.f32 %v7653, 1.0
    %v7656 = vrcp.pop %v7654
    %v7657 = vmul.f32 1.0, %v7656
    %v7658 = vrcp.pop %v7655
    %v7659 = vmul.f32 1.0, %v7658
    %v7660 = vtanh.pop %v7632
    %v7661 = vtanh.pop %v7633
    %v7662 = vxor.u32 %v7634, 2147483648
    %v7663 = vxor.u32 %v7635, 2147483648
    %v7664 = vmul.f32 %v7662, 1.442695
    %v7665 = vpow.pop %v7664
    %v7666 = vmul.f32 %v7663, 1.442695
    %v7667 = vpow.pop %v7666
    %v7668 = vadd.f32 %v7665, 1.0
    %v7669 = vadd.f32 %v7667, 1.0
    %v7670 = vrcp.pop %v7668
    %v7671 = vmul.f32 1.0, %v7670
    %v7672 = vrcp.pop %v7669
    %v7673 = vmul.f32 1.0, %v7672
    %v7674 = vld [vmem:[#allocation5] sm:$0xff]
    %v7675 = vld [vmem:[#allocation5 + $0x8] sm:$0xff]
    %v7676 = vmul.f32 %v7657, %v7674
    %v7677 = vmul.f32 %v7659, %v7675
    %v7678 = vmul.f32 %v7645, %v7660
    %v7679 = vmul.f32 %v7647, %v7661
    %v7680 = vadd.f32 %v7676, %v7678
    %v7681 = vadd.f32 %v7677, %v7679
    %v7682 = vtanh.pop %v7680
    %v7683 = vtanh.pop %v7681
    %v7684 = vmul.f32 %v7671, %v7682
    %v7685 = vmul.f32 %v7673, %v7683
    %7686 = vst [vmem:[#allocation4] sm:$0xff] %v7684
    %7687 = vst [vmem:[#allocation4 + $0x8] sm:$0xff] %v7685
    %7688 = vst [vmem:[#allocation5] sm:$0xff] %v7680
    %7689 = vst [vmem:[#allocation5 + $0x8] sm:$0xff] %v7681
    %7690 = vst [vmem:[%s3717] sm:$0xff] %v7684
    %7691 = vst [vmem:[%s3717 + $0x8] sm:$0xff] %v7685
    %v7692 = vld [vmem:[#allocation4] sm:$0xff]
    %v7693 = vld [vmem:[#allocation4 + $0x8] sm:$0xff]
    %v7694 = vld [vmem:[%s3724] sm:$0xff]
    %v7695 = vld [vmem:[%s3724 + $0x8] sm:$0xff]
    %v7696 = vld [vmem:[%s3724 + $0x10] sm:$0xff]
    %v7697 = vld [vmem:[%s3724 + $0x18] sm:$0xff]
    %v7698 = vld [vmem:[%s3724 + $0x20] sm:$0xff]
    %v7699 = vld [vmem:[%s3724 + $0x28] sm:$0xff]
    %v7700 = vld [vmem:[%s3724 + $0x30] sm:$0xff]
    %v7701 = vld [vmem:[%s3724 + $0x38] sm:$0xff]
    %7702 = vmatprep.subr.mxu0 %v4931
    %7703 = vmatpush1.msra.mxu0 %v4930
    %7704 = vmatprep.subr.mxu0 %v4939
    %7705 = vmatpush1.msra.mxu0 %v4938
    %7706 = vmatprep.subr.mxu0 %v4947
    %7707 = vmatpush1.msra.mxu0 %v4946
    %7708 = vmatprep.subr.mxu0 %v4955
    %7709 = vmatpush1.msra.mxu0 %v4954
    %7710 = vmatprep.subr.mxu0 %v4963
    %7711 = vmatpush1.msra.mxu0 %v4962
    %7712 = vmatprep.subr.mxu0 %v4971
    %7713 = vmatpush1.msra.mxu0 %v4970
    %7714 = vmatprep.subr.mxu0 %v4979
    %7715 = vmatpush1.msra.mxu0 %v4978
    %7716 = vmatprep.subr.mxu0 %v4987
    %7717 = vmatpush1.msra.mxu0 %v4986
    %7718 = vmatprep.subr.mxu0 %v4995
    %7719 = vmatpush1.msra.mxu0 %v4994
    %7720 = vmatprep.subr.mxu0 %v5003
    %7721 = vmatpush1.msra.mxu0 %v5002
    %7722 = vmatprep.subr.mxu0 %v5011
    %7723 = vmatpush1.msra.mxu0 %v5010
    %7724 = vmatprep.subr.mxu0 %v5019
    %7725 = vmatpush1.msra.mxu0 %v5018
    %7726 = vmatprep.subr.mxu0 %v5027
    %7727 = vmatpush1.msra.mxu0 %v5026
    %7728 = vmatprep.subr.mxu0 %v5035
    %7729 = vmatpush1.msra.mxu0 %v5034
    %7730 = vmatprep.subr.mxu0 %v5043
    %7731 = vmatpush1.msra.mxu0 %v5042
    %7732 = vmatprep.subr.mxu0 %v5051
    %7733 = vmatpush1.msra.mxu0 %v5050
    %7734 = vmatprep.subr.mxu0 %v5059
    %7735 = vmatpush1.msra.mxu0 %v5058
    %7736 = vmatprep.subr.mxu0 %v5067
    %7737 = vmatpush1.msra.mxu0 %v5066
    %7738 = vmatprep.subr.mxu0 %v5075
    %7739 = vmatpush1.msra.mxu0 %v5074
    %7740 = vmatprep.subr.mxu0 %v5083
    %7741 = vmatpush1.msra.mxu0 %v5082
    %7742 = vmatprep.subr.mxu0 %v5091
    %7743 = vmatpush1.msra.mxu0 %v5090
    %7744 = vmatprep.subr.mxu0 %v5099
    %7745 = vmatpush1.msra.mxu0 %v5098
    %7746 = vmatprep.subr.mxu0 %v5107
    %7747 = vmatpush1.msra.mxu0 %v5106
    %7748 = vmatprep.subr.mxu0 %v5115
    %7749 = vmatpush1.msra.mxu0 %v5114
    %7750 = vmatprep.subr.mxu0 %v5123
    %7751 = vmatpush1.msra.mxu0 %v5122
    %7752 = vmatprep.subr.mxu0 %v5131
    %7753 = vmatpush1.msra.mxu0 %v5130
    %7754 = vmatprep.subr.mxu0 %v5139
    %7755 = vmatpush1.msra.mxu0 %v5138
    %7756 = vmatprep.subr.mxu0 %v5147
    %7757 = vmatpush1.msra.mxu0 %v5146
    %7758 = vmatprep.subr.mxu0 %v5155
    %7759 = vmatpush1.msra.mxu0 %v5154
    %7760 = vmatprep.subr.mxu0 %v5163
    %7761 = vmatpush1.msra.mxu0 %v5162
    %7762 = vmatprep.subr.mxu0 %v5171
    %7763 = vmatpush1.msra.mxu0 %v5170
    %7764 = vmatprep.subr.mxu0 %v5179
    %7765 = vmatpush1.msra.mxu0 %v5178
    %7766 = vmatprep.mubr.f32.mxu0 %v7693
    %7767 = vmatmul.mubr.f32.gmra.mrb[0].mxu0 %v7692
    %v7768 = vpop.f32.mrb[0].mxu0
    %v7769 = vadd.f32 0.0, %v7768
    %v7770 = vpop.f32.mrb[0].mxu0
    %v7771 = vadd.f32 0.0, %v7770
    %7772 = vdwg.mxu0
    %7773 = vmatprep.subr.mxu0 %v4933
    %7774 = vmatpush1.msra.mxu0 %v4932
    %7775 = vmatprep.subr.mxu0 %v4941
    %7776 = vmatpush1.msra.mxu0 %v4940
    %7777 = vmatprep.subr.mxu0 %v4949
    %7778 = vmatpush1.msra.mxu0 %v4948
    %7779 = vmatprep.subr.mxu0 %v4957
    %7780 = vmatpush1.msra.mxu0 %v4956
    %7781 = vmatprep.subr.mxu0 %v4965
    %7782 = vmatpush1.msra.mxu0 %v4964
    %7783 = vmatprep.subr.mxu0 %v4973
    %7784 = vmatpush1.msra.mxu0 %v4972
    %7785 = vmatprep.subr.mxu0 %v4981
    %7786 = vmatpush1.msra.mxu0 %v4980
    %7787 = vmatprep.subr.mxu0 %v4989
    %7788 = vmatpush1.msra.mxu0 %v4988
    %7789 = vmatprep.subr.mxu0 %v4997
    %7790 = vmatpush1.msra.mxu0 %v4996
    %7791 = vmatprep.subr.mxu0 %v5005
    %7792 = vmatpush1.msra.mxu0 %v5004
    %7793 = vmatprep.subr.mxu0 %v5013
    %7794 = vmatpush1.msra.mxu0 %v5012
    %7795 = vmatprep.subr.mxu0 %v5021
    %7796 = vmatpush1.msra.mxu0 %v5020
    %7797 = vmatprep.subr.mxu0 %v5029
    %7798 = vmatpush1.msra.mxu0 %v5028
    %7799 = vmatprep.subr.mxu0 %v5037
    %7800 = vmatpush1.msra.mxu0 %v5036
    %7801 = vmatprep.subr.mxu0 %v5045
    %7802 = vmatpush1.msra.mxu0 %v5044
    %7803 = vmatprep.subr.mxu0 %v5053
    %7804 = vmatpush1.msra.mxu0 %v5052
    %7805 = vmatprep.subr.mxu0 %v5061
    %7806 = vmatpush1.msra.mxu0 %v5060
    %7807 = vmatprep.subr.mxu0 %v5069
    %7808 = vmatpush1.msra.mxu0 %v5068
    %7809 = vmatprep.subr.mxu0 %v5077
    %7810 = vmatpush1.msra.mxu0 %v5076
    %7811 = vmatprep.subr.mxu0 %v5085
    %7812 = vmatpush1.msra.mxu0 %v5084
    %7813 = vmatprep.subr.mxu0 %v5093
    %7814 = vmatpush1.msra.mxu0 %v5092
    %7815 = vmatprep.subr.mxu0 %v5101
    %7816 = vmatpush1.msra.mxu0 %v5100
    %7817 = vmatprep.subr.mxu0 %v5109
    %7818 = vmatpush1.msra.mxu0 %v5108
    %7819 = vmatprep.subr.mxu0 %v5117
    %7820 = vmatpush1.msra.mxu0 %v5116
    %7821 = vmatprep.subr.mxu0 %v5125
    %7822 = vmatpush1.msra.mxu0 %v5124
    %7823 = vmatprep.subr.mxu0 %v5133
    %7824 = vmatpush1.msra.mxu0 %v5132
    %7825 = vmatprep.subr.mxu0 %v5141
    %7826 = vmatpush1.msra.mxu0 %v5140
    %7827 = vmatprep.subr.mxu0 %v5149
    %7828 = vmatpush1.msra.mxu0 %v5148
    %7829 = vmatprep.subr.mxu0 %v5157
    %7830 = vmatpush1.msra.mxu0 %v5156
    %7831 = vmatprep.subr.mxu0 %v5165
    %7832 = vmatpush1.msra.mxu0 %v5164
    %7833 = vmatprep.subr.mxu0 %v5173
    %7834 = vmatpush1.msra.mxu0 %v5172
    %7835 = vmatprep.subr.mxu0 %v5181
    %7836 = vmatpush1.msra.mxu0 %v5180
    %7837 = vmatprep.mubr.f32.mxu0 %v7693
    %7838 = vmatmul.mubr.f32.gmra.mrb[0].mxu0 %v7692
    %v7839 = vpop.f32.mrb[0].mxu0
    %v7840 = vadd.f32 0.0, %v7839
    %v7841 = vpop.f32.mrb[0].mxu0
    %v7842 = vadd.f32 0.0, %v7841
    %7843 = vdwg.mxu0
    %7844 = vmatprep.subr.mxu0 %v4935
    %7845 = vmatpush1.msra.mxu0 %v4934
    %7846 = vmatprep.subr.mxu0 %v4943
    %7847 = vmatpush1.msra.mxu0 %v4942
    %7848 = vmatprep.subr.mxu0 %v4951
    %7849 = vmatpush1.msra.mxu0 %v4950
    %7850 = vmatprep.subr.mxu0 %v4959
    %7851 = vmatpush1.msra.mxu0 %v4958
    %7852 = vmatprep.subr.mxu0 %v4967
    %7853 = vmatpush1.msra.mxu0 %v4966
    %7854 = vmatprep.subr.mxu0 %v4975
    %7855 = vmatpush1.msra.mxu0 %v4974
    %7856 = vmatprep.subr.mxu0 %v4983
    %7857 = vmatpush1.msra.mxu0 %v4982
    %7858 = vmatprep.subr.mxu0 %v4991
    %7859 = vmatpush1.msra.mxu0 %v4990
    %7860 = vmatprep.subr.mxu0 %v4999
    %7861 = vmatpush1.msra.mxu0 %v4998
    %7862 = vmatprep.subr.mxu0 %v5007
    %7863 = vmatpush1.msra.mxu0 %v5006
    %7864 = vmatprep.subr.mxu0 %v5015
    %7865 = vmatpush1.msra.mxu0 %v5014
    %7866 = vmatprep.subr.mxu0 %v5023
    %7867 = vmatpush1.msra.mxu0 %v5022
    %7868 = vmatprep.subr.mxu0 %v5031
    %7869 = vmatpush1.msra.mxu0 %v5030
    %7870 = vmatprep.subr.mxu0 %v5039
    %7871 = vmatpush1.msra.mxu0 %v5038
    %7872 = vmatprep.subr.mxu0 %v5047
    %7873 = vmatpush1.msra.mxu0 %v5046
    %7874 = vmatprep.subr.mxu0 %v5055
    %7875 = vmatpush1.msra.mxu0 %v5054
    %7876 = vmatprep.subr.mxu0 %v5063
    %7877 = vmatpush1.msra.mxu0 %v5062
    %7878 = vmatprep.subr.mxu0 %v5071
    %7879 = vmatpush1.msra.mxu0 %v5070
    %7880 = vmatprep.subr.mxu0 %v5079
    %7881 = vmatpush1.msra.mxu0 %v5078
    %7882 = vmatprep.subr.mxu0 %v5087
    %7883 = vmatpush1.msra.mxu0 %v5086
    %7884 = vmatprep.subr.mxu0 %v5095
    %7885 = vmatpush1.msra.mxu0 %v5094
    %7886 = vmatprep.subr.mxu0 %v5103
    %7887 = vmatpush1.msra.mxu0 %v5102
    %7888 = vmatprep.subr.mxu0 %v5111
    %7889 = vmatpush1.msra.mxu0 %v5110
    %7890 = vmatprep.subr.mxu0 %v5119
    %7891 = vmatpush1.msra.mxu0 %v5118
    %7892 = vmatprep.subr.mxu0 %v5127
    %7893 = vmatpush1.msra.mxu0 %v5126
    %7894 = vmatprep.subr.mxu0 %v5135
    %7895 = vmatpush1.msra.mxu0 %v5134
    %7896 = vmatprep.subr.mxu0 %v5143
    %7897 = vmatpush1.msra.mxu0 %v5142
    %7898 = vmatprep.subr.mxu0 %v5151
    %7899 = vmatpush1.msra.mxu0 %v5150
    %7900 = vmatprep.subr.mxu0 %v5159
    %7901 = vmatpush1.msra.mxu0 %v5158
    %7902 = vmatprep.subr.mxu0 %v5167
    %7903 = vmatpush1.msra.mxu0 %v5166
    %7904 = vmatprep.subr.mxu0 %v5175
    %7905 = vmatpush1.msra.mxu0 %v5174
    %7906 = vmatprep.subr.mxu0 %v5183
    %7907 = vmatpush1.msra.mxu0 %v5182
    %7908 = vmatprep.mubr.f32.mxu0 %v7693
    %7909 = vmatmul.mubr.f32.gmra.mrb[0].mxu0 %v7692
    %v7910 = vpop.f32.mrb[0].mxu0
    %v7911 = vadd.f32 0.0, %v7910
    %v7912 = vpop.f32.mrb[0].mxu0
    %v7913 = vadd.f32 0.0, %v7912
    %7914 = vdwg.mxu0
    %7915 = vmatprep.subr.mxu0 %v4937
    %7916 = vmatpush1.msra.mxu0 %v4936
    %7917 = vmatprep.subr.mxu0 %v4945
    %7918 = vmatpush1.msra.mxu0 %v4944
    %7919 = vmatprep.subr.mxu0 %v4953
    %7920 = vmatpush1.msra.mxu0 %v4952
    %7921 = vmatprep.subr.mxu0 %v4961
    %7922 = vmatpush1.msra.mxu0 %v4960
    %7923 = vmatprep.subr.mxu0 %v4969
    %7924 = vmatpush1.msra.mxu0 %v4968
    %7925 = vmatprep.subr.mxu0 %v4977
    %7926 = vmatpush1.msra.mxu0 %v4976
    %7927 = vmatprep.subr.mxu0 %v4985
    %7928 = vmatpush1.msra.mxu0 %v4984
    %7929 = vmatprep.subr.mxu0 %v4993
    %7930 = vmatpush1.msra.mxu0 %v4992
    %7931 = vmatprep.subr.mxu0 %v5001
    %7932 = vmatpush1.msra.mxu0 %v5000
    %7933 = vmatprep.subr.mxu0 %v5009
    %7934 = vmatpush1.msra.mxu0 %v5008
    %7935 = vmatprep.subr.mxu0 %v5017
    %7936 = vmatpush1.msra.mxu0 %v5016
    %7937 = vmatprep.subr.mxu0 %v5025
    %7938 = vmatpush1.msra.mxu0 %v5024
    %7939 = vmatprep.subr.mxu0 %v5033
    %7940 = vmatpush1.msra.mxu0 %v5032
    %7941 = vmatprep.subr.mxu0 %v5041
    %7942 = vmatpush1.msra.mxu0 %v5040
    %7943 = vmatprep.subr.mxu0 %v5049
    %7944 = vmatpush1.msra.mxu0 %v5048
    %7945 = vmatprep.subr.mxu0 %v5057
    %7946 = vmatpush1.msra.mxu0 %v5056
    %7947 = vmatprep.subr.mxu0 %v5065
    %7948 = vmatpush1.msra.mxu0 %v5064
    %7949 = vmatprep.subr.mxu0 %v5073
    %7950 = vmatpush1.msra.mxu0 %v5072
    %7951 = vmatprep.subr.mxu0 %v5081
    %7952 = vmatpush1.msra.mxu0 %v5080
    %7953 = vmatprep.subr.mxu0 %v5089
    %7954 = vmatpush1.msra.mxu0 %v5088
    %7955 = vmatprep.subr.mxu0 %v5097
    %7956 = vmatpush1.msra.mxu0 %v5096
    %7957 = vmatprep.subr.mxu0 %v5105
    %7958 = vmatpush1.msra.mxu0 %v5104
    %7959 = vmatprep.subr.mxu0 %v5113
    %7960 = vmatpush1.msra.mxu0 %v5112
    %7961 = vmatprep.subr.mxu0 %v5121
    %7962 = vmatpush1.msra.mxu0 %v5120
    %7963 = vmatprep.subr.mxu0 %v5129
    %7964 = vmatpush1.msra.mxu0 %v5128
    %7965 = vmatprep.subr.mxu0 %v5137
    %7966 = vmatpush1.msra.mxu0 %v5136
    %7967 = vmatprep.subr.mxu0 %v5145
    %7968 = vmatpush1.msra.mxu0 %v5144
    %7969 = vmatprep.subr.mxu0 %v5153
    %7970 = vmatpush1.msra.mxu0 %v5152
    %7971 = vmatprep.subr.mxu0 %v5161
    %7972 = vmatpush1.msra.mxu0 %v5160
    %7973 = vmatprep.subr.mxu0 %v5169
    %7974 = vmatpush1.msra.mxu0 %v5168
    %7975 = vmatprep.subr.mxu0 %v5177
    %7976 = vmatpush1.msra.mxu0 %v5176
    %7977 = vmatprep.subr.mxu0 %v5185
    %7978 = vmatpush1.msra.mxu0 %v5184
    %7979 = vmatprep.mubr.f32.mxu0 %v7693
    %7980 = vmatmul.mubr.f32.gmra.mrb[0].mxu0 %v7692
    %v7981 = vpop.f32.mrb[0].mxu0
    %v7982 = vadd.f32 0.0, %v7981
    %v7983 = vpop.f32.mrb[0].mxu0
    %v7984 = vadd.f32 0.0, %v7983
    %7985 = vdwg.mxu0
    %v7986 = vadd.f32 %v7694, %v7769
    %v7987 = vadd.f32 %v7695, %v7771
    %v7988 = vadd.f32 %v7696, %v7840
    %v7989 = vadd.f32 %v7697, %v7842
    %v7990 = vadd.f32 %v7698, %v7911
    %v7991 = vadd.f32 %v7699, %v7913
    %v7992 = vadd.f32 %v7700, %v7982
    %v7993 = vadd.f32 %v7701, %v7984
    %v7994 = vxor.u32 %v7986, 2147483648
    %v7995 = vxor.u32 %v7987, 2147483648
    %v7996 = vmul.f32 %v7994, 1.442695
    %v7997 = vpow.pop %v7996
    %v7998 = vmul.f32 %v7995, 1.442695
    %v7999 = vpow.pop %v7998
    %v8000 = vadd.f32 %v7997, 1.0
    %v8001 = vadd.f32 %v7999, 1.0
    %v8002 = vrcp.pop %v8000
    %v8003 = vmul.f32 1.0, %v8002
    %v8004 = vrcp.pop %v8001
    %v8005 = vmul.f32 1.0, %v8004
    %v8006 = vxor.u32 %v7988, 2147483648
    %v8007 = vxor.u32 %v7989, 2147483648
    %v8008 = vmul.f32 %v8006, 1.442695
    %v8009 = vpow.pop %v8008
    %v8010 = vmul.f32 %v8007, 1.442695
    %v8011 = vpow.pop %v8010
    %v8012 = vadd.f32 %v8009, 1.0
    %v8013 = vadd.f32 %v8011, 1.0
    %v8014 = vrcp.pop %v8012
    %v8015 = vmul.f32 1.0, %v8014
    %v8016 = vrcp.pop %v8013
    %v8017 = vmul.f32 1.0, %v8016
    %v8018 = vtanh.pop %v7990
    %v8019 = vtanh.pop %v7991
    %v8020 = vxor.u32 %v7992, 2147483648
    %v8021 = vxor.u32 %v7993, 2147483648
    %v8022 = vmul.f32 %v8020, 1.442695
    %v8023 = vpow.pop %v8022
    %v8024 = vmul.f32 %v8021, 1.442695
    %v8025 = vpow.pop %v8024
    %v8026 = vadd.f32 %v8023, 1.0
    %v8027 = vadd.f32 %v8025, 1.0
    %v8028 = vrcp.pop %v8026
    %v8029 = vmul.f32 1.0, %v8028
    %v8030 = vrcp.pop %v8027
    %v8031 = vmul.f32 1.0, %v8030
    %v8032 = vld [vmem:[#allocation5] sm:$0xff]
    %v8033 = vld [vmem:[#allocation5 + $0x8] sm:$0xff]
    %v8034 = vmul.f32 %v8015, %v8032
    %v8035 = vmul.f32 %v8017, %v8033
    %v8036 = vmul.f32 %v8003, %v8018
    %v8037 = vmul.f32 %v8005, %v8019
    %v8038 = vadd.f32 %v8034, %v8036
    %v8039 = vadd.f32 %v8035, %v8037
    %v8040 = vtanh.pop %v8038
    %v8041 = vtanh.pop %v8039
    %v8042 = vmul.f32 %v8029, %v8040
    %v8043 = vmul.f32 %v8031, %v8041
    %8044 = vst [vmem:[#allocation4] sm:$0xff] %v8042
    %8045 = vst [vmem:[#allocation4 + $0x8] sm:$0xff] %v8043
    %8046 = vst [vmem:[#allocation5] sm:$0xff] %v8038
    %8047 = vst [vmem:[#allocation5 + $0x8] sm:$0xff] %v8039
    %8048 = vst [vmem:[%s4081] sm:$0xff] %v8042
    %8049 = vst [vmem:[%s4081 + $0x8] sm:$0xff] %v8043
    %v8050 = vld [vmem:[#allocation4] sm:$0xff]
    %v8051 = vld [vmem:[#allocation4 + $0x8] sm:$0xff]
    %8052 = vst [vmem:[#allocation31] sm:$0xff] %v8050
    %8053 = vst [vmem:[#allocation31 + $0x8] sm:$0xff] %v8051
    %v8054 = vld [vmem:[#allocation5] sm:$0xff]
    %v8055 = vld [vmem:[#allocation5 + $0x8] sm:$0xff]
    %8056 = vst [vmem:[#allocation33] sm:$0xff] %v8054
    %8057 = vst [vmem:[#allocation33 + $0x8] sm:$0xff] %v8055
    %v8058 = vld [vmem:[#allocation3] sm:$0xff]
    %v8059 = vld [vmem:[#allocation3 + $0x8] sm:$0xff]
    %v8060 = vld [vmem:[#allocation3 + $0x10] sm:$0xff]
    %v8061 = vld [vmem:[#allocation3 + $0x18] sm:$0xff]
    %v8062 = vld [vmem:[#allocation3 + $0x20] sm:$0xff]
    %v8063 = vld [vmem:[#allocation3 + $0x28] sm:$0xff]
    %v8064 = vld [vmem:[#allocation3 + $0x30] sm:$0xff]
    %v8065 = vld [vmem:[#allocation3 + $0x38] sm:$0xff]
    %v8066 = vld [vmem:[#allocation3 + $0x40] sm:$0xff]
    %v8067 = vld [vmem:[#allocation3 + $0x48] sm:$0xff]
    %v8068 = vld [vmem:[#allocation3 + $0x50] sm:$0xff]
    %v8069 = vld [vmem:[#allocation3 + $0x58] sm:$0xff]
    %v8070 = vld [vmem:[#allocation3 + $0x60] sm:$0xff]
    %v8071 = vld [vmem:[#allocation3 + $0x68] sm:$0xff]
    %v8072 = vld [vmem:[#allocation3 + $0x70] sm:$0xff]
    %v8073 = vld [vmem:[#allocation3 + $0x78] sm:$0xff]
    %v8074 = vld [vmem:[#allocation24] sm:$0xff]
    %v8075 = vld [vmem:[#allocation24 + $0x8] sm:$0xff]
    %v8076 = vld [vmem:[#allocation24 + $0x10] sm:$0xff]
    %v8077 = vld [vmem:[#allocation24 + $0x18] sm:$0xff]
    %v8078 = vld [vmem:[#allocation24 + $0x20] sm:$0xff]
    %v8079 = vld [vmem:[#allocation24 + $0x28] sm:$0xff]
    %v8080 = vld [vmem:[#allocation24 + $0x30] sm:$0xff]
    %v8081 = vld [vmem:[#allocation24 + $0x38] sm:$0xff]
    %v8082 = vld [vmem:[#allocation24 + $0x40] sm:$0xff]
    %v8083 = vld [vmem:[#allocation24 + $0x48] sm:$0xff]
    %v8084 = vld [vmem:[#allocation24 + $0x50] sm:$0xff]
    %v8085 = vld [vmem:[#allocation24 + $0x58] sm:$0xff]
    %v8086 = vld [vmem:[#allocation24 + $0x60] sm:$0xff]
    %v8087 = vld [vmem:[#allocation24 + $0x68] sm:$0xff]
    %v8088 = vld [vmem:[#allocation24 + $0x70] sm:$0xff]
    %v8089 = vld [vmem:[#allocation24 + $0x78] sm:$0xff]
    %v8090 = vld [vmem:[#allocation24 + $0x80] sm:$0xff]
    %v8091 = vld [vmem:[#allocation24 + $0x88] sm:$0xff]
    %v8092 = vld [vmem:[#allocation24 + $0x90] sm:$0xff]
    %v8093 = vld [vmem:[#allocation24 + $0x98] sm:$0xff]
    %v8094 = vld [vmem:[#allocation24 + $0xa0] sm:$0xff]
    %v8095 = vld [vmem:[#allocation24 + $0xa8] sm:$0xff]
    %v8096 = vld [vmem:[#allocation24 + $0xb0] sm:$0xff]
    %v8097 = vld [vmem:[#allocation24 + $0xb8] sm:$0xff]
    %v8098 = vld [vmem:[#allocation24 + $0xc0] sm:$0xff]
    %v8099 = vld [vmem:[#allocation24 + $0xc8] sm:$0xff]
    %v8100 = vld [vmem:[#allocation24 + $0xd0] sm:$0xff]
    %v8101 = vld [vmem:[#allocation24 + $0xd8] sm:$0xff]
    %v8102 = vld [vmem:[#allocation24 + $0xe0] sm:$0xff]
    %v8103 = vld [vmem:[#allocation24 + $0xe8] sm:$0xff]
    %v8104 = vld [vmem:[#allocation24 + $0xf0] sm:$0xff]
    %v8105 = vld [vmem:[#allocation24 + $0xf8] sm:$0xff]
    %v8106 = vld [vmem:[#allocation26] sm:$0x1]
    %v8108 = vlaneseq
    %v8109 = vshrl.u32 %v8108, 7
    %v8110 = vsub.s32 0, %v8109
    %v8111 = vrot.slane %v8106, %v8110
    %8113 = vmatprep.subr.mxu0 0.0
    %8114 = vmatpush1.msra.mxu0 %v8074
    %8115 = vmatprep.subr.mxu0 0.0
    %8116 = vmatpush1.msra.mxu0 %v8075
    %8117 = vmatprep.subr.mxu0 0.0
    %8118 = vmatpush1.msra.mxu0 %v8076
    %8119 = vmatprep.subr.mxu0 0.0
    %8120 = vmatpush1.msra.mxu0 %v8077
    %8121 = vmatprep.subr.mxu0 0.0
    %8122 = vmatpush1.msra.mxu0 %v8078
    %8123 = vmatprep.subr.mxu0 0.0
    %8124 = vmatpush1.msra.mxu0 %v8079
    %8125 = vmatprep.subr.mxu0 0.0
    %8126 = vmatpush1.msra.mxu0 %v8080
    %8127 = vmatprep.subr.mxu0 0.0
    %8128 = vmatpush1.msra.mxu0 %v8081
    %8129 = vmatprep.subr.mxu0 0.0
    %8130 = vmatpush1.msra.mxu0 %v8082
    %8131 = vmatprep.subr.mxu0 0.0
    %8132 = vmatpush1.msra.mxu0 %v8083
    %8133 = vmatprep.subr.mxu0 0.0
    %8134 = vmatpush1.msra.mxu0 %v8084
    %8135 = vmatprep.subr.mxu0 0.0
    %8136 = vmatpush1.msra.mxu0 %v8085
    %8137 = vmatprep.subr.mxu0 0.0
    %8138 = vmatpush1.msra.mxu0 %v8086
    %8139 = vmatprep.subr.mxu0 0.0
    %8140 = vmatpush1.msra.mxu0 %v8087
    %8141 = vmatprep.subr.mxu0 0.0
    %8142 = vmatpush1.msra.mxu0 %v8088
    %8143 = vmatprep.subr.mxu0 0.0
    %8144 = vmatpush1.msra.mxu0 %v8089
    %8145 = vmatprep.subr.mxu0 0.0
    %8146 = vmatpush1.msra.mxu0 %v8090
    %8147 = vmatprep.subr.mxu0 0.0
    %8148 = vmatpush1.msra.mxu0 %v8091
    %8149 = vmatprep.subr.mxu0 0.0
    %8150 = vmatpush1.msra.mxu0 %v8092
    %8151 = vmatprep.subr.mxu0 0.0
    %8152 = vmatpush1.msra.mxu0 %v8093
    %8153 = vmatprep.subr.mxu0 0.0
    %8154 = vmatpush1.msra.mxu0 %v8094
    %8155 = vmatprep.subr.mxu0 0.0
    %8156 = vmatpush1.msra.mxu0 %v8095
    %8157 = vmatprep.subr.mxu0 0.0
    %8158 = vmatpush1.msra.mxu0 %v8096
    %8159 = vmatprep.subr.mxu0 0.0
    %8160 = vmatpush1.msra.mxu0 %v8097
    %8161 = vmatprep.subr.mxu0 0.0
    %8162 = vmatpush1.msra.mxu0 %v8098
    %8163 = vmatprep.subr.mxu0 0.0
    %8164 = vmatpush1.msra.mxu0 %v8099
    %8165 = vmatprep.subr.mxu0 0.0
    %8166 = vmatpush1.msra.mxu0 %v8100
    %8167 = vmatprep.subr.mxu0 0.0
    %8168 = vmatpush1.msra.mxu0 %v8101
    %8169 = vmatprep.subr.mxu0 0.0
    %8170 = vmatpush1.msra.mxu0 %v8102
    %8171 = vmatprep.subr.mxu0 0.0
    %8172 = vmatpush1.msra.mxu0 %v8103
    %8173 = vmatprep.subr.mxu0 0.0
    %8174 = vmatpush1.msra.mxu0 %v8104
    %8175 = vmatprep.subr.mxu0 0.0
    %8176 = vmatpush1.msra.mxu0 %v8105
    %8177 = vmatprep.mubr.f32.mxu0 %v8059
    %8178 = vmatmul.mubr.f32.gmra.mrb[0].mxu0 %v8058
    %v8179 = vpop.f32.mrb[0].mxu0
    %v8180 = vadd.f32 %v8111, %v8179
    %v8181 = vpop.f32.mrb[0].mxu0
    %8182 = vmatprep.mubr.f32.mxu0 %v8061
    %8183 = vmatmul.mubr.f32.gmra.mrb[0].mxu0 %v8060
    %v8184 = vpop.f32.mrb[0].mxu0
    %v8185 = vadd.f32 %v8111, %v8184
    %v8186 = vpop.f32.mrb[0].mxu0
    %8187 = vmatprep.mubr.f32.mxu0 %v8063
    %8188 = vmatmul.mubr.f32.gmra.mrb[0].mxu0 %v8062
    %v8189 = vpop.f32.mrb[0].mxu0
    %v8190 = vadd.f32 %v8111, %v8189
    %v8191 = vpop.f32.mrb[0].mxu0
    %8192 = vmatprep.mubr.f32.mxu0 %v8065
    %8193 = vmatmul.mubr.f32.gmra.mrb[0].mxu0 %v8064
    %v8194 = vpop.f32.mrb[0].mxu0
    %v8195 = vadd.f32 %v8111, %v8194
    %v8196 = vpop.f32.mrb[0].mxu0
    %8197 = vmatprep.mubr.f32.mxu0 %v8067
    %8198 = vmatmul.mubr.f32.gmra.mrb[0].mxu0 %v8066
    %v8199 = vpop.f32.mrb[0].mxu0
    %v8200 = vadd.f32 %v8111, %v8199
    %v8201 = vpop.f32.mrb[0].mxu0
    %8202 = vmatprep.mubr.f32.mxu0 %v8069
    %8203 = vmatmul.mubr.f32.gmra.mrb[0].mxu0 %v8068
    %v8204 = vpop.f32.mrb[0].mxu0
    %v8205 = vadd.f32 %v8111, %v8204
    %v8206 = vpop.f32.mrb[0].mxu0
    %8207 = vmatprep.mubr.f32.mxu0 %v8071
    %8208 = vmatmul.mubr.f32.gmra.mrb[0].mxu0 %v8070
    %v8209 = vpop.f32.mrb[0].mxu0
    %v8210 = vadd.f32 %v8111, %v8209
    %v8211 = vpop.f32.mrb[0].mxu0
    %8212 = vmatprep.mubr.f32.mxu0 %v8073
    %8213 = vmatmul.mubr.f32.gmra.mrb[0].mxu0 %v8072
    %v8214 = vpop.f32.mrb[0].mxu0
    %v8215 = vadd.f32 %v8111, %v8214
    %v8216 = vpop.f32.mrb[0].mxu0
    %8217 = vdwg.mxu0
    %8218 = vst [vmem:[#allocation27] sm:$0xff] %v8180
    %8219 = vst [vmem:[#allocation27 + $0x8] sm:$0xff] %v8185
    %8220 = vst [vmem:[#allocation27 + $0x10] sm:$0xff] %v8190
    %8221 = vst [vmem:[#allocation27 + $0x18] sm:$0xff] %v8195
    %8222 = vst [vmem:[#allocation27 + $0x20] sm:$0xff] %v8200
    %8223 = vst [vmem:[#allocation27 + $0x28] sm:$0xff] %v8205
    %8224 = vst [vmem:[#allocation27 + $0x30] sm:$0xff] %v8210
    %8225 = vst [vmem:[#allocation27 + $0x38] sm:$0xff] %v8215
    // Predicated region
    $region106: #{lstm_forward.1} parent=1 // pred_check
      _
    $region107: #{lstm_forward.1} parent=1 // pred_check_branch
      %8227 = sbr.rel (0) target = $region109
    $region108: #{lstm_forward.1} parent=1 // pred_region
      %s8229 = ssub.s32 1024, 1024
      %8230 = vsyncadd [#allocation8], %s8229
      %s8231 = sshll.u32 [#allocation27], 4
      %s8232 = int_to_ptr.vmem [resolvable:$true] %s8231
      %8237 = dma.vmem_to_hbm [thread:$0]  %s8232, 1024, %s13, [#allocation8], 128, 128, 8
    $region109: #{lstm_forward.1} parent=1 // pred_fallthru
      _
    // Predicated region
    $region110: #{lstm_forward.1} parent=1 // pred_check
      _
    $region111: #{lstm_forward.1} parent=1 // pred_check_branch
      %8239 = sbr.rel (0) target = $region113
    $region112: #{lstm_forward.1} parent=1 // pred_region
      %s8241 = ssub.s32 256, 256
      %8242 = vsyncadd [#allocation29], %s8241
      %s8244 = sshll.u32 [#allocation28], 4
      %s8245 = int_to_ptr.vmem [resolvable:$true] %s8244
      %8247 = dma.vmem_to_hbm [thread:$0]  %s8245, 256, %s14, [#allocation29]
    $region113: #{lstm_forward.1} parent=1 // pred_fallthru
      _
    // Predicated region
    $region114: #{lstm_forward.1} parent=1 // pred_check
      _
    $region115: #{lstm_forward.1} parent=1 // pred_check_branch
      %8249 = sbr.rel (0) target = $region117
    $region116: #{lstm_forward.1} parent=1 // pred_region
      %s8251 = ssub.s32 256, 256
      %8252 = vsyncadd [#allocation29], %s8251
      %s8254 = sshll.u32 [#allocation30], 4
      %s8255 = int_to_ptr.vmem [resolvable:$true] %s8254
      %8257 = dma.vmem_to_hbm [thread:$0]  %s8255, 256, %s15, [#allocation29]
    $region117: #{lstm_forward.1} parent=1 // pred_fallthru
      _
    // Predicated region
    $region118: #{lstm_forward.1} parent=1 // pred_check
      _
    $region119: #{lstm_forward.1} parent=1 // pred_check_branch
      %8259 = sbr.rel (0) target = $region121
    $region120: #{lstm_forward.1} parent=1 // pred_region
      %s8261 = ssub.s32 256, 256
      %8262 = vsyncadd [#allocation32], %s8261
      %s8264 = sshll.u32 [#allocation31], 4
      %s8265 = int_to_ptr.vmem [resolvable:$true] %s8264
      %8267 = dma.vmem_to_hbm [thread:$0]  %s8265, 256, %s16, [#allocation32]
    $region121: #{lstm_forward.1} parent=1 // pred_fallthru
      _
    // Predicated region
    $region122: #{lstm_forward.1} parent=1 // pred_check
      _
    $region123: #{lstm_forward.1} parent=1 // pred_check_branch
      %8269 = sbr.rel (0) target = $region125
    $region124: #{lstm_forward.1} parent=1 // pred_region
      %s8271 = ssub.s32 256, 256
      %8272 = vsyncadd [#allocation32], %s8271
      %s8274 = sshll.u32 [#allocation33], 4
      %s8275 = int_to_ptr.vmem [resolvable:$true] %s8274
      %8277 = dma.vmem_to_hbm [thread:$0]  %s8275, 256, %s17, [#allocation32]
    $region125: #{lstm_forward.1} parent=1 // pred_fallthru
      _
    // Predicated region
    $region126: #{lstm_forward.1} parent=1 // pred_check
      _
    $region127: #{lstm_forward.1} parent=1 // pred_check_branch
      %8279 = sbr.rel (0) target = $region129
    $region128: #{lstm_forward.1} parent=1 // pred_region
      %8280 = dma.done [#allocation8], 1024
    $region129: #{lstm_forward.1} parent=1 // pred_fallthru
      _
    // Predicated region
    $region130: #{lstm_forward.1} parent=1 // pred_check
      _
    $region131: #{lstm_forward.1} parent=1 // pred_check_branch
      %8282 = sbr.rel (0) target = $region133
    $region132: #{lstm_forward.1} parent=1 // pred_region
      %8283 = dma.done [#allocation29], 256
    $region133: #{lstm_forward.1} parent=1 // pred_fallthru
      _
    // Predicated region
    $region134: #{lstm_forward.1} parent=1 // pred_check
      _
    $region135: #{lstm_forward.1} parent=1 // pred_check_branch
      %8285 = sbr.rel (0) target = $region137
    $region136: #{lstm_forward.1} parent=1 // pred_region
      %8286 = dma.done [#allocation29], 256
    $region137: #{lstm_forward.1} parent=1 // pred_fallthru
      _
    // Predicated region
    $region138: #{lstm_forward.1} parent=1 // pred_check
      _
    $region139: #{lstm_forward.1} parent=1 // pred_check_branch
      %8288 = sbr.rel (0) target = $region141
    $region140: #{lstm_forward.1} parent=1 // pred_region
      %8289 = dma.done [#allocation32], 256
    $region141: #{lstm_forward.1} parent=1 // pred_fallthru
      _
    // Predicated region
    $region142: #{lstm_forward.1} parent=1 // pred_check
      _
    $region143: #{lstm_forward.1} parent=1 // pred_check_branch
      %8291 = sbr.rel (0) target = $region145
    $region144: #{lstm_forward.1} parent=1 // pred_region
      %8292 = dma.done [#allocation32], 256
    $region145: #{lstm_forward.1} parent=1 // pred_fallthru
      _
    %8293 = vsyncpa [#allocation7], 1
    %8294 = vsyncpa [#allocation10], 1
    %8295 = vsyncpa [#allocation13], 1
    %8296 = vsyncpa [#allocation16], 1
    %8297 = vsyncpa [#allocation19], 1
    %8298 = vsyncpa [#allocation22], 1
    %8299 = vsyncpa [#allocation25], 1
    %8300 = vsyncpa [#allocation8], 1
    %8301 = vsyncpa [#allocation29], 1
    %8302 = vsyncpa [#allocation32], 1

</llo_original>
